<compile_context>
chip_gen: v6e
topology: v6e:2x2x1
jax: 0.10.0
libtpu: 0.0.40
codegen_flags: <defaults>
</compile_context>

<pallas_src>
import functools

import numpy as np
import jax
import jax.numpy as jnp
from jax import lax
from jax.experimental import pallas as pl
from jax.experimental.pallas import tpu as pltpu


# --------------------------------------------------------------------------
# helpers
# --------------------------------------------------------------------------
def _const_spec(shape):
    """BlockSpec for a grid-invariant operand: full block, constant index_map,
    single-buffered (no point double-buffering something that never changes)."""
    nd = len(shape)
    return pl.BlockSpec(shape, lambda i, _nd=nd: (0,) * _nd,
                        pipeline_mode=pl.Buffered(1))


def _vmem_limit(est_bytes):
    """Scoped-VMEM request: generous vs. the estimate, capped below v7x's 64 MiB/TC."""
    return int(min(56 << 20, max(32 << 20, 2 * est_bytes)))


def _row_tile(rows, row_bytes, budget):
    """Largest row tile (divisor of rows, multiple of 8) that fits `budget`; prefer a
    grid of length >= 2 so both v7x TensorCores get work."""
    best_single = None
    for t in (2048, 1024, 512, 256, 128, 64, 32, 16, 8):
        if rows % t or t * row_bytes > budget:
            continue
        if rows // t >= 2:
            return t
        if best_single is None:
            best_single = t
    return best_single if best_single is not None else rows


def _pick_window_batch(n_total, n_mask_windows, n_tokens, per_window_bytes, budget,
                       max_rows=1024):
    """#windows per grid step: must divide the per-image window count (a block never
    mixes attention masks / batch items), keep the slab <= max_rows rows and within the
    VMEM byte budget, and prefer a grid length >= 2 (v7x megacore)."""
    best_any = 1
    best_par = None
    for wb in range(1, n_mask_windows + 1):
        if n_mask_windows % wb or n_total % wb:
            continue
        if wb * n_tokens > max_rows or wb * per_window_bytes > budget:
            continue
        best_any = wb
        if n_total // wb >= 2:
            best_par = wb
    return best_par if best_par is not None else best_any


def _erf(x):
    # Abramowitz & Stegun 7.1.26 rational approximation (|err| < 1.5e-7): exact-erf
    # GELU semantics using only VPU/EUP-friendly ops.
    p = 0.3275911
    a1, a2, a3, a4, a5 = (0.254829592, -0.284496736, 1.421413741,
                          -1.453152027, 1.061405429)
    ax = jnp.abs(x)
    t = 1.0 / (1.0 + p * ax)
    poly = ((((a5 * t + a4) * t + a3) * t + a2) * t + a1) * t
    y = 1.0 - poly * jnp.exp(-ax * ax)
    return jnp.where(x >= 0, y, -y)


def _gelu(x):
    return 0.5 * x * (1.0 + _erf(x * 0.7071067811865476))


def _layernorm(x, gamma, beta, eps):
    mean = jnp.mean(x, axis=-1, keepdims=True)
    xc = x - mean
    var = jnp.mean(xc * xc, axis=-1, keepdims=True)
    return xc * lax.rsqrt(var + eps) * gamma + beta


# --------------------------------------------------------------------------
# Kernel 1: fused LayerNorm + window attention (batched over Wb windows)
# --------------------------------------------------------------------------
def _win_attn_core(x_ref, g_ref, b_ref, wqkv_ref, bqkv_ref, bias_ref,
                   wproj_ref, bproj_ref, o_ref, mask, *,
                   num_heads, head_dim, scale, dim, eps):
    Wb, N, C = x_ref.shape
    x = x_ref[...].astype(jnp.float32).reshape(Wb * N, C)
    # norm1 fused here (per-token -> commutes with roll / window partition).
    xn = _layernorm(x, g_ref[...], b_ref[...], eps)
    # bf16 MXU operands, f32 accumulation.
    qkv = jnp.dot(xn.astype(jnp.bfloat16), wqkv_ref[...],
                  preferred_element_type=jnp.float32) + bqkv_ref[...]   # (Wb*N, 3C) f32
    bias_all = bias_ref[...].astype(jnp.float32)                        # (nH, N, N)
    heads = []
    for h in range(num_heads):
        q = (qkv[:, h * head_dim:(h + 1) * head_dim] * scale).reshape(Wb, N, head_dim)
        k = qkv[:, dim + h * head_dim:
                dim + (h + 1) * head_dim].reshape(Wb, N, head_dim)
        v = qkv[:, 2 * dim + h * head_dim:
                2 * dim + (h + 1) * head_dim].reshape(Wb, N, head_dim)
        s = jnp.einsum('bqd,bkd->bqk', q.astype(jnp.bfloat16), k.astype(jnp.bfloat16),
                       preferred_element_type=jnp.float32)              # (Wb, N, N)
        s = s + bias_all[h][None]
        if mask is not None:
            s = s + mask                                                # (Wb, N, N)
        m = jnp.max(s, axis=-1, keepdims=True)
        p = jnp.exp(s - m)
        l = jnp.sum(p, axis=-1, keepdims=True)                          # (Wb, N, 1)
        pv = jnp.einsum('bqk,bkd->bqd', p.astype(jnp.bfloat16), v.astype(jnp.bfloat16),
                        preferred_element_type=jnp.float32)             # (Wb, N, hd)
        # normalize the small (N, hd) result on the EUP instead of dividing (N, N).
        heads.append(pv * pl.reciprocal(l, approx=True))
    out = jnp.concatenate(heads, axis=-1).reshape(Wb * N, C)
    out = jnp.dot(out.astype(jnp.bfloat16), wproj_ref[...],
                  preferred_element_type=jnp.float32) + bproj_ref[...]
    o_ref[...] = out.reshape(Wb, N, C).astype(o_ref.dtype)


def _win_attn_kernel_masked(x_ref, g_ref, b_ref, wqkv_ref, bqkv_ref, bias_ref,
                            mask_ref, wproj_ref, bproj_ref, o_ref, **kw):
    _win_attn_core(x_ref, g_ref, b_ref, wqkv_ref, bqkv_ref, bias_ref,
                   wproj_ref, bproj_ref, o_ref,
                   mask_ref[...].astype(jnp.float32), **kw)


def _win_attn_kernel_nomask(x_ref, g_ref, b_ref, wqkv_ref, bqkv_ref, bias_ref,
                            wproj_ref, bproj_ref, o_ref, **kw):
    _win_attn_core(x_ref, g_ref, b_ref, wqkv_ref, bqkv_ref, bias_ref,
                   wproj_ref, bproj_ref, o_ref, None, **kw)


def window_attention(xw, gamma1, beta1, wqkv, bqkv, rel_bias, mask, wproj, bproj,
                     num_heads, scale, eps=1e-5):
    """xw: (num_windows*B, N, C) raw window tokens (f32); weights bf16; mask (nW,N,N) bf16."""
    nWB, N, C = xw.shape
    nH = num_heads
    hd = C // nH
    nW = nWB if mask is None else mask.shape[0]

    const_bytes = (2 * C * 4 + C * 3 * C * 2 + 3 * C * 4
                   + nH * N * N * 2 + C * C * 2 + C * 4)
    per_win = 32 * N * C + 16 * N * N          # streamed blocks + live values, per window
    budget = max(4 << 20, (24 << 20) - const_bytes)
    Wb = _pick_window_batch(nWB, nW, N, per_win, budget)
    grid = (nWB // Wb,)
    est = const_bytes + Wb * per_win + (0 if mask is None else 2 * Wb * N * N * 2) \
        + (2 << 20)
    kw = dict(num_heads=nH, head_dim=hd, scale=scale, dim=C, eps=eps)

    in_specs = [
        pl.BlockSpec((Wb, N, C), lambda i: (i, 0, 0)),     # x windows (streamed)
        _const_spec((1, C)),                               # gamma1
        _const_spec((1, C)),                               # beta1
        _const_spec((C, 3 * C)),                           # wqkv  (bf16)
        _const_spec((1, 3 * C)),                           # bqkv
        _const_spec((nH, N, N)),                           # relative position bias (bf16)
    ]
    args = [xw, gamma1.reshape(1, -1), beta1.reshape(1, -1), wqkv,
            bqkv.reshape(1, -1), rel_bias]

    if mask is None:
        kernel = functools.partial(_win_attn_kernel_nomask, **kw)
    else:
        n_mask_blocks = nW // Wb
        kernel = functools.partial(_win_attn_kernel_masked, **kw)
        if n_mask_blocks == 1:
            in_specs.append(_const_spec((Wb, N, N)))
        else:
            in_specs.append(pl.BlockSpec((Wb, N, N),
                                         lambda i, _n=n_mask_blocks: (i % _n, 0, 0)))
        args.append(mask)

    in_specs += [_const_spec((C, C)),                      # wproj (bf16)
                 _const_spec((1, C))]                      # bproj
    args += [wproj, bproj.reshape(1, -1)]

    return pl.pallas_call(
        kernel,
        out_shape=jax.ShapeDtypeStruct((nWB, N, C), xw.dtype),
        grid=grid,
        in_specs=in_specs,
        out_specs=pl.BlockSpec((Wb, N, C), lambda i: (i, 0, 0)),
        compiler_params=pltpu.CompilerParams(
            dimension_semantics=("parallel",),
            vmem_limit_bytes=_vmem_limit(est)),
    )(*args)


# --------------------------------------------------------------------------
# Kernel 2: fused (shortcut + attn) + MLP(LayerNorm(.)) + residual
# --------------------------------------------------------------------------
def _res_mlp_kernel(s_ref, a_ref, g_ref, b_ref, w1_ref, b1_ref, w2_ref, b2_ref,
                    o_ref, *, eps):
    t = s_ref[...].astype(jnp.float32) + a_ref[...].astype(jnp.float32)
    xn = _layernorm(t, g_ref[...], b_ref[...], eps)
    h = jnp.dot(xn.astype(jnp.bfloat16), w1_ref[...],
                preferred_element_type=jnp.float32) + b1_ref[...]
    h = _gelu(h)
    y = jnp.dot(h.astype(jnp.bfloat16), w2_ref[...],
                preferred_element_type=jnp.float32) + b2_ref[...]
    o_ref[...] = (t + y).astype(o_ref.dtype)


def residual_mlp(shortcut2d, attn2d, gamma, beta, w1, b1, w2, b2, eps=1e-5):
    R, C = shortcut2d.shape
    Hd = w1.shape[1]
    const_bytes = C * Hd * 2 + Hd * C * 2 + (Hd + 4 * C) * 4
    row_bytes = 4 * (9 * C + 2 * Hd)           # streamed (2 in + 1 out, dbl-buf) + values
    budget = max(4 << 20, (24 << 20) - const_bytes)
    tr = _row_tile(R, row_bytes, budget)
    est = const_bytes + tr * row_bytes + (2 << 20)
    # TODO(synk): for very large C*Hd (v5e), additionally tile the hidden dim with an f32
    # accumulator (pl.when init/finalize) instead of keeping both weight slabs resident.
    return pl.pallas_call(
        functools.partial(_res_mlp_kernel, eps=eps),
        out_shape=jax.ShapeDtypeStruct((R, C), shortcut2d.dtype),
        grid=(R // tr,),
        in_specs=[pl.BlockSpec((tr, C), lambda i: (i, 0)),
                  pl.BlockSpec((tr, C), lambda i: (i, 0)),
                  _const_spec((1, C)),
                  _const_spec((1, C)),
                  _const_spec((C, Hd)),
                  _const_spec((1, Hd)),
                  _const_spec((Hd, C)),
                  _const_spec((1, C))],
        out_specs=pl.BlockSpec((tr, C), lambda i: (i, 0)),
        compiler_params=pltpu.CompilerParams(
            dimension_semantics=("parallel",),
            vmem_limit_bytes=_vmem_limit(est)),
    )(shortcut2d, attn2d, gamma.reshape(1, -1), beta.reshape(1, -1),
      w1, b1.reshape(1, -1), w2, b2.reshape(1, -1))


# --------------------------------------------------------------------------
# Kernel 3: PatchExpand3D linear + fused per-group LayerNorm (lane-dense)
# --------------------------------------------------------------------------
def _expand_ln_kernel(x_ref, w_ref, m_ref, mt_ref, g_ref, b_ref, o_ref, *, inv_c, eps):
    # y = x @ W_expand : bf16 operands, f32 accumulation.
    y = jnp.dot(x_ref[...].astype(jnp.bfloat16), w_ref[...],
                preferred_element_type=jnp.float32)                      # (tr, O=4*C0)
    # Per-(C0//2)-group LayerNorm statistics via tiny segment matmuls (f32):
    #   M  (O, 8) 0/1 group indicator, MT (8, O) its transpose.
    # This keeps everything lane-dense: no per-group column slicing, one dense store.
    s1 = jnp.dot(y, m_ref[...], preferred_element_type=jnp.float32) * inv_c       # mean
    s2 = jnp.dot(y * y, m_ref[...], preferred_element_type=jnp.float32) * inv_c   # E[y^2]
    var8 = jnp.maximum(s2 - s1 * s1, 0.0)
    inv8 = lax.rsqrt(var8 + eps)
    mean_f = jnp.dot(s1, mt_ref[...], preferred_element_type=jnp.float32)   # (tr, O)
    inv_f = jnp.dot(inv8, mt_ref[...], preferred_element_type=jnp.float32)  # (tr, O)
    o_ref[...] = ((y - mean_f) * inv_f * g_ref[...] + b_ref[...]).astype(o_ref.dtype)


def patch_expand2d(x2d, w_expand, seg_m, seg_mt, gamma_t, beta_t, eps=1e-5):
    R, C0 = x2d.shape
    O = w_expand.shape[1]          # 4*C0
    c = O // 8
    const_bytes = C0 * O * 2 + 2 * O * 8 * 4 + 2 * O * 4
    row_bytes = 8 * (C0 + O) + 16 * O
    budget = max(4 << 20, (24 << 20) - const_bytes)
    tr = _row_tile(R, row_bytes, budget)
    est = const_bytes + tr * row_bytes + (2 << 20)
    return pl.pallas_call(
        functools.partial(_expand_ln_kernel, inv_c=1.0 / c, eps=eps),
        out_shape=jax.ShapeDtypeStruct((R, O), x2d.dtype),
        grid=(R // tr,),
        in_specs=[pl.BlockSpec((tr, C0), lambda i: (i, 0)),
                  _const_spec((C0, O)),
                  _const_spec((O, 8)),
                  _const_spec((8, O)),
                  _const_spec((1, O)),
                  _const_spec((1, O))],
        out_specs=pl.BlockSpec((tr, O), lambda i: (i, 0)),
        compiler_params=pltpu.CompilerParams(
            dimension_semantics=("parallel",),
            vmem_limit_bytes=_vmem_limit(est)),
    )(x2d, w_expand, seg_m, seg_mt, gamma_t, beta_t)


# --------------------------------------------------------------------------
# window partition / reverse, masks, relative position index (plain JAX glue)
# --------------------------------------------------------------------------
def window_partition_3d(x, ws):
    B, Z, H, W, C = x.shape
    x = x.reshape(B, Z // ws, ws, H // ws, ws, W // ws, ws, C)
    x = jnp.transpose(x, (0, 1, 3, 5, 2, 4, 6, 7))
    return x.reshape(-1, ws, ws, ws, C)


def window_reverse_3d(windows, ws, Z, H, W):
    # Reproduces the reference source verbatim, including its (Z, B, H, W, C) view.
    B = windows.shape[0] // (Z * H * W // ws ** 3)
    x = windows.reshape(B, Z // ws, H // ws, W // ws, ws, ws, ws, -1)
    x = jnp.transpose(x, (0, 1, 4, 2, 5, 3, 6, 7))
    return x.reshape(Z, B, H, W, -1)


def compute_attn_mask(input_resolution, window_size, shift_size):
    if shift_size <= 0:
        return None
    Z, H, W = input_resolution
    img_mask = np.zeros((1, Z, H, W, 1), np.float32)
    sl = (slice(0, -window_size), slice(-window_size, -shift_size),
          slice(-shift_size, None))
    cnt = 0
    for z in sl:
        for h in sl:
            for w in sl:
                img_mask[:, z, h, w, :] = cnt
                cnt += 1
    ws = window_size
    mw = img_mask.reshape(1, Z // ws, ws, H // ws, ws, W // ws, ws, 1)
    mw = mw.transpose(0, 1, 3, 5, 2, 4, 6, 7).reshape(-1, ws ** 3)
    attn_mask = mw[:, None, :] - mw[:, :, None]
    return np.where(attn_mask != 0, -100.0, 0.0).astype(np.float32)


def compute_rel_pos_index(wz, wh, ww):
    coords = np.stack(np.meshgrid(np.arange(wz), np.arange(wh), np.arange(ww),
                                  indexing='ij'))
    cf = coords.reshape(3, -1)
    rel = (cf[:, :, None] - cf[:, None, :]).transpose(1, 2, 0).astype(np.int64)
    rel[:, :, 0] += wz - 1
    rel[:, :, 1] += wh - 1
    rel[:, :, 2] += ww - 1
    rel[:, :, 0] *= (2 * wh - 1) * (2 * ww - 1)
    rel[:, :, 1] *= 2 * ww - 1
    return rel.sum(-1)   # (N, N)


# --------------------------------------------------------------------------
# BasicLayer_up3D (JAX / Pallas port)
# --------------------------------------------------------------------------
class BasicLayerUp3D:
    def __init__(self, key, dim, input_resolution, depth, num_heads,
                 window_size, mlp_ratio=4.0, upsample=True):
        self.dim = dim
        self.input_resolution = input_resolution
        self.depth = depth
        self.num_heads = num_heads
        self.mlp_ratio = mlp_ratio
        if min(input_resolution) <= window_size:
            window_size = min(input_resolution)
        self.window_size = window_size
        N = window_size ** 3
        head_dim = dim // num_heads
        self.scale = head_dim ** (-0.5)
        mlp_hidden = int(dim * mlp_ratio)
        rel_index = compute_rel_pos_index(window_size, window_size, window_size)

        ks = iter(jax.random.split(key, depth * 10 + 4))

        def rnd(shape, dtype=jnp.float32):
            return (jax.random.normal(next(ks), shape, jnp.float32) * 0.02).astype(dtype)

        self.blocks = []
        for i in range(depth):
            shift = 0 if i % 2 == 0 else window_size // 2
            if min(input_resolution) <= window_size:
                shift = 0
            table = rnd(((2 * window_size - 1) ** 3, num_heads))
            rel_bias = jnp.transpose(
                table[rel_index.reshape(-1)].reshape(N, N, num_heads),
                (2, 0, 1)).astype(jnp.bfloat16)
            mask_np = compute_attn_mask(input_resolution, window_size, shift)
            blk = dict(
                shift=shift,
                g1=jnp.ones((dim,), jnp.float32),
                b1=jnp.zeros((dim,), jnp.float32),
                wqkv=rnd((dim, 3 * dim), jnp.bfloat16),
                bqkv=rnd((3 * dim,)),
                rel_bias=rel_bias,
                mask=None if mask_np is None else jnp.asarray(mask_np, jnp.bfloat16),
                wproj=rnd((dim, dim), jnp.bfloat16),
                bproj=rnd((dim,)),
                g2=jnp.ones((dim,), jnp.float32),
                b2=jnp.zeros((dim,), jnp.float32),
                w1=rnd((dim, mlp_hidden), jnp.bfloat16),
                b1m=rnd((mlp_hidden,)),
                w2=rnd((mlp_hidden, dim), jnp.bfloat16),
                b2m=rnd((dim,)),
            )
            self.blocks.append(blk)

        if upsample:
            O = 4 * dim
            c = dim // 2
            self.w_expand = rnd((dim, O), jnp.bfloat16)
            self.g_up = jnp.ones((c,), jnp.float32)
            self.b_up = jnp.zeros((c,), jnp.float32)
            seg = np.zeros((O, 8), np.float32)
            for g in range(8):
                seg[g * c:(g + 1) * c, g] = 1.0
            self.seg_m = jnp.asarray(seg)
            self.seg_mt = jnp.asarray(np.ascontiguousarray(seg.T))
            self.g_up_t = jnp.tile(self.g_up, 8).reshape(1, O)
            self.b_up_t = jnp.tile(self.b_up, 8).reshape(1, O)
        else:
            self.w_expand = None

    # -- SwinTransformerBlock3D forward -----------------------------------
    def _block_forward(self, x, blk):
        Z, H, W = self.input_resolution
        B, L, C = x.shape
        ws, shift = self.window_size, blk['shift']
        # norm1 is fused into the attention kernel (per-token, commutes with the
        # roll / window-partition permutations below).
        xr = x.reshape(B, Z, H, W, C)
        if shift > 0:
            xr = jnp.roll(xr, (-shift, -shift, -shift), axis=(1, 2, 3))
        xw = window_partition_3d(xr, ws).reshape(-1, ws ** 3, C)
        aw = window_attention(xw, blk['g1'], blk['b1'], blk['wqkv'], blk['bqkv'],
                              blk['rel_bias'], blk['mask'], blk['wproj'],
                              blk['bproj'], self.num_heads, self.scale)
        aw = aw.reshape(-1, ws, ws, ws, C)
        sx = window_reverse_3d(aw, ws, Z, H, W)   # (Z, B, H, W, C) verbatim ordering
        if shift > 0:
            sx = jnp.roll(sx, (shift, shift, shift), axis=(1, 2, 3))
        attn_out = sx.reshape(B, Z * H * W, C)
        # shortcut add + norm2 + MLP + residual fused into one Pallas kernel.
        y = residual_mlp(x.reshape(B * L, C), attn_out.reshape(B * L, C),
                         blk['g2'], blk['b2'], blk['w1'], blk['b1m'],
                         blk['w2'], blk['b2m'])
        return y.reshape(B, L, C)

    # -- PatchExpand3D forward --------------------------------------------
    def _patch_expand(self, x):
        Z, H, W = self.input_resolution
        B, L, C0 = x.shape
        # Linear expand + per-(C//8)-group LayerNorm fused (LN commutes with the
        # p1/p2/p3 rearrange below, which only permutes (token, group) pairs).
        xe = patch_expand2d(x.reshape(B * L, C0), self.w_expand,
                            self.seg_m, self.seg_mt, self.g_up_t, self.b_up_t)
        C = 4 * C0
        c = C // 8
        xv = xe.reshape(B, Z, H, W, 2, 2, 2, c)
        xv = jnp.transpose(xv, (0, 1, 4, 2, 5, 3, 6, 7))
        return xv.reshape(B, Z * H * W * 8, c)

    def __call__(self, x):
        for blk in self.blocks:
            x = self._block_forward(x, blk)
        if self.w_expand is not None:
            x = self._patch_expand(x)
        return x


# --------------------------------------------------------------------------
if __name__ == "__main__":
    key = jax.random.PRNGKey(0)
    B, dim = 2, 32
    input_resolution = (4, 4, 4)
    depth, num_heads, window_size = 2, 4, 2

    layer = BasicLayerUp3D(key, dim, input_resolution, depth, num_heads,
                           window_size, mlp_ratio=4.0, upsample=True)

    Z, H, W = input_resolution
    L = Z * H * W
    x = jax.random.normal(jax.random.fold_in(key, 123), (B, L, dim), jnp.float32)

    fwd = jax.jit(layer.__call__)
    y = fwd(x)
    jax.block_until_ready(y)
    assert y.shape == (B, 8 * L, dim // 2), y.shape
    assert bool(jnp.all(jnp.isfinite(y)))
    print("KERNEL_OK")
</pallas_src>

<mosaic_0001>
module attributes {stable_mosaic.version = 11 : i64} {
  func.func @_win_attn_kernel_nomask(%arg0: i32, %arg1: memref<8x8x32xf32, #tpu.memory_space<vmem>>, %arg2: memref<1x32xf32, #tpu.memory_space<vmem>>, %arg3: memref<1x32xf32, #tpu.memory_space<vmem>>, %arg4: memref<32x96xbf16, #tpu.memory_space<vmem>>, %arg5: memref<1x96xf32, #tpu.memory_space<vmem>>, %arg6: memref<4x8x8xbf16, #tpu.memory_space<vmem>>, %arg7: memref<32x32xbf16, #tpu.memory_space<vmem>>, %arg8: memref<1x32xf32, #tpu.memory_space<vmem>>, %arg9: memref<8x8x32xf32, #tpu.memory_space<vmem>>) attributes {dimension_semantics = [#tpu.dimension_semantics<parallel>], iteration_bounds = array<i64: 2>, scalar_prefetch = 0 : i64, scratch_operands = 0 : i64, tpu.core_type = #tpu.core_type<tc>, window_params = [{transform_indices = @transform_0, window_bounds = array<i64: 8, 8, 32>}, {pipeline_mode = #tpu.pipeline_mode<synchronous>, transform_indices = @transform_1, window_bounds = array<i64: 1, 32>}, {pipeline_mode = #tpu.pipeline_mode<synchronous>, transform_indices = @transform_2, window_bounds = array<i64: 1, 32>}, {pipeline_mode = #tpu.pipeline_mode<synchronous>, transform_indices = @transform_3, window_bounds = array<i64: 32, 96>}, {pipeline_mode = #tpu.pipeline_mode<synchronous>, transform_indices = @transform_4, window_bounds = array<i64: 1, 96>}, {pipeline_mode = #tpu.pipeline_mode<synchronous>, transform_indices = @transform_5, window_bounds = array<i64: 4, 8, 8>}, {pipeline_mode = #tpu.pipeline_mode<synchronous>, transform_indices = @transform_6, window_bounds = array<i64: 32, 32>}, {pipeline_mode = #tpu.pipeline_mode<synchronous>, transform_indices = @transform_7, window_bounds = array<i64: 1, 32>}, {transform_indices = @transform_8, window_bounds = array<i64: 8, 8, 32>}]} {
    %c0 = arith.constant 0 : index
    %c0_0 = arith.constant 0 : index
    %c0_1 = arith.constant 0 : index
    %0 = vector.load %arg1[%c0, %c0_0, %c0_1] : memref<8x8x32xf32, #tpu.memory_space<vmem>>, vector<8x8x32xf32>
    %1 = vector.shape_cast %0 : vector<8x8x32xf32> to vector<64x32xf32>
    %c0_2 = arith.constant 0 : index
    %c0_3 = arith.constant 0 : index
    %2 = vector.load %arg2[%c0_2, %c0_3] : memref<1x32xf32, #tpu.memory_space<vmem>>, vector<1x32xf32>
    %c0_4 = arith.constant 0 : index
    %c0_5 = arith.constant 0 : index
    %3 = vector.load %arg3[%c0_4, %c0_5] : memref<1x32xf32, #tpu.memory_space<vmem>>, vector<1x32xf32>
    %cst = arith.constant dense<0.000000e+00> : vector<64xf32>
    %4 = vector.multi_reduction <add>, %1, %cst [1] : vector<64x32xf32> to vector<64xf32>
    %5 = vector.shape_cast %4 : vector<64xf32> to vector<64x1xf32>
    %cst_6 = arith.constant 3.200000e+01 : f32
    %6 = vector.broadcast %cst_6 : f32 to vector<64x1xf32>
    %7 = arith.divf %5, %6 : vector<64x1xf32>
    %8 = vector.broadcast %7 : vector<64x1xf32> to vector<64x32xf32>
    %9 = arith.subf %1, %8 : vector<64x32xf32>
    %10 = arith.mulf %9, %9 : vector<64x32xf32>
    %cst_7 = arith.constant dense<0.000000e+00> : vector<64xf32>
    %11 = vector.multi_reduction <add>, %10, %cst_7 [1] : vector<64x32xf32> to vector<64xf32>
    %12 = vector.shape_cast %11 : vector<64xf32> to vector<64x1xf32>
    %cst_8 = arith.constant 3.200000e+01 : f32
    %13 = vector.broadcast %cst_8 : f32 to vector<64x1xf32>
    %14 = arith.divf %12, %13 : vector<64x1xf32>
    %cst_9 = arith.constant 9.99999974E-6 : f32
    %15 = vector.broadcast %cst_9 : f32 to vector<64x1xf32>
    %16 = arith.addf %14, %15 : vector<64x1xf32>
    %17 = math.rsqrt %16 : vector<64x1xf32>
    %18 = vector.broadcast %17 : vector<64x1xf32> to vector<64x32xf32>
    %19 = arith.mulf %9, %18 : vector<64x32xf32>
    %20 = vector.broadcast %2 : vector<1x32xf32> to vector<64x32xf32>
    %21 = arith.mulf %19, %20 : vector<64x32xf32>
    %22 = vector.broadcast %3 : vector<1x32xf32> to vector<64x32xf32>
    %23 = arith.addf %21, %22 : vector<64x32xf32>
    %24 = arith.truncf %23 : vector<64x32xf32> to vector<64x32xbf16>
    %c0_10 = arith.constant 0 : index
    %c0_11 = arith.constant 0 : index
    %25 = vector.load %arg4[%c0_10, %c0_11] : memref<32x96xbf16, #tpu.memory_space<vmem>>, vector<32x96xbf16>
    %cst_12 = arith.constant dense<0.000000e+00> : vector<64x96xf32>
    %26 = tpu.matmul %24, %25, %cst_12 {dimension_numbers = #tpu.dot_dimension_numbers<[1], [0], [0], [1], [0, 0, 1, 1], [], []>} : vector<64x32xbf16>, vector<32x96xbf16>, vector<64x96xf32> -> vector<64x96xf32>
    %c0_13 = arith.constant 0 : index
    %c0_14 = arith.constant 0 : index
    %27 = vector.load %arg5[%c0_13, %c0_14] : memref<1x96xf32, #tpu.memory_space<vmem>>, vector<1x96xf32>
    %28 = vector.broadcast %27 : vector<1x96xf32> to vector<64x96xf32>
    %29 = arith.addf %26, %28 : vector<64x96xf32>
    %c0_15 = arith.constant 0 : index
    %c0_16 = arith.constant 0 : index
    %c0_17 = arith.constant 0 : index
    %30 = vector.load %arg6[%c0_15, %c0_16, %c0_17] : memref<4x8x8xbf16, #tpu.memory_space<vmem>>, vector<4x8x8xbf16>
    %31 = arith.extf %30 : vector<4x8x8xbf16> to vector<4x8x8xf32>
    %32 = vector.extract_strided_slice %29 {offsets = [0, 0], sizes = [64, 8], strides = [1, 1]} : vector<64x96xf32> to vector<64x8xf32>
    %cst_18 = arith.constant 0.353553385 : f32
    %33 = vector.broadcast %cst_18 : f32 to vector<64x8xf32>
    %34 = arith.mulf %32, %33 : vector<64x8xf32>
    %35 = vector.shape_cast %34 : vector<64x8xf32> to vector<8x8x8xf32>
    %36 = vector.extract_strided_slice %29 {offsets = [0, 32], sizes = [64, 8], strides = [1, 1]} : vector<64x96xf32> to vector<64x8xf32>
    %37 = vector.shape_cast %36 : vector<64x8xf32> to vector<8x8x8xf32>
    %38 = vector.extract_strided_slice %29 {offsets = [0, 64], sizes = [64, 8], strides = [1, 1]} : vector<64x96xf32> to vector<64x8xf32>
    %39 = vector.shape_cast %38 : vector<64x8xf32> to vector<8x8x8xf32>
    %40 = arith.truncf %35 : vector<8x8x8xf32> to vector<8x8x8xbf16>
    %41 = arith.truncf %37 : vector<8x8x8xf32> to vector<8x8x8xbf16>
    "tpu.trace_start"() <{level = 10 : i32, message = "bqd,bkd->bqk"}> : () -> ()
    %cst_19 = arith.constant dense<0.000000e+00> : vector<8x8x8xf32>
    %42 = tpu.matmul %40, %41, %cst_19 {dimension_numbers = #tpu.dot_dimension_numbers<[2], [2], [1], [1], [0, 0, 0, 1, 1, 1], [0], [0]>} : vector<8x8x8xbf16>, vector<8x8x8xbf16>, vector<8x8x8xf32> -> vector<8x8x8xf32>
    "tpu.trace_stop"() : () -> ()
    %43 = vector.extract_strided_slice %31 {offsets = [0, 0, 0], sizes = [1, 8, 8], strides = [1, 1, 1]} : vector<4x8x8xf32> to vector<1x8x8xf32>
    %44 = vector.shape_cast %43 : vector<1x8x8xf32> to vector<8x8xf32>
    %45 = vector.shape_cast %44 : vector<8x8xf32> to vector<1x8x8xf32>
    %46 = vector.broadcast %45 : vector<1x8x8xf32> to vector<8x8x8xf32>
    %47 = arith.addf %42, %46 : vector<8x8x8xf32>
    %cst_20 = arith.constant dense<0xFF800000> : vector<8x8xf32>
    %48 = vector.multi_reduction <maximumf>, %47, %cst_20 [2] : vector<8x8x8xf32> to vector<8x8xf32>
    %49 = vector.shape_cast %48 : vector<8x8xf32> to vector<8x8x1xf32>
    %50 = vector.broadcast %49 : vector<8x8x1xf32> to vector<8x8x8xf32>
    %51 = arith.subf %47, %50 : vector<8x8x8xf32>
    %52 = math.exp %51 : vector<8x8x8xf32>
    %cst_21 = arith.constant dense<0.000000e+00> : vector<8x8xf32>
    %53 = vector.multi_reduction <add>, %52, %cst_21 [2] : vector<8x8x8xf32> to vector<8x8xf32>
    %54 = vector.shape_cast %53 : vector<8x8xf32> to vector<8x8x1xf32>
    %55 = arith.truncf %52 : vector<8x8x8xf32> to vector<8x8x8xbf16>
    %56 = arith.truncf %39 : vector<8x8x8xf32> to vector<8x8x8xbf16>
    "tpu.trace_start"() <{level = 10 : i32, message = "bqk,bkd->bqd"}> : () -> ()
    %cst_22 = arith.constant dense<0.000000e+00> : vector<8x8x8xf32>
    %57 = tpu.matmul %55, %56, %cst_22 {dimension_numbers = #tpu.dot_dimension_numbers<[2], [1], [1], [2], [0, 0, 0, 1, 1, 2], [0], [0]>} : vector<8x8x8xbf16>, vector<8x8x8xbf16>, vector<8x8x8xf32> -> vector<8x8x8xf32>
    "tpu.trace_stop"() : () -> ()
    %58 = tpu.reciprocal %54 {approx = true} : vector<8x8x1xf32> -> vector<8x8x1xf32>
    %59 = vector.broadcast %58 : vector<8x8x1xf32> to vector<8x8x8xf32>
    %60 = arith.mulf %57, %59 : vector<8x8x8xf32>
    %61 = vector.extract_strided_slice %29 {offsets = [0, 8], sizes = [64, 8], strides = [1, 1]} : vector<64x96xf32> to vector<64x8xf32>
    %cst_23 = arith.constant 0.353553385 : f32
    %62 = vector.broadcast %cst_23 : f32 to vector<64x8xf32>
    %63 = arith.mulf %61, %62 : vector<64x8xf32>
    %64 = vector.shape_cast %63 : vector<64x8xf32> to vector<8x8x8xf32>
    %65 = vector.extract_strided_slice %29 {offsets = [0, 40], sizes = [64, 8], strides = [1, 1]} : vector<64x96xf32> to vector<64x8xf32>
    %66 = vector.shape_cast %65 : vector<64x8xf32> to vector<8x8x8xf32>
    %67 = vector.extract_strided_slice %29 {offsets = [0, 72], sizes = [64, 8], strides = [1, 1]} : vector<64x96xf32> to vector<64x8xf32>
    %68 = vector.shape_cast %67 : vector<64x8xf32> to vector<8x8x8xf32>
    %69 = arith.truncf %64 : vector<8x8x8xf32> to vector<8x8x8xbf16>
    %70 = arith.truncf %66 : vector<8x8x8xf32> to vector<8x8x8xbf16>
    "tpu.trace_start"() <{level = 10 : i32, message = "bqd,bkd->bqk"}> : () -> ()
    %cst_24 = arith.constant dense<0.000000e+00> : vector<8x8x8xf32>
    %71 = tpu.matmul %69, %70, %cst_24 {dimension_numbers = #tpu.dot_dimension_numbers<[2], [2], [1], [1], [0, 0, 0, 1, 1, 1], [0], [0]>} : vector<8x8x8xbf16>, vector<8x8x8xbf16>, vector<8x8x8xf32> -> vector<8x8x8xf32>
    "tpu.trace_stop"() : () -> ()
    %72 = vector.extract_strided_slice %31 {offsets = [1, 0, 0], sizes = [1, 8, 8], strides = [1, 1, 1]} : vector<4x8x8xf32> to vector<1x8x8xf32>
    %73 = vector.shape_cast %72 : vector<1x8x8xf32> to vector<8x8xf32>
    %74 = vector.shape_cast %73 : vector<8x8xf32> to vector<1x8x8xf32>
    %75 = vector.broadcast %74 : vector<1x8x8xf32> to vector<8x8x8xf32>
    %76 = arith.addf %71, %75 : vector<8x8x8xf32>
    %cst_25 = arith.constant dense<0xFF800000> : vector<8x8xf32>
    %77 = vector.multi_reduction <maximumf>, %76, %cst_25 [2] : vector<8x8x8xf32> to vector<8x8xf32>
    %78 = vector.shape_cast %77 : vector<8x8xf32> to vector<8x8x1xf32>
    %79 = vector.broadcast %78 : vector<8x8x1xf32> to vector<8x8x8xf32>
    %80 = arith.subf %76, %79 : vector<8x8x8xf32>
    %81 = math.exp %80 : vector<8x8x8xf32>
    %cst_26 = arith.constant dense<0.000000e+00> : vector<8x8xf32>
    %82 = vector.multi_reduction <add>, %81, %cst_26 [2] : vector<8x8x8xf32> to vector<8x8xf32>
    %83 = vector.shape_cast %82 : vector<8x8xf32> to vector<8x8x1xf32>
    %84 = arith.truncf %81 : vector<8x8x8xf32> to vector<8x8x8xbf16>
    %85 = arith.truncf %68 : vector<8x8x8xf32> to vector<8x8x8xbf16>
    "tpu.trace_start"() <{level = 10 : i32, message = "bqk,bkd->bqd"}> : () -> ()
    %cst_27 = arith.constant dense<0.000000e+00> : vector<8x8x8xf32>
    %86 = tpu.matmul %84, %85, %cst_27 {dimension_numbers = #tpu.dot_dimension_numbers<[2], [1], [1], [2], [0, 0, 0, 1, 1, 2], [0], [0]>} : vector<8x8x8xbf16>, vector<8x8x8xbf16>, vector<8x8x8xf32> -> vector<8x8x8xf32>
    "tpu.trace_stop"() : () -> ()
    %87 = tpu.reciprocal %83 {approx = true} : vector<8x8x1xf32> -> vector<8x8x1xf32>
    %88 = vector.broadcast %87 : vector<8x8x1xf32> to vector<8x8x8xf32>
    %89 = arith.mulf %86, %88 : vector<8x8x8xf32>
    %90 = vector.extract_strided_slice %29 {offsets = [0, 16], sizes = [64, 8], strides = [1, 1]} : vector<64x96xf32> to vector<64x8xf32>
    %cst_28 = arith.constant 0.353553385 : f32
    %91 = vector.broadcast %cst_28 : f32 to vector<64x8xf32>
    %92 = arith.mulf %90, %91 : vector<64x8xf32>
    %93 = vector.shape_cast %92 : vector<64x8xf32> to vector<8x8x8xf32>
    %94 = vector.extract_strided_slice %29 {offsets = [0, 48], sizes = [64, 8], strides = [1, 1]} : vector<64x96xf32> to vector<64x8xf32>
    %95 = vector.shape_cast %94 : vector<64x8xf32> to vector<8x8x8xf32>
    %96 = vector.extract_strided_slice %29 {offsets = [0, 80], sizes = [64, 8], strides = [1, 1]} : vector<64x96xf32> to vector<64x8xf32>
    %97 = vector.shape_cast %96 : vector<64x8xf32> to vector<8x8x8xf32>
    %98 = arith.truncf %93 : vector<8x8x8xf32> to vector<8x8x8xbf16>
    %99 = arith.truncf %95 : vector<8x8x8xf32> to vector<8x8x8xbf16>
    "tpu.trace_start"() <{level = 10 : i32, message = "bqd,bkd->bqk"}> : () -> ()
    %cst_29 = arith.constant dense<0.000000e+00> : vector<8x8x8xf32>
    %100 = tpu.matmul %98, %99, %cst_29 {dimension_numbers = #tpu.dot_dimension_numbers<[2], [2], [1], [1], [0, 0, 0, 1, 1, 1], [0], [0]>} : vector<8x8x8xbf16>, vector<8x8x8xbf16>, vector<8x8x8xf32> -> vector<8x8x8xf32>
    "tpu.trace_stop"() : () -> ()
    %101 = vector.extract_strided_slice %31 {offsets = [2, 0, 0], sizes = [1, 8, 8], strides = [1, 1, 1]} : vector<4x8x8xf32> to vector<1x8x8xf32>
    %102 = vector.shape_cast %101 : vector<1x8x8xf32> to vector<8x8xf32>
    %103 = vector.shape_cast %102 : vector<8x8xf32> to vector<1x8x8xf32>
    %104 = vector.broadcast %103 : vector<1x8x8xf32> to vector<8x8x8xf32>
    %105 = arith.addf %100, %104 : vector<8x8x8xf32>
    %cst_30 = arith.constant dense<0xFF800000> : vector<8x8xf32>
    %106 = vector.multi_reduction <maximumf>, %105, %cst_30 [2] : vector<8x8x8xf32> to vector<8x8xf32>
    %107 = vector.shape_cast %106 : vector<8x8xf32> to vector<8x8x1xf32>
    %108 = vector.broadcast %107 : vector<8x8x1xf32> to vector<8x8x8xf32>
    %109 = arith.subf %105, %108 : vector<8x8x8xf32>
    %110 = math.exp %109 : vector<8x8x8xf32>
    %cst_31 = arith.constant dense<0.000000e+00> : vector<8x8xf32>
    %111 = vector.multi_reduction <add>, %110, %cst_31 [2] : vector<8x8x8xf32> to vector<8x8xf32>
    %112 = vector.shape_cast %111 : vector<8x8xf32> to vector<8x8x1xf32>
    %113 = arith.truncf %110 : vector<8x8x8xf32> to vector<8x8x8xbf16>
    %114 = arith.truncf %97 : vector<8x8x8xf32> to vector<8x8x8xbf16>
    "tpu.trace_start"() <{level = 10 : i32, message = "bqk,bkd->bqd"}> : () -> ()
    %cst_32 = arith.constant dense<0.000000e+00> : vector<8x8x8xf32>
    %115 = tpu.matmul %113, %114, %cst_32 {dimension_numbers = #tpu.dot_dimension_numbers<[2], [1], [1], [2], [0, 0, 0, 1, 1, 2], [0], [0]>} : vector<8x8x8xbf16>, vector<8x8x8xbf16>, vector<8x8x8xf32> -> vector<8x8x8xf32>
    "tpu.trace_stop"() : () -> ()
    %116 = tpu.reciprocal %112 {approx = true} : vector<8x8x1xf32> -> vector<8x8x1xf32>
    %117 = vector.broadcast %116 : vector<8x8x1xf32> to vector<8x8x8xf32>
    %118 = arith.mulf %115, %117 : vector<8x8x8xf32>
    %119 = vector.extract_strided_slice %29 {offsets = [0, 24], sizes = [64, 8], strides = [1, 1]} : vector<64x96xf32> to vector<64x8xf32>
    %cst_33 = arith.constant 0.353553385 : f32
    %120 = vector.broadcast %cst_33 : f32 to vector<64x8xf32>
    %121 = arith.mulf %119, %120 : vector<64x8xf32>
    %122 = vector.shape_cast %121 : vector<64x8xf32> to vector<8x8x8xf32>
    %123 = vector.extract_strided_slice %29 {offsets = [0, 56], sizes = [64, 8], strides = [1, 1]} : vector<64x96xf32> to vector<64x8xf32>
    %124 = vector.shape_cast %123 : vector<64x8xf32> to vector<8x8x8xf32>
    %125 = vector.extract_strided_slice %29 {offsets = [0, 88], sizes = [64, 8], strides = [1, 1]} : vector<64x96xf32> to vector<64x8xf32>
    %126 = vector.shape_cast %125 : vector<64x8xf32> to vector<8x8x8xf32>
    %127 = arith.truncf %122 : vector<8x8x8xf32> to vector<8x8x8xbf16>
    %128 = arith.truncf %124 : vector<8x8x8xf32> to vector<8x8x8xbf16>
    "tpu.trace_start"() <{level = 10 : i32, message = "bqd,bkd->bqk"}> : () -> ()
    %cst_34 = arith.constant dense<0.000000e+00> : vector<8x8x8xf32>
    %129 = tpu.matmul %127, %128, %cst_34 {dimension_numbers = #tpu.dot_dimension_numbers<[2], [2], [1], [1], [0, 0, 0, 1, 1, 1], [0], [0]>} : vector<8x8x8xbf16>, vector<8x8x8xbf16>, vector<8x8x8xf32> -> vector<8x8x8xf32>
    "tpu.trace_stop"() : () -> ()
    %130 = vector.extract_strided_slice %31 {offsets = [3, 0, 0], sizes = [1, 8, 8], strides = [1, 1, 1]} : vector<4x8x8xf32> to vector<1x8x8xf32>
    %131 = vector.shape_cast %130 : vector<1x8x8xf32> to vector<8x8xf32>
    %132 = vector.shape_cast %131 : vector<8x8xf32> to vector<1x8x8xf32>
    %133 = vector.broadcast %132 : vector<1x8x8xf32> to vector<8x8x8xf32>
    %134 = arith.addf %129, %133 : vector<8x8x8xf32>
    %cst_35 = arith.constant dense<0xFF800000> : vector<8x8xf32>
    %135 = vector.multi_reduction <maximumf>, %134, %cst_35 [2] : vector<8x8x8xf32> to vector<8x8xf32>
    %136 = vector.shape_cast %135 : vector<8x8xf32> to vector<8x8x1xf32>
    %137 = vector.broadcast %136 : vector<8x8x1xf32> to vector<8x8x8xf32>
    %138 = arith.subf %134, %137 : vector<8x8x8xf32>
    %139 = math.exp %138 : vector<8x8x8xf32>
    %cst_36 = arith.constant dense<0.000000e+00> : vector<8x8xf32>
    %140 = vector.multi_reduction <add>, %139, %cst_36 [2] : vector<8x8x8xf32> to vector<8x8xf32>
    %141 = vector.shape_cast %140 : vector<8x8xf32> to vector<8x8x1xf32>
    %142 = arith.truncf %139 : vector<8x8x8xf32> to vector<8x8x8xbf16>
    %143 = arith.truncf %126 : vector<8x8x8xf32> to vector<8x8x8xbf16>
    "tpu.trace_start"() <{level = 10 : i32, message = "bqk,bkd->bqd"}> : () -> ()
    %cst_37 = arith.constant dense<0.000000e+00> : vector<8x8x8xf32>
    %144 = tpu.matmul %142, %143, %cst_37 {dimension_numbers = #tpu.dot_dimension_numbers<[2], [1], [1], [2], [0, 0, 0, 1, 1, 2], [0], [0]>} : vector<8x8x8xbf16>, vector<8x8x8xbf16>, vector<8x8x8xf32> -> vector<8x8x8xf32>
    "tpu.trace_stop"() : () -> ()
    %145 = tpu.reciprocal %141 {approx = true} : vector<8x8x1xf32> -> vector<8x8x1xf32>
    %146 = vector.broadcast %145 : vector<8x8x1xf32> to vector<8x8x8xf32>
    %147 = arith.mulf %144, %146 : vector<8x8x8xf32>
    %148 = tpu.concatenate %60, %89, %118, %147 in 2 : vector<8x8x8xf32>, vector<8x8x8xf32>, vector<8x8x8xf32>, vector<8x8x8xf32> -> vector<8x8x32xf32>
    %149 = vector.shape_cast %148 : vector<8x8x32xf32> to vector<64x32xf32>
    %150 = arith.truncf %149 : vector<64x32xf32> to vector<64x32xbf16>
    %c0_38 = arith.constant 0 : index
    %c0_39 = arith.constant 0 : index
    %151 = vector.load %arg7[%c0_38, %c0_39] : memref<32x32xbf16, #tpu.memory_space<vmem>>, vector<32x32xbf16>
    %cst_40 = arith.constant dense<0.000000e+00> : vector<64x32xf32>
    %152 = tpu.matmul %150, %151, %cst_40 {dimension_numbers = #tpu.dot_dimension_numbers<[1], [0], [0], [1], [0, 0, 1, 1], [], []>} : vector<64x32xbf16>, vector<32x32xbf16>, vector<64x32xf32> -> vector<64x32xf32>
    %c0_41 = arith.constant 0 : index
    %c0_42 = arith.constant 0 : index
    %153 = vector.load %arg8[%c0_41, %c0_42] : memref<1x32xf32, #tpu.memory_space<vmem>>, vector<1x32xf32>
    %154 = vector.broadcast %153 : vector<1x32xf32> to vector<64x32xf32>
    %155 = arith.addf %152, %154 : vector<64x32xf32>
    %156 = vector.shape_cast %155 : vector<64x32xf32> to vector<8x8x32xf32>
    %c0_43 = arith.constant 0 : index
    %c0_44 = arith.constant 0 : index
    %c0_45 = arith.constant 0 : index
    %157 = vector.load %arg9[%c0_43, %c0_44, %c0_45] : memref<8x8x32xf32, #tpu.memory_space<vmem>>, vector<8x8x32xf32>
    tpu.vector_store %arg9[%c0_43, %c0_44, %c0_45], %156 {strides = array<i32>} : memref<8x8x32xf32, #tpu.memory_space<vmem>>, vector<8x8x32xf32>,
    return
  }
  func.func @transform_0(%arg0: i32) -> (i32, i32, i32) {
    %c0_i32 = arith.constant 0 : i32
    %c0_i32_0 = arith.constant 0 : i32
    %c0_i32_1 = arith.constant 0 : i32
    return %arg0, %c0_i32, %c0_i32_0 : i32, i32, i32
  }
  func.func @transform_1(%arg0: i32) -> (i32, i32) {
    %c0_i32 = arith.constant 0 : i32
    %c0_i32_0 = arith.constant 0 : i32
    %c0_i32_1 = arith.constant 0 : i32
    return %c0_i32, %c0_i32_0 : i32, i32
  }
  func.func @transform_2(%arg0: i32) -> (i32, i32) {
    %c0_i32 = arith.constant 0 : i32
    %c0_i32_0 = arith.constant 0 : i32
    %c0_i32_1 = arith.constant 0 : i32
    return %c0_i32, %c0_i32_0 : i32, i32
  }
  func.func @transform_3(%arg0: i32) -> (i32, i32) {
    %c0_i32 = arith.constant 0 : i32
    %c0_i32_0 = arith.constant 0 : i32
    %c0_i32_1 = arith.constant 0 : i32
    return %c0_i32, %c0_i32_0 : i32, i32
  }
  func.func @transform_4(%arg0: i32) -> (i32, i32) {
    %c0_i32 = arith.constant 0 : i32
    %c0_i32_0 = arith.constant 0 : i32
    %c0_i32_1 = arith.constant 0 : i32
    return %c0_i32, %c0_i32_0 : i32, i32
  }
  func.func @transform_5(%arg0: i32) -> (i32, i32, i32) {
    %c0_i32 = arith.constant 0 : i32
    %c0_i32_0 = arith.constant 0 : i32
    %c0_i32_1 = arith.constant 0 : i32
    %c0_i32_2 = arith.constant 0 : i32
    return %c0_i32, %c0_i32_0, %c0_i32_1 : i32, i32, i32
  }
  func.func @transform_6(%arg0: i32) -> (i32, i32) {
    %c0_i32 = arith.constant 0 : i32
    %c0_i32_0 = arith.constant 0 : i32
    %c0_i32_1 = arith.constant 0 : i32
    return %c0_i32, %c0_i32_0 : i32, i32
  }
  func.func @transform_7(%arg0: i32) -> (i32, i32) {
    %c0_i32 = arith.constant 0 : i32
    %c0_i32_0 = arith.constant 0 : i32
    %c0_i32_1 = arith.constant 0 : i32
    return %c0_i32, %c0_i32_0 : i32, i32
  }
  func.func @transform_8(%arg0: i32) -> (i32, i32, i32) {
    %c0_i32 = arith.constant 0 : i32
    %c0_i32_0 = arith.constant 0 : i32
    %c0_i32_1 = arith.constant 0 : i32
    return %arg0, %c0_i32, %c0_i32_0 : i32, i32, i32
  }
}

module attributes {stable_mosaic.version = 11 : i64} {
  func.func @_res_mlp_kernel(%arg0: i32, %arg1: memref<64x32xf32, #tpu.memory_space<vmem>>, %arg2: memref<64x32xf32, #tpu.memory_space<vmem>>, %arg3: memref<1x32xf32, #tpu.memory_space<vmem>>, %arg4: memref<1x32xf32, #tpu.memory_space<vmem>>, %arg5: memref<32x128xbf16, #tpu.memory_space<vmem>>, %arg6: memref<1x128xf32, #tpu.memory_space<vmem>>, %arg7: memref<128x32xbf16, #tpu.memory_space<vmem>>, %arg8: memref<1x32xf32, #tpu.memory_space<vmem>>, %arg9: memref<64x32xf32, #tpu.memory_space<vmem>>) attributes {dimension_semantics = [#tpu.dimension_semantics<parallel>], iteration_bounds = array<i64: 2>, scalar_prefetch = 0 : i64, scratch_operands = 0 : i64, tpu.core_type = #tpu.core_type<tc>, window_params = [{transform_indices = @transform_0, window_bounds = array<i64: 64, 32>}, {transform_indices = @transform_1, window_bounds = array<i64: 64, 32>}, {pipeline_mode = #tpu.pipeline_mode<synchronous>, transform_indices = @transform_2, window_bounds = array<i64: 1, 32>}, {pipeline_mode = #tpu.pipeline_mode<synchronous>, transform_indices = @transform_3, window_bounds = array<i64: 1, 32>}, {pipeline_mode = #tpu.pipeline_mode<synchronous>, transform_indices = @transform_4, window_bounds = array<i64: 32, 128>}, {pipeline_mode = #tpu.pipeline_mode<synchronous>, transform_indices = @transform_5, window_bounds = array<i64: 1, 128>}, {pipeline_mode = #tpu.pipeline_mode<synchronous>, transform_indices = @transform_6, window_bounds = array<i64: 128, 32>}, {pipeline_mode = #tpu.pipeline_mode<synchronous>, transform_indices = @transform_7, window_bounds = array<i64: 1, 32>}, {transform_indices = @transform_8, window_bounds = array<i64: 64, 32>}]} {
    %c0 = arith.constant 0 : index
    %c0_0 = arith.constant 0 : index
    %0 = vector.load %arg1[%c0, %c0_0] : memref<64x32xf32, #tpu.memory_space<vmem>>, vector<64x32xf32>
    %c0_1 = arith.constant 0 : index
    %c0_2 = arith.constant 0 : index
    %1 = vector.load %arg2[%c0_1, %c0_2] : memref<64x32xf32, #tpu.memory_space<vmem>>, vector<64x32xf32>
    %2 = arith.addf %0, %1 : vector<64x32xf32>
    %c0_3 = arith.constant 0 : index
    %c0_4 = arith.constant 0 : index
    %3 = vector.load %arg3[%c0_3, %c0_4] : memref<1x32xf32, #tpu.memory_space<vmem>>, vector<1x32xf32>
    %c0_5 = arith.constant 0 : index
    %c0_6 = arith.constant 0 : index
    %4 = vector.load %arg4[%c0_5, %c0_6] : memref<1x32xf32, #tpu.memory_space<vmem>>, vector<1x32xf32>
    %cst = arith.constant dense<0.000000e+00> : vector<64xf32>
    %5 = vector.multi_reduction <add>, %2, %cst [1] : vector<64x32xf32> to vector<64xf32>
    %6 = vector.shape_cast %5 : vector<64xf32> to vector<64x1xf32>
    %cst_7 = arith.constant 3.200000e+01 : f32
    %7 = vector.broadcast %cst_7 : f32 to vector<64x1xf32>
    %8 = arith.divf %6, %7 : vector<64x1xf32>
    %9 = vector.broadcast %8 : vector<64x1xf32> to vector<64x32xf32>
    %10 = arith.subf %2, %9 : vector<64x32xf32>
    %11 = arith.mulf %10, %10 : vector<64x32xf32>
    %cst_8 = arith.constant dense<0.000000e+00> : vector<64xf32>
    %12 = vector.multi_reduction <add>, %11, %cst_8 [1] : vector<64x32xf32> to vector<64xf32>
    %13 = vector.shape_cast %12 : vector<64xf32> to vector<64x1xf32>
    %cst_9 = arith.constant 3.200000e+01 : f32
    %14 = vector.broadcast %cst_9 : f32 to vector<64x1xf32>
    %15 = arith.divf %13, %14 : vector<64x1xf32>
    %cst_10 = arith.constant 9.99999974E-6 : f32
    %16 = vector.broadcast %cst_10 : f32 to vector<64x1xf32>
    %17 = arith.addf %15, %16 : vector<64x1xf32>
    %18 = math.rsqrt %17 : vector<64x1xf32>
    %19 = vector.broadcast %18 : vector<64x1xf32> to vector<64x32xf32>
    %20 = arith.mulf %10, %19 : vector<64x32xf32>
    %21 = vector.broadcast %3 : vector<1x32xf32> to vector<64x32xf32>
    %22 = arith.mulf %20, %21 : vector<64x32xf32>
    %23 = vector.broadcast %4 : vector<1x32xf32> to vector<64x32xf32>
    %24 = arith.addf %22, %23 : vector<64x32xf32>
    %25 = arith.truncf %24 : vector<64x32xf32> to vector<64x32xbf16>
    %c0_11 = arith.constant 0 : index
    %c0_12 = arith.constant 0 : index
    %26 = vector.load %arg5[%c0_11, %c0_12] : memref<32x128xbf16, #tpu.memory_space<vmem>>, vector<32x128xbf16>
    %cst_13 = arith.constant dense<0.000000e+00> : vector<64x128xf32>
    %27 = tpu.matmul %25, %26, %cst_13 {dimension_numbers = #tpu.dot_dimension_numbers<[1], [0], [0], [1], [0, 0, 1, 1], [], []>} : vector<64x32xbf16>, vector<32x128xbf16>, vector<64x128xf32> -> vector<64x128xf32>
    %c0_14 = arith.constant 0 : index
    %c0_15 = arith.constant 0 : index
    %28 = vector.load %arg6[%c0_14, %c0_15] : memref<1x128xf32, #tpu.memory_space<vmem>>, vector<1x128xf32>
    %29 = vector.broadcast %28 : vector<1x128xf32> to vector<64x128xf32>
    %30 = arith.addf %27, %29 : vector<64x128xf32>
    %cst_16 = arith.constant 5.000000e-01 : f32
    %31 = vector.broadcast %cst_16 : f32 to vector<64x128xf32>
    %32 = arith.mulf %31, %30 : vector<64x128xf32>
    %cst_17 = arith.constant 0.707106769 : f32
    %33 = vector.broadcast %cst_17 : f32 to vector<64x128xf32>
    %34 = arith.mulf %30, %33 : vector<64x128xf32>
    %35 = math.absf %34 : vector<64x128xf32>
    %cst_18 = arith.constant 0.327591091 : f32
    %36 = vector.broadcast %cst_18 : f32 to vector<64x128xf32>
    %37 = arith.mulf %36, %35 : vector<64x128xf32>
    %cst_19 = arith.constant 1.000000e+00 : f32
    %38 = vector.broadcast %cst_19 : f32 to vector<64x128xf32>
    %39 = arith.addf %38, %37 : vector<64x128xf32>
    %cst_20 = arith.constant 1.000000e+00 : f32
    %40 = vector.broadcast %cst_20 : f32 to vector<64x128xf32>
    %41 = arith.divf %40, %39 : vector<64x128xf32>
    %cst_21 = arith.constant 1.06140542 : f32
    %42 = vector.broadcast %cst_21 : f32 to vector<64x128xf32>
    %43 = arith.mulf %42, %41 : vector<64x128xf32>
    %cst_22 = arith.constant -1.45315206 : f32
    %44 = vector.broadcast %cst_22 : f32 to vector<64x128xf32>
    %45 = arith.addf %43, %44 : vector<64x128xf32>
    %46 = arith.mulf %45, %41 : vector<64x128xf32>
    %cst_23 = arith.constant 1.42141378 : f32
    %47 = vector.broadcast %cst_23 : f32 to vector<64x128xf32>
    %48 = arith.addf %46, %47 : vector<64x128xf32>
    %49 = arith.mulf %48, %41 : vector<64x128xf32>
    %cst_24 = arith.constant -0.284496725 : f32
    %50 = vector.broadcast %cst_24 : f32 to vector<64x128xf32>
    %51 = arith.addf %49, %50 : vector<64x128xf32>
    %52 = arith.mulf %51, %41 : vector<64x128xf32>
    %cst_25 = arith.constant 0.254829586 : f32
    %53 = vector.broadcast %cst_25 : f32 to vector<64x128xf32>
    %54 = arith.addf %52, %53 : vector<64x128xf32>
    %55 = arith.mulf %54, %41 : vector<64x128xf32>
    %cst_26 = arith.constant 0.000000e+00 : f32
    %56 = vector.broadcast %cst_26 : f32 to vector<64x128xf32>
    %57 = arith.subf %56, %35 : vector<64x128xf32>
    %58 = arith.mulf %57, %35 : vector<64x128xf32>
    %59 = math.exp %58 : vector<64x128xf32>
    %60 = arith.mulf %55, %59 : vector<64x128xf32>
    %cst_27 = arith.constant 1.000000e+00 : f32
    %61 = vector.broadcast %cst_27 : f32 to vector<64x128xf32>
    %62 = arith.subf %61, %60 : vector<64x128xf32>
    %cst_28 = arith.constant 0.000000e+00 : f32
    %63 = vector.broadcast %cst_28 : f32 to vector<64x128xf32>
    %64 = arith.cmpf oge, %34, %63 : vector<64x128xf32>
    %cst_29 = arith.constant 0.000000e+00 : f32
    %65 = vector.broadcast %cst_29 : f32 to vector<64x128xf32>
    %66 = arith.subf %65, %62 : vector<64x128xf32>
    %67 = arith.select %64, %62, %66 : vector<64x128xi1>, vector<64x128xf32>
    %cst_30 = arith.constant 1.000000e+00 : f32
    %68 = vector.broadcast %cst_30 : f32 to vector<64x128xf32>
    %69 = arith.addf %68, %67 : vector<64x128xf32>
    %70 = arith.mulf %32, %69 : vector<64x128xf32>
    %71 = arith.truncf %70 : vector<64x128xf32> to vector<64x128xbf16>
    %c0_31 = arith.constant 0 : index
    %c0_32 = arith.constant 0 : index
    %72 = vector.load %arg7[%c0_31, %c0_32] : memref<128x32xbf16, #tpu.memory_space<vmem>>, vector<128x32xbf16>
    %cst_33 = arith.constant dense<0.000000e+00> : vector<64x32xf32>
    %73 = tpu.matmul %71, %72, %cst_33 {dimension_numbers = #tpu.dot_dimension_numbers<[1], [0], [0], [1], [0, 0, 1, 1], [], []>} : vector<64x128xbf16>, vector<128x32xbf16>, vector<64x32xf32> -> vector<64x32xf32>
    %c0_34 = arith.constant 0 : index
    %c0_35 = arith.constant 0 : index
    %74 = vector.load %arg8[%c0_34, %c0_35] : memref<1x32xf32, #tpu.memory_space<vmem>>, vector<1x32xf32>
    %75 = vector.broadcast %74 : vector<1x32xf32> to vector<64x32xf32>
    %76 = arith.addf %73, %75 : vector<64x32xf32>
    %77 = arith.addf %2, %76 : vector<64x32xf32>
    %c0_36 = arith.constant 0 : index
    %c0_37 = arith.constant 0 : index
    %78 = vector.load %arg9[%c0_36, %c0_37] : memref<64x32xf32, #tpu.memory_space<vmem>>, vector<64x32xf32>
    tpu.vector_store %arg9[%c0_36, %c0_37], %77 {strides = array<i32>} : memref<64x32xf32, #tpu.memory_space<vmem>>, vector<64x32xf32>,
    return
  }
  func.func @transform_0(%arg0: i32) -> (i32, i32) {
    %c0_i32 = arith.constant 0 : i32
    %c0_i32_0 = arith.constant 0 : i32
    return %arg0, %c0_i32 : i32, i32
  }
  func.func @transform_1(%arg0: i32) -> (i32, i32) {
    %c0_i32 = arith.constant 0 : i32
    %c0_i32_0 = arith.constant 0 : i32
    return %arg0, %c0_i32 : i32, i32
  }
  func.func @transform_2(%arg0: i32) -> (i32, i32) {
    %c0_i32 = arith.constant 0 : i32
    %c0_i32_0 = arith.constant 0 : i32
    %c0_i32_1 = arith.constant 0 : i32
    return %c0_i32, %c0_i32_0 : i32, i32
  }
  func.func @transform_3(%arg0: i32) -> (i32, i32) {
    %c0_i32 = arith.constant 0 : i32
    %c0_i32_0 = arith.constant 0 : i32
    %c0_i32_1 = arith.constant 0 : i32
    return %c0_i32, %c0_i32_0 : i32, i32
  }
  func.func @transform_4(%arg0: i32) -> (i32, i32) {
    %c0_i32 = arith.constant 0 : i32
    %c0_i32_0 = arith.constant 0 : i32
    %c0_i32_1 = arith.constant 0 : i32
    return %c0_i32, %c0_i32_0 : i32, i32
  }
  func.func @transform_5(%arg0: i32) -> (i32, i32) {
    %c0_i32 = arith.constant 0 : i32
    %c0_i32_0 = arith.constant 0 : i32
    %c0_i32_1 = arith.constant 0 : i32
    return %c0_i32, %c0_i32_0 : i32, i32
  }
  func.func @transform_6(%arg0: i32) -> (i32, i32) {
    %c0_i32 = arith.constant 0 : i32
    %c0_i32_0 = arith.constant 0 : i32
    %c0_i32_1 = arith.constant 0 : i32
    return %c0_i32, %c0_i32_0 : i32, i32
  }
  func.func @transform_7(%arg0: i32) -> (i32, i32) {
    %c0_i32 = arith.constant 0 : i32
    %c0_i32_0 = arith.constant 0 : i32
    %c0_i32_1 = arith.constant 0 : i32
    return %c0_i32, %c0_i32_0 : i32, i32
  }
  func.func @transform_8(%arg0: i32) -> (i32, i32) {
    %c0_i32 = arith.constant 0 : i32
    %c0_i32_0 = arith.constant 0 : i32
    return %arg0, %c0_i32 : i32, i32
  }
}

module attributes {stable_mosaic.version = 11 : i64} {
  func.func @_win_attn_kernel_masked(%arg0: i32, %arg1: memref<8x8x32xf32, #tpu.memory_space<vmem>>, %arg2: memref<1x32xf32, #tpu.memory_space<vmem>>, %arg3: memref<1x32xf32, #tpu.memory_space<vmem>>, %arg4: memref<32x96xbf16, #tpu.memory_space<vmem>>, %arg5: memref<1x96xf32, #tpu.memory_space<vmem>>, %arg6: memref<4x8x8xbf16, #tpu.memory_space<vmem>>, %arg7: memref<8x8x8xbf16, #tpu.memory_space<vmem>>, %arg8: memref<32x32xbf16, #tpu.memory_space<vmem>>, %arg9: memref<1x32xf32, #tpu.memory_space<vmem>>, %arg10: memref<8x8x32xf32, #tpu.memory_space<vmem>>) attributes {dimension_semantics = [#tpu.dimension_semantics<parallel>], iteration_bounds = array<i64: 2>, scalar_prefetch = 0 : i64, scratch_operands = 0 : i64, tpu.core_type = #tpu.core_type<tc>, window_params = [{transform_indices = @transform_0, window_bounds = array<i64: 8, 8, 32>}, {pipeline_mode = #tpu.pipeline_mode<synchronous>, transform_indices = @transform_1, window_bounds = array<i64: 1, 32>}, {pipeline_mode = #tpu.pipeline_mode<synchronous>, transform_indices = @transform_2, window_bounds = array<i64: 1, 32>}, {pipeline_mode = #tpu.pipeline_mode<synchronous>, transform_indices = @transform_3, window_bounds = array<i64: 32, 96>}, {pipeline_mode = #tpu.pipeline_mode<synchronous>, transform_indices = @transform_4, window_bounds = array<i64: 1, 96>}, {pipeline_mode = #tpu.pipeline_mode<synchronous>, transform_indices = @transform_5, window_bounds = array<i64: 4, 8, 8>}, {pipeline_mode = #tpu.pipeline_mode<synchronous>, transform_indices = @transform_6, window_bounds = array<i64: 8, 8, 8>}, {pipeline_mode = #tpu.pipeline_mode<synchronous>, transform_indices = @transform_7, window_bounds = array<i64: 32, 32>}, {pipeline_mode = #tpu.pipeline_mode<synchronous>, transform_indices = @transform_8, window_bounds = array<i64: 1, 32>}, {transform_indices = @transform_9, window_bounds = array<i64: 8, 8, 32>}]} {
    %c0 = arith.constant 0 : index
    %c0_0 = arith.constant 0 : index
    %c0_1 = arith.constant 0 : index
    %0 = vector.load %arg7[%c0, %c0_0, %c0_1] : memref<8x8x8xbf16, #tpu.memory_space<vmem>>, vector<8x8x8xbf16>
    %1 = arith.extf %0 : vector<8x8x8xbf16> to vector<8x8x8xf32>
    %c0_2 = arith.constant 0 : index
    %c0_3 = arith.constant 0 : index
    %c0_4 = arith.constant 0 : index
    %2 = vector.load %arg1[%c0_2, %c0_3, %c0_4] : memref<8x8x32xf32, #tpu.memory_space<vmem>>, vector<8x8x32xf32>
    %3 = vector.shape_cast %2 : vector<8x8x32xf32> to vector<64x32xf32>
    %c0_5 = arith.constant 0 : index
    %c0_6 = arith.constant 0 : index
    %4 = vector.load %arg2[%c0_5, %c0_6] : memref<1x32xf32, #tpu.memory_space<vmem>>, vector<1x32xf32>
    %c0_7 = arith.constant 0 : index
    %c0_8 = arith.constant 0 : index
    %5 = vector.load %arg3[%c0_7, %c0_8] : memref<1x32xf32, #tpu.memory_space<vmem>>, vector<1x32xf32>
    %cst = arith.constant dense<0.000000e+00> : vector<64xf32>
    %6 = vector.multi_reduction <add>, %3, %cst [1] : vector<64x32xf32> to vector<64xf32>
    %7 = vector.shape_cast %6 : vector<64xf32> to vector<64x1xf32>
    %cst_9 = arith.constant 3.200000e+01 : f32
    %8 = vector.broadcast %cst_9 : f32 to vector<64x1xf32>
    %9 = arith.divf %7, %8 : vector<64x1xf32>
    %10 = vector.broadcast %9 : vector<64x1xf32> to vector<64x32xf32>
    %11 = arith.subf %3, %10 : vector<64x32xf32>
    %12 = arith.mulf %11, %11 : vector<64x32xf32>
    %cst_10 = arith.constant dense<0.000000e+00> : vector<64xf32>
    %13 = vector.multi_reduction <add>, %12, %cst_10 [1] : vector<64x32xf32> to vector<64xf32>
    %14 = vector.shape_cast %13 : vector<64xf32> to vector<64x1xf32>
    %cst_11 = arith.constant 3.200000e+01 : f32
    %15 = vector.broadcast %cst_11 : f32 to vector<64x1xf32>
    %16 = arith.divf %14, %15 : vector<64x1xf32>
    %cst_12 = arith.constant 9.99999974E-6 : f32
    %17 = vector.broadcast %cst_12 : f32 to vector<64x1xf32>
    %18 = arith.addf %16, %17 : vector<64x1xf32>
    %19 = math.rsqrt %18 : vector<64x1xf32>
    %20 = vector.broadcast %19 : vector<64x1xf32> to vector<64x32xf32>
    %21 = arith.mulf %11, %20 : vector<64x32xf32>
    %22 = vector.broadcast %4 : vector<1x32xf32> to vector<64x32xf32>
    %23 = arith.mulf %21, %22 : vector<64x32xf32>
    %24 = vector.broadcast %5 : vector<1x32xf32> to vector<64x32xf32>
    %25 = arith.addf %23, %24 : vector<64x32xf32>
    %26 = arith.truncf %25 : vector<64x32xf32> to vector<64x32xbf16>
    %c0_13 = arith.constant 0 : index
    %c0_14 = arith.constant 0 : index
    %27 = vector.load %arg4[%c0_13, %c0_14] : memref<32x96xbf16, #tpu.memory_space<vmem>>, vector<32x96xbf16>
    %cst_15 = arith.constant dense<0.000000e+00> : vector<64x96xf32>
    %28 = tpu.matmul %26, %27, %cst_15 {dimension_numbers = #tpu.dot_dimension_numbers<[1], [0], [0], [1], [0, 0, 1, 1], [], []>} : vector<64x32xbf16>, vector<32x96xbf16>, vector<64x96xf32> -> vector<64x96xf32>
    %c0_16 = arith.constant 0 : index
    %c0_17 = arith.constant 0 : index
    %29 = vector.load %arg5[%c0_16, %c0_17] : memref<1x96xf32, #tpu.memory_space<vmem>>, vector<1x96xf32>
    %30 = vector.broadcast %29 : vector<1x96xf32> to vector<64x96xf32>
    %31 = arith.addf %28, %30 : vector<64x96xf32>
    %c0_18 = arith.constant 0 : index
    %c0_19 = arith.constant 0 : index
    %c0_20 = arith.constant 0 : index
    %32 = vector.load %arg6[%c0_18, %c0_19, %c0_20] : memref<4x8x8xbf16, #tpu.memory_space<vmem>>, vector<4x8x8xbf16>
    %33 = arith.extf %32 : vector<4x8x8xbf16> to vector<4x8x8xf32>
    %34 = vector.extract_strided_slice %31 {offsets = [0, 0], sizes = [64, 8], strides = [1, 1]} : vector<64x96xf32> to vector<64x8xf32>
    %cst_21 = arith.constant 0.353553385 : f32
    %35 = vector.broadcast %cst_21 : f32 to vector<64x8xf32>
    %36 = arith.mulf %34, %35 : vector<64x8xf32>
    %37 = vector.shape_cast %36 : vector<64x8xf32> to vector<8x8x8xf32>
    %38 = vector.extract_strided_slice %31 {offsets = [0, 32], sizes = [64, 8], strides = [1, 1]} : vector<64x96xf32> to vector<64x8xf32>
    %39 = vector.shape_cast %38 : vector<64x8xf32> to vector<8x8x8xf32>
    %40 = vector.extract_strided_slice %31 {offsets = [0, 64], sizes = [64, 8], strides = [1, 1]} : vector<64x96xf32> to vector<64x8xf32>
    %41 = vector.shape_cast %40 : vector<64x8xf32> to vector<8x8x8xf32>
    %42 = arith.truncf %37 : vector<8x8x8xf32> to vector<8x8x8xbf16>
    %43 = arith.truncf %39 : vector<8x8x8xf32> to vector<8x8x8xbf16>
    "tpu.trace_start"() <{level = 10 : i32, message = "bqd,bkd->bqk"}> : () -> ()
    %cst_22 = arith.constant dense<0.000000e+00> : vector<8x8x8xf32>
    %44 = tpu.matmul %42, %43, %cst_22 {dimension_numbers = #tpu.dot_dimension_numbers<[2], [2], [1], [1], [0, 0, 0, 1, 1, 1], [0], [0]>} : vector<8x8x8xbf16>, vector<8x8x8xbf16>, vector<8x8x8xf32> -> vector<8x8x8xf32>
    "tpu.trace_stop"() : () -> ()
    %45 = vector.extract_strided_slice %33 {offsets = [0, 0, 0], sizes = [1, 8, 8], strides = [1, 1, 1]} : vector<4x8x8xf32> to vector<1x8x8xf32>
    %46 = vector.shape_cast %45 : vector<1x8x8xf32> to vector<8x8xf32>
    %47 = vector.shape_cast %46 : vector<8x8xf32> to vector<1x8x8xf32>
    %48 = vector.broadcast %47 : vector<1x8x8xf32> to vector<8x8x8xf32>
    %49 = arith.addf %44, %48 : vector<8x8x8xf32>
    %50 = arith.addf %49, %1 : vector<8x8x8xf32>
    %cst_23 = arith.constant dense<0xFF800000> : vector<8x8xf32>
    %51 = vector.multi_reduction <maximumf>, %50, %cst_23 [2] : vector<8x8x8xf32> to vector<8x8xf32>
    %52 = vector.shape_cast %51 : vector<8x8xf32> to vector<8x8x1xf32>
    %53 = vector.broadcast %52 : vector<8x8x1xf32> to vector<8x8x8xf32>
    %54 = arith.subf %50, %53 : vector<8x8x8xf32>
    %55 = math.exp %54 : vector<8x8x8xf32>
    %cst_24 = arith.constant dense<0.000000e+00> : vector<8x8xf32>
    %56 = vector.multi_reduction <add>, %55, %cst_24 [2] : vector<8x8x8xf32> to vector<8x8xf32>
    %57 = vector.shape_cast %56 : vector<8x8xf32> to vector<8x8x1xf32>
    %58 = arith.truncf %55 : vector<8x8x8xf32> to vector<8x8x8xbf16>
    %59 = arith.truncf %41 : vector<8x8x8xf32> to vector<8x8x8xbf16>
    "tpu.trace_start"() <{level = 10 : i32, message = "bqk,bkd->bqd"}> : () -> ()
    %cst_25 = arith.constant dense<0.000000e+00> : vector<8x8x8xf32>
    %60 = tpu.matmul %58, %59, %cst_25 {dimension_numbers = #tpu.dot_dimension_numbers<[2], [1], [1], [2], [0, 0, 0, 1, 1, 2], [0], [0]>} : vector<8x8x8xbf16>, vector<8x8x8xbf16>, vector<8x8x8xf32> -> vector<8x8x8xf32>
    "tpu.trace_stop"() : () -> ()
    %61 = tpu.reciprocal %57 {approx = true} : vector<8x8x1xf32> -> vector<8x8x1xf32>
    %62 = vector.broadcast %61 : vector<8x8x1xf32> to vector<8x8x8xf32>
    %63 = arith.mulf %60, %62 : vector<8x8x8xf32>
    %64 = vector.extract_strided_slice %31 {offsets = [0, 8], sizes = [64, 8], strides = [1, 1]} : vector<64x96xf32> to vector<64x8xf32>
    %cst_26 = arith.constant 0.353553385 : f32
    %65 = vector.broadcast %cst_26 : f32 to vector<64x8xf32>
    %66 = arith.mulf %64, %65 : vector<64x8xf32>
    %67 = vector.shape_cast %66 : vector<64x8xf32> to vector<8x8x8xf32>
    %68 = vector.extract_strided_slice %31 {offsets = [0, 40], sizes = [64, 8], strides = [1, 1]} : vector<64x96xf32> to vector<64x8xf32>
    %69 = vector.shape_cast %68 : vector<64x8xf32> to vector<8x8x8xf32>
    %70 = vector.extract_strided_slice %31 {offsets = [0, 72], sizes = [64, 8], strides = [1, 1]} : vector<64x96xf32> to vector<64x8xf32>
    %71 = vector.shape_cast %70 : vector<64x8xf32> to vector<8x8x8xf32>
    %72 = arith.truncf %67 : vector<8x8x8xf32> to vector<8x8x8xbf16>
    %73 = arith.truncf %69 : vector<8x8x8xf32> to vector<8x8x8xbf16>
    "tpu.trace_start"() <{level = 10 : i32, message = "bqd,bkd->bqk"}> : () -> ()
    %cst_27 = arith.constant dense<0.000000e+00> : vector<8x8x8xf32>
    %74 = tpu.matmul %72, %73, %cst_27 {dimension_numbers = #tpu.dot_dimension_numbers<[2], [2], [1], [1], [0, 0, 0, 1, 1, 1], [0], [0]>} : vector<8x8x8xbf16>, vector<8x8x8xbf16>, vector<8x8x8xf32> -> vector<8x8x8xf32>
    "tpu.trace_stop"() : () -> ()
    %75 = vector.extract_strided_slice %33 {offsets = [1, 0, 0], sizes = [1, 8, 8], strides = [1, 1, 1]} : vector<4x8x8xf32> to vector<1x8x8xf32>
    %76 = vector.shape_cast %75 : vector<1x8x8xf32> to vector<8x8xf32>
    %77 = vector.shape_cast %76 : vector<8x8xf32> to vector<1x8x8xf32>
    %78 = vector.broadcast %77 : vector<1x8x8xf32> to vector<8x8x8xf32>
    %79 = arith.addf %74, %78 : vector<8x8x8xf32>
    %80 = arith.addf %79, %1 : vector<8x8x8xf32>
    %cst_28 = arith.constant dense<0xFF800000> : vector<8x8xf32>
    %81 = vector.multi_reduction <maximumf>, %80, %cst_28 [2] : vector<8x8x8xf32> to vector<8x8xf32>
    %82 = vector.shape_cast %81 : vector<8x8xf32> to vector<8x8x1xf32>
    %83 = vector.broadcast %82 : vector<8x8x1xf32> to vector<8x8x8xf32>
    %84 = arith.subf %80, %83 : vector<8x8x8xf32>
    %85 = math.exp %84 : vector<8x8x8xf32>
    %cst_29 = arith.constant dense<0.000000e+00> : vector<8x8xf32>
    %86 = vector.multi_reduction <add>, %85, %cst_29 [2] : vector<8x8x8xf32> to vector<8x8xf32>
    %87 = vector.shape_cast %86 : vector<8x8xf32> to vector<8x8x1xf32>
    %88 = arith.truncf %85 : vector<8x8x8xf32> to vector<8x8x8xbf16>
    %89 = arith.truncf %71 : vector<8x8x8xf32> to vector<8x8x8xbf16>
    "tpu.trace_start"() <{level = 10 : i32, message = "bqk,bkd->bqd"}> : () -> ()
    %cst_30 = arith.constant dense<0.000000e+00> : vector<8x8x8xf32>
    %90 = tpu.matmul %88, %89, %cst_30 {dimension_numbers = #tpu.dot_dimension_numbers<[2], [1], [1], [2], [0, 0, 0, 1, 1, 2], [0], [0]>} : vector<8x8x8xbf16>, vector<8x8x8xbf16>, vector<8x8x8xf32> -> vector<8x8x8xf32>
    "tpu.trace_stop"() : () -> ()
    %91 = tpu.reciprocal %87 {approx = true} : vector<8x8x1xf32> -> vector<8x8x1xf32>
    %92 = vector.broadcast %91 : vector<8x8x1xf32> to vector<8x8x8xf32>
    %93 = arith.mulf %90, %92 : vector<8x8x8xf32>
    %94 = vector.extract_strided_slice %31 {offsets = [0, 16], sizes = [64, 8], strides = [1, 1]} : vector<64x96xf32> to vector<64x8xf32>
    %cst_31 = arith.constant 0.353553385 : f32
    %95 = vector.broadcast %cst_31 : f32 to vector<64x8xf32>
    %96 = arith.mulf %94, %95 : vector<64x8xf32>
    %97 = vector.shape_cast %96 : vector<64x8xf32> to vector<8x8x8xf32>
    %98 = vector.extract_strided_slice %31 {offsets = [0, 48], sizes = [64, 8], strides = [1, 1]} : vector<64x96xf32> to vector<64x8xf32>
    %99 = vector.shape_cast %98 : vector<64x8xf32> to vector<8x8x8xf32>
    %100 = vector.extract_strided_slice %31 {offsets = [0, 80], sizes = [64, 8], strides = [1, 1]} : vector<64x96xf32> to vector<64x8xf32>
    %101 = vector.shape_cast %100 : vector<64x8xf32> to vector<8x8x8xf32>
    %102 = arith.truncf %97 : vector<8x8x8xf32> to vector<8x8x8xbf16>
    %103 = arith.truncf %99 : vector<8x8x8xf32> to vector<8x8x8xbf16>
    "tpu.trace_start"() <{level = 10 : i32, message = "bqd,bkd->bqk"}> : () -> ()
    %cst_32 = arith.constant dense<0.000000e+00> : vector<8x8x8xf32>
    %104 = tpu.matmul %102, %103, %cst_32 {dimension_numbers = #tpu.dot_dimension_numbers<[2], [2], [1], [1], [0, 0, 0, 1, 1, 1], [0], [0]>} : vector<8x8x8xbf16>, vector<8x8x8xbf16>, vector<8x8x8xf32> -> vector<8x8x8xf32>
    "tpu.trace_stop"() : () -> ()
    %105 = vector.extract_strided_slice %33 {offsets = [2, 0, 0], sizes = [1, 8, 8], strides = [1, 1, 1]} : vector<4x8x8xf32> to vector<1x8x8xf32>
    %106 = vector.shape_cast %105 : vector<1x8x8xf32> to vector<8x8xf32>
    %107 = vector.shape_cast %106 : vector<8x8xf32> to vector<1x8x8xf32>
    %108 = vector.broadcast %107 : vector<1x8x8xf32> to vector<8x8x8xf32>
    %109 = arith.addf %104, %108 : vector<8x8x8xf32>
    %110 = arith.addf %109, %1 : vector<8x8x8xf32>
    %cst_33 = arith.constant dense<0xFF800000> : vector<8x8xf32>
    %111 = vector.multi_reduction <maximumf>, %110, %cst_33 [2] : vector<8x8x8xf32> to vector<8x8xf32>
    %112 = vector.shape_cast %111 : vector<8x8xf32> to vector<8x8x1xf32>
    %113 = vector.broadcast %112 : vector<8x8x1xf32> to vector<8x8x8xf32>
    %114 = arith.subf %110, %113 : vector<8x8x8xf32>
    %115 = math.exp %114 : vector<8x8x8xf32>
    %cst_34 = arith.constant dense<0.000000e+00> : vector<8x8xf32>
    %116 = vector.multi_reduction <add>, %115, %cst_34 [2] : vector<8x8x8xf32> to vector<8x8xf32>
    %117 = vector.shape_cast %116 : vector<8x8xf32> to vector<8x8x1xf32>
    %118 = arith.truncf %115 : vector<8x8x8xf32> to vector<8x8x8xbf16>
    %119 = arith.truncf %101 : vector<8x8x8xf32> to vector<8x8x8xbf16>
    "tpu.trace_start"() <{level = 10 : i32, message = "bqk,bkd->bqd"}> : () -> ()
    %cst_35 = arith.constant dense<0.000000e+00> : vector<8x8x8xf32>
    %120 = tpu.matmul %118, %119, %cst_35 {dimension_numbers = #tpu.dot_dimension_numbers<[2], [1], [1], [2], [0, 0, 0, 1, 1, 2], [0], [0]>} : vector<8x8x8xbf16>, vector<8x8x8xbf16>, vector<8x8x8xf32> -> vector<8x8x8xf32>
    "tpu.trace_stop"() : () -> ()
    %121 = tpu.reciprocal %117 {approx = true} : vector<8x8x1xf32> -> vector<8x8x1xf32>
    %122 = vector.broadcast %121 : vector<8x8x1xf32> to vector<8x8x8xf32>
    %123 = arith.mulf %120, %122 : vector<8x8x8xf32>
    %124 = vector.extract_strided_slice %31 {offsets = [0, 24], sizes = [64, 8], strides = [1, 1]} : vector<64x96xf32> to vector<64x8xf32>
    %cst_36 = arith.constant 0.353553385 : f32
    %125 = vector.broadcast %cst_36 : f32 to vector<64x8xf32>
    %126 = arith.mulf %124, %125 : vector<64x8xf32>
    %127 = vector.shape_cast %126 : vector<64x8xf32> to vector<8x8x8xf32>
    %128 = vector.extract_strided_slice %31 {offsets = [0, 56], sizes = [64, 8], strides = [1, 1]} : vector<64x96xf32> to vector<64x8xf32>
    %129 = vector.shape_cast %128 : vector<64x8xf32> to vector<8x8x8xf32>
    %130 = vector.extract_strided_slice %31 {offsets = [0, 88], sizes = [64, 8], strides = [1, 1]} : vector<64x96xf32> to vector<64x8xf32>
    %131 = vector.shape_cast %130 : vector<64x8xf32> to vector<8x8x8xf32>
    %132 = arith.truncf %127 : vector<8x8x8xf32> to vector<8x8x8xbf16>
    %133 = arith.truncf %129 : vector<8x8x8xf32> to vector<8x8x8xbf16>
    "tpu.trace_start"() <{level = 10 : i32, message = "bqd,bkd->bqk"}> : () -> ()
    %cst_37 = arith.constant dense<0.000000e+00> : vector<8x8x8xf32>
    %134 = tpu.matmul %132, %133, %cst_37 {dimension_numbers = #tpu.dot_dimension_numbers<[2], [2], [1], [1], [0, 0, 0, 1, 1, 1], [0], [0]>} : vector<8x8x8xbf16>, vector<8x8x8xbf16>, vector<8x8x8xf32> -> vector<8x8x8xf32>
    "tpu.trace_stop"() : () -> ()
    %135 = vector.extract_strided_slice %33 {offsets = [3, 0, 0], sizes = [1, 8, 8], strides = [1, 1, 1]} : vector<4x8x8xf32> to vector<1x8x8xf32>
    %136 = vector.shape_cast %135 : vector<1x8x8xf32> to vector<8x8xf32>
    %137 = vector.shape_cast %136 : vector<8x8xf32> to vector<1x8x8xf32>
    %138 = vector.broadcast %137 : vector<1x8x8xf32> to vector<8x8x8xf32>
    %139 = arith.addf %134, %138 : vector<8x8x8xf32>
    %140 = arith.addf %139, %1 : vector<8x8x8xf32>
    %cst_38 = arith.constant dense<0xFF800000> : vector<8x8xf32>
    %141 = vector.multi_reduction <maximumf>, %140, %cst_38 [2] : vector<8x8x8xf32> to vector<8x8xf32>
    %142 = vector.shape_cast %141 : vector<8x8xf32> to vector<8x8x1xf32>
    %143 = vector.broadcast %142 : vector<8x8x1xf32> to vector<8x8x8xf32>
    %144 = arith.subf %140, %143 : vector<8x8x8xf32>
    %145 = math.exp %144 : vector<8x8x8xf32>
    %cst_39 = arith.constant dense<0.000000e+00> : vector<8x8xf32>
    %146 = vector.multi_reduction <add>, %145, %cst_39 [2] : vector<8x8x8xf32> to vector<8x8xf32>
    %147 = vector.shape_cast %146 : vector<8x8xf32> to vector<8x8x1xf32>
    %148 = arith.truncf %145 : vector<8x8x8xf32> to vector<8x8x8xbf16>
    %149 = arith.truncf %131 : vector<8x8x8xf32> to vector<8x8x8xbf16>
    "tpu.trace_start"() <{level = 10 : i32, message = "bqk,bkd->bqd"}> : () -> ()
    %cst_40 = arith.constant dense<0.000000e+00> : vector<8x8x8xf32>
    %150 = tpu.matmul %148, %149, %cst_40 {dimension_numbers = #tpu.dot_dimension_numbers<[2], [1], [1], [2], [0, 0, 0, 1, 1, 2], [0], [0]>} : vector<8x8x8xbf16>, vector<8x8x8xbf16>, vector<8x8x8xf32> -> vector<8x8x8xf32>
    "tpu.trace_stop"() : () -> ()
    %151 = tpu.reciprocal %147 {approx = true} : vector<8x8x1xf32> -> vector<8x8x1xf32>
    %152 = vector.broadcast %151 : vector<8x8x1xf32> to vector<8x8x8xf32>
    %153 = arith.mulf %150, %152 : vector<8x8x8xf32>
    %154 = tpu.concatenate %63, %93, %123, %153 in 2 : vector<8x8x8xf32>, vector<8x8x8xf32>, vector<8x8x8xf32>, vector<8x8x8xf32> -> vector<8x8x32xf32>
    %155 = vector.shape_cast %154 : vector<8x8x32xf32> to vector<64x32xf32>
    %156 = arith.truncf %155 : vector<64x32xf32> to vector<64x32xbf16>
    %c0_41 = arith.constant 0 : index
    %c0_42 = arith.constant 0 : index
    %157 = vector.load %arg8[%c0_41, %c0_42] : memref<32x32xbf16, #tpu.memory_space<vmem>>, vector<32x32xbf16>
    %cst_43 = arith.constant dense<0.000000e+00> : vector<64x32xf32>
    %158 = tpu.matmul %156, %157, %cst_43 {dimension_numbers = #tpu.dot_dimension_numbers<[1], [0], [0], [1], [0, 0, 1, 1], [], []>} : vector<64x32xbf16>, vector<32x32xbf16>, vector<64x32xf32> -> vector<64x32xf32>
    %c0_44 = arith.constant 0 : index
    %c0_45 = arith.constant 0 : index
    %159 = vector.load %arg9[%c0_44, %c0_45] : memref<1x32xf32, #tpu.memory_space<vmem>>, vector<1x32xf32>
    %160 = vector.broadcast %159 : vector<1x32xf32> to vector<64x32xf32>
    %161 = arith.addf %158, %160 : vector<64x32xf32>
    %162 = vector.shape_cast %161 : vector<64x32xf32> to vector<8x8x32xf32>
    %c0_46 = arith.constant 0 : index
    %c0_47 = arith.constant 0 : index
    %c0_48 = arith.constant 0 : index
    %163 = vector.load %arg10[%c0_46, %c0_47, %c0_48] : memref<8x8x32xf32, #tpu.memory_space<vmem>>, vector<8x8x32xf32>
    tpu.vector_store %arg10[%c0_46, %c0_47, %c0_48], %162 {strides = array<i32>} : memref<8x8x32xf32, #tpu.memory_space<vmem>>, vector<8x8x32xf32>,
    return
  }
  func.func @transform_0(%arg0: i32) -> (i32, i32, i32) {
    %c0_i32 = arith.constant 0 : i32
    %c0_i32_0 = arith.constant 0 : i32
    %c0_i32_1 = arith.constant 0 : i32
    return %arg0, %c0_i32, %c0_i32_0 : i32, i32, i32
  }
  func.func @transform_1(%arg0: i32) -> (i32, i32) {
    %c0_i32 = arith.constant 0 : i32
    %c0_i32_0 = arith.constant 0 : i32
    %c0_i32_1 = arith.constant 0 : i32
    return %c0_i32, %c0_i32_0 : i32, i32
  }
  func.func @transform_2(%arg0: i32) -> (i32, i32) {
    %c0_i32 = arith.constant 0 : i32
    %c0_i32_0 = arith.constant 0 : i32
    %c0_i32_1 = arith.constant 0 : i32
    return %c0_i32, %c0_i32_0 : i32, i32
  }
  func.func @transform_3(%arg0: i32) -> (i32, i32) {
    %c0_i32 = arith.constant 0 : i32
    %c0_i32_0 = arith.constant 0 : i32
    %c0_i32_1 = arith.constant 0 : i32
    return %c0_i32, %c0_i32_0 : i32, i32
  }
  func.func @transform_4(%arg0: i32) -> (i32, i32) {
    %c0_i32 = arith.constant 0 : i32
    %c0_i32_0 = arith.constant 0 : i32
    %c0_i32_1 = arith.constant 0 : i32
    return %c0_i32, %c0_i32_0 : i32, i32
  }
  func.func @transform_5(%arg0: i32) -> (i32, i32, i32) {
    %c0_i32 = arith.constant 0 : i32
    %c0_i32_0 = arith.constant 0 : i32
    %c0_i32_1 = arith.constant 0 : i32
    %c0_i32_2 = arith.constant 0 : i32
    return %c0_i32, %c0_i32_0, %c0_i32_1 : i32, i32, i32
  }
  func.func @transform_6(%arg0: i32) -> (i32, i32, i32) {
    %c0_i32 = arith.constant 0 : i32
    %c0_i32_0 = arith.constant 0 : i32
    %c0_i32_1 = arith.constant 0 : i32
    %c0_i32_2 = arith.constant 0 : i32
    return %c0_i32, %c0_i32_0, %c0_i32_1 : i32, i32, i32
  }
  func.func @transform_7(%arg0: i32) -> (i32, i32) {
    %c0_i32 = arith.constant 0 : i32
    %c0_i32_0 = arith.constant 0 : i32
    %c0_i32_1 = arith.constant 0 : i32
    return %c0_i32, %c0_i32_0 : i32, i32
  }
  func.func @transform_8(%arg0: i32) -> (i32, i32) {
    %c0_i32 = arith.constant 0 : i32
    %c0_i32_0 = arith.constant 0 : i32
    %c0_i32_1 = arith.constant 0 : i32
    return %c0_i32, %c0_i32_0 : i32, i32
  }
  func.func @transform_9(%arg0: i32) -> (i32, i32, i32) {
    %c0_i32 = arith.constant 0 : i32
    %c0_i32_0 = arith.constant 0 : i32
    %c0_i32_1 = arith.constant 0 : i32
    return %arg0, %c0_i32, %c0_i32_0 : i32, i32, i32
  }
}

module attributes {stable_mosaic.version = 11 : i64} {
  func.func @_expand_ln_kernel(%arg0: i32, %arg1: memref<64x32xf32, #tpu.memory_space<vmem>>, %arg2: memref<32x128xbf16, #tpu.memory_space<vmem>>, %arg3: memref<128x8xf32, #tpu.memory_space<vmem>>, %arg4: memref<8x128xf32, #tpu.memory_space<vmem>>, %arg5: memref<1x128xf32, #tpu.memory_space<vmem>>, %arg6: memref<1x128xf32, #tpu.memory_space<vmem>>, %arg7: memref<64x128xf32, #tpu.memory_space<vmem>>) attributes {dimension_semantics = [#tpu.dimension_semantics<parallel>], iteration_bounds = array<i64: 2>, scalar_prefetch = 0 : i64, scratch_operands = 0 : i64, tpu.core_type = #tpu.core_type<tc>, window_params = [{transform_indices = @transform_0, window_bounds = array<i64: 64, 32>}, {pipeline_mode = #tpu.pipeline_mode<synchronous>, transform_indices = @transform_1, window_bounds = array<i64: 32, 128>}, {pipeline_mode = #tpu.pipeline_mode<synchronous>, transform_indices = @transform_2, window_bounds = array<i64: 128, 8>}, {pipeline_mode = #tpu.pipeline_mode<synchronous>, transform_indices = @transform_3, window_bounds = array<i64: 8, 128>}, {pipeline_mode = #tpu.pipeline_mode<synchronous>, transform_indices = @transform_4, window_bounds = array<i64: 1, 128>}, {pipeline_mode = #tpu.pipeline_mode<synchronous>, transform_indices = @transform_5, window_bounds = array<i64: 1, 128>}, {transform_indices = @transform_6, window_bounds = array<i64: 64, 128>}]} {
    %c0 = arith.constant 0 : index
    %c0_0 = arith.constant 0 : index
    %0 = vector.load %arg1[%c0, %c0_0] : memref<64x32xf32, #tpu.memory_space<vmem>>, vector<64x32xf32>
    %1 = arith.truncf %0 : vector<64x32xf32> to vector<64x32xbf16>
    %c0_1 = arith.constant 0 : index
    %c0_2 = arith.constant 0 : index
    %2 = vector.load %arg2[%c0_1, %c0_2] : memref<32x128xbf16, #tpu.memory_space<vmem>>, vector<32x128xbf16>
    %cst = arith.constant dense<0.000000e+00> : vector<64x128xf32>
    %3 = tpu.matmul %1, %2, %cst {dimension_numbers = #tpu.dot_dimension_numbers<[1], [0], [0], [1], [0, 0, 1, 1], [], []>} : vector<64x32xbf16>, vector<32x128xbf16>, vector<64x128xf32> -> vector<64x128xf32>
    %c0_3 = arith.constant 0 : index
    %c0_4 = arith.constant 0 : index
    %4 = vector.load %arg3[%c0_3, %c0_4] : memref<128x8xf32, #tpu.memory_space<vmem>>, vector<128x8xf32>
    %cst_5 = arith.constant dense<0.000000e+00> : vector<64x8xf32>
    %5 = tpu.matmul %3, %4, %cst_5 {dimension_numbers = #tpu.dot_dimension_numbers<[1], [0], [0], [1], [0, 0, 1, 1], [], []>} : vector<64x128xf32>, vector<128x8xf32>, vector<64x8xf32> -> vector<64x8xf32>
    %cst_6 = arith.constant 6.250000e-02 : f32
    %6 = vector.broadcast %cst_6 : f32 to vector<64x8xf32>
    %7 = arith.mulf %5, %6 : vector<64x8xf32>
    %8 = arith.mulf %3, %3 : vector<64x128xf32>
    %c0_7 = arith.constant 0 : index
    %c0_8 = arith.constant 0 : index
    %9 = vector.load %arg3[%c0_7, %c0_8] : memref<128x8xf32, #tpu.memory_space<vmem>>, vector<128x8xf32>
    %cst_9 = arith.constant dense<0.000000e+00> : vector<64x8xf32>
    %10 = tpu.matmul %8, %9, %cst_9 {dimension_numbers = #tpu.dot_dimension_numbers<[1], [0], [0], [1], [0, 0, 1, 1], [], []>} : vector<64x128xf32>, vector<128x8xf32>, vector<64x8xf32> -> vector<64x8xf32>
    %cst_10 = arith.constant 6.250000e-02 : f32
    %11 = vector.broadcast %cst_10 : f32 to vector<64x8xf32>
    %12 = arith.mulf %10, %11 : vector<64x8xf32>
    %13 = arith.mulf %7, %7 : vector<64x8xf32>
    %14 = arith.subf %12, %13 : vector<64x8xf32>
    %cst_11 = arith.constant 0.000000e+00 : f32
    %15 = vector.broadcast %cst_11 : f32 to vector<64x8xf32>
    %16 = arith.maximumf %14, %15 : vector<64x8xf32>
    %cst_12 = arith.constant 9.99999974E-6 : f32
    %17 = vector.broadcast %cst_12 : f32 to vector<64x8xf32>
    %18 = arith.addf %16, %17 : vector<64x8xf32>
    %19 = math.rsqrt %18 : vector<64x8xf32>
    %c0_13 = arith.constant 0 : index
    %c0_14 = arith.constant 0 : index
    %20 = vector.load %arg4[%c0_13, %c0_14] : memref<8x128xf32, #tpu.memory_space<vmem>>, vector<8x128xf32>
    %cst_15 = arith.constant dense<0.000000e+00> : vector<64x128xf32>
    %21 = tpu.matmul %7, %20, %cst_15 {dimension_numbers = #tpu.dot_dimension_numbers<[1], [0], [0], [1], [0, 0, 1, 1], [], []>} : vector<64x8xf32>, vector<8x128xf32>, vector<64x128xf32> -> vector<64x128xf32>
    %c0_16 = arith.constant 0 : index
    %c0_17 = arith.constant 0 : index
    %22 = vector.load %arg4[%c0_16, %c0_17] : memref<8x128xf32, #tpu.memory_space<vmem>>, vector<8x128xf32>
    %cst_18 = arith.constant dense<0.000000e+00> : vector<64x128xf32>
    %23 = tpu.matmul %19, %22, %cst_18 {dimension_numbers = #tpu.dot_dimension_numbers<[1], [0], [0], [1], [0, 0, 1, 1], [], []>} : vector<64x8xf32>, vector<8x128xf32>, vector<64x128xf32> -> vector<64x128xf32>
    %24 = arith.subf %3, %21 : vector<64x128xf32>
    %25 = arith.mulf %24, %23 : vector<64x128xf32>
    %c0_19 = arith.constant 0 : index
    %c0_20 = arith.constant 0 : index
    %26 = vector.load %arg5[%c0_19, %c0_20] : memref<1x128xf32, #tpu.memory_space<vmem>>, vector<1x128xf32>
    %27 = vector.broadcast %26 : vector<1x128xf32> to vector<64x128xf32>
    %28 = arith.mulf %25, %27 : vector<64x128xf32>
    %c0_21 = arith.constant 0 : index
    %c0_22 = arith.constant 0 : index
    %29 = vector.load %arg6[%c0_21, %c0_22] : memref<1x128xf32, #tpu.memory_space<vmem>>, vector<1x128xf32>
    %30 = vector.broadcast %29 : vector<1x128xf32> to vector<64x128xf32>
    %31 = arith.addf %28, %30 : vector<64x128xf32>
    %c0_23 = arith.constant 0 : index
    %c0_24 = arith.constant 0 : index
    %32 = vector.load %arg7[%c0_23, %c0_24] : memref<64x128xf32, #tpu.memory_space<vmem>>, vector<64x128xf32>
    tpu.vector_store %arg7[%c0_23, %c0_24], %31 {strides = array<i32>} : memref<64x128xf32, #tpu.memory_space<vmem>>, vector<64x128xf32>,
    return
  }
  func.func @transform_0(%arg0: i32) -> (i32, i32) {
    %c0_i32 = arith.constant 0 : i32
    %c0_i32_0 = arith.constant 0 : i32
    return %arg0, %c0_i32 : i32, i32
  }
  func.func @transform_1(%arg0: i32) -> (i32, i32) {
    %c0_i32 = arith.constant 0 : i32
    %c0_i32_0 = arith.constant 0 : i32
    %c0_i32_1 = arith.constant 0 : i32
    return %c0_i32, %c0_i32_0 : i32, i32
  }
  func.func @transform_2(%arg0: i32) -> (i32, i32) {
    %c0_i32 = arith.constant 0 : i32
    %c0_i32_0 = arith.constant 0 : i32
    %c0_i32_1 = arith.constant 0 : i32
    return %c0_i32, %c0_i32_0 : i32, i32
  }
  func.func @transform_3(%arg0: i32) -> (i32, i32) {
    %c0_i32 = arith.constant 0 : i32
    %c0_i32_0 = arith.constant 0 : i32
    %c0_i32_1 = arith.constant 0 : i32
    return %c0_i32, %c0_i32_0 : i32, i32
  }
  func.func @transform_4(%arg0: i32) -> (i32, i32) {
    %c0_i32 = arith.constant 0 : i32
    %c0_i32_0 = arith.constant 0 : i32
    %c0_i32_1 = arith.constant 0 : i32
    return %c0_i32, %c0_i32_0 : i32, i32
  }
  func.func @transform_5(%arg0: i32) -> (i32, i32) {
    %c0_i32 = arith.constant 0 : i32
    %c0_i32_0 = arith.constant 0 : i32
    %c0_i32_1 = arith.constant 0 : i32
    return %c0_i32, %c0_i32_0 : i32, i32
  }
  func.func @transform_6(%arg0: i32) -> (i32, i32) {
    %c0_i32 = arith.constant 0 : i32
    %c0_i32_0 = arith.constant 0 : i32
    return %arg0, %c0_i32 : i32, i32
  }
}

</mosaic_0001>

<llo_original>
// kernel: a_call__.6
$region0: #{a_call__.6}
  #allocation0 [shape = 'u32[]', space=smem, size = 0x4, offset = 0x4, fixed_abs, tag = 'smem constant byte address 0x4 - core index']
  #allocation1 [shape = 'u32[144,128]{1,0:T(1,128)}', space=vmem, size = 0x12000, scoped, tag = 'internal scratch']
  %s0 = inlined_call_operand.vmem [shape: f32[128,32], index: 0, kind: input, shape index: {}]
  %s1 = inlined_call_operand.vmem [shape: f32[128,32], index: 1, kind: input, shape index: {}]
  %s2 = inlined_call_operand.vmem [shape: f32[1,32], index: 2, kind: input, shape index: {}]
  %s3 = inlined_call_operand.vmem [shape: f32[1,32], index: 3, kind: input, shape index: {}]
  %s4 = inlined_call_operand.vmem [shape: bf16[32,128], index: 4, kind: input, shape index: {}]
  %s5 = inlined_call_operand.vmem [shape: f32[1,128], index: 5, kind: input, shape index: {}]
  %s6 = inlined_call_operand.vmem [shape: bf16[128,32], index: 6, kind: input, shape index: {}]
  %s7 = inlined_call_operand.vmem [shape: f32[1,32], index: 7, kind: input, shape index: {}]
  %s8 = inlined_call_operand.vmem [shape: f32[128,32], index: 8, kind: output, shape index: {}]
  %s9 = sld [smem:[#allocation0]]
  $region65: #{a_call__.6} parent=0
    _
  %s11 = ssub.s32 1, %s9
  %s12 = scalar_select 0, %s11, %s9
  loop: start=0, step=1, limit=4
  $region2: #{a_call__.6} parent=0 // loop_pre_header
    _
  $region3: #{a_call__.6} parent=0 // loop_header
    %s14 = sphi 0, %s18
    %p15 = scmp.ge.s32.totalorder %s14, 4
    %s24 = sphi 0, %s26
    %s27 = sphi 0, %s24
    %s28 = sphi 0, %s27
    %s44 = sphi 0, %s28
    %s50 = sphi 0, %s52
    %s53 = sphi 0, %s50
    %s54 = sphi 0, %s53
    %s70 = sphi 0, %s54
    %s74 = sphi 0, %s74
    %s76 = sphi 0, %s74
    %s77 = sphi 0, %s76
    %s91 = sphi 0, %s77
    %s95 = sphi 0, %s95
    %s97 = sphi 0, %s95
    %s98 = sphi 0, %s97
    %s112 = sphi 0, %s98
    %s116 = sphi 0, %s116
    %s118 = sphi 0, %s116
    %s119 = sphi 0, %s118
    %s133 = sphi 0, %s119
    %s137 = sphi 0, %s137
    %s139 = sphi 0, %s137
    %s140 = sphi 0, %s139
    %s154 = sphi 0, %s140
    %s158 = sphi 0, %s158
    %s160 = sphi 0, %s158
    %s161 = sphi 0, %s160
    %s175 = sphi 0, %s161
    %s179 = sphi 0, %s179
    %s181 = sphi 0, %s179
    %s182 = sphi 0, %s181
    %s196 = sphi 0, %s182
    %s202 = sphi 0, %s204
    %s205 = sphi 0, %s202
    %s206 = sphi 0, %s205
    %s222 = sphi 0, %s206
  $region4: #{a_call__.6} parent=0 // loop_header_branch
    %17 = sbr.rel (%p15) target = $region8
  $region5: #{a_call__.6} parent=0 // loop_body
    %s19 = ssub.s32 %s14, 1
    %s20 = ssub.s32 %s14, 2
    %s21 = sadd.s32 %s14, 1
    %s22 = ssub.s32 %s14, %s21
    %p23 = scmp.eq.s32.totalorder %s22, 0
    %s25 = sadd.s32 %s24, 1
    %s26 = scalar_select %p23, %s24, %s25
    %p29 = pneg %p23
    %p30 = scmp.eq.s32.totalorder %s14, 1
    %p31 = por %p29, %p30
    %p32 = scmp.ne.s32.totalorder %s24, %s27
    %p33 = scmp.eq.s32.totalorder %s14, 0
    %p34 = por %p32, %p33
    %p35 = scmp.ne.s32.totalorder %s24, %s27
    %p36 = scmp.eq.s32.totalorder %s19, 1
    %p37 = por %p35, %p36
    %p38 = scmp.ne.s32.totalorder %s27, %s28
    %p39 = scmp.eq.s32.totalorder %s19, 0
    %p40 = por %p38, %p39
    %p41 = scmp.ne.s32.totalorder %s27, %s28
    %p42 = scmp.eq.s32.totalorder %s20, 1
    %p43 = por %p41, %p42
    %p45 = scmp.ne.s32.totalorder %s28, %s44
    %p46 = scmp.eq.s32.totalorder %s20, 0
    %p47 = por %p45, %p46
    %s48 = ssub.s32 %s14, %s21
    %p49 = scmp.eq.s32.totalorder %s48, 0
    %s51 = sadd.s32 %s50, 1
    %s52 = scalar_select %p49, %s50, %s51
    %p55 = pneg %p49
    %p56 = scmp.eq.s32.totalorder %s14, 1
    %p57 = por %p55, %p56
    %p58 = scmp.ne.s32.totalorder %s50, %s53
    %p59 = scmp.eq.s32.totalorder %s14, 0
    %p60 = por %p58, %p59
    %p61 = scmp.ne.s32.totalorder %s50, %s53
    %p62 = scmp.eq.s32.totalorder %s19, 1
    %p63 = por %p61, %p62
    %p64 = scmp.ne.s32.totalorder %s53, %s54
    %p65 = scmp.eq.s32.totalorder %s19, 0
    %p66 = por %p64, %p65
    %p67 = scmp.ne.s32.totalorder %s53, %s54
    %p68 = scmp.eq.s32.totalorder %s20, 1
    %p69 = por %p67, %p68
    %p71 = scmp.ne.s32.totalorder %s54, %s70
    %p72 = scmp.eq.s32.totalorder %s20, 0
    %p73 = por %p71, %p72
    %s75 = sadd.s32 %s74, 1
    %p78 = scmp.eq.s32.totalorder %s14, 1
    %p79 = scmp.ne.s32.totalorder %s74, %s76
    %p80 = scmp.eq.s32.totalorder %s14, 0
    %p81 = por %p79, %p80
    %p82 = scmp.ne.s32.totalorder %s74, %s76
    %p83 = scmp.eq.s32.totalorder %s19, 1
    %p84 = por %p82, %p83
    %p85 = scmp.ne.s32.totalorder %s76, %s77
    %p86 = scmp.eq.s32.totalorder %s19, 0
    %p87 = por %p85, %p86
    %p88 = scmp.ne.s32.totalorder %s76, %s77
    %p89 = scmp.eq.s32.totalorder %s20, 1
    %p90 = por %p88, %p89
    %p92 = scmp.ne.s32.totalorder %s77, %s91
    %p93 = scmp.eq.s32.totalorder %s20, 0
    %p94 = por %p92, %p93
    %s96 = sadd.s32 %s95, 1
    %p99 = scmp.eq.s32.totalorder %s14, 1
    %p100 = scmp.ne.s32.totalorder %s95, %s97
    %p101 = scmp.eq.s32.totalorder %s14, 0
    %p102 = por %p100, %p101
    %p103 = scmp.ne.s32.totalorder %s95, %s97
    %p104 = scmp.eq.s32.totalorder %s19, 1
    %p105 = por %p103, %p104
    %p106 = scmp.ne.s32.totalorder %s97, %s98
    %p107 = scmp.eq.s32.totalorder %s19, 0
    %p108 = por %p106, %p107
    %p109 = scmp.ne.s32.totalorder %s97, %s98
    %p110 = scmp.eq.s32.totalorder %s20, 1
    %p111 = por %p109, %p110
    %p113 = scmp.ne.s32.totalorder %s98, %s112
    %p114 = scmp.eq.s32.totalorder %s20, 0
    %p115 = por %p113, %p114
    %s117 = sadd.s32 %s116, 1
    %p120 = scmp.eq.s32.totalorder %s14, 1
    %p121 = scmp.ne.s32.totalorder %s116, %s118
    %p122 = scmp.eq.s32.totalorder %s14, 0
    %p123 = por %p121, %p122
    %p124 = scmp.ne.s32.totalorder %s116, %s118
    %p125 = scmp.eq.s32.totalorder %s19, 1
    %p126 = por %p124, %p125
    %p127 = scmp.ne.s32.totalorder %s118, %s119
    %p128 = scmp.eq.s32.totalorder %s19, 0
    %p129 = por %p127, %p128
    %p130 = scmp.ne.s32.totalorder %s118, %s119
    %p131 = scmp.eq.s32.totalorder %s20, 1
    %p132 = por %p130, %p131
    %p134 = scmp.ne.s32.totalorder %s119, %s133
    %p135 = scmp.eq.s32.totalorder %s20, 0
    %p136 = por %p134, %p135
    %s138 = sadd.s32 %s137, 1
    %p141 = scmp.eq.s32.totalorder %s14, 1
    %p142 = scmp.ne.s32.totalorder %s137, %s139
    %p143 = scmp.eq.s32.totalorder %s14, 0
    %p144 = por %p142, %p143
    %p145 = scmp.ne.s32.totalorder %s137, %s139
    %p146 = scmp.eq.s32.totalorder %s19, 1
    %p147 = por %p145, %p146
    %p148 = scmp.ne.s32.totalorder %s139, %s140
    %p149 = scmp.eq.s32.totalorder %s19, 0
    %p150 = por %p148, %p149
    %p151 = scmp.ne.s32.totalorder %s139, %s140
    %p152 = scmp.eq.s32.totalorder %s20, 1
    %p153 = por %p151, %p152
    %p155 = scmp.ne.s32.totalorder %s140, %s154
    %p156 = scmp.eq.s32.totalorder %s20, 0
    %p157 = por %p155, %p156
    %s159 = sadd.s32 %s158, 1
    %p162 = scmp.eq.s32.totalorder %s14, 1
    %p163 = scmp.ne.s32.totalorder %s158, %s160
    %p164 = scmp.eq.s32.totalorder %s14, 0
    %p165 = por %p163, %p164
    %p166 = scmp.ne.s32.totalorder %s158, %s160
    %p167 = scmp.eq.s32.totalorder %s19, 1
    %p168 = por %p166, %p167
    %p169 = scmp.ne.s32.totalorder %s160, %s161
    %p170 = scmp.eq.s32.totalorder %s19, 0
    %p171 = por %p169, %p170
    %p172 = scmp.ne.s32.totalorder %s160, %s161
    %p173 = scmp.eq.s32.totalorder %s20, 1
    %p174 = por %p172, %p173
    %p176 = scmp.ne.s32.totalorder %s161, %s175
    %p177 = scmp.eq.s32.totalorder %s20, 0
    %p178 = por %p176, %p177
    %s180 = sadd.s32 %s179, 1
    %p183 = scmp.eq.s32.totalorder %s14, 1
    %p184 = scmp.ne.s32.totalorder %s179, %s181
    %p185 = scmp.eq.s32.totalorder %s14, 0
    %p186 = por %p184, %p185
    %p187 = scmp.ne.s32.totalorder %s179, %s181
    %p188 = scmp.eq.s32.totalorder %s19, 1
    %p189 = por %p187, %p188
    %p190 = scmp.ne.s32.totalorder %s181, %s182
    %p191 = scmp.eq.s32.totalorder %s19, 0
    %p192 = por %p190, %p191
    %p193 = scmp.ne.s32.totalorder %s181, %s182
    %p194 = scmp.eq.s32.totalorder %s20, 1
    %p195 = por %p193, %p194
    %p197 = scmp.ne.s32.totalorder %s182, %s196
    %p198 = scmp.eq.s32.totalorder %s20, 0
    %p199 = por %p197, %p198
    %s200 = ssub.s32 %s14, %s21
    %p201 = scmp.eq.s32.totalorder %s200, 0
    %s203 = sadd.s32 %s202, 1
    %s204 = scalar_select %p201, %s202, %s203
    %p207 = pneg %p201
    %p208 = scmp.eq.s32.totalorder %s14, 1
    %p209 = por %p207, %p208
    %p210 = scmp.ne.s32.totalorder %s202, %s205
    %p211 = scmp.eq.s32.totalorder %s14, 0
    %p212 = por %p210, %p211
    %p213 = scmp.ne.s32.totalorder %s202, %s205
    %p214 = scmp.eq.s32.totalorder %s19, 1
    %p215 = por %p213, %p214
    %p216 = scmp.ne.s32.totalorder %s205, %s206
    %p217 = scmp.eq.s32.totalorder %s19, 0
    %p218 = por %p216, %p217
    %p219 = scmp.ne.s32.totalorder %s205, %s206
    %p220 = scmp.eq.s32.totalorder %s20, 1
    %p221 = por %p219, %p220
    %p223 = scmp.ne.s32.totalorder %s206, %s222
    %p224 = scmp.eq.s32.totalorder %s20, 0
    %p225 = por %p223, %p224
    %p226 = scmp.le.s32.totalorder 1, %s14
    %p227 = scmp.lt.s32.totalorder %s14, 3
    %p228 = pnand %p226, %p227
    %p229 = pneg %p228
    // Predicated region
    $region9: #{a_call__.6} parent=5 // pred_check
      _
    $region10: #{a_call__.6} parent=5 // pred_check_branch
      %231 = sbr.rel (%p228) target = $region12
    $region11: #{a_call__.6} parent=5 // pred_region
      %s232 = ssub.s32 %s14, 1
      // Predicated region
      $region13: #{a_call__.6} parent=11 // pred_check
        %p233 = pneg %p87
      $region14: #{a_call__.6} parent=11 // pred_check_branch
        %235 = sbr.rel (%p233) target = $region16
      $region15: #{a_call__.6} parent=11 // pred_region
        _
      $region16: #{a_call__.6} parent=11 // pred_fallthru
        _
      // Predicated region
      $region17: #{a_call__.6} parent=11 // pred_check
        %p236 = pneg %p108
      $region18: #{a_call__.6} parent=11 // pred_check_branch
        %238 = sbr.rel (%p236) target = $region20
      $region19: #{a_call__.6} parent=11 // pred_region
        _
      $region20: #{a_call__.6} parent=11 // pred_fallthru
        _
      // Predicated region
      $region21: #{a_call__.6} parent=11 // pred_check
        %p239 = pneg %p129
      $region22: #{a_call__.6} parent=11 // pred_check_branch
        %241 = sbr.rel (%p239) target = $region24
      $region23: #{a_call__.6} parent=11 // pred_region
        _
      $region24: #{a_call__.6} parent=11 // pred_fallthru
        _
      // Predicated region
      $region25: #{a_call__.6} parent=11 // pred_check
        %p242 = pneg %p150
      $region26: #{a_call__.6} parent=11 // pred_check_branch
        %244 = sbr.rel (%p242) target = $region28
      $region27: #{a_call__.6} parent=11 // pred_region
        _
      $region28: #{a_call__.6} parent=11 // pred_fallthru
        _
      // Predicated region
      $region29: #{a_call__.6} parent=11 // pred_check
        %p245 = pneg %p171
      $region30: #{a_call__.6} parent=11 // pred_check_branch
        %247 = sbr.rel (%p245) target = $region32
      $region31: #{a_call__.6} parent=11 // pred_region
        _
      $region32: #{a_call__.6} parent=11 // pred_fallthru
        _
      // Predicated region
      $region33: #{a_call__.6} parent=11 // pred_check
        %p248 = pneg %p192
      $region34: #{a_call__.6} parent=11 // pred_check_branch
        %250 = sbr.rel (%p248) target = $region36
      $region35: #{a_call__.6} parent=11 // pred_region
        _
      $region36: #{a_call__.6} parent=11 // pred_fallthru
        _
    $region12: #{a_call__.6} parent=5 // pred_fallthru
      _
    %p251 = scmp.lt.s32.totalorder %s14, 2
    // Predicated region
    $region37: #{a_call__.6} parent=5 // pred_check
      %p252 = pneg %p251
    $region38: #{a_call__.6} parent=5 // pred_check_branch
      %254 = sbr.rel (%p252) target = $region40
    $region39: #{a_call__.6} parent=5 // pred_region
      // Predicated region
      $region41: #{a_call__.6} parent=39 // pred_check
        %p255 = pneg %p34
      $region42: #{a_call__.6} parent=39 // pred_check_branch
        %257 = sbr.rel (%p255) target = $region44
      $region43: #{a_call__.6} parent=39 // pred_region
        %s258 = smul.u32 8, %s14
        %p259 = scmp.lt.s32.totalorder %s258, 15
        %s260 = scalar_select %p259, %s258, 15
        %s261 = smul.addr %s260, 8
        %s262 = scalar_lea.vmem %s0, %s261
        %s263 = smul.u32 8, %s14
      $region44: #{a_call__.6} parent=39 // pred_fallthru
        _
      // Predicated region
      $region45: #{a_call__.6} parent=39 // pred_check
        %p264 = pneg %p60
      $region46: #{a_call__.6} parent=39 // pred_check_branch
        %266 = sbr.rel (%p264) target = $region48
      $region47: #{a_call__.6} parent=39 // pred_region
        %s267 = smul.u32 8, %s14
        %p268 = scmp.lt.s32.totalorder %s267, 15
        %s269 = scalar_select %p268, %s267, 15
        %s270 = smul.addr %s269, 8
        %s271 = scalar_lea.vmem %s1, %s270
        %s272 = smul.u32 8, %s14
      $region48: #{a_call__.6} parent=39 // pred_fallthru
        _
    $region40: #{a_call__.6} parent=5 // pred_fallthru
      _
    %p273 = scmp.le.s32.totalorder 1, %s14
    %p274 = scmp.lt.s32.totalorder %s14, 3
    %p275 = pnand %p273, %p274
    %p276 = pneg %p275
    // Predicated region
    $region49: #{a_call__.6} parent=5 // pred_check
      _
    $region50: #{a_call__.6} parent=5 // pred_check_branch
      %278 = sbr.rel (%p275) target = $region52
    $region51: #{a_call__.6} parent=5 // pred_region
      %s279 = ssub.s32 %s14, 1
      %s280 = smul.u32 8, %s19
      %p281 = scmp.lt.s32.totalorder %s280, 15
      %s282 = scalar_select %p281, %s280, 15
      %s283 = smul.addr %s282, 8
      %s284 = scalar_lea.vmem %s0, %s283
      %p285 = pneg %p40
      %p286 = pneg %p37
      %s287 = smul.u32 8, %s19
      %p288 = scmp.lt.s32.totalorder %s287, 15
      %s289 = scalar_select %p288, %s287, 15
      %s290 = smul.addr %s289, 8
      %s291 = scalar_lea.vmem %s1, %s290
      %p292 = pneg %p66
      %p293 = pneg %p63
      %p294 = pneg %p87
      %p295 = pneg %p84
      %p296 = pneg %p108
      %p297 = pneg %p105
      %p298 = pneg %p129
      %p299 = pneg %p126
      %p300 = pneg %p150
      %p301 = pneg %p147
      %p302 = pneg %p171
      %p303 = pneg %p168
      %p304 = pneg %p192
      %p305 = pneg %p189
      %p306 = pneg %p218
      %p307 = pneg %p215
      %s308 = smul.u32 8, %s19
      %p309 = scmp.lt.s32.totalorder %s308, 15
      %s310 = scalar_select %p309, %s308, 15
      %s311 = smul.addr %s310, 8
      %s312 = scalar_lea.vmem %s8, %s311
      %s313 = smul.u32 8, %s19
      %p314 = scmp.lt.s32.totalorder %s313, 15
      %s315 = scalar_select %p314, %s313, 15
      %s316 = smul.addr %s315, 8
      %s317 = scalar_lea.vmem %s0, %s316
      %s318 = smul.u32 8, %s19
      %s319 = smul.u32 8, %s19
      %p320 = scmp.lt.s32.totalorder %s319, 15
      %s321 = scalar_select %p320, %s319, 15
      %s322 = smul.addr %s321, 8
      %s323 = scalar_lea.vmem %s1, %s322
      %s324 = smul.u32 8, %s19
      %s325 = smul.u32 8, %s19
      %p326 = scmp.lt.s32.totalorder %s325, 15
      %s327 = scalar_select %p326, %s325, 15
      %s328 = smul.addr %s327, 8
      %s329 = scalar_lea.vmem %s8, %s328
      %s330 = smul.u32 8, %s19
      %v332 = vld [vmem:[%s317] sm:$0xff]
      %v333 = vld [vmem:[%s317 + $0x8] sm:$0xff]
      %v334 = vld [vmem:[%s317 + $0x10] sm:$0xff]
      %v335 = vld [vmem:[%s317 + $0x18] sm:$0xff]
      %v336 = vld [vmem:[%s317 + $0x20] sm:$0xff]
      %v337 = vld [vmem:[%s317 + $0x28] sm:$0xff]
      %v338 = vld [vmem:[%s317 + $0x30] sm:$0xff]
      %v339 = vld [vmem:[%s317 + $0x38] sm:$0xff]
      %v340 = vld [vmem:[%s323] sm:$0xff]
      %v341 = vld [vmem:[%s323 + $0x8] sm:$0xff]
      %v342 = vld [vmem:[%s323 + $0x10] sm:$0xff]
      %v343 = vld [vmem:[%s323 + $0x18] sm:$0xff]
      %v344 = vld [vmem:[%s323 + $0x20] sm:$0xff]
      %v345 = vld [vmem:[%s323 + $0x28] sm:$0xff]
      %v346 = vld [vmem:[%s323 + $0x30] sm:$0xff]
      %v347 = vld [vmem:[%s323 + $0x38] sm:$0xff]
      %v348 = vadd.f32 %v332, %v340
      %v349 = vadd.f32 %v333, %v341
      %v350 = vadd.f32 %v334, %v342
      %v351 = vadd.f32 %v335, %v343
      %v352 = vadd.f32 %v336, %v344
      %v353 = vadd.f32 %v337, %v345
      %v354 = vadd.f32 %v338, %v346
      %v355 = vadd.f32 %v339, %v347
      %v356 = vld [vmem:[%s2] sm:$0x1]
      %v357 = vld [vmem:[%s3] sm:$0x1]
      %vm358 = vcmask 261120
      %v359 = vsel %vm358, %v348, 0.0
      %360 = vadd.xlane.f32.xlu0 %v359
      %v361 = vpop.xlane.xlu0 %360
      %v362 = vsel %vm358, %v349, 0.0
      %363 = vadd.xlane.f32.xlu0 %v362
      %v364 = vpop.xlane.xlu0 %363
      %v365 = vsel %vm358, %v350, 0.0
      %366 = vadd.xlane.f32.xlu0 %v365
      %v367 = vpop.xlane.xlu0 %366
      %v368 = vsel %vm358, %v351, 0.0
      %369 = vadd.xlane.f32.xlu0 %v368
      %v370 = vpop.xlane.xlu0 %369
      %v371 = vsel %vm358, %v352, 0.0
      %372 = vadd.xlane.f32.xlu0 %v371
      %v373 = vpop.xlane.xlu0 %372
      %v374 = vsel %vm358, %v353, 0.0
      %375 = vadd.xlane.f32.xlu0 %v374
      %v376 = vpop.xlane.xlu0 %375
      %v377 = vsel %vm358, %v354, 0.0
      %378 = vadd.xlane.f32.xlu0 %v377
      %v379 = vpop.xlane.xlu0 %378
      %v380 = vsel %vm358, %v355, 0.0
      %381 = vadd.xlane.f32.xlu0 %v380
      %v382 = vpop.xlane.xlu0 %381
      %v383 = vrcp.pop 32.0
      %v384 = vmul.f32 %v361, %v383
      %v385 = vmul.f32 %v364, %v383
      %v386 = vmul.f32 %v367, %v383
      %v387 = vmul.f32 %v370, %v383
      %v388 = vmul.f32 %v373, %v383
      %v389 = vmul.f32 %v376, %v383
      %v390 = vmul.f32 %v379, %v383
      %v391 = vmul.f32 %v382, %v383
      %v392 = vsub.f32 %v348, %v384
      %v393 = vsub.f32 %v349, %v385
      %v394 = vsub.f32 %v350, %v386
      %v395 = vsub.f32 %v351, %v387
      %v396 = vsub.f32 %v352, %v388
      %v397 = vsub.f32 %v353, %v389
      %v398 = vsub.f32 %v354, %v390
      %v399 = vsub.f32 %v355, %v391
      %v400 = vmul.f32 %v392, %v392
      %v401 = vmul.f32 %v393, %v393
      %v402 = vmul.f32 %v394, %v394
      %v403 = vmul.f32 %v395, %v395
      %v404 = vmul.f32 %v396, %v396
      %v405 = vmul.f32 %v397, %v397
      %v406 = vmul.f32 %v398, %v398
      %v407 = vmul.f32 %v399, %v399
      %v408 = vsel %vm358, %v400, 0.0
      %409 = vadd.xlane.f32.xlu0 %v408
      %v410 = vpop.xlane.xlu0 %409
      %v411 = vsel %vm358, %v401, 0.0
      %412 = vadd.xlane.f32.xlu0 %v411
      %v413 = vpop.xlane.xlu0 %412
      %v414 = vsel %vm358, %v402, 0.0
      %415 = vadd.xlane.f32.xlu0 %v414
      %v416 = vpop.xlane.xlu0 %415
      %v417 = vsel %vm358, %v403, 0.0
      %418 = vadd.xlane.f32.xlu0 %v417
      %v419 = vpop.xlane.xlu0 %418
      %v420 = vsel %vm358, %v404, 0.0
      %421 = vadd.xlane.f32.xlu0 %v420
      %v422 = vpop.xlane.xlu0 %421
      %v423 = vsel %vm358, %v405, 0.0
      %424 = vadd.xlane.f32.xlu0 %v423
      %v425 = vpop.xlane.xlu0 %424
      %v426 = vsel %vm358, %v406, 0.0
      %427 = vadd.xlane.f32.xlu0 %v426
      %v428 = vpop.xlane.xlu0 %427
      %v429 = vsel %vm358, %v407, 0.0
      %430 = vadd.xlane.f32.xlu0 %v429
      %v431 = vpop.xlane.xlu0 %430
      %v432 = vmul.f32 %v410, %v383
      %v433 = vmul.f32 %v413, %v383
      %v434 = vmul.f32 %v416, %v383
      %v435 = vmul.f32 %v419, %v383
      %v436 = vmul.f32 %v422, %v383
      %v437 = vmul.f32 %v425, %v383
      %v438 = vmul.f32 %v428, %v383
      %v439 = vmul.f32 %v431, %v383
      %v440 = vadd.f32 %v432, 1e-05
      %v441 = vadd.f32 %v433, 1e-05
      %v442 = vadd.f32 %v434, 1e-05
      %v443 = vadd.f32 %v435, 1e-05
      %v444 = vadd.f32 %v436, 1e-05
      %v445 = vadd.f32 %v437, 1e-05
      %v446 = vadd.f32 %v438, 1e-05
      %v447 = vadd.f32 %v439, 1e-05
      %v448 = vrsqrt.pop %v440
      %v449 = vrsqrt.pop %v441
      %v450 = vrsqrt.pop %v442
      %v451 = vrsqrt.pop %v443
      %v452 = vrsqrt.pop %v444
      %v453 = vrsqrt.pop %v445
      %v454 = vrsqrt.pop %v446
      %v455 = vrsqrt.pop %v447
      %v456 = vmul.f32 %v392, %v448
      %v457 = vmul.f32 %v393, %v449
      %v458 = vmul.f32 %v394, %v450
      %v459 = vmul.f32 %v395, %v451
      %v460 = vmul.f32 %v396, %v452
      %v461 = vmul.f32 %v397, %v453
      %v462 = vmul.f32 %v398, %v454
      %v463 = vmul.f32 %v399, %v455
      %v465 = vlaneseq
      %v466 = vshrl.u32 %v465, 7
      %v467 = vsub.s32 0, %v466
      %v468 = vrot.slane %v356, %v467
      %v470 = vmul.f32 %v456, %v468
      %v471 = vmul.f32 %v457, %v468
      %v472 = vmul.f32 %v458, %v468
      %v473 = vmul.f32 %v459, %v468
      %v474 = vmul.f32 %v460, %v468
      %v475 = vmul.f32 %v461, %v468
      %v476 = vmul.f32 %v462, %v468
      %v477 = vmul.f32 %v463, %v468
      %v479 = vlaneseq
      %v480 = vshrl.u32 %v479, 7
      %v481 = vsub.s32 0, %v480
      %v482 = vrot.slane %v357, %v481
      %v484 = vadd.f32 %v470, %v482
      %v485 = vadd.f32 %v471, %v482
      %v486 = vadd.f32 %v472, %v482
      %v487 = vadd.f32 %v473, %v482
      %v488 = vadd.f32 %v474, %v482
      %v489 = vadd.f32 %v475, %v482
      %v490 = vadd.f32 %v476, %v482
      %v491 = vadd.f32 %v477, %v482
      %v492 = vpack.c.bf16 %v485, %v484
      %v493 = vpack.c.bf16 %v487, %v486
      %v494 = vpack.c.bf16 %v489, %v488
      %v495 = vpack.c.bf16 %v491, %v490
      %v496 = vld [vmem:[%s4] sm:$0xf]
      %v497 = vld [vmem:[%s4 + $0x4] sm:$0xf]
      %v498 = vld [vmem:[%s4 + $0x8] sm:$0xf]
      %v499 = vld [vmem:[%s4 + $0xc] sm:$0xf]
      %v500 = vld [vmem:[%s5] sm:$0x1]
      %v502 = vlaneseq
      %v503 = vshrl.u32 %v502, 7
      %v504 = vsub.s32 0, %v503
      %v505 = vrot.slane %v500, %v504
      %v511 = vunpack.c.l.b16 %v496
      %v512 = vunpack.c.l.b16 %v497
      %v513 = vunpack.c.l.b16 %v498
      %v514 = vunpack.c.l.b16 %v499
      %v515 = vpack.c.b16 %v512, %v511
      %v516 = vpack.c.b16 %v514, %v513
      %v520 = vsel %vm358, %v492, 0
      %v523 = vsel %vm358, %v493, 0
      %v526 = vsel %vm358, %v494, 0
      %v529 = vsel %vm358, %v495, 0
      %531 = vmatprep.subr.bf16.mxu0 0
      %532 = vmatpush1.bf16.msra.mxu0 0
      %533 = vmatprep.subr.bf16.mxu0 0
      %534 = vmatpush1.bf16.msra.mxu0 0
      %535 = vmatprep.subr.bf16.mxu0 0
      %536 = vmatpush1.bf16.msra.mxu0 0
      %537 = vmatprep.subr.bf16.mxu0 0
      %538 = vmatpush1.bf16.msra.mxu0 0
      %539 = vmatprep.subr.bf16.mxu0 0
      %540 = vmatpush1.bf16.msra.mxu0 0
      %541 = vmatprep.subr.bf16.mxu0 0
      %542 = vmatpush1.bf16.msra.mxu0 0
      %543 = vmatprep.subr.bf16.mxu0 0
      %544 = vmatpush1.bf16.msra.mxu0 %v516
      %545 = vmatprep.subr.bf16.mxu0 0
      %546 = vmatpush1.bf16.msra.mxu0 %v515
      %547 = vmatprep.subr.bf16.mxu0 0
      %548 = vmatpush2.bf16.msra.mxu0 0
      %549 = vmatprep.subr.bf16.mxu0 0
      %550 = vmatpush2.bf16.msra.mxu0 0
      %551 = vmatprep.subr.bf16.mxu0 0
      %552 = vmatpush2.bf16.msra.mxu0 0
      %553 = vmatprep.subr.bf16.mxu0 0
      %554 = vmatpush2.bf16.msra.mxu0 0
      %555 = vmatprep.subr.bf16.mxu0 0
      %556 = vmatpush2.bf16.msra.mxu0 0
      %557 = vmatprep.subr.bf16.mxu0 0
      %558 = vmatpush2.bf16.msra.mxu0 0
      %559 = vmatprep.subr.bf16.mxu0 0
      %560 = vmatpush2.bf16.msra.mxu0 0
      %561 = vmatprep.subr.bf16.mxu0 0
      %562 = vmatpush2.bf16.msra.mxu0 0
      %563 = vmatprep.mubr.bf16.mxu0 0
      %564 = vmatmul.mubr.bf16.gmra.mxu0 %v520
      %v565 = vpop.f32.mrf.mxu0
      %v566 = vadd.f32 %v505, %v565
      %v567 = vpop.f32.mrf.mxu0
      %v568 = vpop.f32.mrf.mxu0
      %v569 = vadd.f32 %v505, %v568
      %v570 = vpop.f32.mrf.mxu0
      %571 = vmatprep.mubr.bf16.mxu0 0
      %572 = vmatmul.mubr.bf16.gmra.mxu0 %v523
      %v573 = vpop.f32.mrf.mxu0
      %v574 = vadd.f32 %v505, %v573
      %v575 = vpop.f32.mrf.mxu0
      %v576 = vpop.f32.mrf.mxu0
      %v577 = vadd.f32 %v505, %v576
      %v578 = vpop.f32.mrf.mxu0
      %579 = vmatprep.mubr.bf16.mxu0 0
      %580 = vmatmul.mubr.bf16.gmra.mxu0 %v526
      %v581 = vpop.f32.mrf.mxu0
      %v582 = vadd.f32 %v505, %v581
      %v583 = vpop.f32.mrf.mxu0
      %v584 = vpop.f32.mrf.mxu0
      %v585 = vadd.f32 %v505, %v584
      %v586 = vpop.f32.mrf.mxu0
      %587 = vmatprep.mubr.bf16.mxu0 0
      %588 = vmatmul.mubr.bf16.gmra.mxu0 %v529
      %v589 = vpop.f32.mrf.mxu0
      %v590 = vadd.f32 %v505, %v589
      %v591 = vpop.f32.mrf.mxu0
      %v592 = vpop.f32.mrf.mxu0
      %v593 = vadd.f32 %v505, %v592
      %v594 = vpop.f32.mrf.mxu0
      %595 = vdwg.mxu0
      %v596 = vmul.f32 %v566, 0.5
      %v597 = vmul.f32 %v569, 0.5
      %v598 = vmul.f32 %v574, 0.5
      %v599 = vmul.f32 %v577, 0.5
      %v600 = vmul.f32 %v582, 0.5
      %v601 = vmul.f32 %v585, 0.5
      %v602 = vmul.f32 %v590, 0.5
      %v603 = vmul.f32 %v593, 0.5
      %v604 = vmul.f32 %v566, 0.70710677
      %v605 = vmul.f32 %v569, 0.70710677
      %v606 = vmul.f32 %v574, 0.70710677
      %v607 = vmul.f32 %v577, 0.70710677
      %v608 = vmul.f32 %v582, 0.70710677
      %v609 = vmul.f32 %v585, 0.70710677
      %v610 = vmul.f32 %v590, 0.70710677
      %v611 = vmul.f32 %v593, 0.70710677
      %v612 = vand.u32 2147483647, %v604
      %v613 = vand.u32 2147483647, %v605
      %v614 = vand.u32 2147483647, %v606
      %v615 = vand.u32 2147483647, %v607
      %v616 = vand.u32 2147483647, %v608
      %v617 = vand.u32 2147483647, %v609
      %v618 = vand.u32 2147483647, %v610
      %v619 = vand.u32 2147483647, %v611
      %v620 = vmul.f32 %v612, 0.3275911
      %v621 = vmul.f32 %v613, 0.3275911
      %v622 = vmul.f32 %v614, 0.3275911
      %v623 = vmul.f32 %v615, 0.3275911
      %v624 = vmul.f32 %v616, 0.3275911
      %v625 = vmul.f32 %v617, 0.3275911
      %v626 = vmul.f32 %v618, 0.3275911
      %v627 = vmul.f32 %v619, 0.3275911
      %v628 = vadd.f32 %v620, 1.0
      %v629 = vadd.f32 %v621, 1.0
      %v630 = vadd.f32 %v622, 1.0
      %v631 = vadd.f32 %v623, 1.0
      %v632 = vadd.f32 %v624, 1.0
      %v633 = vadd.f32 %v625, 1.0
      %v634 = vadd.f32 %v626, 1.0
      %v635 = vadd.f32 %v627, 1.0
      %v636 = vrcp.pop %v628
      %v637 = vmul.f32 1.0, %v636
      %v638 = vrcp.pop %v629
      %v639 = vmul.f32 1.0, %v638
      %v640 = vrcp.pop %v630
      %v641 = vmul.f32 1.0, %v640
      %v642 = vrcp.pop %v631
      %v643 = vmul.f32 1.0, %v642
      %v644 = vrcp.pop %v632
      %v645 = vmul.f32 1.0, %v644
      %v646 = vrcp.pop %v633
      %v647 = vmul.f32 1.0, %v646
      %v648 = vrcp.pop %v634
      %v649 = vmul.f32 1.0, %v648
      %v650 = vrcp.pop %v635
      %v651 = vmul.f32 1.0, %v650
      %v652 = vmul.f32 %v637, 1.0614054
      %v653 = vmul.f32 %v639, 1.0614054
      %v654 = vmul.f32 %v641, 1.0614054
      %v655 = vmul.f32 %v643, 1.0614054
      %v656 = vmul.f32 %v645, 1.0614054
      %v657 = vmul.f32 %v647, 1.0614054
      %v658 = vmul.f32 %v649, 1.0614054
      %v659 = vmul.f32 %v651, 1.0614054
      %v660 = vadd.f32 %v652, -1.4531521
      %v661 = vadd.f32 %v653, -1.4531521
      %v662 = vadd.f32 %v654, -1.4531521
      %v663 = vadd.f32 %v655, -1.4531521
      %v664 = vadd.f32 %v656, -1.4531521
      %v665 = vadd.f32 %v657, -1.4531521
      %v666 = vadd.f32 %v658, -1.4531521
      %v667 = vadd.f32 %v659, -1.4531521
      %v668 = vmul.f32 %v660, %v637
      %v669 = vmul.f32 %v661, %v639
      %v670 = vmul.f32 %v662, %v641
      %v671 = vmul.f32 %v663, %v643
      %v672 = vmul.f32 %v664, %v645
      %v673 = vmul.f32 %v665, %v647
      %v674 = vmul.f32 %v666, %v649
      %v675 = vmul.f32 %v667, %v651
      %v676 = vadd.f32 %v668, 1.4214138
      %v677 = vadd.f32 %v669, 1.4214138
      %v678 = vadd.f32 %v670, 1.4214138
      %v679 = vadd.f32 %v671, 1.4214138
      %v680 = vadd.f32 %v672, 1.4214138
      %v681 = vadd.f32 %v673, 1.4214138
      %v682 = vadd.f32 %v674, 1.4214138
      %v683 = vadd.f32 %v675, 1.4214138
      %v684 = vmul.f32 %v676, %v637
      %v685 = vmul.f32 %v677, %v639
      %v686 = vmul.f32 %v678, %v641
      %v687 = vmul.f32 %v679, %v643
      %v688 = vmul.f32 %v680, %v645
      %v689 = vmul.f32 %v681, %v647
      %v690 = vmul.f32 %v682, %v649
      %v691 = vmul.f32 %v683, %v651
      %v692 = vadd.f32 %v684, -0.28449672
      %v693 = vadd.f32 %v685, -0.28449672
      %v694 = vadd.f32 %v686, -0.28449672
      %v695 = vadd.f32 %v687, -0.28449672
      %v696 = vadd.f32 %v688, -0.28449672
      %v697 = vadd.f32 %v689, -0.28449672
      %v698 = vadd.f32 %v690, -0.28449672
      %v699 = vadd.f32 %v691, -0.28449672
      %v700 = vmul.f32 %v692, %v637
      %v701 = vmul.f32 %v693, %v639
      %v702 = vmul.f32 %v694, %v641
      %v703 = vmul.f32 %v695, %v643
      %v704 = vmul.f32 %v696, %v645
      %v705 = vmul.f32 %v697, %v647
      %v706 = vmul.f32 %v698, %v649
      %v707 = vmul.f32 %v699, %v651
      %v708 = vadd.f32 %v700, 0.2548296
      %v709 = vadd.f32 %v701, 0.2548296
      %v710 = vadd.f32 %v702, 0.2548296
      %v711 = vadd.f32 %v703, 0.2548296
      %v712 = vadd.f32 %v704, 0.2548296
      %v713 = vadd.f32 %v705, 0.2548296
      %v714 = vadd.f32 %v706, 0.2548296
      %v715 = vadd.f32 %v707, 0.2548296
      %v716 = vmul.f32 %v708, %v637
      %v717 = vmul.f32 %v709, %v639
      %v718 = vmul.f32 %v710, %v641
      %v719 = vmul.f32 %v711, %v643
      %v720 = vmul.f32 %v712, %v645
      %v721 = vmul.f32 %v713, %v647
      %v722 = vmul.f32 %v714, %v649
      %v723 = vmul.f32 %v715, %v651
      %v724 = vsub.f32 0.0, %v612
      %v725 = vsub.f32 0.0, %v613
      %v726 = vsub.f32 0.0, %v614
      %v727 = vsub.f32 0.0, %v615
      %v728 = vsub.f32 0.0, %v616
      %v729 = vsub.f32 0.0, %v617
      %v730 = vsub.f32 0.0, %v618
      %v731 = vsub.f32 0.0, %v619
      %v732 = vmul.f32 %v724, %v612
      %v733 = vmul.f32 %v725, %v613
      %v734 = vmul.f32 %v726, %v614
      %v735 = vmul.f32 %v727, %v615
      %v736 = vmul.f32 %v728, %v616
      %v737 = vmul.f32 %v729, %v617
      %v738 = vmul.f32 %v730, %v618
      %v739 = vmul.f32 %v731, %v619
      %v740 = vmul.f32 %v732, 1.442695
      %v741 = vpow.pop %v740
      %v742 = vmul.f32 %v733, 1.442695
      %v743 = vpow.pop %v742
      %v744 = vmul.f32 %v734, 1.442695
      %v745 = vpow.pop %v744
      %v746 = vmul.f32 %v735, 1.442695
      %v747 = vpow.pop %v746
      %v748 = vmul.f32 %v736, 1.442695
      %v749 = vpow.pop %v748
      %v750 = vmul.f32 %v737, 1.442695
      %v751 = vpow.pop %v750
      %v752 = vmul.f32 %v738, 1.442695
      %v753 = vpow.pop %v752
      %v754 = vmul.f32 %v739, 1.442695
      %v755 = vpow.pop %v754
      %v756 = vmul.f32 %v716, %v741
      %v757 = vmul.f32 %v717, %v743
      %v758 = vmul.f32 %v718, %v745
      %v759 = vmul.f32 %v719, %v747
      %v760 = vmul.f32 %v720, %v749
      %v761 = vmul.f32 %v721, %v751
      %v762 = vmul.f32 %v722, %v753
      %v763 = vmul.f32 %v723, %v755
      %v764 = vsub.f32 1.0, %v756
      %v765 = vsub.f32 1.0, %v757
      %v766 = vsub.f32 1.0, %v758
      %v767 = vsub.f32 1.0, %v759
      %v768 = vsub.f32 1.0, %v760
      %v769 = vsub.f32 1.0, %v761
      %v770 = vsub.f32 1.0, %v762
      %v771 = vsub.f32 1.0, %v763
      %vm772 = vcmp.ge.f32.partialorder %v604, 0.0
      %vm773 = vcmp.ge.f32.partialorder %v605, 0.0
      %vm774 = vcmp.ge.f32.partialorder %v606, 0.0
      %vm775 = vcmp.ge.f32.partialorder %v607, 0.0
      %vm776 = vcmp.ge.f32.partialorder %v608, 0.0
      %vm777 = vcmp.ge.f32.partialorder %v609, 0.0
      %vm778 = vcmp.ge.f32.partialorder %v610, 0.0
      %vm779 = vcmp.ge.f32.partialorder %v611, 0.0
      %v780 = vsub.f32 0.0, %v764
      %v781 = vsub.f32 0.0, %v765
      %v782 = vsub.f32 0.0, %v766
      %v783 = vsub.f32 0.0, %v767
      %v784 = vsub.f32 0.0, %v768
      %v785 = vsub.f32 0.0, %v769
      %v786 = vsub.f32 0.0, %v770
      %v787 = vsub.f32 0.0, %v771
      %v788 = vsel %vm772, %v764, %v780
      %v789 = vsel %vm773, %v765, %v781
      %v790 = vsel %vm774, %v766, %v782
      %v791 = vsel %vm775, %v767, %v783
      %v792 = vsel %vm776, %v768, %v784
      %v793 = vsel %vm777, %v769, %v785
      %v794 = vsel %vm778, %v770, %v786
      %v795 = vsel %vm779, %v771, %v787
      %v796 = vadd.f32 %v788, 1.0
      %v797 = vadd.f32 %v789, 1.0
      %v798 = vadd.f32 %v790, 1.0
      %v799 = vadd.f32 %v791, 1.0
      %v800 = vadd.f32 %v792, 1.0
      %v801 = vadd.f32 %v793, 1.0
      %v802 = vadd.f32 %v794, 1.0
      %v803 = vadd.f32 %v795, 1.0
      %v804 = vmul.f32 %v596, %v796
      %v805 = vmul.f32 %v597, %v797
      %v806 = vmul.f32 %v598, %v798
      %v807 = vmul.f32 %v599, %v799
      %v808 = vmul.f32 %v600, %v800
      %v809 = vmul.f32 %v601, %v801
      %v810 = vmul.f32 %v602, %v802
      %v811 = vmul.f32 %v603, %v803
      %v812 = vpack.c.bf16 %v805, %v804
      %v813 = vpack.c.bf16 %v807, %v806
      %v814 = vpack.c.bf16 %v809, %v808
      %v815 = vpack.c.bf16 %v811, %v810
      %v816 = vld [vmem:[%s6] sm:$0xf]
      %v817 = vld [vmem:[%s6 + $0x4] sm:$0xf]
      %v818 = vld [vmem:[%s6 + $0x8] sm:$0xf]
      %v819 = vld [vmem:[%s6 + $0xc] sm:$0xf]
      %v820 = vld [vmem:[%s6 + $0x10] sm:$0xf]
      %v821 = vld [vmem:[%s6 + $0x14] sm:$0xf]
      %v822 = vld [vmem:[%s6 + $0x18] sm:$0xf]
      %v823 = vld [vmem:[%s6 + $0x1c] sm:$0xf]
      %v824 = vld [vmem:[%s6 + $0x20] sm:$0xf]
      %v825 = vld [vmem:[%s6 + $0x24] sm:$0xf]
      %v826 = vld [vmem:[%s6 + $0x28] sm:$0xf]
      %v827 = vld [vmem:[%s6 + $0x2c] sm:$0xf]
      %v828 = vld [vmem:[%s6 + $0x30] sm:$0xf]
      %v829 = vld [vmem:[%s6 + $0x34] sm:$0xf]
      %v830 = vld [vmem:[%s6 + $0x38] sm:$0xf]
      %v831 = vld [vmem:[%s6 + $0x3c] sm:$0xf]
      %v832 = vld [vmem:[%s7] sm:$0x1]
      %v834 = vlaneseq
      %v835 = vshrl.u32 %v834, 7
      %v836 = vsub.s32 0, %v835
      %v837 = vrot.slane %v832, %v836
      %v855 = vunpack.c.l.b16 %v816
      %v856 = vunpack.c.l.b16 %v817
      %v857 = vunpack.c.l.b16 %v818
      %v858 = vunpack.c.l.b16 %v819
      %v859 = vunpack.c.l.b16 %v820
      %v860 = vunpack.c.l.b16 %v821
      %v861 = vunpack.c.l.b16 %v822
      %v862 = vunpack.c.l.b16 %v823
      %v863 = vunpack.c.l.b16 %v824
      %v864 = vunpack.c.l.b16 %v825
      %v865 = vunpack.c.l.b16 %v826
      %v866 = vunpack.c.l.b16 %v827
      %v867 = vunpack.c.l.b16 %v828
      %v868 = vunpack.c.l.b16 %v829
      %v869 = vunpack.c.l.b16 %v830
      %v870 = vunpack.c.l.b16 %v831
      %v871 = vpack.c.b16 %v856, %v855
      %v872 = vpack.c.b16 %v858, %v857
      %v873 = vpack.c.b16 %v860, %v859
      %v874 = vpack.c.b16 %v862, %v861
      %v875 = vpack.c.b16 %v864, %v863
      %v876 = vpack.c.b16 %v866, %v865
      %v877 = vpack.c.b16 %v868, %v867
      %v878 = vpack.c.b16 %v870, %v869
      %887 = vmatprep.subr.bf16.mxu0 0
      %888 = vmatpush1.bf16.msra.mxu0 %v878
      %889 = vmatprep.subr.bf16.mxu0 0
      %890 = vmatpush1.bf16.msra.mxu0 %v877
      %891 = vmatprep.subr.bf16.mxu0 0
      %892 = vmatpush1.bf16.msra.mxu0 %v876
      %893 = vmatprep.subr.bf16.mxu0 0
      %894 = vmatpush1.bf16.msra.mxu0 %v875
      %895 = vmatprep.subr.bf16.mxu0 0
      %896 = vmatpush1.bf16.msra.mxu0 %v874
      %897 = vmatprep.subr.bf16.mxu0 0
      %898 = vmatpush1.bf16.msra.mxu0 %v873
      %899 = vmatprep.subr.bf16.mxu0 0
      %900 = vmatpush1.bf16.msra.mxu0 %v872
      %901 = vmatprep.subr.bf16.mxu0 0
      %902 = vmatpush1.bf16.msra.mxu0 %v871
      %903 = vmatprep.subr.bf16.mxu0 0
      %904 = vmatpush2.bf16.msra.mxu0 0
      %905 = vmatprep.subr.bf16.mxu0 0
      %906 = vmatpush2.bf16.msra.mxu0 0
      %907 = vmatprep.subr.bf16.mxu0 0
      %908 = vmatpush2.bf16.msra.mxu0 0
      %909 = vmatprep.subr.bf16.mxu0 0
      %910 = vmatpush2.bf16.msra.mxu0 0
      %911 = vmatprep.subr.bf16.mxu0 0
      %912 = vmatpush2.bf16.msra.mxu0 0
      %913 = vmatprep.subr.bf16.mxu0 0
      %914 = vmatpush2.bf16.msra.mxu0 0
      %915 = vmatprep.subr.bf16.mxu0 0
      %916 = vmatpush2.bf16.msra.mxu0 0
      %917 = vmatprep.subr.bf16.mxu0 0
      %918 = vmatpush2.bf16.msra.mxu0 0
      %919 = vmatprep.mubr.bf16.mxu0 0
      %920 = vmatmul.mubr.bf16.gmra.mxu0 %v812
      %v921 = vpop.f32.mrf.mxu0
      %v922 = vadd.f32 %v837, %v921
      %v923 = vpop.f32.mrf.mxu0
      %v924 = vpop.f32.mrf.mxu0
      %v925 = vadd.f32 %v837, %v924
      %v926 = vpop.f32.mrf.mxu0
      %927 = vmatprep.mubr.bf16.mxu0 0
      %928 = vmatmul.mubr.bf16.gmra.mxu0 %v813
      %v929 = vpop.f32.mrf.mxu0
      %v930 = vadd.f32 %v837, %v929
      %v931 = vpop.f32.mrf.mxu0
      %v932 = vpop.f32.mrf.mxu0
      %v933 = vadd.f32 %v837, %v932
      %v934 = vpop.f32.mrf.mxu0
      %935 = vmatprep.mubr.bf16.mxu0 0
      %936 = vmatmul.mubr.bf16.gmra.mxu0 %v814
      %v937 = vpop.f32.mrf.mxu0
      %v938 = vadd.f32 %v837, %v937
      %v939 = vpop.f32.mrf.mxu0
      %v940 = vpop.f32.mrf.mxu0
      %v941 = vadd.f32 %v837, %v940
      %v942 = vpop.f32.mrf.mxu0
      %943 = vmatprep.mubr.bf16.mxu0 0
      %944 = vmatmul.mubr.bf16.gmra.mxu0 %v815
      %v945 = vpop.f32.mrf.mxu0
      %v946 = vadd.f32 %v837, %v945
      %v947 = vpop.f32.mrf.mxu0
      %v948 = vpop.f32.mrf.mxu0
      %v949 = vadd.f32 %v837, %v948
      %v950 = vpop.f32.mrf.mxu0
      %951 = vdwg.mxu0
      %v952 = vadd.f32 %v348, %v922
      %v953 = vadd.f32 %v349, %v925
      %v954 = vadd.f32 %v350, %v930
      %v955 = vadd.f32 %v351, %v933
      %v956 = vadd.f32 %v352, %v938
      %v957 = vadd.f32 %v353, %v941
      %v958 = vadd.f32 %v354, %v946
      %v959 = vadd.f32 %v355, %v949
      %960 = vst.msk [vmem:[%s329] sm:$0xff] %vm358, %v952
      %961 = vst.msk [vmem:[%s329 + $0x8] sm:$0xff] %vm358, %v953
      %962 = vst.msk [vmem:[%s329 + $0x10] sm:$0xff] %vm358, %v954
      %963 = vst.msk [vmem:[%s329 + $0x18] sm:$0xff] %vm358, %v955
      %964 = vst.msk [vmem:[%s329 + $0x20] sm:$0xff] %vm358, %v956
      %965 = vst.msk [vmem:[%s329 + $0x28] sm:$0xff] %vm358, %v957
      %966 = vst.msk [vmem:[%s329 + $0x30] sm:$0xff] %vm358, %v958
      %967 = vst.msk [vmem:[%s329 + $0x38] sm:$0xff] %vm358, %v959
      %s968 = smul.u32 8, %s19
      %p969 = scmp.lt.s32.totalorder %s968, 15
      %s970 = scalar_select %p969, %s968, 15
      %s971 = smul.addr %s970, 8
      %s972 = scalar_lea.vmem %s8, %s971
      // Predicated region
      $region53: #{a_call__.6} parent=51 // pred_check
        %p973 = pneg %p215
      $region54: #{a_call__.6} parent=51 // pred_check_branch
        %975 = sbr.rel (%p973) target = $region56
      $region55: #{a_call__.6} parent=51 // pred_region
        %s976 = smul.u32 8, %s19
      $region56: #{a_call__.6} parent=51 // pred_fallthru
        _
    $region52: #{a_call__.6} parent=5 // pred_fallthru
      _
    %p977 = scmp.le.s32.totalorder 2, %s14
    // Predicated region
    $region57: #{a_call__.6} parent=5 // pred_check
      %p978 = pneg %p977
    $region58: #{a_call__.6} parent=5 // pred_check_branch
      %980 = sbr.rel (%p978) target = $region60
    $region59: #{a_call__.6} parent=5 // pred_region
      %s981 = ssub.s32 %s14, 2
      // Predicated region
      $region61: #{a_call__.6} parent=59 // pred_check
        %p982 = pneg %p221
      $region62: #{a_call__.6} parent=59 // pred_check_branch
        %984 = sbr.rel (%p982) target = $region64
      $region63: #{a_call__.6} parent=59 // pred_region
        %s985 = smul.u32 8, %s20
        %p986 = scmp.lt.s32.totalorder %s985, 15
        %s987 = scalar_select %p986, %s985, 15
        %s988 = smul.addr %s987, 8
        %s989 = scalar_lea.vmem %s8, %s988
      $region64: #{a_call__.6} parent=59 // pred_fallthru
        _
    $region60: #{a_call__.6} parent=5 // pred_fallthru
      _
  $region6: #{a_call__.6} parent=0 // loop_footer
    %s18 = sadd.s32 1, %s14
  $region7: #{a_call__.6} parent=0 // loop_footer_branch
    %13 = sbr.rel target = $region3
  $region8: #{a_call__.6} parent=0 // loop_exit
    _

// kernel: a_call__.9
$region0: #{a_call__.9}
  #allocation0 [shape = 'u32[]', space=smem, size = 0x4, offset = 0x4, fixed_abs, tag = 'smem constant byte address 0x4 - core index']
  #allocation1 [shape = 'u32[144,128]{1,0:T(1,128)}', space=vmem, size = 0x12000, scoped, tag = 'internal scratch']
  %s0 = inlined_call_operand.vmem [shape: f32[128,32], index: 0, kind: input, shape index: {}]
  %s1 = inlined_call_operand.vmem [shape: bf16[32,128], index: 1, kind: input, shape index: {}]
  %s2 = inlined_call_operand.vmem [shape: f32[128,8], index: 2, kind: input, shape index: {}]
  %s3 = inlined_call_operand.vmem [shape: f32[8,128], index: 3, kind: input, shape index: {}]
  %s4 = inlined_call_operand.vmem [shape: f32[1,128], index: 4, kind: input, shape index: {}]
  %s5 = inlined_call_operand.vmem [shape: f32[1,128], index: 5, kind: input, shape index: {}]
  %s6 = inlined_call_operand.vmem [shape: f32[128,128], index: 6, kind: output, shape index: {}]
  %s7 = sld [smem:[#allocation0]]
  $region57: #{a_call__.9} parent=0
    _
  %s9 = ssub.s32 1, %s7
  %s10 = scalar_select 0, %s9, %s7
  loop: start=0, step=1, limit=4
  $region2: #{a_call__.9} parent=0 // loop_pre_header
    _
  $region3: #{a_call__.9} parent=0 // loop_header
    %s12 = sphi 0, %s16
    %p13 = scmp.ge.s32.totalorder %s12, 4
    %s22 = sphi 0, %s24
    %s25 = sphi 0, %s22
    %s26 = sphi 0, %s25
    %s42 = sphi 0, %s26
    %s46 = sphi 0, %s46
    %s48 = sphi 0, %s46
    %s49 = sphi 0, %s48
    %s63 = sphi 0, %s49
    %s67 = sphi 0, %s67
    %s69 = sphi 0, %s67
    %s70 = sphi 0, %s69
    %s84 = sphi 0, %s70
    %s88 = sphi 0, %s88
    %s90 = sphi 0, %s88
    %s91 = sphi 0, %s90
    %s105 = sphi 0, %s91
    %s109 = sphi 0, %s109
    %s111 = sphi 0, %s109
    %s112 = sphi 0, %s111
    %s126 = sphi 0, %s112
    %s130 = sphi 0, %s130
    %s132 = sphi 0, %s130
    %s133 = sphi 0, %s132
    %s147 = sphi 0, %s133
    %s153 = sphi 0, %s155
    %s156 = sphi 0, %s153
    %s157 = sphi 0, %s156
    %s173 = sphi 0, %s157
  $region4: #{a_call__.9} parent=0 // loop_header_branch
    %15 = sbr.rel (%p13) target = $region8
  $region5: #{a_call__.9} parent=0 // loop_body
    %s17 = ssub.s32 %s12, 1
    %s18 = ssub.s32 %s12, 2
    %s19 = sadd.s32 %s12, 1
    %s20 = ssub.s32 %s12, %s19
    %p21 = scmp.eq.s32.totalorder %s20, 0
    %s23 = sadd.s32 %s22, 1
    %s24 = scalar_select %p21, %s22, %s23
    %p27 = pneg %p21
    %p28 = scmp.eq.s32.totalorder %s12, 1
    %p29 = por %p27, %p28
    %p30 = scmp.ne.s32.totalorder %s22, %s25
    %p31 = scmp.eq.s32.totalorder %s12, 0
    %p32 = por %p30, %p31
    %p33 = scmp.ne.s32.totalorder %s22, %s25
    %p34 = scmp.eq.s32.totalorder %s17, 1
    %p35 = por %p33, %p34
    %p36 = scmp.ne.s32.totalorder %s25, %s26
    %p37 = scmp.eq.s32.totalorder %s17, 0
    %p38 = por %p36, %p37
    %p39 = scmp.ne.s32.totalorder %s25, %s26
    %p40 = scmp.eq.s32.totalorder %s18, 1
    %p41 = por %p39, %p40
    %p43 = scmp.ne.s32.totalorder %s26, %s42
    %p44 = scmp.eq.s32.totalorder %s18, 0
    %p45 = por %p43, %p44
    %s47 = sadd.s32 %s46, 1
    %p50 = scmp.eq.s32.totalorder %s12, 1
    %p51 = scmp.ne.s32.totalorder %s46, %s48
    %p52 = scmp.eq.s32.totalorder %s12, 0
    %p53 = por %p51, %p52
    %p54 = scmp.ne.s32.totalorder %s46, %s48
    %p55 = scmp.eq.s32.totalorder %s17, 1
    %p56 = por %p54, %p55
    %p57 = scmp.ne.s32.totalorder %s48, %s49
    %p58 = scmp.eq.s32.totalorder %s17, 0
    %p59 = por %p57, %p58
    %p60 = scmp.ne.s32.totalorder %s48, %s49
    %p61 = scmp.eq.s32.totalorder %s18, 1
    %p62 = por %p60, %p61
    %p64 = scmp.ne.s32.totalorder %s49, %s63
    %p65 = scmp.eq.s32.totalorder %s18, 0
    %p66 = por %p64, %p65
    %s68 = sadd.s32 %s67, 1
    %p71 = scmp.eq.s32.totalorder %s12, 1
    %p72 = scmp.ne.s32.totalorder %s67, %s69
    %p73 = scmp.eq.s32.totalorder %s12, 0
    %p74 = por %p72, %p73
    %p75 = scmp.ne.s32.totalorder %s67, %s69
    %p76 = scmp.eq.s32.totalorder %s17, 1
    %p77 = por %p75, %p76
    %p78 = scmp.ne.s32.totalorder %s69, %s70
    %p79 = scmp.eq.s32.totalorder %s17, 0
    %p80 = por %p78, %p79
    %p81 = scmp.ne.s32.totalorder %s69, %s70
    %p82 = scmp.eq.s32.totalorder %s18, 1
    %p83 = por %p81, %p82
    %p85 = scmp.ne.s32.totalorder %s70, %s84
    %p86 = scmp.eq.s32.totalorder %s18, 0
    %p87 = por %p85, %p86
    %s89 = sadd.s32 %s88, 1
    %p92 = scmp.eq.s32.totalorder %s12, 1
    %p93 = scmp.ne.s32.totalorder %s88, %s90
    %p94 = scmp.eq.s32.totalorder %s12, 0
    %p95 = por %p93, %p94
    %p96 = scmp.ne.s32.totalorder %s88, %s90
    %p97 = scmp.eq.s32.totalorder %s17, 1
    %p98 = por %p96, %p97
    %p99 = scmp.ne.s32.totalorder %s90, %s91
    %p100 = scmp.eq.s32.totalorder %s17, 0
    %p101 = por %p99, %p100
    %p102 = scmp.ne.s32.totalorder %s90, %s91
    %p103 = scmp.eq.s32.totalorder %s18, 1
    %p104 = por %p102, %p103
    %p106 = scmp.ne.s32.totalorder %s91, %s105
    %p107 = scmp.eq.s32.totalorder %s18, 0
    %p108 = por %p106, %p107
    %s110 = sadd.s32 %s109, 1
    %p113 = scmp.eq.s32.totalorder %s12, 1
    %p114 = scmp.ne.s32.totalorder %s109, %s111
    %p115 = scmp.eq.s32.totalorder %s12, 0
    %p116 = por %p114, %p115
    %p117 = scmp.ne.s32.totalorder %s109, %s111
    %p118 = scmp.eq.s32.totalorder %s17, 1
    %p119 = por %p117, %p118
    %p120 = scmp.ne.s32.totalorder %s111, %s112
    %p121 = scmp.eq.s32.totalorder %s17, 0
    %p122 = por %p120, %p121
    %p123 = scmp.ne.s32.totalorder %s111, %s112
    %p124 = scmp.eq.s32.totalorder %s18, 1
    %p125 = por %p123, %p124
    %p127 = scmp.ne.s32.totalorder %s112, %s126
    %p128 = scmp.eq.s32.totalorder %s18, 0
    %p129 = por %p127, %p128
    %s131 = sadd.s32 %s130, 1
    %p134 = scmp.eq.s32.totalorder %s12, 1
    %p135 = scmp.ne.s32.totalorder %s130, %s132
    %p136 = scmp.eq.s32.totalorder %s12, 0
    %p137 = por %p135, %p136
    %p138 = scmp.ne.s32.totalorder %s130, %s132
    %p139 = scmp.eq.s32.totalorder %s17, 1
    %p140 = por %p138, %p139
    %p141 = scmp.ne.s32.totalorder %s132, %s133
    %p142 = scmp.eq.s32.totalorder %s17, 0
    %p143 = por %p141, %p142
    %p144 = scmp.ne.s32.totalorder %s132, %s133
    %p145 = scmp.eq.s32.totalorder %s18, 1
    %p146 = por %p144, %p145
    %p148 = scmp.ne.s32.totalorder %s133, %s147
    %p149 = scmp.eq.s32.totalorder %s18, 0
    %p150 = por %p148, %p149
    %s151 = ssub.s32 %s12, %s19
    %p152 = scmp.eq.s32.totalorder %s151, 0
    %s154 = sadd.s32 %s153, 1
    %s155 = scalar_select %p152, %s153, %s154
    %p158 = pneg %p152
    %p159 = scmp.eq.s32.totalorder %s12, 1
    %p160 = por %p158, %p159
    %p161 = scmp.ne.s32.totalorder %s153, %s156
    %p162 = scmp.eq.s32.totalorder %s12, 0
    %p163 = por %p161, %p162
    %p164 = scmp.ne.s32.totalorder %s153, %s156
    %p165 = scmp.eq.s32.totalorder %s17, 1
    %p166 = por %p164, %p165
    %p167 = scmp.ne.s32.totalorder %s156, %s157
    %p168 = scmp.eq.s32.totalorder %s17, 0
    %p169 = por %p167, %p168
    %p170 = scmp.ne.s32.totalorder %s156, %s157
    %p171 = scmp.eq.s32.totalorder %s18, 1
    %p172 = por %p170, %p171
    %p174 = scmp.ne.s32.totalorder %s157, %s173
    %p175 = scmp.eq.s32.totalorder %s18, 0
    %p176 = por %p174, %p175
    %p177 = scmp.le.s32.totalorder 1, %s12
    %p178 = scmp.lt.s32.totalorder %s12, 3
    %p179 = pnand %p177, %p178
    %p180 = pneg %p179
    // Predicated region
    $region9: #{a_call__.9} parent=5 // pred_check
      _
    $region10: #{a_call__.9} parent=5 // pred_check_branch
      %182 = sbr.rel (%p179) target = $region12
    $region11: #{a_call__.9} parent=5 // pred_region
      %s183 = ssub.s32 %s12, 1
      // Predicated region
      $region13: #{a_call__.9} parent=11 // pred_check
        %p184 = pneg %p59
      $region14: #{a_call__.9} parent=11 // pred_check_branch
        %186 = sbr.rel (%p184) target = $region16
      $region15: #{a_call__.9} parent=11 // pred_region
        _
      $region16: #{a_call__.9} parent=11 // pred_fallthru
        _
      // Predicated region
      $region17: #{a_call__.9} parent=11 // pred_check
        %p187 = pneg %p80
      $region18: #{a_call__.9} parent=11 // pred_check_branch
        %189 = sbr.rel (%p187) target = $region20
      $region19: #{a_call__.9} parent=11 // pred_region
        _
      $region20: #{a_call__.9} parent=11 // pred_fallthru
        _
      // Predicated region
      $region21: #{a_call__.9} parent=11 // pred_check
        %p190 = pneg %p101
      $region22: #{a_call__.9} parent=11 // pred_check_branch
        %192 = sbr.rel (%p190) target = $region24
      $region23: #{a_call__.9} parent=11 // pred_region
        _
      $region24: #{a_call__.9} parent=11 // pred_fallthru
        _
      // Predicated region
      $region25: #{a_call__.9} parent=11 // pred_check
        %p193 = pneg %p122
      $region26: #{a_call__.9} parent=11 // pred_check_branch
        %195 = sbr.rel (%p193) target = $region28
      $region27: #{a_call__.9} parent=11 // pred_region
        _
      $region28: #{a_call__.9} parent=11 // pred_fallthru
        _
      // Predicated region
      $region29: #{a_call__.9} parent=11 // pred_check
        %p196 = pneg %p143
      $region30: #{a_call__.9} parent=11 // pred_check_branch
        %198 = sbr.rel (%p196) target = $region32
      $region31: #{a_call__.9} parent=11 // pred_region
        _
      $region32: #{a_call__.9} parent=11 // pred_fallthru
        _
    $region12: #{a_call__.9} parent=5 // pred_fallthru
      _
    %p199 = scmp.lt.s32.totalorder %s12, 2
    // Predicated region
    $region33: #{a_call__.9} parent=5 // pred_check
      %p200 = pneg %p199
    $region34: #{a_call__.9} parent=5 // pred_check_branch
      %202 = sbr.rel (%p200) target = $region36
    $region35: #{a_call__.9} parent=5 // pred_region
      // Predicated region
      $region37: #{a_call__.9} parent=35 // pred_check
        %p203 = pneg %p32
      $region38: #{a_call__.9} parent=35 // pred_check_branch
        %205 = sbr.rel (%p203) target = $region40
      $region39: #{a_call__.9} parent=35 // pred_region
        %s206 = smul.u32 8, %s12
        %p207 = scmp.lt.s32.totalorder %s206, 15
        %s208 = scalar_select %p207, %s206, 15
        %s209 = smul.addr %s208, 8
        %s210 = scalar_lea.vmem %s0, %s209
        %s211 = smul.u32 8, %s12
      $region40: #{a_call__.9} parent=35 // pred_fallthru
        _
    $region36: #{a_call__.9} parent=5 // pred_fallthru
      _
    %p212 = scmp.le.s32.totalorder 1, %s12
    %p213 = scmp.lt.s32.totalorder %s12, 3
    %p214 = pnand %p212, %p213
    %p215 = pneg %p214
    // Predicated region
    $region41: #{a_call__.9} parent=5 // pred_check
      _
    $region42: #{a_call__.9} parent=5 // pred_check_branch
      %217 = sbr.rel (%p214) target = $region44
    $region43: #{a_call__.9} parent=5 // pred_region
      %s218 = ssub.s32 %s12, 1
      %s219 = smul.u32 8, %s17
      %p220 = scmp.lt.s32.totalorder %s219, 15
      %s221 = scalar_select %p220, %s219, 15
      %s222 = smul.addr %s221, 8
      %s223 = scalar_lea.vmem %s0, %s222
      %p224 = pneg %p38
      %p225 = pneg %p35
      %p226 = pneg %p59
      %p227 = pneg %p56
      %p228 = pneg %p80
      %p229 = pneg %p77
      %p230 = pneg %p101
      %p231 = pneg %p98
      %p232 = pneg %p122
      %p233 = pneg %p119
      %p234 = pneg %p143
      %p235 = pneg %p140
      %p236 = pneg %p169
      %p237 = pneg %p166
      %s238 = smul.u32 8, %s17
      %p239 = scmp.lt.s32.totalorder %s238, 15
      %s240 = scalar_select %p239, %s238, 15
      %s241 = smul.addr %s240, 8
      %s242 = scalar_lea.vmem %s6, %s241
      %s243 = smul.u32 8, %s17
      %p244 = scmp.lt.s32.totalorder %s243, 15
      %s245 = scalar_select %p244, %s243, 15
      %s246 = smul.addr %s245, 8
      %s247 = scalar_lea.vmem %s0, %s246
      %s248 = smul.u32 8, %s17
      %s249 = smul.u32 8, %s17
      %p250 = scmp.lt.s32.totalorder %s249, 15
      %s251 = scalar_select %p250, %s249, 15
      %s252 = smul.addr %s251, 8
      %s253 = scalar_lea.vmem %s6, %s252
      %s254 = smul.u32 8, %s17
      %v256 = vld [vmem:[%s247] sm:$0xff]
      %v257 = vld [vmem:[%s247 + $0x8] sm:$0xff]
      %v258 = vld [vmem:[%s247 + $0x10] sm:$0xff]
      %v259 = vld [vmem:[%s247 + $0x18] sm:$0xff]
      %v260 = vld [vmem:[%s247 + $0x20] sm:$0xff]
      %v261 = vld [vmem:[%s247 + $0x28] sm:$0xff]
      %v262 = vld [vmem:[%s247 + $0x30] sm:$0xff]
      %v263 = vld [vmem:[%s247 + $0x38] sm:$0xff]
      %v264 = vpack.c.bf16 %v257, %v256
      %v265 = vpack.c.bf16 %v259, %v258
      %v266 = vpack.c.bf16 %v261, %v260
      %v267 = vpack.c.bf16 %v263, %v262
      %v268 = vld [vmem:[%s1] sm:$0xf]
      %v269 = vld [vmem:[%s1 + $0x4] sm:$0xf]
      %v270 = vld [vmem:[%s1 + $0x8] sm:$0xf]
      %v271 = vld [vmem:[%s1 + $0xc] sm:$0xf]
      %v276 = vunpack.c.l.b16 %v268
      %v277 = vunpack.c.l.b16 %v269
      %v278 = vunpack.c.l.b16 %v270
      %v279 = vunpack.c.l.b16 %v271
      %v280 = vpack.c.b16 %v277, %v276
      %v281 = vpack.c.b16 %v279, %v278
      %vm284 = vcmask 261120
      %v286 = vsel %vm284, %v264, 0
      %v289 = vsel %vm284, %v265, 0
      %v292 = vsel %vm284, %v266, 0
      %v295 = vsel %vm284, %v267, 0
      %297 = vmatprep.subr.bf16.mxu0 0
      %298 = vmatpush1.bf16.msra.mxu0 0
      %299 = vmatprep.subr.bf16.mxu0 0
      %300 = vmatpush1.bf16.msra.mxu0 0
      %301 = vmatprep.subr.bf16.mxu0 0
      %302 = vmatpush1.bf16.msra.mxu0 0
      %303 = vmatprep.subr.bf16.mxu0 0
      %304 = vmatpush1.bf16.msra.mxu0 0
      %305 = vmatprep.subr.bf16.mxu0 0
      %306 = vmatpush1.bf16.msra.mxu0 0
      %307 = vmatprep.subr.bf16.mxu0 0
      %308 = vmatpush1.bf16.msra.mxu0 0
      %309 = vmatprep.subr.bf16.mxu0 0
      %310 = vmatpush1.bf16.msra.mxu0 %v281
      %311 = vmatprep.subr.bf16.mxu0 0
      %312 = vmatpush1.bf16.msra.mxu0 %v280
      %313 = vmatprep.subr.bf16.mxu0 0
      %314 = vmatpush2.bf16.msra.mxu0 0
      %315 = vmatprep.subr.bf16.mxu0 0
      %316 = vmatpush2.bf16.msra.mxu0 0
      %317 = vmatprep.subr.bf16.mxu0 0
      %318 = vmatpush2.bf16.msra.mxu0 0
      %319 = vmatprep.subr.bf16.mxu0 0
      %320 = vmatpush2.bf16.msra.mxu0 0
      %321 = vmatprep.subr.bf16.mxu0 0
      %322 = vmatpush2.bf16.msra.mxu0 0
      %323 = vmatprep.subr.bf16.mxu0 0
      %324 = vmatpush2.bf16.msra.mxu0 0
      %325 = vmatprep.subr.bf16.mxu0 0
      %326 = vmatpush2.bf16.msra.mxu0 0
      %327 = vmatprep.subr.bf16.mxu0 0
      %328 = vmatpush2.bf16.msra.mxu0 0
      %329 = vmatprep.mubr.bf16.mxu0 0
      %330 = vmatmul.mubr.bf16.gmra.mxu0 %v286
      %v331 = vpop.f32.mrf.mxu0
      %v332 = vadd.f32 0.0, %v331
      %v333 = vpop.f32.mrf.mxu0
      %v334 = vpop.f32.mrf.mxu0
      %v335 = vadd.f32 0.0, %v334
      %v336 = vpop.f32.mrf.mxu0
      %337 = vmatprep.mubr.bf16.mxu0 0
      %338 = vmatmul.mubr.bf16.gmra.mxu0 %v289
      %v339 = vpop.f32.mrf.mxu0
      %v340 = vadd.f32 0.0, %v339
      %v341 = vpop.f32.mrf.mxu0
      %v342 = vpop.f32.mrf.mxu0
      %v343 = vadd.f32 0.0, %v342
      %v344 = vpop.f32.mrf.mxu0
      %345 = vmatprep.mubr.bf16.mxu0 0
      %346 = vmatmul.mubr.bf16.gmra.mxu0 %v292
      %v347 = vpop.f32.mrf.mxu0
      %v348 = vadd.f32 0.0, %v347
      %v349 = vpop.f32.mrf.mxu0
      %v350 = vpop.f32.mrf.mxu0
      %v351 = vadd.f32 0.0, %v350
      %v352 = vpop.f32.mrf.mxu0
      %353 = vmatprep.mubr.bf16.mxu0 0
      %354 = vmatmul.mubr.bf16.gmra.mxu0 %v295
      %v355 = vpop.f32.mrf.mxu0
      %v356 = vadd.f32 0.0, %v355
      %v357 = vpop.f32.mrf.mxu0
      %v358 = vpop.f32.mrf.mxu0
      %v359 = vadd.f32 0.0, %v358
      %v360 = vpop.f32.mrf.mxu0
      %361 = vdwg.mxu0
      %v362 = vld [vmem:[%s2] sm:$0xff]
      %v363 = vld [vmem:[%s2 + $0x8] sm:$0xff]
      %v364 = vld [vmem:[%s2 + $0x10] sm:$0xff]
      %v365 = vld [vmem:[%s2 + $0x18] sm:$0xff]
      %v366 = vld [vmem:[%s2 + $0x20] sm:$0xff]
      %v367 = vld [vmem:[%s2 + $0x28] sm:$0xff]
      %v368 = vld [vmem:[%s2 + $0x30] sm:$0xff]
      %v369 = vld [vmem:[%s2 + $0x38] sm:$0xff]
      %v370 = vld [vmem:[%s2 + $0x40] sm:$0xff]
      %v371 = vld [vmem:[%s2 + $0x48] sm:$0xff]
      %v372 = vld [vmem:[%s2 + $0x50] sm:$0xff]
      %v373 = vld [vmem:[%s2 + $0x58] sm:$0xff]
      %v374 = vld [vmem:[%s2 + $0x60] sm:$0xff]
      %v375 = vld [vmem:[%s2 + $0x68] sm:$0xff]
      %v376 = vld [vmem:[%s2 + $0x70] sm:$0xff]
      %v377 = vld [vmem:[%s2 + $0x78] sm:$0xff]
      %378 = vmatprep.subr.mxu0 0.0
      %379 = vmatpush1.msra.mxu0 %v377
      %380 = vmatprep.subr.mxu0 0.0
      %381 = vmatpush1.msra.mxu0 %v376
      %382 = vmatprep.subr.mxu0 0.0
      %383 = vmatpush1.msra.mxu0 %v375
      %384 = vmatprep.subr.mxu0 0.0
      %385 = vmatpush1.msra.mxu0 %v374
      %386 = vmatprep.subr.mxu0 0.0
      %387 = vmatpush1.msra.mxu0 %v373
      %388 = vmatprep.subr.mxu0 0.0
      %389 = vmatpush1.msra.mxu0 %v372
      %390 = vmatprep.subr.mxu0 0.0
      %391 = vmatpush1.msra.mxu0 %v371
      %392 = vmatprep.subr.mxu0 0.0
      %393 = vmatpush1.msra.mxu0 %v370
      %394 = vmatprep.subr.mxu0 0.0
      %395 = vmatpush1.msra.mxu0 %v369
      %396 = vmatprep.subr.mxu0 0.0
      %397 = vmatpush1.msra.mxu0 %v368
      %398 = vmatprep.subr.mxu0 0.0
      %399 = vmatpush1.msra.mxu0 %v367
      %400 = vmatprep.subr.mxu0 0.0
      %401 = vmatpush1.msra.mxu0 %v366
      %402 = vmatprep.subr.mxu0 0.0
      %403 = vmatpush1.msra.mxu0 %v365
      %404 = vmatprep.subr.mxu0 0.0
      %405 = vmatpush1.msra.mxu0 %v364
      %406 = vmatprep.subr.mxu0 0.0
      %407 = vmatpush1.msra.mxu0 %v363
      %408 = vmatprep.subr.mxu0 0.0
      %409 = vmatpush1.msra.mxu0 %v362
      %410 = vmatprep.subr.mxu0 0.0
      %411 = vmatpush2.msra.mxu0 0.0
      %412 = vmatprep.subr.mxu0 0.0
      %413 = vmatpush2.msra.mxu0 0.0
      %414 = vmatprep.subr.mxu0 0.0
      %415 = vmatpush2.msra.mxu0 0.0
      %416 = vmatprep.subr.mxu0 0.0
      %417 = vmatpush2.msra.mxu0 0.0
      %418 = vmatprep.subr.mxu0 0.0
      %419 = vmatpush2.msra.mxu0 0.0
      %420 = vmatprep.subr.mxu0 0.0
      %421 = vmatpush2.msra.mxu0 0.0
      %422 = vmatprep.subr.mxu0 0.0
      %423 = vmatpush2.msra.mxu0 0.0
      %424 = vmatprep.subr.mxu0 0.0
      %425 = vmatpush2.msra.mxu0 0.0
      %426 = vmatprep.subr.mxu0 0.0
      %427 = vmatpush2.msra.mxu0 0.0
      %428 = vmatprep.subr.mxu0 0.0
      %429 = vmatpush2.msra.mxu0 0.0
      %430 = vmatprep.subr.mxu0 0.0
      %431 = vmatpush2.msra.mxu0 0.0
      %432 = vmatprep.subr.mxu0 0.0
      %433 = vmatpush2.msra.mxu0 0.0
      %434 = vmatprep.subr.mxu0 0.0
      %435 = vmatpush2.msra.mxu0 0.0
      %436 = vmatprep.subr.mxu0 0.0
      %437 = vmatpush2.msra.mxu0 0.0
      %438 = vmatprep.subr.mxu0 0.0
      %439 = vmatpush2.msra.mxu0 0.0
      %440 = vmatprep.subr.mxu0 0.0
      %441 = vmatpush2.msra.mxu0 0.0
      %442 = vmatprep.mubr.f32.mxu0 0.0
      %443 = vmatmul.mubr.f32.gmra.mxu0 %v332
      %v444 = vpop.f32.mrf.mxu0
      %v445 = vadd.f32 0.0, %v444
      %v446 = vpop.f32.mrf.mxu0
      %447 = vmatprep.mubr.f32.mxu0 0.0
      %448 = vmatmul.mubr.f32.gmra.mxu0 %v335
      %v449 = vpop.f32.mrf.mxu0
      %v450 = vadd.f32 0.0, %v449
      %v451 = vpop.f32.mrf.mxu0
      %452 = vmatprep.mubr.f32.mxu0 0.0
      %453 = vmatmul.mubr.f32.gmra.mxu0 %v340
      %v454 = vpop.f32.mrf.mxu0
      %v455 = vadd.f32 0.0, %v454
      %v456 = vpop.f32.mrf.mxu0
      %457 = vmatprep.mubr.f32.mxu0 0.0
      %458 = vmatmul.mubr.f32.gmra.mxu0 %v343
      %v459 = vpop.f32.mrf.mxu0
      %v460 = vadd.f32 0.0, %v459
      %v461 = vpop.f32.mrf.mxu0
      %462 = vmatprep.mubr.f32.mxu0 0.0
      %463 = vmatmul.mubr.f32.gmra.mxu0 %v348
      %v464 = vpop.f32.mrf.mxu0
      %v465 = vadd.f32 0.0, %v464
      %v466 = vpop.f32.mrf.mxu0
      %467 = vmatprep.mubr.f32.mxu0 0.0
      %468 = vmatmul.mubr.f32.gmra.mxu0 %v351
      %v469 = vpop.f32.mrf.mxu0
      %v470 = vadd.f32 0.0, %v469
      %v471 = vpop.f32.mrf.mxu0
      %472 = vmatprep.mubr.f32.mxu0 0.0
      %473 = vmatmul.mubr.f32.gmra.mxu0 %v356
      %v474 = vpop.f32.mrf.mxu0
      %v475 = vadd.f32 0.0, %v474
      %v476 = vpop.f32.mrf.mxu0
      %477 = vmatprep.mubr.f32.mxu0 0.0
      %478 = vmatmul.mubr.f32.gmra.mxu0 %v359
      %v479 = vpop.f32.mrf.mxu0
      %v480 = vadd.f32 0.0, %v479
      %v481 = vpop.f32.mrf.mxu0
      %482 = vdwg.mxu0
      %v483 = vmul.f32 %v445, 0.0625
      %v484 = vmul.f32 %v450, 0.0625
      %v485 = vmul.f32 %v455, 0.0625
      %v486 = vmul.f32 %v460, 0.0625
      %v487 = vmul.f32 %v465, 0.0625
      %v488 = vmul.f32 %v470, 0.0625
      %v489 = vmul.f32 %v475, 0.0625
      %v490 = vmul.f32 %v480, 0.0625
      %v491 = vmul.f32 %v332, %v332
      %v492 = vmul.f32 %v335, %v335
      %v493 = vmul.f32 %v340, %v340
      %v494 = vmul.f32 %v343, %v343
      %v495 = vmul.f32 %v348, %v348
      %v496 = vmul.f32 %v351, %v351
      %v497 = vmul.f32 %v356, %v356
      %v498 = vmul.f32 %v359, %v359
      %499 = vmatprep.subr.mxu0 0.0
      %500 = vmatpush1.msra.mxu0 %v377
      %501 = vmatprep.subr.mxu0 0.0
      %502 = vmatpush1.msra.mxu0 %v376
      %503 = vmatprep.subr.mxu0 0.0
      %504 = vmatpush1.msra.mxu0 %v375
      %505 = vmatprep.subr.mxu0 0.0
      %506 = vmatpush1.msra.mxu0 %v374
      %507 = vmatprep.subr.mxu0 0.0
      %508 = vmatpush1.msra.mxu0 %v373
      %509 = vmatprep.subr.mxu0 0.0
      %510 = vmatpush1.msra.mxu0 %v372
      %511 = vmatprep.subr.mxu0 0.0
      %512 = vmatpush1.msra.mxu0 %v371
      %513 = vmatprep.subr.mxu0 0.0
      %514 = vmatpush1.msra.mxu0 %v370
      %515 = vmatprep.subr.mxu0 0.0
      %516 = vmatpush1.msra.mxu0 %v369
      %517 = vmatprep.subr.mxu0 0.0
      %518 = vmatpush1.msra.mxu0 %v368
      %519 = vmatprep.subr.mxu0 0.0
      %520 = vmatpush1.msra.mxu0 %v367
      %521 = vmatprep.subr.mxu0 0.0
      %522 = vmatpush1.msra.mxu0 %v366
      %523 = vmatprep.subr.mxu0 0.0
      %524 = vmatpush1.msra.mxu0 %v365
      %525 = vmatprep.subr.mxu0 0.0
      %526 = vmatpush1.msra.mxu0 %v364
      %527 = vmatprep.subr.mxu0 0.0
      %528 = vmatpush1.msra.mxu0 %v363
      %529 = vmatprep.subr.mxu0 0.0
      %530 = vmatpush1.msra.mxu0 %v362
      %531 = vmatprep.subr.mxu0 0.0
      %532 = vmatpush2.msra.mxu0 0.0
      %533 = vmatprep.subr.mxu0 0.0
      %534 = vmatpush2.msra.mxu0 0.0
      %535 = vmatprep.subr.mxu0 0.0
      %536 = vmatpush2.msra.mxu0 0.0
      %537 = vmatprep.subr.mxu0 0.0
      %538 = vmatpush2.msra.mxu0 0.0
      %539 = vmatprep.subr.mxu0 0.0
      %540 = vmatpush2.msra.mxu0 0.0
      %541 = vmatprep.subr.mxu0 0.0
      %542 = vmatpush2.msra.mxu0 0.0
      %543 = vmatprep.subr.mxu0 0.0
      %544 = vmatpush2.msra.mxu0 0.0
      %545 = vmatprep.subr.mxu0 0.0
      %546 = vmatpush2.msra.mxu0 0.0
      %547 = vmatprep.subr.mxu0 0.0
      %548 = vmatpush2.msra.mxu0 0.0
      %549 = vmatprep.subr.mxu0 0.0
      %550 = vmatpush2.msra.mxu0 0.0
      %551 = vmatprep.subr.mxu0 0.0
      %552 = vmatpush2.msra.mxu0 0.0
      %553 = vmatprep.subr.mxu0 0.0
      %554 = vmatpush2.msra.mxu0 0.0
      %555 = vmatprep.subr.mxu0 0.0
      %556 = vmatpush2.msra.mxu0 0.0
      %557 = vmatprep.subr.mxu0 0.0
      %558 = vmatpush2.msra.mxu0 0.0
      %559 = vmatprep.subr.mxu0 0.0
      %560 = vmatpush2.msra.mxu0 0.0
      %561 = vmatprep.subr.mxu0 0.0
      %562 = vmatpush2.msra.mxu0 0.0
      %563 = vmatprep.mubr.f32.mxu0 0.0
      %564 = vmatmul.mubr.f32.gmra.mxu0 %v491
      %v565 = vpop.f32.mrf.mxu0
      %v566 = vadd.f32 0.0, %v565
      %v567 = vpop.f32.mrf.mxu0
      %568 = vmatprep.mubr.f32.mxu0 0.0
      %569 = vmatmul.mubr.f32.gmra.mxu0 %v492
      %v570 = vpop.f32.mrf.mxu0
      %v571 = vadd.f32 0.0, %v570
      %v572 = vpop.f32.mrf.mxu0
      %573 = vmatprep.mubr.f32.mxu0 0.0
      %574 = vmatmul.mubr.f32.gmra.mxu0 %v493
      %v575 = vpop.f32.mrf.mxu0
      %v576 = vadd.f32 0.0, %v575
      %v577 = vpop.f32.mrf.mxu0
      %578 = vmatprep.mubr.f32.mxu0 0.0
      %579 = vmatmul.mubr.f32.gmra.mxu0 %v494
      %v580 = vpop.f32.mrf.mxu0
      %v581 = vadd.f32 0.0, %v580
      %v582 = vpop.f32.mrf.mxu0
      %583 = vmatprep.mubr.f32.mxu0 0.0
      %584 = vmatmul.mubr.f32.gmra.mxu0 %v495
      %v585 = vpop.f32.mrf.mxu0
      %v586 = vadd.f32 0.0, %v585
      %v587 = vpop.f32.mrf.mxu0
      %588 = vmatprep.mubr.f32.mxu0 0.0
      %589 = vmatmul.mubr.f32.gmra.mxu0 %v496
      %v590 = vpop.f32.mrf.mxu0
      %v591 = vadd.f32 0.0, %v590
      %v592 = vpop.f32.mrf.mxu0
      %593 = vmatprep.mubr.f32.mxu0 0.0
      %594 = vmatmul.mubr.f32.gmra.mxu0 %v497
      %v595 = vpop.f32.mrf.mxu0
      %v596 = vadd.f32 0.0, %v595
      %v597 = vpop.f32.mrf.mxu0
      %598 = vmatprep.mubr.f32.mxu0 0.0
      %599 = vmatmul.mubr.f32.gmra.mxu0 %v498
      %v600 = vpop.f32.mrf.mxu0
      %v601 = vadd.f32 0.0, %v600
      %v602 = vpop.f32.mrf.mxu0
      %603 = vdwg.mxu0
      %v604 = vmul.f32 %v566, 0.0625
      %v605 = vmul.f32 %v571, 0.0625
      %v606 = vmul.f32 %v576, 0.0625
      %v607 = vmul.f32 %v581, 0.0625
      %v608 = vmul.f32 %v586, 0.0625
      %v609 = vmul.f32 %v591, 0.0625
      %v610 = vmul.f32 %v596, 0.0625
      %v611 = vmul.f32 %v601, 0.0625
      %v612 = vmul.f32 %v483, %v483
      %v613 = vmul.f32 %v484, %v484
      %v614 = vmul.f32 %v485, %v485
      %v615 = vmul.f32 %v486, %v486
      %v616 = vmul.f32 %v487, %v487
      %v617 = vmul.f32 %v488, %v488
      %v618 = vmul.f32 %v489, %v489
      %v619 = vmul.f32 %v490, %v490
      %v620 = vsub.f32 %v604, %v612
      %v621 = vsub.f32 %v605, %v613
      %v622 = vsub.f32 %v606, %v614
      %v623 = vsub.f32 %v607, %v615
      %v624 = vsub.f32 %v608, %v616
      %v625 = vsub.f32 %v609, %v617
      %v626 = vsub.f32 %v610, %v618
      %v627 = vsub.f32 %v611, %v619
      %v628 = vmax.f32 %v620, 0.0
      %v629 = vmax.f32 %v621, 0.0
      %v630 = vmax.f32 %v622, 0.0
      %v631 = vmax.f32 %v623, 0.0
      %v632 = vmax.f32 %v624, 0.0
      %v633 = vmax.f32 %v625, 0.0
      %v634 = vmax.f32 %v626, 0.0
      %v635 = vmax.f32 %v627, 0.0
      %v636 = vadd.f32 %v628, 1e-05
      %v637 = vadd.f32 %v629, 1e-05
      %v638 = vadd.f32 %v630, 1e-05
      %v639 = vadd.f32 %v631, 1e-05
      %v640 = vadd.f32 %v632, 1e-05
      %v641 = vadd.f32 %v633, 1e-05
      %v642 = vadd.f32 %v634, 1e-05
      %v643 = vadd.f32 %v635, 1e-05
      %v644 = vrsqrt.pop %v636
      %v645 = vrsqrt.pop %v637
      %v646 = vrsqrt.pop %v638
      %v647 = vrsqrt.pop %v639
      %v648 = vrsqrt.pop %v640
      %v649 = vrsqrt.pop %v641
      %v650 = vrsqrt.pop %v642
      %v651 = vrsqrt.pop %v643
      %v652 = vld [vmem:[%s3] sm:$0xff]
      %vm653 = vcmask 64512
      %v655 = vsel %vm653, %v483, 0
      %v658 = vsel %vm653, %v484, 0
      %v661 = vsel %vm653, %v485, 0
      %v664 = vsel %vm653, %v486, 0
      %v667 = vsel %vm653, %v487, 0
      %v670 = vsel %vm653, %v488, 0
      %v673 = vsel %vm653, %v489, 0
      %v676 = vsel %vm653, %v490, 0
      %678 = vmatprep.subr.mxu0 0.0
      %679 = vmatpush1.msra.mxu0 0.0
      %680 = vmatprep.subr.mxu0 0.0
      %681 = vmatpush1.msra.mxu0 0.0
      %682 = vmatprep.subr.mxu0 0.0
      %683 = vmatpush1.msra.mxu0 0.0
      %684 = vmatprep.subr.mxu0 0.0
      %685 = vmatpush1.msra.mxu0 0.0
      %686 = vmatprep.subr.mxu0 0.0
      %687 = vmatpush1.msra.mxu0 0.0
      %688 = vmatprep.subr.mxu0 0.0
      %689 = vmatpush1.msra.mxu0 0.0
      %690 = vmatprep.subr.mxu0 0.0
      %691 = vmatpush1.msra.mxu0 0.0
      %692 = vmatprep.subr.mxu0 0.0
      %693 = vmatpush1.msra.mxu0 0.0
      %694 = vmatprep.subr.mxu0 0.0
      %695 = vmatpush1.msra.mxu0 0.0
      %696 = vmatprep.subr.mxu0 0.0
      %697 = vmatpush1.msra.mxu0 0.0
      %698 = vmatprep.subr.mxu0 0.0
      %699 = vmatpush1.msra.mxu0 0.0
      %700 = vmatprep.subr.mxu0 0.0
      %701 = vmatpush1.msra.mxu0 0.0
      %702 = vmatprep.subr.mxu0 0.0
      %703 = vmatpush1.msra.mxu0 0.0
      %704 = vmatprep.subr.mxu0 0.0
      %705 = vmatpush1.msra.mxu0 0.0
      %706 = vmatprep.subr.mxu0 0.0
      %707 = vmatpush1.msra.mxu0 0.0
      %708 = vmatprep.subr.mxu0 0.0
      %709 = vmatpush1.msra.mxu0 %v652
      %710 = vmatprep.subr.mxu0 0.0
      %711 = vmatpush2.msra.mxu0 0.0
      %712 = vmatprep.subr.mxu0 0.0
      %713 = vmatpush2.msra.mxu0 0.0
      %714 = vmatprep.subr.mxu0 0.0
      %715 = vmatpush2.msra.mxu0 0.0
      %716 = vmatprep.subr.mxu0 0.0
      %717 = vmatpush2.msra.mxu0 0.0
      %718 = vmatprep.subr.mxu0 0.0
      %719 = vmatpush2.msra.mxu0 0.0
      %720 = vmatprep.subr.mxu0 0.0
      %721 = vmatpush2.msra.mxu0 0.0
      %722 = vmatprep.subr.mxu0 0.0
      %723 = vmatpush2.msra.mxu0 0.0
      %724 = vmatprep.subr.mxu0 0.0
      %725 = vmatpush2.msra.mxu0 0.0
      %726 = vmatprep.subr.mxu0 0.0
      %727 = vmatpush2.msra.mxu0 0.0
      %728 = vmatprep.subr.mxu0 0.0
      %729 = vmatpush2.msra.mxu0 0.0
      %730 = vmatprep.subr.mxu0 0.0
      %731 = vmatpush2.msra.mxu0 0.0
      %732 = vmatprep.subr.mxu0 0.0
      %733 = vmatpush2.msra.mxu0 0.0
      %734 = vmatprep.subr.mxu0 0.0
      %735 = vmatpush2.msra.mxu0 0.0
      %736 = vmatprep.subr.mxu0 0.0
      %737 = vmatpush2.msra.mxu0 0.0
      %738 = vmatprep.subr.mxu0 0.0
      %739 = vmatpush2.msra.mxu0 0.0
      %740 = vmatprep.subr.mxu0 0.0
      %741 = vmatpush2.msra.mxu0 0.0
      %742 = vmatprep.mubr.f32.mxu0 0.0
      %743 = vmatmul.mubr.f32.gmra.mxu0 %v655
      %v744 = vpop.f32.mrf.mxu0
      %v745 = vadd.f32 0.0, %v744
      %v746 = vpop.f32.mrf.mxu0
      %747 = vmatprep.mubr.f32.mxu0 0.0
      %748 = vmatmul.mubr.f32.gmra.mxu0 %v658
      %v749 = vpop.f32.mrf.mxu0
      %v750 = vadd.f32 0.0, %v749
      %v751 = vpop.f32.mrf.mxu0
      %752 = vmatprep.mubr.f32.mxu0 0.0
      %753 = vmatmul.mubr.f32.gmra.mxu0 %v661
      %v754 = vpop.f32.mrf.mxu0
      %v755 = vadd.f32 0.0, %v754
      %v756 = vpop.f32.mrf.mxu0
      %757 = vmatprep.mubr.f32.mxu0 0.0
      %758 = vmatmul.mubr.f32.gmra.mxu0 %v664
      %v759 = vpop.f32.mrf.mxu0
      %v760 = vadd.f32 0.0, %v759
      %v761 = vpop.f32.mrf.mxu0
      %762 = vmatprep.mubr.f32.mxu0 0.0
      %763 = vmatmul.mubr.f32.gmra.mxu0 %v667
      %v764 = vpop.f32.mrf.mxu0
      %v765 = vadd.f32 0.0, %v764
      %v766 = vpop.f32.mrf.mxu0
      %767 = vmatprep.mubr.f32.mxu0 0.0
      %768 = vmatmul.mubr.f32.gmra.mxu0 %v670
      %v769 = vpop.f32.mrf.mxu0
      %v770 = vadd.f32 0.0, %v769
      %v771 = vpop.f32.mrf.mxu0
      %772 = vmatprep.mubr.f32.mxu0 0.0
      %773 = vmatmul.mubr.f32.gmra.mxu0 %v673
      %v774 = vpop.f32.mrf.mxu0
      %v775 = vadd.f32 0.0, %v774
      %v776 = vpop.f32.mrf.mxu0
      %777 = vmatprep.mubr.f32.mxu0 0.0
      %778 = vmatmul.mubr.f32.gmra.mxu0 %v676
      %v779 = vpop.f32.mrf.mxu0
      %v780 = vadd.f32 0.0, %v779
      %v781 = vpop.f32.mrf.mxu0
      %782 = vdwg.mxu0
      %v784 = vsel %vm653, %v644, 0
      %v787 = vsel %vm653, %v645, 0
      %v790 = vsel %vm653, %v646, 0
      %v793 = vsel %vm653, %v647, 0
      %v796 = vsel %vm653, %v648, 0
      %v799 = vsel %vm653, %v649, 0
      %v802 = vsel %vm653, %v650, 0
      %v805 = vsel %vm653, %v651, 0
      %807 = vmatprep.subr.mxu0 0.0
      %808 = vmatpush1.msra.mxu0 0.0
      %809 = vmatprep.subr.mxu0 0.0
      %810 = vmatpush1.msra.mxu0 0.0
      %811 = vmatprep.subr.mxu0 0.0
      %812 = vmatpush1.msra.mxu0 0.0
      %813 = vmatprep.subr.mxu0 0.0
      %814 = vmatpush1.msra.mxu0 0.0
      %815 = vmatprep.subr.mxu0 0.0
      %816 = vmatpush1.msra.mxu0 0.0
      %817 = vmatprep.subr.mxu0 0.0
      %818 = vmatpush1.msra.mxu0 0.0
      %819 = vmatprep.subr.mxu0 0.0
      %820 = vmatpush1.msra.mxu0 0.0
      %821 = vmatprep.subr.mxu0 0.0
      %822 = vmatpush1.msra.mxu0 0.0
      %823 = vmatprep.subr.mxu0 0.0
      %824 = vmatpush1.msra.mxu0 0.0
      %825 = vmatprep.subr.mxu0 0.0
      %826 = vmatpush1.msra.mxu0 0.0
      %827 = vmatprep.subr.mxu0 0.0
      %828 = vmatpush1.msra.mxu0 0.0
      %829 = vmatprep.subr.mxu0 0.0
      %830 = vmatpush1.msra.mxu0 0.0
      %831 = vmatprep.subr.mxu0 0.0
      %832 = vmatpush1.msra.mxu0 0.0
      %833 = vmatprep.subr.mxu0 0.0
      %834 = vmatpush1.msra.mxu0 0.0
      %835 = vmatprep.subr.mxu0 0.0
      %836 = vmatpush1.msra.mxu0 0.0
      %837 = vmatprep.subr.mxu0 0.0
      %838 = vmatpush1.msra.mxu0 %v652
      %839 = vmatprep.subr.mxu0 0.0
      %840 = vmatpush2.msra.mxu0 0.0
      %841 = vmatprep.subr.mxu0 0.0
      %842 = vmatpush2.msra.mxu0 0.0
      %843 = vmatprep.subr.mxu0 0.0
      %844 = vmatpush2.msra.mxu0 0.0
      %845 = vmatprep.subr.mxu0 0.0
      %846 = vmatpush2.msra.mxu0 0.0
      %847 = vmatprep.subr.mxu0 0.0
      %848 = vmatpush2.msra.mxu0 0.0
      %849 = vmatprep.subr.mxu0 0.0
      %850 = vmatpush2.msra.mxu0 0.0
      %851 = vmatprep.subr.mxu0 0.0
      %852 = vmatpush2.msra.mxu0 0.0
      %853 = vmatprep.subr.mxu0 0.0
      %854 = vmatpush2.msra.mxu0 0.0
      %855 = vmatprep.subr.mxu0 0.0
      %856 = vmatpush2.msra.mxu0 0.0
      %857 = vmatprep.subr.mxu0 0.0
      %858 = vmatpush2.msra.mxu0 0.0
      %859 = vmatprep.subr.mxu0 0.0
      %860 = vmatpush2.msra.mxu0 0.0
      %861 = vmatprep.subr.mxu0 0.0
      %862 = vmatpush2.msra.mxu0 0.0
      %863 = vmatprep.subr.mxu0 0.0
      %864 = vmatpush2.msra.mxu0 0.0
      %865 = vmatprep.subr.mxu0 0.0
      %866 = vmatpush2.msra.mxu0 0.0
      %867 = vmatprep.subr.mxu0 0.0
      %868 = vmatpush2.msra.mxu0 0.0
      %869 = vmatprep.subr.mxu0 0.0
      %870 = vmatpush2.msra.mxu0 0.0
      %871 = vmatprep.mubr.f32.mxu0 0.0
      %872 = vmatmul.mubr.f32.gmra.mxu0 %v784
      %v873 = vpop.f32.mrf.mxu0
      %v874 = vadd.f32 0.0, %v873
      %v875 = vpop.f32.mrf.mxu0
      %876 = vmatprep.mubr.f32.mxu0 0.0
      %877 = vmatmul.mubr.f32.gmra.mxu0 %v787
      %v878 = vpop.f32.mrf.mxu0
      %v879 = vadd.f32 0.0, %v878
      %v880 = vpop.f32.mrf.mxu0
      %881 = vmatprep.mubr.f32.mxu0 0.0
      %882 = vmatmul.mubr.f32.gmra.mxu0 %v790
      %v883 = vpop.f32.mrf.mxu0
      %v884 = vadd.f32 0.0, %v883
      %v885 = vpop.f32.mrf.mxu0
      %886 = vmatprep.mubr.f32.mxu0 0.0
      %887 = vmatmul.mubr.f32.gmra.mxu0 %v793
      %v888 = vpop.f32.mrf.mxu0
      %v889 = vadd.f32 0.0, %v888
      %v890 = vpop.f32.mrf.mxu0
      %891 = vmatprep.mubr.f32.mxu0 0.0
      %892 = vmatmul.mubr.f32.gmra.mxu0 %v796
      %v893 = vpop.f32.mrf.mxu0
      %v894 = vadd.f32 0.0, %v893
      %v895 = vpop.f32.mrf.mxu0
      %896 = vmatprep.mubr.f32.mxu0 0.0
      %897 = vmatmul.mubr.f32.gmra.mxu0 %v799
      %v898 = vpop.f32.mrf.mxu0
      %v899 = vadd.f32 0.0, %v898
      %v900 = vpop.f32.mrf.mxu0
      %901 = vmatprep.mubr.f32.mxu0 0.0
      %902 = vmatmul.mubr.f32.gmra.mxu0 %v802
      %v903 = vpop.f32.mrf.mxu0
      %v904 = vadd.f32 0.0, %v903
      %v905 = vpop.f32.mrf.mxu0
      %906 = vmatprep.mubr.f32.mxu0 0.0
      %907 = vmatmul.mubr.f32.gmra.mxu0 %v805
      %v908 = vpop.f32.mrf.mxu0
      %v909 = vadd.f32 0.0, %v908
      %v910 = vpop.f32.mrf.mxu0
      %911 = vdwg.mxu0
      %v912 = vsub.f32 %v332, %v745
      %v913 = vsub.f32 %v335, %v750
      %v914 = vsub.f32 %v340, %v755
      %v915 = vsub.f32 %v343, %v760
      %v916 = vsub.f32 %v348, %v765
      %v917 = vsub.f32 %v351, %v770
      %v918 = vsub.f32 %v356, %v775
      %v919 = vsub.f32 %v359, %v780
      %v920 = vmul.f32 %v912, %v874
      %v921 = vmul.f32 %v913, %v879
      %v922 = vmul.f32 %v914, %v884
      %v923 = vmul.f32 %v915, %v889
      %v924 = vmul.f32 %v916, %v894
      %v925 = vmul.f32 %v917, %v899
      %v926 = vmul.f32 %v918, %v904
      %v927 = vmul.f32 %v919, %v909
      %v928 = vld [vmem:[%s4] sm:$0x1]
      %v930 = vlaneseq
      %v931 = vshrl.u32 %v930, 7
      %v932 = vsub.s32 0, %v931
      %v933 = vrot.slane %v928, %v932
      %v935 = vmul.f32 %v920, %v933
      %v936 = vmul.f32 %v921, %v933
      %v937 = vmul.f32 %v922, %v933
      %v938 = vmul.f32 %v923, %v933
      %v939 = vmul.f32 %v924, %v933
      %v940 = vmul.f32 %v925, %v933
      %v941 = vmul.f32 %v926, %v933
      %v942 = vmul.f32 %v927, %v933
      %v943 = vld [vmem:[%s5] sm:$0x1]
      %v945 = vlaneseq
      %v946 = vshrl.u32 %v945, 7
      %v947 = vsub.s32 0, %v946
      %v948 = vrot.slane %v943, %v947
      %v950 = vadd.f32 %v935, %v948
      %v951 = vadd.f32 %v936, %v948
      %v952 = vadd.f32 %v937, %v948
      %v953 = vadd.f32 %v938, %v948
      %v954 = vadd.f32 %v939, %v948
      %v955 = vadd.f32 %v940, %v948
      %v956 = vadd.f32 %v941, %v948
      %v957 = vadd.f32 %v942, %v948
      %958 = vst [vmem:[%s253] sm:$0xff] %v950
      %959 = vst [vmem:[%s253 + $0x8] sm:$0xff] %v951
      %960 = vst [vmem:[%s253 + $0x10] sm:$0xff] %v952
      %961 = vst [vmem:[%s253 + $0x18] sm:$0xff] %v953
      %962 = vst [vmem:[%s253 + $0x20] sm:$0xff] %v954
      %963 = vst [vmem:[%s253 + $0x28] sm:$0xff] %v955
      %964 = vst [vmem:[%s253 + $0x30] sm:$0xff] %v956
      %965 = vst [vmem:[%s253 + $0x38] sm:$0xff] %v957
      %s966 = smul.u32 8, %s17
      %p967 = scmp.lt.s32.totalorder %s966, 15
      %s968 = scalar_select %p967, %s966, 15
      %s969 = smul.addr %s968, 8
      %s970 = scalar_lea.vmem %s6, %s969
      // Predicated region
      $region45: #{a_call__.9} parent=43 // pred_check
        %p971 = pneg %p166
      $region46: #{a_call__.9} parent=43 // pred_check_branch
        %973 = sbr.rel (%p971) target = $region48
      $region47: #{a_call__.9} parent=43 // pred_region
        %s974 = smul.u32 8, %s17
      $region48: #{a_call__.9} parent=43 // pred_fallthru
        _
    $region44: #{a_call__.9} parent=5 // pred_fallthru
      _
    %p975 = scmp.le.s32.totalorder 2, %s12
    // Predicated region
    $region49: #{a_call__.9} parent=5 // pred_check
      %p976 = pneg %p975
    $region50: #{a_call__.9} parent=5 // pred_check_branch
      %978 = sbr.rel (%p976) target = $region52
    $region51: #{a_call__.9} parent=5 // pred_region
      %s979 = ssub.s32 %s12, 2
      // Predicated region
      $region53: #{a_call__.9} parent=51 // pred_check
        %p980 = pneg %p172
      $region54: #{a_call__.9} parent=51 // pred_check_branch
        %982 = sbr.rel (%p980) target = $region56
      $region55: #{a_call__.9} parent=51 // pred_region
        %s983 = smul.u32 8, %s18
        %p984 = scmp.lt.s32.totalorder %s983, 15
        %s985 = scalar_select %p984, %s983, 15
        %s986 = smul.addr %s985, 8
        %s987 = scalar_lea.vmem %s6, %s986
      $region56: #{a_call__.9} parent=51 // pred_fallthru
        _
    $region52: #{a_call__.9} parent=5 // pred_fallthru
      _
  $region6: #{a_call__.9} parent=0 // loop_footer
    %s16 = sadd.s32 1, %s12
  $region7: #{a_call__.9} parent=0 // loop_footer_branch
    %11 = sbr.rel target = $region3
  $region8: #{a_call__.9} parent=0 // loop_exit
    _

// kernel: a_call__.5
$region0: #{a_call__.5}
  #allocation0 [shape = 'u32[]', space=smem, size = 0x4, offset = 0x4, fixed_abs, tag = 'smem constant byte address 0x4 - core index']
  #allocation1 [shape = 'u32[144,128]{1,0:T(1,128)}', space=vmem, size = 0x12000, scoped, tag = 'internal scratch']
  %s0 = inlined_call_operand.vmem [shape: f32[16,8,32], index: 0, kind: input, shape index: {}]
  %s1 = inlined_call_operand.vmem [shape: f32[1,32], index: 1, kind: input, shape index: {}]
  %s2 = inlined_call_operand.vmem [shape: f32[1,32], index: 2, kind: input, shape index: {}]
  %s3 = inlined_call_operand.vmem [shape: bf16[32,96], index: 3, kind: input, shape index: {}]
  %s4 = inlined_call_operand.vmem [shape: f32[1,96], index: 4, kind: input, shape index: {}]
  %s5 = inlined_call_operand.vmem [shape: bf16[4,8,8], index: 5, kind: input, shape index: {}]
  %s6 = inlined_call_operand.vmem [shape: bf16[32,32], index: 6, kind: input, shape index: {}]
  %s7 = inlined_call_operand.vmem [shape: f32[1,32], index: 7, kind: input, shape index: {}]
  %s8 = inlined_call_operand.vmem [shape: f32[16,8,32], index: 8, kind: output, shape index: {}]
  %s9 = sld [smem:[#allocation0]]
  $region65: #{a_call__.5} parent=0
    _
  %s11 = ssub.s32 1, %s9
  %s12 = scalar_select 0, %s11, %s9
  loop: start=0, step=1, limit=4
  $region2: #{a_call__.5} parent=0 // loop_pre_header
    _
  $region3: #{a_call__.5} parent=0 // loop_header
    %s14 = sphi 0, %s18
    %p15 = scmp.ge.s32.totalorder %s14, 4
    %s24 = sphi 0, %s26
    %s27 = sphi 0, %s24
    %s28 = sphi 0, %s27
    %s44 = sphi 0, %s28
    %s48 = sphi 0, %s48
    %s50 = sphi 0, %s48
    %s51 = sphi 0, %s50
    %s65 = sphi 0, %s51
    %s69 = sphi 0, %s69
    %s71 = sphi 0, %s69
    %s72 = sphi 0, %s71
    %s86 = sphi 0, %s72
    %s90 = sphi 0, %s90
    %s92 = sphi 0, %s90
    %s93 = sphi 0, %s92
    %s107 = sphi 0, %s93
    %s111 = sphi 0, %s111
    %s113 = sphi 0, %s111
    %s114 = sphi 0, %s113
    %s128 = sphi 0, %s114
    %s132 = sphi 0, %s132
    %s134 = sphi 0, %s132
    %s135 = sphi 0, %s134
    %s149 = sphi 0, %s135
    %s153 = sphi 0, %s153
    %s155 = sphi 0, %s153
    %s156 = sphi 0, %s155
    %s170 = sphi 0, %s156
    %s174 = sphi 0, %s174
    %s176 = sphi 0, %s174
    %s177 = sphi 0, %s176
    %s191 = sphi 0, %s177
    %s197 = sphi 0, %s199
    %s200 = sphi 0, %s197
    %s201 = sphi 0, %s200
    %s217 = sphi 0, %s201
  $region4: #{a_call__.5} parent=0 // loop_header_branch
    %17 = sbr.rel (%p15) target = $region8
  $region5: #{a_call__.5} parent=0 // loop_body
    %s19 = ssub.s32 %s14, 1
    %s20 = ssub.s32 %s14, 2
    %s21 = sadd.s32 %s14, 1
    %s22 = ssub.s32 %s14, %s21
    %p23 = scmp.eq.s32.totalorder %s22, 0
    %s25 = sadd.s32 %s24, 1
    %s26 = scalar_select %p23, %s24, %s25
    %p29 = pneg %p23
    %p30 = scmp.eq.s32.totalorder %s14, 1
    %p31 = por %p29, %p30
    %p32 = scmp.ne.s32.totalorder %s24, %s27
    %p33 = scmp.eq.s32.totalorder %s14, 0
    %p34 = por %p32, %p33
    %p35 = scmp.ne.s32.totalorder %s24, %s27
    %p36 = scmp.eq.s32.totalorder %s19, 1
    %p37 = por %p35, %p36
    %p38 = scmp.ne.s32.totalorder %s27, %s28
    %p39 = scmp.eq.s32.totalorder %s19, 0
    %p40 = por %p38, %p39
    %p41 = scmp.ne.s32.totalorder %s27, %s28
    %p42 = scmp.eq.s32.totalorder %s20, 1
    %p43 = por %p41, %p42
    %p45 = scmp.ne.s32.totalorder %s28, %s44
    %p46 = scmp.eq.s32.totalorder %s20, 0
    %p47 = por %p45, %p46
    %s49 = sadd.s32 %s48, 1
    %p52 = scmp.eq.s32.totalorder %s14, 1
    %p53 = scmp.ne.s32.totalorder %s48, %s50
    %p54 = scmp.eq.s32.totalorder %s14, 0
    %p55 = por %p53, %p54
    %p56 = scmp.ne.s32.totalorder %s48, %s50
    %p57 = scmp.eq.s32.totalorder %s19, 1
    %p58 = por %p56, %p57
    %p59 = scmp.ne.s32.totalorder %s50, %s51
    %p60 = scmp.eq.s32.totalorder %s19, 0
    %p61 = por %p59, %p60
    %p62 = scmp.ne.s32.totalorder %s50, %s51
    %p63 = scmp.eq.s32.totalorder %s20, 1
    %p64 = por %p62, %p63
    %p66 = scmp.ne.s32.totalorder %s51, %s65
    %p67 = scmp.eq.s32.totalorder %s20, 0
    %p68 = por %p66, %p67
    %s70 = sadd.s32 %s69, 1
    %p73 = scmp.eq.s32.totalorder %s14, 1
    %p74 = scmp.ne.s32.totalorder %s69, %s71
    %p75 = scmp.eq.s32.totalorder %s14, 0
    %p76 = por %p74, %p75
    %p77 = scmp.ne.s32.totalorder %s69, %s71
    %p78 = scmp.eq.s32.totalorder %s19, 1
    %p79 = por %p77, %p78
    %p80 = scmp.ne.s32.totalorder %s71, %s72
    %p81 = scmp.eq.s32.totalorder %s19, 0
    %p82 = por %p80, %p81
    %p83 = scmp.ne.s32.totalorder %s71, %s72
    %p84 = scmp.eq.s32.totalorder %s20, 1
    %p85 = por %p83, %p84
    %p87 = scmp.ne.s32.totalorder %s72, %s86
    %p88 = scmp.eq.s32.totalorder %s20, 0
    %p89 = por %p87, %p88
    %s91 = sadd.s32 %s90, 1
    %p94 = scmp.eq.s32.totalorder %s14, 1
    %p95 = scmp.ne.s32.totalorder %s90, %s92
    %p96 = scmp.eq.s32.totalorder %s14, 0
    %p97 = por %p95, %p96
    %p98 = scmp.ne.s32.totalorder %s90, %s92
    %p99 = scmp.eq.s32.totalorder %s19, 1
    %p100 = por %p98, %p99
    %p101 = scmp.ne.s32.totalorder %s92, %s93
    %p102 = scmp.eq.s32.totalorder %s19, 0
    %p103 = por %p101, %p102
    %p104 = scmp.ne.s32.totalorder %s92, %s93
    %p105 = scmp.eq.s32.totalorder %s20, 1
    %p106 = por %p104, %p105
    %p108 = scmp.ne.s32.totalorder %s93, %s107
    %p109 = scmp.eq.s32.totalorder %s20, 0
    %p110 = por %p108, %p109
    %s112 = sadd.s32 %s111, 1
    %p115 = scmp.eq.s32.totalorder %s14, 1
    %p116 = scmp.ne.s32.totalorder %s111, %s113
    %p117 = scmp.eq.s32.totalorder %s14, 0
    %p118 = por %p116, %p117
    %p119 = scmp.ne.s32.totalorder %s111, %s113
    %p120 = scmp.eq.s32.totalorder %s19, 1
    %p121 = por %p119, %p120
    %p122 = scmp.ne.s32.totalorder %s113, %s114
    %p123 = scmp.eq.s32.totalorder %s19, 0
    %p124 = por %p122, %p123
    %p125 = scmp.ne.s32.totalorder %s113, %s114
    %p126 = scmp.eq.s32.totalorder %s20, 1
    %p127 = por %p125, %p126
    %p129 = scmp.ne.s32.totalorder %s114, %s128
    %p130 = scmp.eq.s32.totalorder %s20, 0
    %p131 = por %p129, %p130
    %s133 = sadd.s32 %s132, 1
    %p136 = scmp.eq.s32.totalorder %s14, 1
    %p137 = scmp.ne.s32.totalorder %s132, %s134
    %p138 = scmp.eq.s32.totalorder %s14, 0
    %p139 = por %p137, %p138
    %p140 = scmp.ne.s32.totalorder %s132, %s134
    %p141 = scmp.eq.s32.totalorder %s19, 1
    %p142 = por %p140, %p141
    %p143 = scmp.ne.s32.totalorder %s134, %s135
    %p144 = scmp.eq.s32.totalorder %s19, 0
    %p145 = por %p143, %p144
    %p146 = scmp.ne.s32.totalorder %s134, %s135
    %p147 = scmp.eq.s32.totalorder %s20, 1
    %p148 = por %p146, %p147
    %p150 = scmp.ne.s32.totalorder %s135, %s149
    %p151 = scmp.eq.s32.totalorder %s20, 0
    %p152 = por %p150, %p151
    %s154 = sadd.s32 %s153, 1
    %p157 = scmp.eq.s32.totalorder %s14, 1
    %p158 = scmp.ne.s32.totalorder %s153, %s155
    %p159 = scmp.eq.s32.totalorder %s14, 0
    %p160 = por %p158, %p159
    %p161 = scmp.ne.s32.totalorder %s153, %s155
    %p162 = scmp.eq.s32.totalorder %s19, 1
    %p163 = por %p161, %p162
    %p164 = scmp.ne.s32.totalorder %s155, %s156
    %p165 = scmp.eq.s32.totalorder %s19, 0
    %p166 = por %p164, %p165
    %p167 = scmp.ne.s32.totalorder %s155, %s156
    %p168 = scmp.eq.s32.totalorder %s20, 1
    %p169 = por %p167, %p168
    %p171 = scmp.ne.s32.totalorder %s156, %s170
    %p172 = scmp.eq.s32.totalorder %s20, 0
    %p173 = por %p171, %p172
    %s175 = sadd.s32 %s174, 1
    %p178 = scmp.eq.s32.totalorder %s14, 1
    %p179 = scmp.ne.s32.totalorder %s174, %s176
    %p180 = scmp.eq.s32.totalorder %s14, 0
    %p181 = por %p179, %p180
    %p182 = scmp.ne.s32.totalorder %s174, %s176
    %p183 = scmp.eq.s32.totalorder %s19, 1
    %p184 = por %p182, %p183
    %p185 = scmp.ne.s32.totalorder %s176, %s177
    %p186 = scmp.eq.s32.totalorder %s19, 0
    %p187 = por %p185, %p186
    %p188 = scmp.ne.s32.totalorder %s176, %s177
    %p189 = scmp.eq.s32.totalorder %s20, 1
    %p190 = por %p188, %p189
    %p192 = scmp.ne.s32.totalorder %s177, %s191
    %p193 = scmp.eq.s32.totalorder %s20, 0
    %p194 = por %p192, %p193
    %s195 = ssub.s32 %s14, %s21
    %p196 = scmp.eq.s32.totalorder %s195, 0
    %s198 = sadd.s32 %s197, 1
    %s199 = scalar_select %p196, %s197, %s198
    %p202 = pneg %p196
    %p203 = scmp.eq.s32.totalorder %s14, 1
    %p204 = por %p202, %p203
    %p205 = scmp.ne.s32.totalorder %s197, %s200
    %p206 = scmp.eq.s32.totalorder %s14, 0
    %p207 = por %p205, %p206
    %p208 = scmp.ne.s32.totalorder %s197, %s200
    %p209 = scmp.eq.s32.totalorder %s19, 1
    %p210 = por %p208, %p209
    %p211 = scmp.ne.s32.totalorder %s200, %s201
    %p212 = scmp.eq.s32.totalorder %s19, 0
    %p213 = por %p211, %p212
    %p214 = scmp.ne.s32.totalorder %s200, %s201
    %p215 = scmp.eq.s32.totalorder %s20, 1
    %p216 = por %p214, %p215
    %p218 = scmp.ne.s32.totalorder %s201, %s217
    %p219 = scmp.eq.s32.totalorder %s20, 0
    %p220 = por %p218, %p219
    %p221 = scmp.le.s32.totalorder 1, %s14
    %p222 = scmp.lt.s32.totalorder %s14, 3
    %p223 = pnand %p221, %p222
    %p224 = pneg %p223
    // Predicated region
    $region9: #{a_call__.5} parent=5 // pred_check
      _
    $region10: #{a_call__.5} parent=5 // pred_check_branch
      %226 = sbr.rel (%p223) target = $region12
    $region11: #{a_call__.5} parent=5 // pred_region
      %s227 = ssub.s32 %s14, 1
      // Predicated region
      $region13: #{a_call__.5} parent=11 // pred_check
        %p228 = pneg %p61
      $region14: #{a_call__.5} parent=11 // pred_check_branch
        %230 = sbr.rel (%p228) target = $region16
      $region15: #{a_call__.5} parent=11 // pred_region
        _
      $region16: #{a_call__.5} parent=11 // pred_fallthru
        _
      // Predicated region
      $region17: #{a_call__.5} parent=11 // pred_check
        %p231 = pneg %p82
      $region18: #{a_call__.5} parent=11 // pred_check_branch
        %233 = sbr.rel (%p231) target = $region20
      $region19: #{a_call__.5} parent=11 // pred_region
        _
      $region20: #{a_call__.5} parent=11 // pred_fallthru
        _
      // Predicated region
      $region21: #{a_call__.5} parent=11 // pred_check
        %p234 = pneg %p103
      $region22: #{a_call__.5} parent=11 // pred_check_branch
        %236 = sbr.rel (%p234) target = $region24
      $region23: #{a_call__.5} parent=11 // pred_region
        _
      $region24: #{a_call__.5} parent=11 // pred_fallthru
        _
      // Predicated region
      $region25: #{a_call__.5} parent=11 // pred_check
        %p237 = pneg %p124
      $region26: #{a_call__.5} parent=11 // pred_check_branch
        %239 = sbr.rel (%p237) target = $region28
      $region27: #{a_call__.5} parent=11 // pred_region
        _
      $region28: #{a_call__.5} parent=11 // pred_fallthru
        _
      // Predicated region
      $region29: #{a_call__.5} parent=11 // pred_check
        %p240 = pneg %p145
      $region30: #{a_call__.5} parent=11 // pred_check_branch
        %242 = sbr.rel (%p240) target = $region32
      $region31: #{a_call__.5} parent=11 // pred_region
        _
      $region32: #{a_call__.5} parent=11 // pred_fallthru
        _
      // Predicated region
      $region33: #{a_call__.5} parent=11 // pred_check
        %p243 = pneg %p166
      $region34: #{a_call__.5} parent=11 // pred_check_branch
        %245 = sbr.rel (%p243) target = $region36
      $region35: #{a_call__.5} parent=11 // pred_region
        _
      $region36: #{a_call__.5} parent=11 // pred_fallthru
        _
      // Predicated region
      $region37: #{a_call__.5} parent=11 // pred_check
        %p246 = pneg %p187
      $region38: #{a_call__.5} parent=11 // pred_check_branch
        %248 = sbr.rel (%p246) target = $region40
      $region39: #{a_call__.5} parent=11 // pred_region
        _
      $region40: #{a_call__.5} parent=11 // pred_fallthru
        _
    $region12: #{a_call__.5} parent=5 // pred_fallthru
      _
    %p249 = scmp.lt.s32.totalorder %s14, 2
    // Predicated region
    $region41: #{a_call__.5} parent=5 // pred_check
      %p250 = pneg %p249
    $region42: #{a_call__.5} parent=5 // pred_check_branch
      %252 = sbr.rel (%p250) target = $region44
    $region43: #{a_call__.5} parent=5 // pred_region
      // Predicated region
      $region45: #{a_call__.5} parent=43 // pred_check
        %p253 = pneg %p34
      $region46: #{a_call__.5} parent=43 // pred_check_branch
        %255 = sbr.rel (%p253) target = $region48
      $region47: #{a_call__.5} parent=43 // pred_region
        %s256 = smul.u32 8, %s14
        %p257 = scmp.lt.s32.totalorder %s256, 15
        %s258 = scalar_select %p257, %s256, 15
        %s259 = smul.addr %s258, 8
        %s260 = scalar_lea.vmem %s0, %s259
        %s261 = smul.u32 8, %s14
      $region48: #{a_call__.5} parent=43 // pred_fallthru
        _
    $region44: #{a_call__.5} parent=5 // pred_fallthru
      _
    %p262 = scmp.le.s32.totalorder 1, %s14
    %p263 = scmp.lt.s32.totalorder %s14, 3
    %p264 = pnand %p262, %p263
    %p265 = pneg %p264
    // Predicated region
    $region49: #{a_call__.5} parent=5 // pred_check
      _
    $region50: #{a_call__.5} parent=5 // pred_check_branch
      %267 = sbr.rel (%p264) target = $region52
    $region51: #{a_call__.5} parent=5 // pred_region
      %s268 = ssub.s32 %s14, 1
      %s269 = smul.u32 8, %s19
      %p270 = scmp.lt.s32.totalorder %s269, 15
      %s271 = scalar_select %p270, %s269, 15
      %s272 = smul.addr %s271, 8
      %s273 = scalar_lea.vmem %s0, %s272
      %p274 = pneg %p40
      %p275 = pneg %p37
      %p276 = pneg %p61
      %p277 = pneg %p58
      %p278 = pneg %p82
      %p279 = pneg %p79
      %p280 = pneg %p103
      %p281 = pneg %p100
      %p282 = pneg %p124
      %p283 = pneg %p121
      %p284 = pneg %p145
      %p285 = pneg %p142
      %p286 = pneg %p166
      %p287 = pneg %p163
      %p288 = pneg %p187
      %p289 = pneg %p184
      %p290 = pneg %p213
      %p291 = pneg %p210
      %s292 = smul.u32 8, %s19
      %p293 = scmp.lt.s32.totalorder %s292, 15
      %s294 = scalar_select %p293, %s292, 15
      %s295 = smul.addr %s294, 8
      %s296 = scalar_lea.vmem %s8, %s295
      %s297 = smul.u32 8, %s19
      %p298 = scmp.lt.s32.totalorder %s297, 15
      %s299 = scalar_select %p298, %s297, 15
      %s300 = smul.addr %s299, 8
      %s301 = scalar_lea.vmem %s0, %s300
      %s302 = smul.u32 8, %s19
      %s303 = smul.u32 8, %s19
      %p304 = scmp.lt.s32.totalorder %s303, 15
      %s305 = scalar_select %p304, %s303, 15
      %s306 = smul.addr %s305, 8
      %s307 = scalar_lea.vmem %s8, %s306
      %s308 = smul.u32 8, %s19
      %v310 = vld [vmem:[%s301] sm:$0xff]
      %v311 = vld [vmem:[%s301 + $0x8] sm:$0xff]
      %v312 = vld [vmem:[%s301 + $0x10] sm:$0xff]
      %v313 = vld [vmem:[%s301 + $0x18] sm:$0xff]
      %v314 = vld [vmem:[%s301 + $0x20] sm:$0xff]
      %v315 = vld [vmem:[%s301 + $0x28] sm:$0xff]
      %v316 = vld [vmem:[%s301 + $0x30] sm:$0xff]
      %v317 = vld [vmem:[%s301 + $0x38] sm:$0xff]
      %v318 = vld [vmem:[%s1] sm:$0x1]
      %v319 = vld [vmem:[%s2] sm:$0x1]
      %vm320 = vcmask 261120
      %v321 = vsel %vm320, %v310, 0.0
      %322 = vadd.xlane.f32.xlu0 %v321
      %v323 = vpop.xlane.xlu0 %322
      %v324 = vsel %vm320, %v311, 0.0
      %325 = vadd.xlane.f32.xlu0 %v324
      %v326 = vpop.xlane.xlu0 %325
      %v327 = vsel %vm320, %v312, 0.0
      %328 = vadd.xlane.f32.xlu0 %v327
      %v329 = vpop.xlane.xlu0 %328
      %v330 = vsel %vm320, %v313, 0.0
      %331 = vadd.xlane.f32.xlu0 %v330
      %v332 = vpop.xlane.xlu0 %331
      %v333 = vsel %vm320, %v314, 0.0
      %334 = vadd.xlane.f32.xlu0 %v333
      %v335 = vpop.xlane.xlu0 %334
      %v336 = vsel %vm320, %v315, 0.0
      %337 = vadd.xlane.f32.xlu0 %v336
      %v338 = vpop.xlane.xlu0 %337
      %v339 = vsel %vm320, %v316, 0.0
      %340 = vadd.xlane.f32.xlu0 %v339
      %v341 = vpop.xlane.xlu0 %340
      %v342 = vsel %vm320, %v317, 0.0
      %343 = vadd.xlane.f32.xlu0 %v342
      %v344 = vpop.xlane.xlu0 %343
      %v345 = vrcp.pop 32.0
      %v346 = vmul.f32 %v323, %v345
      %v347 = vmul.f32 %v326, %v345
      %v348 = vmul.f32 %v329, %v345
      %v349 = vmul.f32 %v332, %v345
      %v350 = vmul.f32 %v335, %v345
      %v351 = vmul.f32 %v338, %v345
      %v352 = vmul.f32 %v341, %v345
      %v353 = vmul.f32 %v344, %v345
      %v354 = vsub.f32 %v310, %v346
      %v355 = vsub.f32 %v311, %v347
      %v356 = vsub.f32 %v312, %v348
      %v357 = vsub.f32 %v313, %v349
      %v358 = vsub.f32 %v314, %v350
      %v359 = vsub.f32 %v315, %v351
      %v360 = vsub.f32 %v316, %v352
      %v361 = vsub.f32 %v317, %v353
      %v362 = vmul.f32 %v354, %v354
      %v363 = vmul.f32 %v355, %v355
      %v364 = vmul.f32 %v356, %v356
      %v365 = vmul.f32 %v357, %v357
      %v366 = vmul.f32 %v358, %v358
      %v367 = vmul.f32 %v359, %v359
      %v368 = vmul.f32 %v360, %v360
      %v369 = vmul.f32 %v361, %v361
      %v370 = vsel %vm320, %v362, 0.0
      %371 = vadd.xlane.f32.xlu0 %v370
      %v372 = vpop.xlane.xlu0 %371
      %v373 = vsel %vm320, %v363, 0.0
      %374 = vadd.xlane.f32.xlu0 %v373
      %v375 = vpop.xlane.xlu0 %374
      %v376 = vsel %vm320, %v364, 0.0
      %377 = vadd.xlane.f32.xlu0 %v376
      %v378 = vpop.xlane.xlu0 %377
      %v379 = vsel %vm320, %v365, 0.0
      %380 = vadd.xlane.f32.xlu0 %v379
      %v381 = vpop.xlane.xlu0 %380
      %v382 = vsel %vm320, %v366, 0.0
      %383 = vadd.xlane.f32.xlu0 %v382
      %v384 = vpop.xlane.xlu0 %383
      %v385 = vsel %vm320, %v367, 0.0
      %386 = vadd.xlane.f32.xlu0 %v385
      %v387 = vpop.xlane.xlu0 %386
      %v388 = vsel %vm320, %v368, 0.0
      %389 = vadd.xlane.f32.xlu0 %v388
      %v390 = vpop.xlane.xlu0 %389
      %v391 = vsel %vm320, %v369, 0.0
      %392 = vadd.xlane.f32.xlu0 %v391
      %v393 = vpop.xlane.xlu0 %392
      %v394 = vmul.f32 %v372, %v345
      %v395 = vmul.f32 %v375, %v345
      %v396 = vmul.f32 %v378, %v345
      %v397 = vmul.f32 %v381, %v345
      %v398 = vmul.f32 %v384, %v345
      %v399 = vmul.f32 %v387, %v345
      %v400 = vmul.f32 %v390, %v345
      %v401 = vmul.f32 %v393, %v345
      %v402 = vadd.f32 %v394, 1e-05
      %v403 = vadd.f32 %v395, 1e-05
      %v404 = vadd.f32 %v396, 1e-05
      %v405 = vadd.f32 %v397, 1e-05
      %v406 = vadd.f32 %v398, 1e-05
      %v407 = vadd.f32 %v399, 1e-05
      %v408 = vadd.f32 %v400, 1e-05
      %v409 = vadd.f32 %v401, 1e-05
      %v410 = vrsqrt.pop %v402
      %v411 = vrsqrt.pop %v403
      %v412 = vrsqrt.pop %v404
      %v413 = vrsqrt.pop %v405
      %v414 = vrsqrt.pop %v406
      %v415 = vrsqrt.pop %v407
      %v416 = vrsqrt.pop %v408
      %v417 = vrsqrt.pop %v409
      %v418 = vmul.f32 %v354, %v410
      %v419 = vmul.f32 %v355, %v411
      %v420 = vmul.f32 %v356, %v412
      %v421 = vmul.f32 %v357, %v413
      %v422 = vmul.f32 %v358, %v414
      %v423 = vmul.f32 %v359, %v415
      %v424 = vmul.f32 %v360, %v416
      %v425 = vmul.f32 %v361, %v417
      %v427 = vlaneseq
      %v428 = vshrl.u32 %v427, 7
      %v429 = vsub.s32 0, %v428
      %v430 = vrot.slane %v318, %v429
      %v432 = vmul.f32 %v418, %v430
      %v433 = vmul.f32 %v419, %v430
      %v434 = vmul.f32 %v420, %v430
      %v435 = vmul.f32 %v421, %v430
      %v436 = vmul.f32 %v422, %v430
      %v437 = vmul.f32 %v423, %v430
      %v438 = vmul.f32 %v424, %v430
      %v439 = vmul.f32 %v425, %v430
      %v441 = vlaneseq
      %v442 = vshrl.u32 %v441, 7
      %v443 = vsub.s32 0, %v442
      %v444 = vrot.slane %v319, %v443
      %v446 = vadd.f32 %v432, %v444
      %v447 = vadd.f32 %v433, %v444
      %v448 = vadd.f32 %v434, %v444
      %v449 = vadd.f32 %v435, %v444
      %v450 = vadd.f32 %v436, %v444
      %v451 = vadd.f32 %v437, %v444
      %v452 = vadd.f32 %v438, %v444
      %v453 = vadd.f32 %v439, %v444
      %v454 = vpack.c.bf16 %v447, %v446
      %v455 = vpack.c.bf16 %v449, %v448
      %v456 = vpack.c.bf16 %v451, %v450
      %v457 = vpack.c.bf16 %v453, %v452
      %v458 = vld [vmem:[%s3] sm:$0xf]
      %v459 = vld [vmem:[%s3 + $0x4] sm:$0xf]
      %v460 = vld [vmem:[%s3 + $0x8] sm:$0xf]
      %v461 = vld [vmem:[%s3 + $0xc] sm:$0xf]
      %v462 = vld [vmem:[%s4] sm:$0x1]
      %v464 = vlaneseq
      %v465 = vshrl.u32 %v464, 7
      %v466 = vsub.s32 0, %v465
      %v467 = vrot.slane %v462, %v466
      %v473 = vunpack.c.l.b16 %v458
      %v474 = vunpack.c.l.b16 %v459
      %v475 = vunpack.c.l.b16 %v460
      %v476 = vunpack.c.l.b16 %v461
      %v477 = vpack.c.b16 %v474, %v473
      %v478 = vpack.c.b16 %v476, %v475
      %v482 = vsel %vm320, %v454, 0
      %v485 = vsel %vm320, %v455, 0
      %v488 = vsel %vm320, %v456, 0
      %v491 = vsel %vm320, %v457, 0
      %493 = vmatprep.subr.bf16.mxu0 0
      %494 = vmatpush1.bf16.msra.mxu0 0
      %495 = vmatprep.subr.bf16.mxu0 0
      %496 = vmatpush1.bf16.msra.mxu0 0
      %497 = vmatprep.subr.bf16.mxu0 0
      %498 = vmatpush1.bf16.msra.mxu0 0
      %499 = vmatprep.subr.bf16.mxu0 0
      %500 = vmatpush1.bf16.msra.mxu0 0
      %501 = vmatprep.subr.bf16.mxu0 0
      %502 = vmatpush1.bf16.msra.mxu0 0
      %503 = vmatprep.subr.bf16.mxu0 0
      %504 = vmatpush1.bf16.msra.mxu0 0
      %505 = vmatprep.subr.bf16.mxu0 0
      %506 = vmatpush1.bf16.msra.mxu0 %v478
      %507 = vmatprep.subr.bf16.mxu0 0
      %508 = vmatpush1.bf16.msra.mxu0 %v477
      %509 = vmatprep.subr.bf16.mxu0 0
      %510 = vmatpush2.bf16.msra.mxu0 0
      %511 = vmatprep.subr.bf16.mxu0 0
      %512 = vmatpush2.bf16.msra.mxu0 0
      %513 = vmatprep.subr.bf16.mxu0 0
      %514 = vmatpush2.bf16.msra.mxu0 0
      %515 = vmatprep.subr.bf16.mxu0 0
      %516 = vmatpush2.bf16.msra.mxu0 0
      %517 = vmatprep.subr.bf16.mxu0 0
      %518 = vmatpush2.bf16.msra.mxu0 0
      %519 = vmatprep.subr.bf16.mxu0 0
      %520 = vmatpush2.bf16.msra.mxu0 0
      %521 = vmatprep.subr.bf16.mxu0 0
      %522 = vmatpush2.bf16.msra.mxu0 0
      %523 = vmatprep.subr.bf16.mxu0 0
      %524 = vmatpush2.bf16.msra.mxu0 0
      %525 = vmatprep.mubr.bf16.mxu0 0
      %526 = vmatmul.mubr.bf16.gmra.mxu0 %v482
      %v527 = vpop.f32.mrf.mxu0
      %v528 = vadd.f32 %v467, %v527
      %v529 = vpop.f32.mrf.mxu0
      %v530 = vpop.f32.mrf.mxu0
      %v531 = vadd.f32 %v467, %v530
      %v532 = vpop.f32.mrf.mxu0
      %533 = vmatprep.mubr.bf16.mxu0 0
      %534 = vmatmul.mubr.bf16.gmra.mxu0 %v485
      %v535 = vpop.f32.mrf.mxu0
      %v536 = vadd.f32 %v467, %v535
      %v537 = vpop.f32.mrf.mxu0
      %v538 = vpop.f32.mrf.mxu0
      %v539 = vadd.f32 %v467, %v538
      %v540 = vpop.f32.mrf.mxu0
      %541 = vmatprep.mubr.bf16.mxu0 0
      %542 = vmatmul.mubr.bf16.gmra.mxu0 %v488
      %v543 = vpop.f32.mrf.mxu0
      %v544 = vadd.f32 %v467, %v543
      %v545 = vpop.f32.mrf.mxu0
      %v546 = vpop.f32.mrf.mxu0
      %v547 = vadd.f32 %v467, %v546
      %v548 = vpop.f32.mrf.mxu0
      %549 = vmatprep.mubr.bf16.mxu0 0
      %550 = vmatmul.mubr.bf16.gmra.mxu0 %v491
      %v551 = vpop.f32.mrf.mxu0
      %v552 = vadd.f32 %v467, %v551
      %v553 = vpop.f32.mrf.mxu0
      %v554 = vpop.f32.mrf.mxu0
      %v555 = vadd.f32 %v467, %v554
      %v556 = vpop.f32.mrf.mxu0
      %557 = vdwg.mxu0
      %v558 = vld [vmem:[%s5] sm:$0xf]
      %v559 = vld [vmem:[%s5 + $0x4] sm:$0xf]
      %v560 = vld [vmem:[%s5 + $0x8] sm:$0xf]
      %v561 = vld [vmem:[%s5 + $0xc] sm:$0xf]
      %v562 = vunpack.c.l.bf16 %v558
      %v563 = vunpack.c.l.bf16 %v559
      %v564 = vunpack.c.l.bf16 %v560
      %v565 = vunpack.c.l.bf16 %v561
      %v566 = vmul.f32 %v528, 0.35355338
      %v567 = vmul.f32 %v531, 0.35355338
      %v568 = vmul.f32 %v536, 0.35355338
      %v569 = vmul.f32 %v539, 0.35355338
      %v570 = vmul.f32 %v544, 0.35355338
      %v571 = vmul.f32 %v547, 0.35355338
      %v572 = vmul.f32 %v552, 0.35355338
      %v573 = vmul.f32 %v555, 0.35355338
      %v574 = vpack.c.bf16 %v566, %v566
      %v575 = vpack.c.bf16 %v567, %v567
      %v576 = vpack.c.bf16 %v568, %v568
      %v577 = vpack.c.bf16 %v569, %v569
      %v578 = vpack.c.bf16 %v570, %v570
      %v579 = vpack.c.bf16 %v571, %v571
      %v580 = vpack.c.bf16 %v572, %v572
      %v581 = vpack.c.bf16 %v573, %v573
      %v582 = vpack.c.bf16 %v528, %v528
      %v583 = vpack.c.bf16 %v531, %v531
      %v584 = vpack.c.bf16 %v536, %v536
      %v585 = vpack.c.bf16 %v539, %v539
      %v586 = vpack.c.bf16 %v544, %v544
      %v587 = vpack.c.bf16 %v547, %v547
      %v588 = vpack.c.bf16 %v552, %v552
      %v589 = vpack.c.bf16 %v555, %v555
      %591 = vrot.lane.b32.xlu0 %v582, 96
      %v592 = vpop.permute.xlu0 %591
      %vm593 = vcmask 64512
      %v595 = vsel %vm593, %v574, 0
      %v598 = vsel %vm593, %v592, 0
      %600 = vmatprep.subr.bf16.mxu0 0
      %601 = vmatpush1.bf16.xpose.msra.mxu0 0
      %602 = vmatprep.subr.bf16.mxu0 0
      %603 = vmatpush1.bf16.xpose.msra.mxu0 0
      %604 = vmatprep.subr.bf16.mxu0 0
      %605 = vmatpush1.bf16.xpose.msra.mxu0 0
      %606 = vmatprep.subr.bf16.mxu0 0
      %607 = vmatpush1.bf16.xpose.msra.mxu0 0
      %608 = vmatprep.subr.bf16.mxu0 0
      %609 = vmatpush1.bf16.xpose.msra.mxu0 0
      %610 = vmatprep.subr.bf16.mxu0 0
      %611 = vmatpush1.bf16.xpose.msra.mxu0 0
      %612 = vmatprep.subr.bf16.mxu0 0
      %613 = vmatpush1.bf16.xpose.msra.mxu0 0
      %614 = vmatprep.subr.bf16.mxu0 0
      %615 = vmatpush1.bf16.xpose.msra.mxu0 %v598
      %616 = vmatprep.subr.bf16.mxu0 0
      %617 = vmatpush2.bf16.xpose.msra.mxu0 0
      %618 = vmatprep.subr.bf16.mxu0 0
      %619 = vmatpush2.bf16.xpose.msra.mxu0 0
      %620 = vmatprep.subr.bf16.mxu0 0
      %621 = vmatpush2.bf16.xpose.msra.mxu0 0
      %622 = vmatprep.subr.bf16.mxu0 0
      %623 = vmatpush2.bf16.xpose.msra.mxu0 0
      %624 = vmatprep.subr.bf16.mxu0 0
      %625 = vmatpush2.bf16.xpose.msra.mxu0 0
      %626 = vmatprep.subr.bf16.mxu0 0
      %627 = vmatpush2.bf16.xpose.msra.mxu0 0
      %628 = vmatprep.subr.bf16.mxu0 0
      %629 = vmatpush2.bf16.xpose.msra.mxu0 0
      %630 = vmatprep.subr.bf16.mxu0 0
      %631 = vmatpush2.bf16.xpose.msra.mxu0 0
      %632 = vmatprep.mubr.bf16.mxu0 0
      %633 = vmatmul.mubr.bf16.gmra.mxu0 %v595
      %v634 = vpop.f32.mrf.mxu0
      %v635 = vadd.f32 %v562, %v634
      %v636 = vpop.f32.mrf.mxu0
      %v637 = vpop.f32.mrf.mxu0
      %v638 = vpop.f32.mrf.mxu0
      %639 = vdwg.mxu0
      %641 = vrot.lane.b32.xlu0 %v583, 96
      %v642 = vpop.permute.xlu0 %641
      %v644 = vsel %vm593, %v575, 0
      %v647 = vsel %vm593, %v642, 0
      %649 = vmatprep.subr.bf16.mxu0 0
      %650 = vmatpush1.bf16.xpose.msra.mxu0 0
      %651 = vmatprep.subr.bf16.mxu0 0
      %652 = vmatpush1.bf16.xpose.msra.mxu0 0
      %653 = vmatprep.subr.bf16.mxu0 0
      %654 = vmatpush1.bf16.xpose.msra.mxu0 0
      %655 = vmatprep.subr.bf16.mxu0 0
      %656 = vmatpush1.bf16.xpose.msra.mxu0 0
      %657 = vmatprep.subr.bf16.mxu0 0
      %658 = vmatpush1.bf16.xpose.msra.mxu0 0
      %659 = vmatprep.subr.bf16.mxu0 0
      %660 = vmatpush1.bf16.xpose.msra.mxu0 0
      %661 = vmatprep.subr.bf16.mxu0 0
      %662 = vmatpush1.bf16.xpose.msra.mxu0 0
      %663 = vmatprep.subr.bf16.mxu0 0
      %664 = vmatpush1.bf16.xpose.msra.mxu0 %v647
      %665 = vmatprep.subr.bf16.mxu0 0
      %666 = vmatpush2.bf16.xpose.msra.mxu0 0
      %667 = vmatprep.subr.bf16.mxu0 0
      %668 = vmatpush2.bf16.xpose.msra.mxu0 0
      %669 = vmatprep.subr.bf16.mxu0 0
      %670 = vmatpush2.bf16.xpose.msra.mxu0 0
      %671 = vmatprep.subr.bf16.mxu0 0
      %672 = vmatpush2.bf16.xpose.msra.mxu0 0
      %673 = vmatprep.subr.bf16.mxu0 0
      %674 = vmatpush2.bf16.xpose.msra.mxu0 0
      %675 = vmatprep.subr.bf16.mxu0 0
      %676 = vmatpush2.bf16.xpose.msra.mxu0 0
      %677 = vmatprep.subr.bf16.mxu0 0
      %678 = vmatpush2.bf16.xpose.msra.mxu0 0
      %679 = vmatprep.subr.bf16.mxu0 0
      %680 = vmatpush2.bf16.xpose.msra.mxu0 0
      %681 = vmatprep.mubr.bf16.mxu0 0
      %682 = vmatmul.mubr.bf16.gmra.mxu0 %v644
      %v683 = vpop.f32.mrf.mxu0
      %v684 = vadd.f32 %v562, %v683
      %v685 = vpop.f32.mrf.mxu0
      %v686 = vpop.f32.mrf.mxu0
      %v687 = vpop.f32.mrf.mxu0
      %688 = vdwg.mxu0
      %690 = vrot.lane.b32.xlu0 %v584, 96
      %v691 = vpop.permute.xlu0 %690
      %v693 = vsel %vm593, %v576, 0
      %v696 = vsel %vm593, %v691, 0
      %698 = vmatprep.subr.bf16.mxu0 0
      %699 = vmatpush1.bf16.xpose.msra.mxu0 0
      %700 = vmatprep.subr.bf16.mxu0 0
      %701 = vmatpush1.bf16.xpose.msra.mxu0 0
      %702 = vmatprep.subr.bf16.mxu0 0
      %703 = vmatpush1.bf16.xpose.msra.mxu0 0
      %704 = vmatprep.subr.bf16.mxu0 0
      %705 = vmatpush1.bf16.xpose.msra.mxu0 0
      %706 = vmatprep.subr.bf16.mxu0 0
      %707 = vmatpush1.bf16.xpose.msra.mxu0 0
      %708 = vmatprep.subr.bf16.mxu0 0
      %709 = vmatpush1.bf16.xpose.msra.mxu0 0
      %710 = vmatprep.subr.bf16.mxu0 0
      %711 = vmatpush1.bf16.xpose.msra.mxu0 0
      %712 = vmatprep.subr.bf16.mxu0 0
      %713 = vmatpush1.bf16.xpose.msra.mxu0 %v696
      %714 = vmatprep.subr.bf16.mxu0 0
      %715 = vmatpush2.bf16.xpose.msra.mxu0 0
      %716 = vmatprep.subr.bf16.mxu0 0
      %717 = vmatpush2.bf16.xpose.msra.mxu0 0
      %718 = vmatprep.subr.bf16.mxu0 0
      %719 = vmatpush2.bf16.xpose.msra.mxu0 0
      %720 = vmatprep.subr.bf16.mxu0 0
      %721 = vmatpush2.bf16.xpose.msra.mxu0 0
      %722 = vmatprep.subr.bf16.mxu0 0
      %723 = vmatpush2.bf16.xpose.msra.mxu0 0
      %724 = vmatprep.subr.bf16.mxu0 0
      %725 = vmatpush2.bf16.xpose.msra.mxu0 0
      %726 = vmatprep.subr.bf16.mxu0 0
      %727 = vmatpush2.bf16.xpose.msra.mxu0 0
      %728 = vmatprep.subr.bf16.mxu0 0
      %729 = vmatpush2.bf16.xpose.msra.mxu0 0
      %730 = vmatprep.mubr.bf16.mxu0 0
      %731 = vmatmul.mubr.bf16.gmra.mxu0 %v693
      %v732 = vpop.f32.mrf.mxu0
      %v733 = vadd.f32 %v562, %v732
      %v734 = vpop.f32.mrf.mxu0
      %v735 = vpop.f32.mrf.mxu0
      %v736 = vpop.f32.mrf.mxu0
      %737 = vdwg.mxu0
      %739 = vrot.lane.b32.xlu0 %v585, 96
      %v740 = vpop.permute.xlu0 %739
      %v742 = vsel %vm593, %v577, 0
      %v745 = vsel %vm593, %v740, 0
      %747 = vmatprep.subr.bf16.mxu0 0
      %748 = vmatpush1.bf16.xpose.msra.mxu0 0
      %749 = vmatprep.subr.bf16.mxu0 0
      %750 = vmatpush1.bf16.xpose.msra.mxu0 0
      %751 = vmatprep.subr.bf16.mxu0 0
      %752 = vmatpush1.bf16.xpose.msra.mxu0 0
      %753 = vmatprep.subr.bf16.mxu0 0
      %754 = vmatpush1.bf16.xpose.msra.mxu0 0
      %755 = vmatprep.subr.bf16.mxu0 0
      %756 = vmatpush1.bf16.xpose.msra.mxu0 0
      %757 = vmatprep.subr.bf16.mxu0 0
      %758 = vmatpush1.bf16.xpose.msra.mxu0 0
      %759 = vmatprep.subr.bf16.mxu0 0
      %760 = vmatpush1.bf16.xpose.msra.mxu0 0
      %761 = vmatprep.subr.bf16.mxu0 0
      %762 = vmatpush1.bf16.xpose.msra.mxu0 %v745
      %763 = vmatprep.subr.bf16.mxu0 0
      %764 = vmatpush2.bf16.xpose.msra.mxu0 0
      %765 = vmatprep.subr.bf16.mxu0 0
      %766 = vmatpush2.bf16.xpose.msra.mxu0 0
      %767 = vmatprep.subr.bf16.mxu0 0
      %768 = vmatpush2.bf16.xpose.msra.mxu0 0
      %769 = vmatprep.subr.bf16.mxu0 0
      %770 = vmatpush2.bf16.xpose.msra.mxu0 0
      %771 = vmatprep.subr.bf16.mxu0 0
      %772 = vmatpush2.bf16.xpose.msra.mxu0 0
      %773 = vmatprep.subr.bf16.mxu0 0
      %774 = vmatpush2.bf16.xpose.msra.mxu0 0
      %775 = vmatprep.subr.bf16.mxu0 0
      %776 = vmatpush2.bf16.xpose.msra.mxu0 0
      %777 = vmatprep.subr.bf16.mxu0 0
      %778 = vmatpush2.bf16.xpose.msra.mxu0 0
      %779 = vmatprep.mubr.bf16.mxu0 0
      %780 = vmatmul.mubr.bf16.gmra.mxu0 %v742
      %v781 = vpop.f32.mrf.mxu0
      %v782 = vadd.f32 %v562, %v781
      %v783 = vpop.f32.mrf.mxu0
      %v784 = vpop.f32.mrf.mxu0
      %v785 = vpop.f32.mrf.mxu0
      %786 = vdwg.mxu0
      %788 = vrot.lane.b32.xlu0 %v586, 96
      %v789 = vpop.permute.xlu0 %788
      %v791 = vsel %vm593, %v578, 0
      %v794 = vsel %vm593, %v789, 0
      %796 = vmatprep.subr.bf16.mxu0 0
      %797 = vmatpush1.bf16.xpose.msra.mxu0 0
      %798 = vmatprep.subr.bf16.mxu0 0
      %799 = vmatpush1.bf16.xpose.msra.mxu0 0
      %800 = vmatprep.subr.bf16.mxu0 0
      %801 = vmatpush1.bf16.xpose.msra.mxu0 0
      %802 = vmatprep.subr.bf16.mxu0 0
      %803 = vmatpush1.bf16.xpose.msra.mxu0 0
      %804 = vmatprep.subr.bf16.mxu0 0
      %805 = vmatpush1.bf16.xpose.msra.mxu0 0
      %806 = vmatprep.subr.bf16.mxu0 0
      %807 = vmatpush1.bf16.xpose.msra.mxu0 0
      %808 = vmatprep.subr.bf16.mxu0 0
      %809 = vmatpush1.bf16.xpose.msra.mxu0 0
      %810 = vmatprep.subr.bf16.mxu0 0
      %811 = vmatpush1.bf16.xpose.msra.mxu0 %v794
      %812 = vmatprep.subr.bf16.mxu0 0
      %813 = vmatpush2.bf16.xpose.msra.mxu0 0
      %814 = vmatprep.subr.bf16.mxu0 0
      %815 = vmatpush2.bf16.xpose.msra.mxu0 0
      %816 = vmatprep.subr.bf16.mxu0 0
      %817 = vmatpush2.bf16.xpose.msra.mxu0 0
      %818 = vmatprep.subr.bf16.mxu0 0
      %819 = vmatpush2.bf16.xpose.msra.mxu0 0
      %820 = vmatprep.subr.bf16.mxu0 0
      %821 = vmatpush2.bf16.xpose.msra.mxu0 0
      %822 = vmatprep.subr.bf16.mxu0 0
      %823 = vmatpush2.bf16.xpose.msra.mxu0 0
      %824 = vmatprep.subr.bf16.mxu0 0
      %825 = vmatpush2.bf16.xpose.msra.mxu0 0
      %826 = vmatprep.subr.bf16.mxu0 0
      %827 = vmatpush2.bf16.xpose.msra.mxu0 0
      %828 = vmatprep.mubr.bf16.mxu0 0
      %829 = vmatmul.mubr.bf16.gmra.mxu0 %v791
      %v830 = vpop.f32.mrf.mxu0
      %v831 = vadd.f32 %v562, %v830
      %v832 = vpop.f32.mrf.mxu0
      %v833 = vpop.f32.mrf.mxu0
      %v834 = vpop.f32.mrf.mxu0
      %835 = vdwg.mxu0
      %837 = vrot.lane.b32.xlu0 %v587, 96
      %v838 = vpop.permute.xlu0 %837
      %v840 = vsel %vm593, %v579, 0
      %v843 = vsel %vm593, %v838, 0
      %845 = vmatprep.subr.bf16.mxu0 0
      %846 = vmatpush1.bf16.xpose.msra.mxu0 0
      %847 = vmatprep.subr.bf16.mxu0 0
      %848 = vmatpush1.bf16.xpose.msra.mxu0 0
      %849 = vmatprep.subr.bf16.mxu0 0
      %850 = vmatpush1.bf16.xpose.msra.mxu0 0
      %851 = vmatprep.subr.bf16.mxu0 0
      %852 = vmatpush1.bf16.xpose.msra.mxu0 0
      %853 = vmatprep.subr.bf16.mxu0 0
      %854 = vmatpush1.bf16.xpose.msra.mxu0 0
      %855 = vmatprep.subr.bf16.mxu0 0
      %856 = vmatpush1.bf16.xpose.msra.mxu0 0
      %857 = vmatprep.subr.bf16.mxu0 0
      %858 = vmatpush1.bf16.xpose.msra.mxu0 0
      %859 = vmatprep.subr.bf16.mxu0 0
      %860 = vmatpush1.bf16.xpose.msra.mxu0 %v843
      %861 = vmatprep.subr.bf16.mxu0 0
      %862 = vmatpush2.bf16.xpose.msra.mxu0 0
      %863 = vmatprep.subr.bf16.mxu0 0
      %864 = vmatpush2.bf16.xpose.msra.mxu0 0
      %865 = vmatprep.subr.bf16.mxu0 0
      %866 = vmatpush2.bf16.xpose.msra.mxu0 0
      %867 = vmatprep.subr.bf16.mxu0 0
      %868 = vmatpush2.bf16.xpose.msra.mxu0 0
      %869 = vmatprep.subr.bf16.mxu0 0
      %870 = vmatpush2.bf16.xpose.msra.mxu0 0
      %871 = vmatprep.subr.bf16.mxu0 0
      %872 = vmatpush2.bf16.xpose.msra.mxu0 0
      %873 = vmatprep.subr.bf16.mxu0 0
      %874 = vmatpush2.bf16.xpose.msra.mxu0 0
      %875 = vmatprep.subr.bf16.mxu0 0
      %876 = vmatpush2.bf16.xpose.msra.mxu0 0
      %877 = vmatprep.mubr.bf16.mxu0 0
      %878 = vmatmul.mubr.bf16.gmra.mxu0 %v840
      %v879 = vpop.f32.mrf.mxu0
      %v880 = vadd.f32 %v562, %v879
      %v881 = vpop.f32.mrf.mxu0
      %v882 = vpop.f32.mrf.mxu0
      %v883 = vpop.f32.mrf.mxu0
      %884 = vdwg.mxu0
      %886 = vrot.lane.b32.xlu0 %v588, 96
      %v887 = vpop.permute.xlu0 %886
      %v889 = vsel %vm593, %v580, 0
      %v892 = vsel %vm593, %v887, 0
      %894 = vmatprep.subr.bf16.mxu0 0
      %895 = vmatpush1.bf16.xpose.msra.mxu0 0
      %896 = vmatprep.subr.bf16.mxu0 0
      %897 = vmatpush1.bf16.xpose.msra.mxu0 0
      %898 = vmatprep.subr.bf16.mxu0 0
      %899 = vmatpush1.bf16.xpose.msra.mxu0 0
      %900 = vmatprep.subr.bf16.mxu0 0
      %901 = vmatpush1.bf16.xpose.msra.mxu0 0
      %902 = vmatprep.subr.bf16.mxu0 0
      %903 = vmatpush1.bf16.xpose.msra.mxu0 0
      %904 = vmatprep.subr.bf16.mxu0 0
      %905 = vmatpush1.bf16.xpose.msra.mxu0 0
      %906 = vmatprep.subr.bf16.mxu0 0
      %907 = vmatpush1.bf16.xpose.msra.mxu0 0
      %908 = vmatprep.subr.bf16.mxu0 0
      %909 = vmatpush1.bf16.xpose.msra.mxu0 %v892
      %910 = vmatprep.subr.bf16.mxu0 0
      %911 = vmatpush2.bf16.xpose.msra.mxu0 0
      %912 = vmatprep.subr.bf16.mxu0 0
      %913 = vmatpush2.bf16.xpose.msra.mxu0 0
      %914 = vmatprep.subr.bf16.mxu0 0
      %915 = vmatpush2.bf16.xpose.msra.mxu0 0
      %916 = vmatprep.subr.bf16.mxu0 0
      %917 = vmatpush2.bf16.xpose.msra.mxu0 0
      %918 = vmatprep.subr.bf16.mxu0 0
      %919 = vmatpush2.bf16.xpose.msra.mxu0 0
      %920 = vmatprep.subr.bf16.mxu0 0
      %921 = vmatpush2.bf16.xpose.msra.mxu0 0
      %922 = vmatprep.subr.bf16.mxu0 0
      %923 = vmatpush2.bf16.xpose.msra.mxu0 0
      %924 = vmatprep.subr.bf16.mxu0 0
      %925 = vmatpush2.bf16.xpose.msra.mxu0 0
      %926 = vmatprep.mubr.bf16.mxu0 0
      %927 = vmatmul.mubr.bf16.gmra.mxu0 %v889
      %v928 = vpop.f32.mrf.mxu0
      %v929 = vadd.f32 %v562, %v928
      %v930 = vpop.f32.mrf.mxu0
      %v931 = vpop.f32.mrf.mxu0
      %v932 = vpop.f32.mrf.mxu0
      %933 = vdwg.mxu0
      %935 = vrot.lane.b32.xlu0 %v589, 96
      %v936 = vpop.permute.xlu0 %935
      %v938 = vsel %vm593, %v581, 0
      %v941 = vsel %vm593, %v936, 0
      %943 = vmatprep.subr.bf16.mxu0 0
      %944 = vmatpush1.bf16.xpose.msra.mxu0 0
      %945 = vmatprep.subr.bf16.mxu0 0
      %946 = vmatpush1.bf16.xpose.msra.mxu0 0
      %947 = vmatprep.subr.bf16.mxu0 0
      %948 = vmatpush1.bf16.xpose.msra.mxu0 0
      %949 = vmatprep.subr.bf16.mxu0 0
      %950 = vmatpush1.bf16.xpose.msra.mxu0 0
      %951 = vmatprep.subr.bf16.mxu0 0
      %952 = vmatpush1.bf16.xpose.msra.mxu0 0
      %953 = vmatprep.subr.bf16.mxu0 0
      %954 = vmatpush1.bf16.xpose.msra.mxu0 0
      %955 = vmatprep.subr.bf16.mxu0 0
      %956 = vmatpush1.bf16.xpose.msra.mxu0 0
      %957 = vmatprep.subr.bf16.mxu0 0
      %958 = vmatpush1.bf16.xpose.msra.mxu0 %v941
      %959 = vmatprep.subr.bf16.mxu0 0
      %960 = vmatpush2.bf16.xpose.msra.mxu0 0
      %961 = vmatprep.subr.bf16.mxu0 0
      %962 = vmatpush2.bf16.xpose.msra.mxu0 0
      %963 = vmatprep.subr.bf16.mxu0 0
      %964 = vmatpush2.bf16.xpose.msra.mxu0 0
      %965 = vmatprep.subr.bf16.mxu0 0
      %966 = vmatpush2.bf16.xpose.msra.mxu0 0
      %967 = vmatprep.subr.bf16.mxu0 0
      %968 = vmatpush2.bf16.xpose.msra.mxu0 0
      %969 = vmatprep.subr.bf16.mxu0 0
      %970 = vmatpush2.bf16.xpose.msra.mxu0 0
      %971 = vmatprep.subr.bf16.mxu0 0
      %972 = vmatpush2.bf16.xpose.msra.mxu0 0
      %973 = vmatprep.subr.bf16.mxu0 0
      %974 = vmatpush2.bf16.xpose.msra.mxu0 0
      %975 = vmatprep.mubr.bf16.mxu0 0
      %976 = vmatmul.mubr.bf16.gmra.mxu0 %v938
      %v977 = vpop.f32.mrf.mxu0
      %v978 = vadd.f32 %v562, %v977
      %v979 = vpop.f32.mrf.mxu0
      %v980 = vpop.f32.mrf.mxu0
      %v981 = vpop.f32.mrf.mxu0
      %982 = vdwg.mxu0
      %v983 = vsel %vm593, %v635, -inf
      %984 = vmax.xlane.f32.xlu0 %v983
      %v985 = vpop.xlane.xlu0 %984
      %v986 = vsel %vm593, %v684, -inf
      %987 = vmax.xlane.f32.xlu0 %v986
      %v988 = vpop.xlane.xlu0 %987
      %v989 = vsel %vm593, %v733, -inf
      %990 = vmax.xlane.f32.xlu0 %v989
      %v991 = vpop.xlane.xlu0 %990
      %v992 = vsel %vm593, %v782, -inf
      %993 = vmax.xlane.f32.xlu0 %v992
      %v994 = vpop.xlane.xlu0 %993
      %v995 = vsel %vm593, %v831, -inf
      %996 = vmax.xlane.f32.xlu0 %v995
      %v997 = vpop.xlane.xlu0 %996
      %v998 = vsel %vm593, %v880, -inf
      %999 = vmax.xlane.f32.xlu0 %v998
      %v1000 = vpop.xlane.xlu0 %999
      %v1001 = vsel %vm593, %v929, -inf
      %1002 = vmax.xlane.f32.xlu0 %v1001
      %v1003 = vpop.xlane.xlu0 %1002
      %v1004 = vsel %vm593, %v978, -inf
      %1005 = vmax.xlane.f32.xlu0 %v1004
      %v1006 = vpop.xlane.xlu0 %1005
      %v1007 = vsub.f32 %v635, %v985
      %v1008 = vsub.f32 %v684, %v988
      %v1009 = vsub.f32 %v733, %v991
      %v1010 = vsub.f32 %v782, %v994
      %v1011 = vsub.f32 %v831, %v997
      %v1012 = vsub.f32 %v880, %v1000
      %v1013 = vsub.f32 %v929, %v1003
      %v1014 = vsub.f32 %v978, %v1006
      %v1015 = vmul.f32 %v1007, 1.442695
      %v1016 = vpow.pop %v1015
      %v1017 = vmul.f32 %v1008, 1.442695
      %v1018 = vpow.pop %v1017
      %v1019 = vmul.f32 %v1009, 1.442695
      %v1020 = vpow.pop %v1019
      %v1021 = vmul.f32 %v1010, 1.442695
      %v1022 = vpow.pop %v1021
      %v1023 = vmul.f32 %v1011, 1.442695
      %v1024 = vpow.pop %v1023
      %v1025 = vmul.f32 %v1012, 1.442695
      %v1026 = vpow.pop %v1025
      %v1027 = vmul.f32 %v1013, 1.442695
      %v1028 = vpow.pop %v1027
      %v1029 = vmul.f32 %v1014, 1.442695
      %v1030 = vpow.pop %v1029
      %v1031 = vsel %vm593, %v1016, 0.0
      %1032 = vadd.xlane.f32.xlu0 %v1031
      %v1033 = vpop.xlane.xlu0 %1032
      %v1034 = vsel %vm593, %v1018, 0.0
      %1035 = vadd.xlane.f32.xlu0 %v1034
      %v1036 = vpop.xlane.xlu0 %1035
      %v1037 = vsel %vm593, %v1020, 0.0
      %1038 = vadd.xlane.f32.xlu0 %v1037
      %v1039 = vpop.xlane.xlu0 %1038
      %v1040 = vsel %vm593, %v1022, 0.0
      %1041 = vadd.xlane.f32.xlu0 %v1040
      %v1042 = vpop.xlane.xlu0 %1041
      %v1043 = vsel %vm593, %v1024, 0.0
      %1044 = vadd.xlane.f32.xlu0 %v1043
      %v1045 = vpop.xlane.xlu0 %1044
      %v1046 = vsel %vm593, %v1026, 0.0
      %1047 = vadd.xlane.f32.xlu0 %v1046
      %v1048 = vpop.xlane.xlu0 %1047
      %v1049 = vsel %vm593, %v1028, 0.0
      %1050 = vadd.xlane.f32.xlu0 %v1049
      %v1051 = vpop.xlane.xlu0 %1050
      %v1052 = vsel %vm593, %v1030, 0.0
      %1053 = vadd.xlane.f32.xlu0 %v1052
      %v1054 = vpop.xlane.xlu0 %1053
      %v1055 = vpack.c.bf16 %v1016, %v1016
      %v1056 = vpack.c.bf16 %v1018, %v1018
      %v1057 = vpack.c.bf16 %v1020, %v1020
      %v1058 = vpack.c.bf16 %v1022, %v1022
      %v1059 = vpack.c.bf16 %v1024, %v1024
      %v1060 = vpack.c.bf16 %v1026, %v1026
      %v1061 = vpack.c.bf16 %v1028, %v1028
      %v1062 = vpack.c.bf16 %v1030, %v1030
      %1063 = vrot.lane.b32.xlu0 %v582, 64
      %v1064 = vpop.permute.xlu0 %1063
      %v1066 = vsel %vm593, %v1055, 0
      %vm1068 = vcmask 1043456
      %v1070 = vsel %vm1068, %v1064, 0
      %1072 = vmatprep.subr.bf16.mxu0 0
      %1073 = vmatpush1.bf16.msra.mxu0 0
      %1074 = vmatprep.subr.bf16.mxu0 0
      %1075 = vmatpush1.bf16.msra.mxu0 0
      %1076 = vmatprep.subr.bf16.mxu0 0
      %1077 = vmatpush1.bf16.msra.mxu0 0
      %1078 = vmatprep.subr.bf16.mxu0 0
      %1079 = vmatpush1.bf16.msra.mxu0 0
      %1080 = vmatprep.subr.bf16.mxu0 0
      %1081 = vmatpush1.bf16.msra.mxu0 0
      %1082 = vmatprep.subr.bf16.mxu0 0
      %1083 = vmatpush1.bf16.msra.mxu0 0
      %1084 = vmatprep.subr.bf16.mxu0 0
      %1085 = vmatpush1.bf16.msra.mxu0 0
      %1086 = vmatprep.subr.bf16.mxu0 0
      %1087 = vmatpush1.bf16.msra.mxu0 %v1070
      %1088 = vmatprep.subr.bf16.mxu0 0
      %1089 = vmatpush2.bf16.msra.mxu0 0
      %1090 = vmatprep.subr.bf16.mxu0 0
      %1091 = vmatpush2.bf16.msra.mxu0 0
      %1092 = vmatprep.subr.bf16.mxu0 0
      %1093 = vmatpush2.bf16.msra.mxu0 0
      %1094 = vmatprep.subr.bf16.mxu0 0
      %1095 = vmatpush2.bf16.msra.mxu0 0
      %1096 = vmatprep.subr.bf16.mxu0 0
      %1097 = vmatpush2.bf16.msra.mxu0 0
      %1098 = vmatprep.subr.bf16.mxu0 0
      %1099 = vmatpush2.bf16.msra.mxu0 0
      %1100 = vmatprep.subr.bf16.mxu0 0
      %1101 = vmatpush2.bf16.msra.mxu0 0
      %1102 = vmatprep.subr.bf16.mxu0 0
      %1103 = vmatpush2.bf16.msra.mxu0 0
      %1104 = vmatprep.mubr.bf16.mxu0 0
      %1105 = vmatmul.mubr.bf16.gmra.mxu0 %v1066
      %v1106 = vpop.f32.mrf.mxu0
      %v1107 = vadd.f32 0.0, %v1106
      %v1108 = vpop.f32.mrf.mxu0
      %v1109 = vpop.f32.mrf.mxu0
      %v1110 = vpop.f32.mrf.mxu0
      %1111 = vdwg.mxu0
      %1112 = vrot.lane.b32.xlu0 %v583, 64
      %v1113 = vpop.permute.xlu0 %1112
      %v1115 = vsel %vm593, %v1056, 0
      %v1118 = vsel %vm1068, %v1113, 0
      %1120 = vmatprep.subr.bf16.mxu0 0
      %1121 = vmatpush1.bf16.msra.mxu0 0
      %1122 = vmatprep.subr.bf16.mxu0 0
      %1123 = vmatpush1.bf16.msra.mxu0 0
      %1124 = vmatprep.subr.bf16.mxu0 0
      %1125 = vmatpush1.bf16.msra.mxu0 0
      %1126 = vmatprep.subr.bf16.mxu0 0
      %1127 = vmatpush1.bf16.msra.mxu0 0
      %1128 = vmatprep.subr.bf16.mxu0 0
      %1129 = vmatpush1.bf16.msra.mxu0 0
      %1130 = vmatprep.subr.bf16.mxu0 0
      %1131 = vmatpush1.bf16.msra.mxu0 0
      %1132 = vmatprep.subr.bf16.mxu0 0
      %1133 = vmatpush1.bf16.msra.mxu0 0
      %1134 = vmatprep.subr.bf16.mxu0 0
      %1135 = vmatpush1.bf16.msra.mxu0 %v1118
      %1136 = vmatprep.subr.bf16.mxu0 0
      %1137 = vmatpush2.bf16.msra.mxu0 0
      %1138 = vmatprep.subr.bf16.mxu0 0
      %1139 = vmatpush2.bf16.msra.mxu0 0
      %1140 = vmatprep.subr.bf16.mxu0 0
      %1141 = vmatpush2.bf16.msra.mxu0 0
      %1142 = vmatprep.subr.bf16.mxu0 0
      %1143 = vmatpush2.bf16.msra.mxu0 0
      %1144 = vmatprep.subr.bf16.mxu0 0
      %1145 = vmatpush2.bf16.msra.mxu0 0
      %1146 = vmatprep.subr.bf16.mxu0 0
      %1147 = vmatpush2.bf16.msra.mxu0 0
      %1148 = vmatprep.subr.bf16.mxu0 0
      %1149 = vmatpush2.bf16.msra.mxu0 0
      %1150 = vmatprep.subr.bf16.mxu0 0
      %1151 = vmatpush2.bf16.msra.mxu0 0
      %1152 = vmatprep.mubr.bf16.mxu0 0
      %1153 = vmatmul.mubr.bf16.gmra.mxu0 %v1115
      %v1154 = vpop.f32.mrf.mxu0
      %v1155 = vadd.f32 0.0, %v1154
      %v1156 = vpop.f32.mrf.mxu0
      %v1157 = vpop.f32.mrf.mxu0
      %v1158 = vpop.f32.mrf.mxu0
      %1159 = vdwg.mxu0
      %1160 = vrot.lane.b32.xlu0 %v584, 64
      %v1161 = vpop.permute.xlu0 %1160
      %v1163 = vsel %vm593, %v1057, 0
      %v1166 = vsel %vm1068, %v1161, 0
      %1168 = vmatprep.subr.bf16.mxu0 0
      %1169 = vmatpush1.bf16.msra.mxu0 0
      %1170 = vmatprep.subr.bf16.mxu0 0
      %1171 = vmatpush1.bf16.msra.mxu0 0
      %1172 = vmatprep.subr.bf16.mxu0 0
      %1173 = vmatpush1.bf16.msra.mxu0 0
      %1174 = vmatprep.subr.bf16.mxu0 0
      %1175 = vmatpush1.bf16.msra.mxu0 0
      %1176 = vmatprep.subr.bf16.mxu0 0
      %1177 = vmatpush1.bf16.msra.mxu0 0
      %1178 = vmatprep.subr.bf16.mxu0 0
      %1179 = vmatpush1.bf16.msra.mxu0 0
      %1180 = vmatprep.subr.bf16.mxu0 0
      %1181 = vmatpush1.bf16.msra.mxu0 0
      %1182 = vmatprep.subr.bf16.mxu0 0
      %1183 = vmatpush1.bf16.msra.mxu0 %v1166
      %1184 = vmatprep.subr.bf16.mxu0 0
      %1185 = vmatpush2.bf16.msra.mxu0 0
      %1186 = vmatprep.subr.bf16.mxu0 0
      %1187 = vmatpush2.bf16.msra.mxu0 0
      %1188 = vmatprep.subr.bf16.mxu0 0
      %1189 = vmatpush2.bf16.msra.mxu0 0
      %1190 = vmatprep.subr.bf16.mxu0 0
      %1191 = vmatpush2.bf16.msra.mxu0 0
      %1192 = vmatprep.subr.bf16.mxu0 0
      %1193 = vmatpush2.bf16.msra.mxu0 0
      %1194 = vmatprep.subr.bf16.mxu0 0
      %1195 = vmatpush2.bf16.msra.mxu0 0
      %1196 = vmatprep.subr.bf16.mxu0 0
      %1197 = vmatpush2.bf16.msra.mxu0 0
      %1198 = vmatprep.subr.bf16.mxu0 0
      %1199 = vmatpush2.bf16.msra.mxu0 0
      %1200 = vmatprep.mubr.bf16.mxu0 0
      %1201 = vmatmul.mubr.bf16.gmra.mxu0 %v1163
      %v1202 = vpop.f32.mrf.mxu0
      %v1203 = vadd.f32 0.0, %v1202
      %v1204 = vpop.f32.mrf.mxu0
      %v1205 = vpop.f32.mrf.mxu0
      %v1206 = vpop.f32.mrf.mxu0
      %1207 = vdwg.mxu0
      %1208 = vrot.lane.b32.xlu0 %v585, 64
      %v1209 = vpop.permute.xlu0 %1208
      %v1211 = vsel %vm593, %v1058, 0
      %v1214 = vsel %vm1068, %v1209, 0
      %1216 = vmatprep.subr.bf16.mxu0 0
      %1217 = vmatpush1.bf16.msra.mxu0 0
      %1218 = vmatprep.subr.bf16.mxu0 0
      %1219 = vmatpush1.bf16.msra.mxu0 0
      %1220 = vmatprep.subr.bf16.mxu0 0
      %1221 = vmatpush1.bf16.msra.mxu0 0
      %1222 = vmatprep.subr.bf16.mxu0 0
      %1223 = vmatpush1.bf16.msra.mxu0 0
      %1224 = vmatprep.subr.bf16.mxu0 0
      %1225 = vmatpush1.bf16.msra.mxu0 0
      %1226 = vmatprep.subr.bf16.mxu0 0
      %1227 = vmatpush1.bf16.msra.mxu0 0
      %1228 = vmatprep.subr.bf16.mxu0 0
      %1229 = vmatpush1.bf16.msra.mxu0 0
      %1230 = vmatprep.subr.bf16.mxu0 0
      %1231 = vmatpush1.bf16.msra.mxu0 %v1214
      %1232 = vmatprep.subr.bf16.mxu0 0
      %1233 = vmatpush2.bf16.msra.mxu0 0
      %1234 = vmatprep.subr.bf16.mxu0 0
      %1235 = vmatpush2.bf16.msra.mxu0 0
      %1236 = vmatprep.subr.bf16.mxu0 0
      %1237 = vmatpush2.bf16.msra.mxu0 0
      %1238 = vmatprep.subr.bf16.mxu0 0
      %1239 = vmatpush2.bf16.msra.mxu0 0
      %1240 = vmatprep.subr.bf16.mxu0 0
      %1241 = vmatpush2.bf16.msra.mxu0 0
      %1242 = vmatprep.subr.bf16.mxu0 0
      %1243 = vmatpush2.bf16.msra.mxu0 0
      %1244 = vmatprep.subr.bf16.mxu0 0
      %1245 = vmatpush2.bf16.msra.mxu0 0
      %1246 = vmatprep.subr.bf16.mxu0 0
      %1247 = vmatpush2.bf16.msra.mxu0 0
      %1248 = vmatprep.mubr.bf16.mxu0 0
      %1249 = vmatmul.mubr.bf16.gmra.mxu0 %v1211
      %v1250 = vpop.f32.mrf.mxu0
      %v1251 = vadd.f32 0.0, %v1250
      %v1252 = vpop.f32.mrf.mxu0
      %v1253 = vpop.f32.mrf.mxu0
      %v1254 = vpop.f32.mrf.mxu0
      %1255 = vdwg.mxu0
      %1256 = vrot.lane.b32.xlu0 %v586, 64
      %v1257 = vpop.permute.xlu0 %1256
      %v1259 = vsel %vm593, %v1059, 0
      %v1262 = vsel %vm1068, %v1257, 0
      %1264 = vmatprep.subr.bf16.mxu0 0
      %1265 = vmatpush1.bf16.msra.mxu0 0
      %1266 = vmatprep.subr.bf16.mxu0 0
      %1267 = vmatpush1.bf16.msra.mxu0 0
      %1268 = vmatprep.subr.bf16.mxu0 0
      %1269 = vmatpush1.bf16.msra.mxu0 0
      %1270 = vmatprep.subr.bf16.mxu0 0
      %1271 = vmatpush1.bf16.msra.mxu0 0
      %1272 = vmatprep.subr.bf16.mxu0 0
      %1273 = vmatpush1.bf16.msra.mxu0 0
      %1274 = vmatprep.subr.bf16.mxu0 0
      %1275 = vmatpush1.bf16.msra.mxu0 0
      %1276 = vmatprep.subr.bf16.mxu0 0
      %1277 = vmatpush1.bf16.msra.mxu0 0
      %1278 = vmatprep.subr.bf16.mxu0 0
      %1279 = vmatpush1.bf16.msra.mxu0 %v1262
      %1280 = vmatprep.subr.bf16.mxu0 0
      %1281 = vmatpush2.bf16.msra.mxu0 0
      %1282 = vmatprep.subr.bf16.mxu0 0
      %1283 = vmatpush2.bf16.msra.mxu0 0
      %1284 = vmatprep.subr.bf16.mxu0 0
      %1285 = vmatpush2.bf16.msra.mxu0 0
      %1286 = vmatprep.subr.bf16.mxu0 0
      %1287 = vmatpush2.bf16.msra.mxu0 0
      %1288 = vmatprep.subr.bf16.mxu0 0
      %1289 = vmatpush2.bf16.msra.mxu0 0
      %1290 = vmatprep.subr.bf16.mxu0 0
      %1291 = vmatpush2.bf16.msra.mxu0 0
      %1292 = vmatprep.subr.bf16.mxu0 0
      %1293 = vmatpush2.bf16.msra.mxu0 0
      %1294 = vmatprep.subr.bf16.mxu0 0
      %1295 = vmatpush2.bf16.msra.mxu0 0
      %1296 = vmatprep.mubr.bf16.mxu0 0
      %1297 = vmatmul.mubr.bf16.gmra.mxu0 %v1259
      %v1298 = vpop.f32.mrf.mxu0
      %v1299 = vadd.f32 0.0, %v1298
      %v1300 = vpop.f32.mrf.mxu0
      %v1301 = vpop.f32.mrf.mxu0
      %v1302 = vpop.f32.mrf.mxu0
      %1303 = vdwg.mxu0
      %1304 = vrot.lane.b32.xlu0 %v587, 64
      %v1305 = vpop.permute.xlu0 %1304
      %v1307 = vsel %vm593, %v1060, 0
      %v1310 = vsel %vm1068, %v1305, 0
      %1312 = vmatprep.subr.bf16.mxu0 0
      %1313 = vmatpush1.bf16.msra.mxu0 0
      %1314 = vmatprep.subr.bf16.mxu0 0
      %1315 = vmatpush1.bf16.msra.mxu0 0
      %1316 = vmatprep.subr.bf16.mxu0 0
      %1317 = vmatpush1.bf16.msra.mxu0 0
      %1318 = vmatprep.subr.bf16.mxu0 0
      %1319 = vmatpush1.bf16.msra.mxu0 0
      %1320 = vmatprep.subr.bf16.mxu0 0
      %1321 = vmatpush1.bf16.msra.mxu0 0
      %1322 = vmatprep.subr.bf16.mxu0 0
      %1323 = vmatpush1.bf16.msra.mxu0 0
      %1324 = vmatprep.subr.bf16.mxu0 0
      %1325 = vmatpush1.bf16.msra.mxu0 0
      %1326 = vmatprep.subr.bf16.mxu0 0
      %1327 = vmatpush1.bf16.msra.mxu0 %v1310
      %1328 = vmatprep.subr.bf16.mxu0 0
      %1329 = vmatpush2.bf16.msra.mxu0 0
      %1330 = vmatprep.subr.bf16.mxu0 0
      %1331 = vmatpush2.bf16.msra.mxu0 0
      %1332 = vmatprep.subr.bf16.mxu0 0
      %1333 = vmatpush2.bf16.msra.mxu0 0
      %1334 = vmatprep.subr.bf16.mxu0 0
      %1335 = vmatpush2.bf16.msra.mxu0 0
      %1336 = vmatprep.subr.bf16.mxu0 0
      %1337 = vmatpush2.bf16.msra.mxu0 0
      %1338 = vmatprep.subr.bf16.mxu0 0
      %1339 = vmatpush2.bf16.msra.mxu0 0
      %1340 = vmatprep.subr.bf16.mxu0 0
      %1341 = vmatpush2.bf16.msra.mxu0 0
      %1342 = vmatprep.subr.bf16.mxu0 0
      %1343 = vmatpush2.bf16.msra.mxu0 0
      %1344 = vmatprep.mubr.bf16.mxu0 0
      %1345 = vmatmul.mubr.bf16.gmra.mxu0 %v1307
      %v1346 = vpop.f32.mrf.mxu0
      %v1347 = vadd.f32 0.0, %v1346
      %v1348 = vpop.f32.mrf.mxu0
      %v1349 = vpop.f32.mrf.mxu0
      %v1350 = vpop.f32.mrf.mxu0
      %1351 = vdwg.mxu0
      %1352 = vrot.lane.b32.xlu0 %v588, 64
      %v1353 = vpop.permute.xlu0 %1352
      %v1355 = vsel %vm593, %v1061, 0
      %v1358 = vsel %vm1068, %v1353, 0
      %1360 = vmatprep.subr.bf16.mxu0 0
      %1361 = vmatpush1.bf16.msra.mxu0 0
      %1362 = vmatprep.subr.bf16.mxu0 0
      %1363 = vmatpush1.bf16.msra.mxu0 0
      %1364 = vmatprep.subr.bf16.mxu0 0
      %1365 = vmatpush1.bf16.msra.mxu0 0
      %1366 = vmatprep.subr.bf16.mxu0 0
      %1367 = vmatpush1.bf16.msra.mxu0 0
      %1368 = vmatprep.subr.bf16.mxu0 0
      %1369 = vmatpush1.bf16.msra.mxu0 0
      %1370 = vmatprep.subr.bf16.mxu0 0
      %1371 = vmatpush1.bf16.msra.mxu0 0
      %1372 = vmatprep.subr.bf16.mxu0 0
      %1373 = vmatpush1.bf16.msra.mxu0 0
      %1374 = vmatprep.subr.bf16.mxu0 0
      %1375 = vmatpush1.bf16.msra.mxu0 %v1358
      %1376 = vmatprep.subr.bf16.mxu0 0
      %1377 = vmatpush2.bf16.msra.mxu0 0
      %1378 = vmatprep.subr.bf16.mxu0 0
      %1379 = vmatpush2.bf16.msra.mxu0 0
      %1380 = vmatprep.subr.bf16.mxu0 0
      %1381 = vmatpush2.bf16.msra.mxu0 0
      %1382 = vmatprep.subr.bf16.mxu0 0
      %1383 = vmatpush2.bf16.msra.mxu0 0
      %1384 = vmatprep.subr.bf16.mxu0 0
      %1385 = vmatpush2.bf16.msra.mxu0 0
      %1386 = vmatprep.subr.bf16.mxu0 0
      %1387 = vmatpush2.bf16.msra.mxu0 0
      %1388 = vmatprep.subr.bf16.mxu0 0
      %1389 = vmatpush2.bf16.msra.mxu0 0
      %1390 = vmatprep.subr.bf16.mxu0 0
      %1391 = vmatpush2.bf16.msra.mxu0 0
      %1392 = vmatprep.mubr.bf16.mxu0 0
      %1393 = vmatmul.mubr.bf16.gmra.mxu0 %v1355
      %v1394 = vpop.f32.mrf.mxu0
      %v1395 = vadd.f32 0.0, %v1394
      %v1396 = vpop.f32.mrf.mxu0
      %v1397 = vpop.f32.mrf.mxu0
      %v1398 = vpop.f32.mrf.mxu0
      %1399 = vdwg.mxu0
      %1400 = vrot.lane.b32.xlu0 %v589, 64
      %v1401 = vpop.permute.xlu0 %1400
      %v1403 = vsel %vm593, %v1062, 0
      %v1406 = vsel %vm1068, %v1401, 0
      %1408 = vmatprep.subr.bf16.mxu0 0
      %1409 = vmatpush1.bf16.msra.mxu0 0
      %1410 = vmatprep.subr.bf16.mxu0 0
      %1411 = vmatpush1.bf16.msra.mxu0 0
      %1412 = vmatprep.subr.bf16.mxu0 0
      %1413 = vmatpush1.bf16.msra.mxu0 0
      %1414 = vmatprep.subr.bf16.mxu0 0
      %1415 = vmatpush1.bf16.msra.mxu0 0
      %1416 = vmatprep.subr.bf16.mxu0 0
      %1417 = vmatpush1.bf16.msra.mxu0 0
      %1418 = vmatprep.subr.bf16.mxu0 0
      %1419 = vmatpush1.bf16.msra.mxu0 0
      %1420 = vmatprep.subr.bf16.mxu0 0
      %1421 = vmatpush1.bf16.msra.mxu0 0
      %1422 = vmatprep.subr.bf16.mxu0 0
      %1423 = vmatpush1.bf16.msra.mxu0 %v1406
      %1424 = vmatprep.subr.bf16.mxu0 0
      %1425 = vmatpush2.bf16.msra.mxu0 0
      %1426 = vmatprep.subr.bf16.mxu0 0
      %1427 = vmatpush2.bf16.msra.mxu0 0
      %1428 = vmatprep.subr.bf16.mxu0 0
      %1429 = vmatpush2.bf16.msra.mxu0 0
      %1430 = vmatprep.subr.bf16.mxu0 0
      %1431 = vmatpush2.bf16.msra.mxu0 0
      %1432 = vmatprep.subr.bf16.mxu0 0
      %1433 = vmatpush2.bf16.msra.mxu0 0
      %1434 = vmatprep.subr.bf16.mxu0 0
      %1435 = vmatpush2.bf16.msra.mxu0 0
      %1436 = vmatprep.subr.bf16.mxu0 0
      %1437 = vmatpush2.bf16.msra.mxu0 0
      %1438 = vmatprep.subr.bf16.mxu0 0
      %1439 = vmatpush2.bf16.msra.mxu0 0
      %1440 = vmatprep.mubr.bf16.mxu0 0
      %1441 = vmatmul.mubr.bf16.gmra.mxu0 %v1403
      %v1442 = vpop.f32.mrf.mxu0
      %v1443 = vadd.f32 0.0, %v1442
      %v1444 = vpop.f32.mrf.mxu0
      %v1445 = vpop.f32.mrf.mxu0
      %v1446 = vpop.f32.mrf.mxu0
      %1447 = vdwg.mxu0
      %v1448 = vrcp.pop %v1033
      %v1449 = vrcp.pop %v1036
      %v1450 = vrcp.pop %v1039
      %v1451 = vrcp.pop %v1042
      %v1452 = vrcp.pop %v1045
      %v1453 = vrcp.pop %v1048
      %v1454 = vrcp.pop %v1051
      %v1455 = vrcp.pop %v1054
      %v1456 = vmul.f32 %v1107, %v1448
      %v1457 = vmul.f32 %v1155, %v1449
      %v1458 = vmul.f32 %v1203, %v1450
      %v1459 = vmul.f32 %v1251, %v1451
      %v1460 = vmul.f32 %v1299, %v1452
      %v1461 = vmul.f32 %v1347, %v1453
      %v1462 = vmul.f32 %v1395, %v1454
      %v1463 = vmul.f32 %v1443, %v1455
      %1465 = vrot.lane.b32.xlu0 %v574, 120
      %v1466 = vpop.permute.xlu0 %1465
      %1467 = vrot.lane.b32.xlu0 %v582, 88
      %v1468 = vpop.permute.xlu0 %1467
      %v1470 = vsel %vm593, %v1466, 0
      %v1473 = vsel %vm593, %v1468, 0
      %1475 = vmatprep.subr.bf16.mxu0 0
      %1476 = vmatpush1.bf16.xpose.msra.mxu0 0
      %1477 = vmatprep.subr.bf16.mxu0 0
      %1478 = vmatpush1.bf16.xpose.msra.mxu0 0
      %1479 = vmatprep.subr.bf16.mxu0 0
      %1480 = vmatpush1.bf16.xpose.msra.mxu0 0
      %1481 = vmatprep.subr.bf16.mxu0 0
      %1482 = vmatpush1.bf16.xpose.msra.mxu0 0
      %1483 = vmatprep.subr.bf16.mxu0 0
      %1484 = vmatpush1.bf16.xpose.msra.mxu0 0
      %1485 = vmatprep.subr.bf16.mxu0 0
      %1486 = vmatpush1.bf16.xpose.msra.mxu0 0
      %1487 = vmatprep.subr.bf16.mxu0 0
      %1488 = vmatpush1.bf16.xpose.msra.mxu0 0
      %1489 = vmatprep.subr.bf16.mxu0 0
      %1490 = vmatpush1.bf16.xpose.msra.mxu0 %v1473
      %1491 = vmatprep.subr.bf16.mxu0 0
      %1492 = vmatpush2.bf16.xpose.msra.mxu0 0
      %1493 = vmatprep.subr.bf16.mxu0 0
      %1494 = vmatpush2.bf16.xpose.msra.mxu0 0
      %1495 = vmatprep.subr.bf16.mxu0 0
      %1496 = vmatpush2.bf16.xpose.msra.mxu0 0
      %1497 = vmatprep.subr.bf16.mxu0 0
      %1498 = vmatpush2.bf16.xpose.msra.mxu0 0
      %1499 = vmatprep.subr.bf16.mxu0 0
      %1500 = vmatpush2.bf16.xpose.msra.mxu0 0
      %1501 = vmatprep.subr.bf16.mxu0 0
      %1502 = vmatpush2.bf16.xpose.msra.mxu0 0
      %1503 = vmatprep.subr.bf16.mxu0 0
      %1504 = vmatpush2.bf16.xpose.msra.mxu0 0
      %1505 = vmatprep.subr.bf16.mxu0 0
      %1506 = vmatpush2.bf16.xpose.msra.mxu0 0
      %1507 = vmatprep.mubr.bf16.mxu0 0
      %1508 = vmatmul.mubr.bf16.gmra.mxu0 %v1470
      %v1509 = vpop.f32.mrf.mxu0
      %v1510 = vadd.f32 %v563, %v1509
      %v1511 = vpop.f32.mrf.mxu0
      %v1512 = vpop.f32.mrf.mxu0
      %v1513 = vpop.f32.mrf.mxu0
      %1514 = vdwg.mxu0
      %1516 = vrot.lane.b32.xlu0 %v575, 120
      %v1517 = vpop.permute.xlu0 %1516
      %1518 = vrot.lane.b32.xlu0 %v583, 88
      %v1519 = vpop.permute.xlu0 %1518
      %v1521 = vsel %vm593, %v1517, 0
      %v1524 = vsel %vm593, %v1519, 0
      %1526 = vmatprep.subr.bf16.mxu0 0
      %1527 = vmatpush1.bf16.xpose.msra.mxu0 0
      %1528 = vmatprep.subr.bf16.mxu0 0
      %1529 = vmatpush1.bf16.xpose.msra.mxu0 0
      %1530 = vmatprep.subr.bf16.mxu0 0
      %1531 = vmatpush1.bf16.xpose.msra.mxu0 0
      %1532 = vmatprep.subr.bf16.mxu0 0
      %1533 = vmatpush1.bf16.xpose.msra.mxu0 0
      %1534 = vmatprep.subr.bf16.mxu0 0
      %1535 = vmatpush1.bf16.xpose.msra.mxu0 0
      %1536 = vmatprep.subr.bf16.mxu0 0
      %1537 = vmatpush1.bf16.xpose.msra.mxu0 0
      %1538 = vmatprep.subr.bf16.mxu0 0
      %1539 = vmatpush1.bf16.xpose.msra.mxu0 0
      %1540 = vmatprep.subr.bf16.mxu0 0
      %1541 = vmatpush1.bf16.xpose.msra.mxu0 %v1524
      %1542 = vmatprep.subr.bf16.mxu0 0
      %1543 = vmatpush2.bf16.xpose.msra.mxu0 0
      %1544 = vmatprep.subr.bf16.mxu0 0
      %1545 = vmatpush2.bf16.xpose.msra.mxu0 0
      %1546 = vmatprep.subr.bf16.mxu0 0
      %1547 = vmatpush2.bf16.xpose.msra.mxu0 0
      %1548 = vmatprep.subr.bf16.mxu0 0
      %1549 = vmatpush2.bf16.xpose.msra.mxu0 0
      %1550 = vmatprep.subr.bf16.mxu0 0
      %1551 = vmatpush2.bf16.xpose.msra.mxu0 0
      %1552 = vmatprep.subr.bf16.mxu0 0
      %1553 = vmatpush2.bf16.xpose.msra.mxu0 0
      %1554 = vmatprep.subr.bf16.mxu0 0
      %1555 = vmatpush2.bf16.xpose.msra.mxu0 0
      %1556 = vmatprep.subr.bf16.mxu0 0
      %1557 = vmatpush2.bf16.xpose.msra.mxu0 0
      %1558 = vmatprep.mubr.bf16.mxu0 0
      %1559 = vmatmul.mubr.bf16.gmra.mxu0 %v1521
      %v1560 = vpop.f32.mrf.mxu0
      %v1561 = vadd.f32 %v563, %v1560
      %v1562 = vpop.f32.mrf.mxu0
      %v1563 = vpop.f32.mrf.mxu0
      %v1564 = vpop.f32.mrf.mxu0
      %1565 = vdwg.mxu0
      %1567 = vrot.lane.b32.xlu0 %v576, 120
      %v1568 = vpop.permute.xlu0 %1567
      %1569 = vrot.lane.b32.xlu0 %v584, 88
      %v1570 = vpop.permute.xlu0 %1569
      %v1572 = vsel %vm593, %v1568, 0
      %v1575 = vsel %vm593, %v1570, 0
      %1577 = vmatprep.subr.bf16.mxu0 0
      %1578 = vmatpush1.bf16.xpose.msra.mxu0 0
      %1579 = vmatprep.subr.bf16.mxu0 0
      %1580 = vmatpush1.bf16.xpose.msra.mxu0 0
      %1581 = vmatprep.subr.bf16.mxu0 0
      %1582 = vmatpush1.bf16.xpose.msra.mxu0 0
      %1583 = vmatprep.subr.bf16.mxu0 0
      %1584 = vmatpush1.bf16.xpose.msra.mxu0 0
      %1585 = vmatprep.subr.bf16.mxu0 0
      %1586 = vmatpush1.bf16.xpose.msra.mxu0 0
      %1587 = vmatprep.subr.bf16.mxu0 0
      %1588 = vmatpush1.bf16.xpose.msra.mxu0 0
      %1589 = vmatprep.subr.bf16.mxu0 0
      %1590 = vmatpush1.bf16.xpose.msra.mxu0 0
      %1591 = vmatprep.subr.bf16.mxu0 0
      %1592 = vmatpush1.bf16.xpose.msra.mxu0 %v1575
      %1593 = vmatprep.subr.bf16.mxu0 0
      %1594 = vmatpush2.bf16.xpose.msra.mxu0 0
      %1595 = vmatprep.subr.bf16.mxu0 0
      %1596 = vmatpush2.bf16.xpose.msra.mxu0 0
      %1597 = vmatprep.subr.bf16.mxu0 0
      %1598 = vmatpush2.bf16.xpose.msra.mxu0 0
      %1599 = vmatprep.subr.bf16.mxu0 0
      %1600 = vmatpush2.bf16.xpose.msra.mxu0 0
      %1601 = vmatprep.subr.bf16.mxu0 0
      %1602 = vmatpush2.bf16.xpose.msra.mxu0 0
      %1603 = vmatprep.subr.bf16.mxu0 0
      %1604 = vmatpush2.bf16.xpose.msra.mxu0 0
      %1605 = vmatprep.subr.bf16.mxu0 0
      %1606 = vmatpush2.bf16.xpose.msra.mxu0 0
      %1607 = vmatprep.subr.bf16.mxu0 0
      %1608 = vmatpush2.bf16.xpose.msra.mxu0 0
      %1609 = vmatprep.mubr.bf16.mxu0 0
      %1610 = vmatmul.mubr.bf16.gmra.mxu0 %v1572
      %v1611 = vpop.f32.mrf.mxu0
      %v1612 = vadd.f32 %v563, %v1611
      %v1613 = vpop.f32.mrf.mxu0
      %v1614 = vpop.f32.mrf.mxu0
      %v1615 = vpop.f32.mrf.mxu0
      %1616 = vdwg.mxu0
      %1618 = vrot.lane.b32.xlu0 %v577, 120
      %v1619 = vpop.permute.xlu0 %1618
      %1620 = vrot.lane.b32.xlu0 %v585, 88
      %v1621 = vpop.permute.xlu0 %1620
      %v1623 = vsel %vm593, %v1619, 0
      %v1626 = vsel %vm593, %v1621, 0
      %1628 = vmatprep.subr.bf16.mxu0 0
      %1629 = vmatpush1.bf16.xpose.msra.mxu0 0
      %1630 = vmatprep.subr.bf16.mxu0 0
      %1631 = vmatpush1.bf16.xpose.msra.mxu0 0
      %1632 = vmatprep.subr.bf16.mxu0 0
      %1633 = vmatpush1.bf16.xpose.msra.mxu0 0
      %1634 = vmatprep.subr.bf16.mxu0 0
      %1635 = vmatpush1.bf16.xpose.msra.mxu0 0
      %1636 = vmatprep.subr.bf16.mxu0 0
      %1637 = vmatpush1.bf16.xpose.msra.mxu0 0
      %1638 = vmatprep.subr.bf16.mxu0 0
      %1639 = vmatpush1.bf16.xpose.msra.mxu0 0
      %1640 = vmatprep.subr.bf16.mxu0 0
      %1641 = vmatpush1.bf16.xpose.msra.mxu0 0
      %1642 = vmatprep.subr.bf16.mxu0 0
      %1643 = vmatpush1.bf16.xpose.msra.mxu0 %v1626
      %1644 = vmatprep.subr.bf16.mxu0 0
      %1645 = vmatpush2.bf16.xpose.msra.mxu0 0
      %1646 = vmatprep.subr.bf16.mxu0 0
      %1647 = vmatpush2.bf16.xpose.msra.mxu0 0
      %1648 = vmatprep.subr.bf16.mxu0 0
      %1649 = vmatpush2.bf16.xpose.msra.mxu0 0
      %1650 = vmatprep.subr.bf16.mxu0 0
      %1651 = vmatpush2.bf16.xpose.msra.mxu0 0
      %1652 = vmatprep.subr.bf16.mxu0 0
      %1653 = vmatpush2.bf16.xpose.msra.mxu0 0
      %1654 = vmatprep.subr.bf16.mxu0 0
      %1655 = vmatpush2.bf16.xpose.msra.mxu0 0
      %1656 = vmatprep.subr.bf16.mxu0 0
      %1657 = vmatpush2.bf16.xpose.msra.mxu0 0
      %1658 = vmatprep.subr.bf16.mxu0 0
      %1659 = vmatpush2.bf16.xpose.msra.mxu0 0
      %1660 = vmatprep.mubr.bf16.mxu0 0
      %1661 = vmatmul.mubr.bf16.gmra.mxu0 %v1623
      %v1662 = vpop.f32.mrf.mxu0
      %v1663 = vadd.f32 %v563, %v1662
      %v1664 = vpop.f32.mrf.mxu0
      %v1665 = vpop.f32.mrf.mxu0
      %v1666 = vpop.f32.mrf.mxu0
      %1667 = vdwg.mxu0
      %1669 = vrot.lane.b32.xlu0 %v578, 120
      %v1670 = vpop.permute.xlu0 %1669
      %1671 = vrot.lane.b32.xlu0 %v586, 88
      %v1672 = vpop.permute.xlu0 %1671
      %v1674 = vsel %vm593, %v1670, 0
      %v1677 = vsel %vm593, %v1672, 0
      %1679 = vmatprep.subr.bf16.mxu0 0
      %1680 = vmatpush1.bf16.xpose.msra.mxu0 0
      %1681 = vmatprep.subr.bf16.mxu0 0
      %1682 = vmatpush1.bf16.xpose.msra.mxu0 0
      %1683 = vmatprep.subr.bf16.mxu0 0
      %1684 = vmatpush1.bf16.xpose.msra.mxu0 0
      %1685 = vmatprep.subr.bf16.mxu0 0
      %1686 = vmatpush1.bf16.xpose.msra.mxu0 0
      %1687 = vmatprep.subr.bf16.mxu0 0
      %1688 = vmatpush1.bf16.xpose.msra.mxu0 0
      %1689 = vmatprep.subr.bf16.mxu0 0
      %1690 = vmatpush1.bf16.xpose.msra.mxu0 0
      %1691 = vmatprep.subr.bf16.mxu0 0
      %1692 = vmatpush1.bf16.xpose.msra.mxu0 0
      %1693 = vmatprep.subr.bf16.mxu0 0
      %1694 = vmatpush1.bf16.xpose.msra.mxu0 %v1677
      %1695 = vmatprep.subr.bf16.mxu0 0
      %1696 = vmatpush2.bf16.xpose.msra.mxu0 0
      %1697 = vmatprep.subr.bf16.mxu0 0
      %1698 = vmatpush2.bf16.xpose.msra.mxu0 0
      %1699 = vmatprep.subr.bf16.mxu0 0
      %1700 = vmatpush2.bf16.xpose.msra.mxu0 0
      %1701 = vmatprep.subr.bf16.mxu0 0
      %1702 = vmatpush2.bf16.xpose.msra.mxu0 0
      %1703 = vmatprep.subr.bf16.mxu0 0
      %1704 = vmatpush2.bf16.xpose.msra.mxu0 0
      %1705 = vmatprep.subr.bf16.mxu0 0
      %1706 = vmatpush2.bf16.xpose.msra.mxu0 0
      %1707 = vmatprep.subr.bf16.mxu0 0
      %1708 = vmatpush2.bf16.xpose.msra.mxu0 0
      %1709 = vmatprep.subr.bf16.mxu0 0
      %1710 = vmatpush2.bf16.xpose.msra.mxu0 0
      %1711 = vmatprep.mubr.bf16.mxu0 0
      %1712 = vmatmul.mubr.bf16.gmra.mxu0 %v1674
      %v1713 = vpop.f32.mrf.mxu0
      %v1714 = vadd.f32 %v563, %v1713
      %v1715 = vpop.f32.mrf.mxu0
      %v1716 = vpop.f32.mrf.mxu0
      %v1717 = vpop.f32.mrf.mxu0
      %1718 = vdwg.mxu0
      %1720 = vrot.lane.b32.xlu0 %v579, 120
      %v1721 = vpop.permute.xlu0 %1720
      %1722 = vrot.lane.b32.xlu0 %v587, 88
      %v1723 = vpop.permute.xlu0 %1722
      %v1725 = vsel %vm593, %v1721, 0
      %v1728 = vsel %vm593, %v1723, 0
      %1730 = vmatprep.subr.bf16.mxu0 0
      %1731 = vmatpush1.bf16.xpose.msra.mxu0 0
      %1732 = vmatprep.subr.bf16.mxu0 0
      %1733 = vmatpush1.bf16.xpose.msra.mxu0 0
      %1734 = vmatprep.subr.bf16.mxu0 0
      %1735 = vmatpush1.bf16.xpose.msra.mxu0 0
      %1736 = vmatprep.subr.bf16.mxu0 0
      %1737 = vmatpush1.bf16.xpose.msra.mxu0 0
      %1738 = vmatprep.subr.bf16.mxu0 0
      %1739 = vmatpush1.bf16.xpose.msra.mxu0 0
      %1740 = vmatprep.subr.bf16.mxu0 0
      %1741 = vmatpush1.bf16.xpose.msra.mxu0 0
      %1742 = vmatprep.subr.bf16.mxu0 0
      %1743 = vmatpush1.bf16.xpose.msra.mxu0 0
      %1744 = vmatprep.subr.bf16.mxu0 0
      %1745 = vmatpush1.bf16.xpose.msra.mxu0 %v1728
      %1746 = vmatprep.subr.bf16.mxu0 0
      %1747 = vmatpush2.bf16.xpose.msra.mxu0 0
      %1748 = vmatprep.subr.bf16.mxu0 0
      %1749 = vmatpush2.bf16.xpose.msra.mxu0 0
      %1750 = vmatprep.subr.bf16.mxu0 0
      %1751 = vmatpush2.bf16.xpose.msra.mxu0 0
      %1752 = vmatprep.subr.bf16.mxu0 0
      %1753 = vmatpush2.bf16.xpose.msra.mxu0 0
      %1754 = vmatprep.subr.bf16.mxu0 0
      %1755 = vmatpush2.bf16.xpose.msra.mxu0 0
      %1756 = vmatprep.subr.bf16.mxu0 0
      %1757 = vmatpush2.bf16.xpose.msra.mxu0 0
      %1758 = vmatprep.subr.bf16.mxu0 0
      %1759 = vmatpush2.bf16.xpose.msra.mxu0 0
      %1760 = vmatprep.subr.bf16.mxu0 0
      %1761 = vmatpush2.bf16.xpose.msra.mxu0 0
      %1762 = vmatprep.mubr.bf16.mxu0 0
      %1763 = vmatmul.mubr.bf16.gmra.mxu0 %v1725
      %v1764 = vpop.f32.mrf.mxu0
      %v1765 = vadd.f32 %v563, %v1764
      %v1766 = vpop.f32.mrf.mxu0
      %v1767 = vpop.f32.mrf.mxu0
      %v1768 = vpop.f32.mrf.mxu0
      %1769 = vdwg.mxu0
      %1771 = vrot.lane.b32.xlu0 %v580, 120
      %v1772 = vpop.permute.xlu0 %1771
      %1773 = vrot.lane.b32.xlu0 %v588, 88
      %v1774 = vpop.permute.xlu0 %1773
      %v1776 = vsel %vm593, %v1772, 0
      %v1779 = vsel %vm593, %v1774, 0
      %1781 = vmatprep.subr.bf16.mxu0 0
      %1782 = vmatpush1.bf16.xpose.msra.mxu0 0
      %1783 = vmatprep.subr.bf16.mxu0 0
      %1784 = vmatpush1.bf16.xpose.msra.mxu0 0
      %1785 = vmatprep.subr.bf16.mxu0 0
      %1786 = vmatpush1.bf16.xpose.msra.mxu0 0
      %1787 = vmatprep.subr.bf16.mxu0 0
      %1788 = vmatpush1.bf16.xpose.msra.mxu0 0
      %1789 = vmatprep.subr.bf16.mxu0 0
      %1790 = vmatpush1.bf16.xpose.msra.mxu0 0
      %1791 = vmatprep.subr.bf16.mxu0 0
      %1792 = vmatpush1.bf16.xpose.msra.mxu0 0
      %1793 = vmatprep.subr.bf16.mxu0 0
      %1794 = vmatpush1.bf16.xpose.msra.mxu0 0
      %1795 = vmatprep.subr.bf16.mxu0 0
      %1796 = vmatpush1.bf16.xpose.msra.mxu0 %v1779
      %1797 = vmatprep.subr.bf16.mxu0 0
      %1798 = vmatpush2.bf16.xpose.msra.mxu0 0
      %1799 = vmatprep.subr.bf16.mxu0 0
      %1800 = vmatpush2.bf16.xpose.msra.mxu0 0
      %1801 = vmatprep.subr.bf16.mxu0 0
      %1802 = vmatpush2.bf16.xpose.msra.mxu0 0
      %1803 = vmatprep.subr.bf16.mxu0 0
      %1804 = vmatpush2.bf16.xpose.msra.mxu0 0
      %1805 = vmatprep.subr.bf16.mxu0 0
      %1806 = vmatpush2.bf16.xpose.msra.mxu0 0
      %1807 = vmatprep.subr.bf16.mxu0 0
      %1808 = vmatpush2.bf16.xpose.msra.mxu0 0
      %1809 = vmatprep.subr.bf16.mxu0 0
      %1810 = vmatpush2.bf16.xpose.msra.mxu0 0
      %1811 = vmatprep.subr.bf16.mxu0 0
      %1812 = vmatpush2.bf16.xpose.msra.mxu0 0
      %1813 = vmatprep.mubr.bf16.mxu0 0
      %1814 = vmatmul.mubr.bf16.gmra.mxu0 %v1776
      %v1815 = vpop.f32.mrf.mxu0
      %v1816 = vadd.f32 %v563, %v1815
      %v1817 = vpop.f32.mrf.mxu0
      %v1818 = vpop.f32.mrf.mxu0
      %v1819 = vpop.f32.mrf.mxu0
      %1820 = vdwg.mxu0
      %1822 = vrot.lane.b32.xlu0 %v581, 120
      %v1823 = vpop.permute.xlu0 %1822
      %1824 = vrot.lane.b32.xlu0 %v589, 88
      %v1825 = vpop.permute.xlu0 %1824
      %v1827 = vsel %vm593, %v1823, 0
      %v1830 = vsel %vm593, %v1825, 0
      %1832 = vmatprep.subr.bf16.mxu0 0
      %1833 = vmatpush1.bf16.xpose.msra.mxu0 0
      %1834 = vmatprep.subr.bf16.mxu0 0
      %1835 = vmatpush1.bf16.xpose.msra.mxu0 0
      %1836 = vmatprep.subr.bf16.mxu0 0
      %1837 = vmatpush1.bf16.xpose.msra.mxu0 0
      %1838 = vmatprep.subr.bf16.mxu0 0
      %1839 = vmatpush1.bf16.xpose.msra.mxu0 0
      %1840 = vmatprep.subr.bf16.mxu0 0
      %1841 = vmatpush1.bf16.xpose.msra.mxu0 0
      %1842 = vmatprep.subr.bf16.mxu0 0
      %1843 = vmatpush1.bf16.xpose.msra.mxu0 0
      %1844 = vmatprep.subr.bf16.mxu0 0
      %1845 = vmatpush1.bf16.xpose.msra.mxu0 0
      %1846 = vmatprep.subr.bf16.mxu0 0
      %1847 = vmatpush1.bf16.xpose.msra.mxu0 %v1830
      %1848 = vmatprep.subr.bf16.mxu0 0
      %1849 = vmatpush2.bf16.xpose.msra.mxu0 0
      %1850 = vmatprep.subr.bf16.mxu0 0
      %1851 = vmatpush2.bf16.xpose.msra.mxu0 0
      %1852 = vmatprep.subr.bf16.mxu0 0
      %1853 = vmatpush2.bf16.xpose.msra.mxu0 0
      %1854 = vmatprep.subr.bf16.mxu0 0
      %1855 = vmatpush2.bf16.xpose.msra.mxu0 0
      %1856 = vmatprep.subr.bf16.mxu0 0
      %1857 = vmatpush2.bf16.xpose.msra.mxu0 0
      %1858 = vmatprep.subr.bf16.mxu0 0
      %1859 = vmatpush2.bf16.xpose.msra.mxu0 0
      %1860 = vmatprep.subr.bf16.mxu0 0
      %1861 = vmatpush2.bf16.xpose.msra.mxu0 0
      %1862 = vmatprep.subr.bf16.mxu0 0
      %1863 = vmatpush2.bf16.xpose.msra.mxu0 0
      %1864 = vmatprep.mubr.bf16.mxu0 0
      %1865 = vmatmul.mubr.bf16.gmra.mxu0 %v1827
      %v1866 = vpop.f32.mrf.mxu0
      %v1867 = vadd.f32 %v563, %v1866
      %v1868 = vpop.f32.mrf.mxu0
      %v1869 = vpop.f32.mrf.mxu0
      %v1870 = vpop.f32.mrf.mxu0
      %1871 = vdwg.mxu0
      %v1872 = vsel %vm593, %v1510, -inf
      %1873 = vmax.xlane.f32.xlu0 %v1872
      %v1874 = vpop.xlane.xlu0 %1873
      %v1875 = vsel %vm593, %v1561, -inf
      %1876 = vmax.xlane.f32.xlu0 %v1875
      %v1877 = vpop.xlane.xlu0 %1876
      %v1878 = vsel %vm593, %v1612, -inf
      %1879 = vmax.xlane.f32.xlu0 %v1878
      %v1880 = vpop.xlane.xlu0 %1879
      %v1881 = vsel %vm593, %v1663, -inf
      %1882 = vmax.xlane.f32.xlu0 %v1881
      %v1883 = vpop.xlane.xlu0 %1882
      %v1884 = vsel %vm593, %v1714, -inf
      %1885 = vmax.xlane.f32.xlu0 %v1884
      %v1886 = vpop.xlane.xlu0 %1885
      %v1887 = vsel %vm593, %v1765, -inf
      %1888 = vmax.xlane.f32.xlu0 %v1887
      %v1889 = vpop.xlane.xlu0 %1888
      %v1890 = vsel %vm593, %v1816, -inf
      %1891 = vmax.xlane.f32.xlu0 %v1890
      %v1892 = vpop.xlane.xlu0 %1891
      %v1893 = vsel %vm593, %v1867, -inf
      %1894 = vmax.xlane.f32.xlu0 %v1893
      %v1895 = vpop.xlane.xlu0 %1894
      %v1896 = vsub.f32 %v1510, %v1874
      %v1897 = vsub.f32 %v1561, %v1877
      %v1898 = vsub.f32 %v1612, %v1880
      %v1899 = vsub.f32 %v1663, %v1883
      %v1900 = vsub.f32 %v1714, %v1886
      %v1901 = vsub.f32 %v1765, %v1889
      %v1902 = vsub.f32 %v1816, %v1892
      %v1903 = vsub.f32 %v1867, %v1895
      %v1904 = vmul.f32 %v1896, 1.442695
      %v1905 = vpow.pop %v1904
      %v1906 = vmul.f32 %v1897, 1.442695
      %v1907 = vpow.pop %v1906
      %v1908 = vmul.f32 %v1898, 1.442695
      %v1909 = vpow.pop %v1908
      %v1910 = vmul.f32 %v1899, 1.442695
      %v1911 = vpow.pop %v1910
      %v1912 = vmul.f32 %v1900, 1.442695
      %v1913 = vpow.pop %v1912
      %v1914 = vmul.f32 %v1901, 1.442695
      %v1915 = vpow.pop %v1914
      %v1916 = vmul.f32 %v1902, 1.442695
      %v1917 = vpow.pop %v1916
      %v1918 = vmul.f32 %v1903, 1.442695
      %v1919 = vpow.pop %v1918
      %v1920 = vsel %vm593, %v1905, 0.0
      %1921 = vadd.xlane.f32.xlu0 %v1920
      %v1922 = vpop.xlane.xlu0 %1921
      %v1923 = vsel %vm593, %v1907, 0.0
      %1924 = vadd.xlane.f32.xlu0 %v1923
      %v1925 = vpop.xlane.xlu0 %1924
      %v1926 = vsel %vm593, %v1909, 0.0
      %1927 = vadd.xlane.f32.xlu0 %v1926
      %v1928 = vpop.xlane.xlu0 %1927
      %v1929 = vsel %vm593, %v1911, 0.0
      %1930 = vadd.xlane.f32.xlu0 %v1929
      %v1931 = vpop.xlane.xlu0 %1930
      %v1932 = vsel %vm593, %v1913, 0.0
      %1933 = vadd.xlane.f32.xlu0 %v1932
      %v1934 = vpop.xlane.xlu0 %1933
      %v1935 = vsel %vm593, %v1915, 0.0
      %1936 = vadd.xlane.f32.xlu0 %v1935
      %v1937 = vpop.xlane.xlu0 %1936
      %v1938 = vsel %vm593, %v1917, 0.0
      %1939 = vadd.xlane.f32.xlu0 %v1938
      %v1940 = vpop.xlane.xlu0 %1939
      %v1941 = vsel %vm593, %v1919, 0.0
      %1942 = vadd.xlane.f32.xlu0 %v1941
      %v1943 = vpop.xlane.xlu0 %1942
      %v1944 = vpack.c.bf16 %v1905, %v1905
      %v1945 = vpack.c.bf16 %v1907, %v1907
      %v1946 = vpack.c.bf16 %v1909, %v1909
      %v1947 = vpack.c.bf16 %v1911, %v1911
      %v1948 = vpack.c.bf16 %v1913, %v1913
      %v1949 = vpack.c.bf16 %v1915, %v1915
      %v1950 = vpack.c.bf16 %v1917, %v1917
      %v1951 = vpack.c.bf16 %v1919, %v1919
      %1952 = vrot.lane.b32.xlu0 %v582, 56
      %v1953 = vpop.permute.xlu0 %1952
      %v1955 = vsel %vm593, %v1944, 0
      %v1958 = vsel %vm1068, %v1953, 0
      %1960 = vmatprep.subr.bf16.mxu0 0
      %1961 = vmatpush1.bf16.msra.mxu0 0
      %1962 = vmatprep.subr.bf16.mxu0 0
      %1963 = vmatpush1.bf16.msra.mxu0 0
      %1964 = vmatprep.subr.bf16.mxu0 0
      %1965 = vmatpush1.bf16.msra.mxu0 0
      %1966 = vmatprep.subr.bf16.mxu0 0
      %1967 = vmatpush1.bf16.msra.mxu0 0
      %1968 = vmatprep.subr.bf16.mxu0 0
      %1969 = vmatpush1.bf16.msra.mxu0 0
      %1970 = vmatprep.subr.bf16.mxu0 0
      %1971 = vmatpush1.bf16.msra.mxu0 0
      %1972 = vmatprep.subr.bf16.mxu0 0
      %1973 = vmatpush1.bf16.msra.mxu0 0
      %1974 = vmatprep.subr.bf16.mxu0 0
      %1975 = vmatpush1.bf16.msra.mxu0 %v1958
      %1976 = vmatprep.subr.bf16.mxu0 0
      %1977 = vmatpush2.bf16.msra.mxu0 0
      %1978 = vmatprep.subr.bf16.mxu0 0
      %1979 = vmatpush2.bf16.msra.mxu0 0
      %1980 = vmatprep.subr.bf16.mxu0 0
      %1981 = vmatpush2.bf16.msra.mxu0 0
      %1982 = vmatprep.subr.bf16.mxu0 0
      %1983 = vmatpush2.bf16.msra.mxu0 0
      %1984 = vmatprep.subr.bf16.mxu0 0
      %1985 = vmatpush2.bf16.msra.mxu0 0
      %1986 = vmatprep.subr.bf16.mxu0 0
      %1987 = vmatpush2.bf16.msra.mxu0 0
      %1988 = vmatprep.subr.bf16.mxu0 0
      %1989 = vmatpush2.bf16.msra.mxu0 0
      %1990 = vmatprep.subr.bf16.mxu0 0
      %1991 = vmatpush2.bf16.msra.mxu0 0
      %1992 = vmatprep.mubr.bf16.mxu0 0
      %1993 = vmatmul.mubr.bf16.gmra.mxu0 %v1955
      %v1994 = vpop.f32.mrf.mxu0
      %v1995 = vadd.f32 0.0, %v1994
      %v1996 = vpop.f32.mrf.mxu0
      %v1997 = vpop.f32.mrf.mxu0
      %v1998 = vpop.f32.mrf.mxu0
      %1999 = vdwg.mxu0
      %2000 = vrot.lane.b32.xlu0 %v583, 56
      %v2001 = vpop.permute.xlu0 %2000
      %v2003 = vsel %vm593, %v1945, 0
      %v2006 = vsel %vm1068, %v2001, 0
      %2008 = vmatprep.subr.bf16.mxu0 0
      %2009 = vmatpush1.bf16.msra.mxu0 0
      %2010 = vmatprep.subr.bf16.mxu0 0
      %2011 = vmatpush1.bf16.msra.mxu0 0
      %2012 = vmatprep.subr.bf16.mxu0 0
      %2013 = vmatpush1.bf16.msra.mxu0 0
      %2014 = vmatprep.subr.bf16.mxu0 0
      %2015 = vmatpush1.bf16.msra.mxu0 0
      %2016 = vmatprep.subr.bf16.mxu0 0
      %2017 = vmatpush1.bf16.msra.mxu0 0
      %2018 = vmatprep.subr.bf16.mxu0 0
      %2019 = vmatpush1.bf16.msra.mxu0 0
      %2020 = vmatprep.subr.bf16.mxu0 0
      %2021 = vmatpush1.bf16.msra.mxu0 0
      %2022 = vmatprep.subr.bf16.mxu0 0
      %2023 = vmatpush1.bf16.msra.mxu0 %v2006
      %2024 = vmatprep.subr.bf16.mxu0 0
      %2025 = vmatpush2.bf16.msra.mxu0 0
      %2026 = vmatprep.subr.bf16.mxu0 0
      %2027 = vmatpush2.bf16.msra.mxu0 0
      %2028 = vmatprep.subr.bf16.mxu0 0
      %2029 = vmatpush2.bf16.msra.mxu0 0
      %2030 = vmatprep.subr.bf16.mxu0 0
      %2031 = vmatpush2.bf16.msra.mxu0 0
      %2032 = vmatprep.subr.bf16.mxu0 0
      %2033 = vmatpush2.bf16.msra.mxu0 0
      %2034 = vmatprep.subr.bf16.mxu0 0
      %2035 = vmatpush2.bf16.msra.mxu0 0
      %2036 = vmatprep.subr.bf16.mxu0 0
      %2037 = vmatpush2.bf16.msra.mxu0 0
      %2038 = vmatprep.subr.bf16.mxu0 0
      %2039 = vmatpush2.bf16.msra.mxu0 0
      %2040 = vmatprep.mubr.bf16.mxu0 0
      %2041 = vmatmul.mubr.bf16.gmra.mxu0 %v2003
      %v2042 = vpop.f32.mrf.mxu0
      %v2043 = vadd.f32 0.0, %v2042
      %v2044 = vpop.f32.mrf.mxu0
      %v2045 = vpop.f32.mrf.mxu0
      %v2046 = vpop.f32.mrf.mxu0
      %2047 = vdwg.mxu0
      %2048 = vrot.lane.b32.xlu0 %v584, 56
      %v2049 = vpop.permute.xlu0 %2048
      %v2051 = vsel %vm593, %v1946, 0
      %v2054 = vsel %vm1068, %v2049, 0
      %2056 = vmatprep.subr.bf16.mxu0 0
      %2057 = vmatpush1.bf16.msra.mxu0 0
      %2058 = vmatprep.subr.bf16.mxu0 0
      %2059 = vmatpush1.bf16.msra.mxu0 0
      %2060 = vmatprep.subr.bf16.mxu0 0
      %2061 = vmatpush1.bf16.msra.mxu0 0
      %2062 = vmatprep.subr.bf16.mxu0 0
      %2063 = vmatpush1.bf16.msra.mxu0 0
      %2064 = vmatprep.subr.bf16.mxu0 0
      %2065 = vmatpush1.bf16.msra.mxu0 0
      %2066 = vmatprep.subr.bf16.mxu0 0
      %2067 = vmatpush1.bf16.msra.mxu0 0
      %2068 = vmatprep.subr.bf16.mxu0 0
      %2069 = vmatpush1.bf16.msra.mxu0 0
      %2070 = vmatprep.subr.bf16.mxu0 0
      %2071 = vmatpush1.bf16.msra.mxu0 %v2054
      %2072 = vmatprep.subr.bf16.mxu0 0
      %2073 = vmatpush2.bf16.msra.mxu0 0
      %2074 = vmatprep.subr.bf16.mxu0 0
      %2075 = vmatpush2.bf16.msra.mxu0 0
      %2076 = vmatprep.subr.bf16.mxu0 0
      %2077 = vmatpush2.bf16.msra.mxu0 0
      %2078 = vmatprep.subr.bf16.mxu0 0
      %2079 = vmatpush2.bf16.msra.mxu0 0
      %2080 = vmatprep.subr.bf16.mxu0 0
      %2081 = vmatpush2.bf16.msra.mxu0 0
      %2082 = vmatprep.subr.bf16.mxu0 0
      %2083 = vmatpush2.bf16.msra.mxu0 0
      %2084 = vmatprep.subr.bf16.mxu0 0
      %2085 = vmatpush2.bf16.msra.mxu0 0
      %2086 = vmatprep.subr.bf16.mxu0 0
      %2087 = vmatpush2.bf16.msra.mxu0 0
      %2088 = vmatprep.mubr.bf16.mxu0 0
      %2089 = vmatmul.mubr.bf16.gmra.mxu0 %v2051
      %v2090 = vpop.f32.mrf.mxu0
      %v2091 = vadd.f32 0.0, %v2090
      %v2092 = vpop.f32.mrf.mxu0
      %v2093 = vpop.f32.mrf.mxu0
      %v2094 = vpop.f32.mrf.mxu0
      %2095 = vdwg.mxu0
      %2096 = vrot.lane.b32.xlu0 %v585, 56
      %v2097 = vpop.permute.xlu0 %2096
      %v2099 = vsel %vm593, %v1947, 0
      %v2102 = vsel %vm1068, %v2097, 0
      %2104 = vmatprep.subr.bf16.mxu0 0
      %2105 = vmatpush1.bf16.msra.mxu0 0
      %2106 = vmatprep.subr.bf16.mxu0 0
      %2107 = vmatpush1.bf16.msra.mxu0 0
      %2108 = vmatprep.subr.bf16.mxu0 0
      %2109 = vmatpush1.bf16.msra.mxu0 0
      %2110 = vmatprep.subr.bf16.mxu0 0
      %2111 = vmatpush1.bf16.msra.mxu0 0
      %2112 = vmatprep.subr.bf16.mxu0 0
      %2113 = vmatpush1.bf16.msra.mxu0 0
      %2114 = vmatprep.subr.bf16.mxu0 0
      %2115 = vmatpush1.bf16.msra.mxu0 0
      %2116 = vmatprep.subr.bf16.mxu0 0
      %2117 = vmatpush1.bf16.msra.mxu0 0
      %2118 = vmatprep.subr.bf16.mxu0 0
      %2119 = vmatpush1.bf16.msra.mxu0 %v2102
      %2120 = vmatprep.subr.bf16.mxu0 0
      %2121 = vmatpush2.bf16.msra.mxu0 0
      %2122 = vmatprep.subr.bf16.mxu0 0
      %2123 = vmatpush2.bf16.msra.mxu0 0
      %2124 = vmatprep.subr.bf16.mxu0 0
      %2125 = vmatpush2.bf16.msra.mxu0 0
      %2126 = vmatprep.subr.bf16.mxu0 0
      %2127 = vmatpush2.bf16.msra.mxu0 0
      %2128 = vmatprep.subr.bf16.mxu0 0
      %2129 = vmatpush2.bf16.msra.mxu0 0
      %2130 = vmatprep.subr.bf16.mxu0 0
      %2131 = vmatpush2.bf16.msra.mxu0 0
      %2132 = vmatprep.subr.bf16.mxu0 0
      %2133 = vmatpush2.bf16.msra.mxu0 0
      %2134 = vmatprep.subr.bf16.mxu0 0
      %2135 = vmatpush2.bf16.msra.mxu0 0
      %2136 = vmatprep.mubr.bf16.mxu0 0
      %2137 = vmatmul.mubr.bf16.gmra.mxu0 %v2099
      %v2138 = vpop.f32.mrf.mxu0
      %v2139 = vadd.f32 0.0, %v2138
      %v2140 = vpop.f32.mrf.mxu0
      %v2141 = vpop.f32.mrf.mxu0
      %v2142 = vpop.f32.mrf.mxu0
      %2143 = vdwg.mxu0
      %2144 = vrot.lane.b32.xlu0 %v586, 56
      %v2145 = vpop.permute.xlu0 %2144
      %v2147 = vsel %vm593, %v1948, 0
      %v2150 = vsel %vm1068, %v2145, 0
      %2152 = vmatprep.subr.bf16.mxu0 0
      %2153 = vmatpush1.bf16.msra.mxu0 0
      %2154 = vmatprep.subr.bf16.mxu0 0
      %2155 = vmatpush1.bf16.msra.mxu0 0
      %2156 = vmatprep.subr.bf16.mxu0 0
      %2157 = vmatpush1.bf16.msra.mxu0 0
      %2158 = vmatprep.subr.bf16.mxu0 0
      %2159 = vmatpush1.bf16.msra.mxu0 0
      %2160 = vmatprep.subr.bf16.mxu0 0
      %2161 = vmatpush1.bf16.msra.mxu0 0
      %2162 = vmatprep.subr.bf16.mxu0 0
      %2163 = vmatpush1.bf16.msra.mxu0 0
      %2164 = vmatprep.subr.bf16.mxu0 0
      %2165 = vmatpush1.bf16.msra.mxu0 0
      %2166 = vmatprep.subr.bf16.mxu0 0
      %2167 = vmatpush1.bf16.msra.mxu0 %v2150
      %2168 = vmatprep.subr.bf16.mxu0 0
      %2169 = vmatpush2.bf16.msra.mxu0 0
      %2170 = vmatprep.subr.bf16.mxu0 0
      %2171 = vmatpush2.bf16.msra.mxu0 0
      %2172 = vmatprep.subr.bf16.mxu0 0
      %2173 = vmatpush2.bf16.msra.mxu0 0
      %2174 = vmatprep.subr.bf16.mxu0 0
      %2175 = vmatpush2.bf16.msra.mxu0 0
      %2176 = vmatprep.subr.bf16.mxu0 0
      %2177 = vmatpush2.bf16.msra.mxu0 0
      %2178 = vmatprep.subr.bf16.mxu0 0
      %2179 = vmatpush2.bf16.msra.mxu0 0
      %2180 = vmatprep.subr.bf16.mxu0 0
      %2181 = vmatpush2.bf16.msra.mxu0 0
      %2182 = vmatprep.subr.bf16.mxu0 0
      %2183 = vmatpush2.bf16.msra.mxu0 0
      %2184 = vmatprep.mubr.bf16.mxu0 0
      %2185 = vmatmul.mubr.bf16.gmra.mxu0 %v2147
      %v2186 = vpop.f32.mrf.mxu0
      %v2187 = vadd.f32 0.0, %v2186
      %v2188 = vpop.f32.mrf.mxu0
      %v2189 = vpop.f32.mrf.mxu0
      %v2190 = vpop.f32.mrf.mxu0
      %2191 = vdwg.mxu0
      %2192 = vrot.lane.b32.xlu0 %v587, 56
      %v2193 = vpop.permute.xlu0 %2192
      %v2195 = vsel %vm593, %v1949, 0
      %v2198 = vsel %vm1068, %v2193, 0
      %2200 = vmatprep.subr.bf16.mxu0 0
      %2201 = vmatpush1.bf16.msra.mxu0 0
      %2202 = vmatprep.subr.bf16.mxu0 0
      %2203 = vmatpush1.bf16.msra.mxu0 0
      %2204 = vmatprep.subr.bf16.mxu0 0
      %2205 = vmatpush1.bf16.msra.mxu0 0
      %2206 = vmatprep.subr.bf16.mxu0 0
      %2207 = vmatpush1.bf16.msra.mxu0 0
      %2208 = vmatprep.subr.bf16.mxu0 0
      %2209 = vmatpush1.bf16.msra.mxu0 0
      %2210 = vmatprep.subr.bf16.mxu0 0
      %2211 = vmatpush1.bf16.msra.mxu0 0
      %2212 = vmatprep.subr.bf16.mxu0 0
      %2213 = vmatpush1.bf16.msra.mxu0 0
      %2214 = vmatprep.subr.bf16.mxu0 0
      %2215 = vmatpush1.bf16.msra.mxu0 %v2198
      %2216 = vmatprep.subr.bf16.mxu0 0
      %2217 = vmatpush2.bf16.msra.mxu0 0
      %2218 = vmatprep.subr.bf16.mxu0 0
      %2219 = vmatpush2.bf16.msra.mxu0 0
      %2220 = vmatprep.subr.bf16.mxu0 0
      %2221 = vmatpush2.bf16.msra.mxu0 0
      %2222 = vmatprep.subr.bf16.mxu0 0
      %2223 = vmatpush2.bf16.msra.mxu0 0
      %2224 = vmatprep.subr.bf16.mxu0 0
      %2225 = vmatpush2.bf16.msra.mxu0 0
      %2226 = vmatprep.subr.bf16.mxu0 0
      %2227 = vmatpush2.bf16.msra.mxu0 0
      %2228 = vmatprep.subr.bf16.mxu0 0
      %2229 = vmatpush2.bf16.msra.mxu0 0
      %2230 = vmatprep.subr.bf16.mxu0 0
      %2231 = vmatpush2.bf16.msra.mxu0 0
      %2232 = vmatprep.mubr.bf16.mxu0 0
      %2233 = vmatmul.mubr.bf16.gmra.mxu0 %v2195
      %v2234 = vpop.f32.mrf.mxu0
      %v2235 = vadd.f32 0.0, %v2234
      %v2236 = vpop.f32.mrf.mxu0
      %v2237 = vpop.f32.mrf.mxu0
      %v2238 = vpop.f32.mrf.mxu0
      %2239 = vdwg.mxu0
      %2240 = vrot.lane.b32.xlu0 %v588, 56
      %v2241 = vpop.permute.xlu0 %2240
      %v2243 = vsel %vm593, %v1950, 0
      %v2246 = vsel %vm1068, %v2241, 0
      %2248 = vmatprep.subr.bf16.mxu0 0
      %2249 = vmatpush1.bf16.msra.mxu0 0
      %2250 = vmatprep.subr.bf16.mxu0 0
      %2251 = vmatpush1.bf16.msra.mxu0 0
      %2252 = vmatprep.subr.bf16.mxu0 0
      %2253 = vmatpush1.bf16.msra.mxu0 0
      %2254 = vmatprep.subr.bf16.mxu0 0
      %2255 = vmatpush1.bf16.msra.mxu0 0
      %2256 = vmatprep.subr.bf16.mxu0 0
      %2257 = vmatpush1.bf16.msra.mxu0 0
      %2258 = vmatprep.subr.bf16.mxu0 0
      %2259 = vmatpush1.bf16.msra.mxu0 0
      %2260 = vmatprep.subr.bf16.mxu0 0
      %2261 = vmatpush1.bf16.msra.mxu0 0
      %2262 = vmatprep.subr.bf16.mxu0 0
      %2263 = vmatpush1.bf16.msra.mxu0 %v2246
      %2264 = vmatprep.subr.bf16.mxu0 0
      %2265 = vmatpush2.bf16.msra.mxu0 0
      %2266 = vmatprep.subr.bf16.mxu0 0
      %2267 = vmatpush2.bf16.msra.mxu0 0
      %2268 = vmatprep.subr.bf16.mxu0 0
      %2269 = vmatpush2.bf16.msra.mxu0 0
      %2270 = vmatprep.subr.bf16.mxu0 0
      %2271 = vmatpush2.bf16.msra.mxu0 0
      %2272 = vmatprep.subr.bf16.mxu0 0
      %2273 = vmatpush2.bf16.msra.mxu0 0
      %2274 = vmatprep.subr.bf16.mxu0 0
      %2275 = vmatpush2.bf16.msra.mxu0 0
      %2276 = vmatprep.subr.bf16.mxu0 0
      %2277 = vmatpush2.bf16.msra.mxu0 0
      %2278 = vmatprep.subr.bf16.mxu0 0
      %2279 = vmatpush2.bf16.msra.mxu0 0
      %2280 = vmatprep.mubr.bf16.mxu0 0
      %2281 = vmatmul.mubr.bf16.gmra.mxu0 %v2243
      %v2282 = vpop.f32.mrf.mxu0
      %v2283 = vadd.f32 0.0, %v2282
      %v2284 = vpop.f32.mrf.mxu0
      %v2285 = vpop.f32.mrf.mxu0
      %v2286 = vpop.f32.mrf.mxu0
      %2287 = vdwg.mxu0
      %2288 = vrot.lane.b32.xlu0 %v589, 56
      %v2289 = vpop.permute.xlu0 %2288
      %v2291 = vsel %vm593, %v1951, 0
      %v2294 = vsel %vm1068, %v2289, 0
      %2296 = vmatprep.subr.bf16.mxu0 0
      %2297 = vmatpush1.bf16.msra.mxu0 0
      %2298 = vmatprep.subr.bf16.mxu0 0
      %2299 = vmatpush1.bf16.msra.mxu0 0
      %2300 = vmatprep.subr.bf16.mxu0 0
      %2301 = vmatpush1.bf16.msra.mxu0 0
      %2302 = vmatprep.subr.bf16.mxu0 0
      %2303 = vmatpush1.bf16.msra.mxu0 0
      %2304 = vmatprep.subr.bf16.mxu0 0
      %2305 = vmatpush1.bf16.msra.mxu0 0
      %2306 = vmatprep.subr.bf16.mxu0 0
      %2307 = vmatpush1.bf16.msra.mxu0 0
      %2308 = vmatprep.subr.bf16.mxu0 0
      %2309 = vmatpush1.bf16.msra.mxu0 0
      %2310 = vmatprep.subr.bf16.mxu0 0
      %2311 = vmatpush1.bf16.msra.mxu0 %v2294
      %2312 = vmatprep.subr.bf16.mxu0 0
      %2313 = vmatpush2.bf16.msra.mxu0 0
      %2314 = vmatprep.subr.bf16.mxu0 0
      %2315 = vmatpush2.bf16.msra.mxu0 0
      %2316 = vmatprep.subr.bf16.mxu0 0
      %2317 = vmatpush2.bf16.msra.mxu0 0
      %2318 = vmatprep.subr.bf16.mxu0 0
      %2319 = vmatpush2.bf16.msra.mxu0 0
      %2320 = vmatprep.subr.bf16.mxu0 0
      %2321 = vmatpush2.bf16.msra.mxu0 0
      %2322 = vmatprep.subr.bf16.mxu0 0
      %2323 = vmatpush2.bf16.msra.mxu0 0
      %2324 = vmatprep.subr.bf16.mxu0 0
      %2325 = vmatpush2.bf16.msra.mxu0 0
      %2326 = vmatprep.subr.bf16.mxu0 0
      %2327 = vmatpush2.bf16.msra.mxu0 0
      %2328 = vmatprep.mubr.bf16.mxu0 0
      %2329 = vmatmul.mubr.bf16.gmra.mxu0 %v2291
      %v2330 = vpop.f32.mrf.mxu0
      %v2331 = vadd.f32 0.0, %v2330
      %v2332 = vpop.f32.mrf.mxu0
      %v2333 = vpop.f32.mrf.mxu0
      %v2334 = vpop.f32.mrf.mxu0
      %2335 = vdwg.mxu0
      %v2336 = vrcp.pop %v1922
      %v2337 = vrcp.pop %v1925
      %v2338 = vrcp.pop %v1928
      %v2339 = vrcp.pop %v1931
      %v2340 = vrcp.pop %v1934
      %v2341 = vrcp.pop %v1937
      %v2342 = vrcp.pop %v1940
      %v2343 = vrcp.pop %v1943
      %v2344 = vmul.f32 %v1995, %v2336
      %v2345 = vmul.f32 %v2043, %v2337
      %v2346 = vmul.f32 %v2091, %v2338
      %v2347 = vmul.f32 %v2139, %v2339
      %v2348 = vmul.f32 %v2187, %v2340
      %v2349 = vmul.f32 %v2235, %v2341
      %v2350 = vmul.f32 %v2283, %v2342
      %v2351 = vmul.f32 %v2331, %v2343
      %2352 = vrot.lane.b32.xlu0 %v574, 112
      %v2353 = vpop.permute.xlu0 %2352
      %2354 = vrot.lane.b32.xlu0 %v582, 80
      %v2355 = vpop.permute.xlu0 %2354
      %v2357 = vsel %vm593, %v2353, 0
      %v2360 = vsel %vm593, %v2355, 0
      %2362 = vmatprep.subr.bf16.mxu0 0
      %2363 = vmatpush1.bf16.xpose.msra.mxu0 0
      %2364 = vmatprep.subr.bf16.mxu0 0
      %2365 = vmatpush1.bf16.xpose.msra.mxu0 0
      %2366 = vmatprep.subr.bf16.mxu0 0
      %2367 = vmatpush1.bf16.xpose.msra.mxu0 0
      %2368 = vmatprep.subr.bf16.mxu0 0
      %2369 = vmatpush1.bf16.xpose.msra.mxu0 0
      %2370 = vmatprep.subr.bf16.mxu0 0
      %2371 = vmatpush1.bf16.xpose.msra.mxu0 0
      %2372 = vmatprep.subr.bf16.mxu0 0
      %2373 = vmatpush1.bf16.xpose.msra.mxu0 0
      %2374 = vmatprep.subr.bf16.mxu0 0
      %2375 = vmatpush1.bf16.xpose.msra.mxu0 0
      %2376 = vmatprep.subr.bf16.mxu0 0
      %2377 = vmatpush1.bf16.xpose.msra.mxu0 %v2360
      %2378 = vmatprep.subr.bf16.mxu0 0
      %2379 = vmatpush2.bf16.xpose.msra.mxu0 0
      %2380 = vmatprep.subr.bf16.mxu0 0
      %2381 = vmatpush2.bf16.xpose.msra.mxu0 0
      %2382 = vmatprep.subr.bf16.mxu0 0
      %2383 = vmatpush2.bf16.xpose.msra.mxu0 0
      %2384 = vmatprep.subr.bf16.mxu0 0
      %2385 = vmatpush2.bf16.xpose.msra.mxu0 0
      %2386 = vmatprep.subr.bf16.mxu0 0
      %2387 = vmatpush2.bf16.xpose.msra.mxu0 0
      %2388 = vmatprep.subr.bf16.mxu0 0
      %2389 = vmatpush2.bf16.xpose.msra.mxu0 0
      %2390 = vmatprep.subr.bf16.mxu0 0
      %2391 = vmatpush2.bf16.xpose.msra.mxu0 0
      %2392 = vmatprep.subr.bf16.mxu0 0
      %2393 = vmatpush2.bf16.xpose.msra.mxu0 0
      %2394 = vmatprep.mubr.bf16.mxu0 0
      %2395 = vmatmul.mubr.bf16.gmra.mxu0 %v2357
      %v2396 = vpop.f32.mrf.mxu0
      %v2397 = vadd.f32 %v564, %v2396
      %v2398 = vpop.f32.mrf.mxu0
      %v2399 = vpop.f32.mrf.mxu0
      %v2400 = vpop.f32.mrf.mxu0
      %2401 = vdwg.mxu0
      %2402 = vrot.lane.b32.xlu0 %v575, 112
      %v2403 = vpop.permute.xlu0 %2402
      %2404 = vrot.lane.b32.xlu0 %v583, 80
      %v2405 = vpop.permute.xlu0 %2404
      %v2407 = vsel %vm593, %v2403, 0
      %v2410 = vsel %vm593, %v2405, 0
      %2412 = vmatprep.subr.bf16.mxu0 0
      %2413 = vmatpush1.bf16.xpose.msra.mxu0 0
      %2414 = vmatprep.subr.bf16.mxu0 0
      %2415 = vmatpush1.bf16.xpose.msra.mxu0 0
      %2416 = vmatprep.subr.bf16.mxu0 0
      %2417 = vmatpush1.bf16.xpose.msra.mxu0 0
      %2418 = vmatprep.subr.bf16.mxu0 0
      %2419 = vmatpush1.bf16.xpose.msra.mxu0 0
      %2420 = vmatprep.subr.bf16.mxu0 0
      %2421 = vmatpush1.bf16.xpose.msra.mxu0 0
      %2422 = vmatprep.subr.bf16.mxu0 0
      %2423 = vmatpush1.bf16.xpose.msra.mxu0 0
      %2424 = vmatprep.subr.bf16.mxu0 0
      %2425 = vmatpush1.bf16.xpose.msra.mxu0 0
      %2426 = vmatprep.subr.bf16.mxu0 0
      %2427 = vmatpush1.bf16.xpose.msra.mxu0 %v2410
      %2428 = vmatprep.subr.bf16.mxu0 0
      %2429 = vmatpush2.bf16.xpose.msra.mxu0 0
      %2430 = vmatprep.subr.bf16.mxu0 0
      %2431 = vmatpush2.bf16.xpose.msra.mxu0 0
      %2432 = vmatprep.subr.bf16.mxu0 0
      %2433 = vmatpush2.bf16.xpose.msra.mxu0 0
      %2434 = vmatprep.subr.bf16.mxu0 0
      %2435 = vmatpush2.bf16.xpose.msra.mxu0 0
      %2436 = vmatprep.subr.bf16.mxu0 0
      %2437 = vmatpush2.bf16.xpose.msra.mxu0 0
      %2438 = vmatprep.subr.bf16.mxu0 0
      %2439 = vmatpush2.bf16.xpose.msra.mxu0 0
      %2440 = vmatprep.subr.bf16.mxu0 0
      %2441 = vmatpush2.bf16.xpose.msra.mxu0 0
      %2442 = vmatprep.subr.bf16.mxu0 0
      %2443 = vmatpush2.bf16.xpose.msra.mxu0 0
      %2444 = vmatprep.mubr.bf16.mxu0 0
      %2445 = vmatmul.mubr.bf16.gmra.mxu0 %v2407
      %v2446 = vpop.f32.mrf.mxu0
      %v2447 = vadd.f32 %v564, %v2446
      %v2448 = vpop.f32.mrf.mxu0
      %v2449 = vpop.f32.mrf.mxu0
      %v2450 = vpop.f32.mrf.mxu0
      %2451 = vdwg.mxu0
      %2452 = vrot.lane.b32.xlu0 %v576, 112
      %v2453 = vpop.permute.xlu0 %2452
      %2454 = vrot.lane.b32.xlu0 %v584, 80
      %v2455 = vpop.permute.xlu0 %2454
      %v2457 = vsel %vm593, %v2453, 0
      %v2460 = vsel %vm593, %v2455, 0
      %2462 = vmatprep.subr.bf16.mxu0 0
      %2463 = vmatpush1.bf16.xpose.msra.mxu0 0
      %2464 = vmatprep.subr.bf16.mxu0 0
      %2465 = vmatpush1.bf16.xpose.msra.mxu0 0
      %2466 = vmatprep.subr.bf16.mxu0 0
      %2467 = vmatpush1.bf16.xpose.msra.mxu0 0
      %2468 = vmatprep.subr.bf16.mxu0 0
      %2469 = vmatpush1.bf16.xpose.msra.mxu0 0
      %2470 = vmatprep.subr.bf16.mxu0 0
      %2471 = vmatpush1.bf16.xpose.msra.mxu0 0
      %2472 = vmatprep.subr.bf16.mxu0 0
      %2473 = vmatpush1.bf16.xpose.msra.mxu0 0
      %2474 = vmatprep.subr.bf16.mxu0 0
      %2475 = vmatpush1.bf16.xpose.msra.mxu0 0
      %2476 = vmatprep.subr.bf16.mxu0 0
      %2477 = vmatpush1.bf16.xpose.msra.mxu0 %v2460
      %2478 = vmatprep.subr.bf16.mxu0 0
      %2479 = vmatpush2.bf16.xpose.msra.mxu0 0
      %2480 = vmatprep.subr.bf16.mxu0 0
      %2481 = vmatpush2.bf16.xpose.msra.mxu0 0
      %2482 = vmatprep.subr.bf16.mxu0 0
      %2483 = vmatpush2.bf16.xpose.msra.mxu0 0
      %2484 = vmatprep.subr.bf16.mxu0 0
      %2485 = vmatpush2.bf16.xpose.msra.mxu0 0
      %2486 = vmatprep.subr.bf16.mxu0 0
      %2487 = vmatpush2.bf16.xpose.msra.mxu0 0
      %2488 = vmatprep.subr.bf16.mxu0 0
      %2489 = vmatpush2.bf16.xpose.msra.mxu0 0
      %2490 = vmatprep.subr.bf16.mxu0 0
      %2491 = vmatpush2.bf16.xpose.msra.mxu0 0
      %2492 = vmatprep.subr.bf16.mxu0 0
      %2493 = vmatpush2.bf16.xpose.msra.mxu0 0
      %2494 = vmatprep.mubr.bf16.mxu0 0
      %2495 = vmatmul.mubr.bf16.gmra.mxu0 %v2457
      %v2496 = vpop.f32.mrf.mxu0
      %v2497 = vadd.f32 %v564, %v2496
      %v2498 = vpop.f32.mrf.mxu0
      %v2499 = vpop.f32.mrf.mxu0
      %v2500 = vpop.f32.mrf.mxu0
      %2501 = vdwg.mxu0
      %2502 = vrot.lane.b32.xlu0 %v577, 112
      %v2503 = vpop.permute.xlu0 %2502
      %2504 = vrot.lane.b32.xlu0 %v585, 80
      %v2505 = vpop.permute.xlu0 %2504
      %v2507 = vsel %vm593, %v2503, 0
      %v2510 = vsel %vm593, %v2505, 0
      %2512 = vmatprep.subr.bf16.mxu0 0
      %2513 = vmatpush1.bf16.xpose.msra.mxu0 0
      %2514 = vmatprep.subr.bf16.mxu0 0
      %2515 = vmatpush1.bf16.xpose.msra.mxu0 0
      %2516 = vmatprep.subr.bf16.mxu0 0
      %2517 = vmatpush1.bf16.xpose.msra.mxu0 0
      %2518 = vmatprep.subr.bf16.mxu0 0
      %2519 = vmatpush1.bf16.xpose.msra.mxu0 0
      %2520 = vmatprep.subr.bf16.mxu0 0
      %2521 = vmatpush1.bf16.xpose.msra.mxu0 0
      %2522 = vmatprep.subr.bf16.mxu0 0
      %2523 = vmatpush1.bf16.xpose.msra.mxu0 0
      %2524 = vmatprep.subr.bf16.mxu0 0
      %2525 = vmatpush1.bf16.xpose.msra.mxu0 0
      %2526 = vmatprep.subr.bf16.mxu0 0
      %2527 = vmatpush1.bf16.xpose.msra.mxu0 %v2510
      %2528 = vmatprep.subr.bf16.mxu0 0
      %2529 = vmatpush2.bf16.xpose.msra.mxu0 0
      %2530 = vmatprep.subr.bf16.mxu0 0
      %2531 = vmatpush2.bf16.xpose.msra.mxu0 0
      %2532 = vmatprep.subr.bf16.mxu0 0
      %2533 = vmatpush2.bf16.xpose.msra.mxu0 0
      %2534 = vmatprep.subr.bf16.mxu0 0
      %2535 = vmatpush2.bf16.xpose.msra.mxu0 0
      %2536 = vmatprep.subr.bf16.mxu0 0
      %2537 = vmatpush2.bf16.xpose.msra.mxu0 0
      %2538 = vmatprep.subr.bf16.mxu0 0
      %2539 = vmatpush2.bf16.xpose.msra.mxu0 0
      %2540 = vmatprep.subr.bf16.mxu0 0
      %2541 = vmatpush2.bf16.xpose.msra.mxu0 0
      %2542 = vmatprep.subr.bf16.mxu0 0
      %2543 = vmatpush2.bf16.xpose.msra.mxu0 0
      %2544 = vmatprep.mubr.bf16.mxu0 0
      %2545 = vmatmul.mubr.bf16.gmra.mxu0 %v2507
      %v2546 = vpop.f32.mrf.mxu0
      %v2547 = vadd.f32 %v564, %v2546
      %v2548 = vpop.f32.mrf.mxu0
      %v2549 = vpop.f32.mrf.mxu0
      %v2550 = vpop.f32.mrf.mxu0
      %2551 = vdwg.mxu0
      %2552 = vrot.lane.b32.xlu0 %v578, 112
      %v2553 = vpop.permute.xlu0 %2552
      %2554 = vrot.lane.b32.xlu0 %v586, 80
      %v2555 = vpop.permute.xlu0 %2554
      %v2557 = vsel %vm593, %v2553, 0
      %v2560 = vsel %vm593, %v2555, 0
      %2562 = vmatprep.subr.bf16.mxu0 0
      %2563 = vmatpush1.bf16.xpose.msra.mxu0 0
      %2564 = vmatprep.subr.bf16.mxu0 0
      %2565 = vmatpush1.bf16.xpose.msra.mxu0 0
      %2566 = vmatprep.subr.bf16.mxu0 0
      %2567 = vmatpush1.bf16.xpose.msra.mxu0 0
      %2568 = vmatprep.subr.bf16.mxu0 0
      %2569 = vmatpush1.bf16.xpose.msra.mxu0 0
      %2570 = vmatprep.subr.bf16.mxu0 0
      %2571 = vmatpush1.bf16.xpose.msra.mxu0 0
      %2572 = vmatprep.subr.bf16.mxu0 0
      %2573 = vmatpush1.bf16.xpose.msra.mxu0 0
      %2574 = vmatprep.subr.bf16.mxu0 0
      %2575 = vmatpush1.bf16.xpose.msra.mxu0 0
      %2576 = vmatprep.subr.bf16.mxu0 0
      %2577 = vmatpush1.bf16.xpose.msra.mxu0 %v2560
      %2578 = vmatprep.subr.bf16.mxu0 0
      %2579 = vmatpush2.bf16.xpose.msra.mxu0 0
      %2580 = vmatprep.subr.bf16.mxu0 0
      %2581 = vmatpush2.bf16.xpose.msra.mxu0 0
      %2582 = vmatprep.subr.bf16.mxu0 0
      %2583 = vmatpush2.bf16.xpose.msra.mxu0 0
      %2584 = vmatprep.subr.bf16.mxu0 0
      %2585 = vmatpush2.bf16.xpose.msra.mxu0 0
      %2586 = vmatprep.subr.bf16.mxu0 0
      %2587 = vmatpush2.bf16.xpose.msra.mxu0 0
      %2588 = vmatprep.subr.bf16.mxu0 0
      %2589 = vmatpush2.bf16.xpose.msra.mxu0 0
      %2590 = vmatprep.subr.bf16.mxu0 0
      %2591 = vmatpush2.bf16.xpose.msra.mxu0 0
      %2592 = vmatprep.subr.bf16.mxu0 0
      %2593 = vmatpush2.bf16.xpose.msra.mxu0 0
      %2594 = vmatprep.mubr.bf16.mxu0 0
      %2595 = vmatmul.mubr.bf16.gmra.mxu0 %v2557
      %v2596 = vpop.f32.mrf.mxu0
      %v2597 = vadd.f32 %v564, %v2596
      %v2598 = vpop.f32.mrf.mxu0
      %v2599 = vpop.f32.mrf.mxu0
      %v2600 = vpop.f32.mrf.mxu0
      %2601 = vdwg.mxu0
      %2602 = vrot.lane.b32.xlu0 %v579, 112
      %v2603 = vpop.permute.xlu0 %2602
      %2604 = vrot.lane.b32.xlu0 %v587, 80
      %v2605 = vpop.permute.xlu0 %2604
      %v2607 = vsel %vm593, %v2603, 0
      %v2610 = vsel %vm593, %v2605, 0
      %2612 = vmatprep.subr.bf16.mxu0 0
      %2613 = vmatpush1.bf16.xpose.msra.mxu0 0
      %2614 = vmatprep.subr.bf16.mxu0 0
      %2615 = vmatpush1.bf16.xpose.msra.mxu0 0
      %2616 = vmatprep.subr.bf16.mxu0 0
      %2617 = vmatpush1.bf16.xpose.msra.mxu0 0
      %2618 = vmatprep.subr.bf16.mxu0 0
      %2619 = vmatpush1.bf16.xpose.msra.mxu0 0
      %2620 = vmatprep.subr.bf16.mxu0 0
      %2621 = vmatpush1.bf16.xpose.msra.mxu0 0
      %2622 = vmatprep.subr.bf16.mxu0 0
      %2623 = vmatpush1.bf16.xpose.msra.mxu0 0
      %2624 = vmatprep.subr.bf16.mxu0 0
      %2625 = vmatpush1.bf16.xpose.msra.mxu0 0
      %2626 = vmatprep.subr.bf16.mxu0 0
      %2627 = vmatpush1.bf16.xpose.msra.mxu0 %v2610
      %2628 = vmatprep.subr.bf16.mxu0 0
      %2629 = vmatpush2.bf16.xpose.msra.mxu0 0
      %2630 = vmatprep.subr.bf16.mxu0 0
      %2631 = vmatpush2.bf16.xpose.msra.mxu0 0
      %2632 = vmatprep.subr.bf16.mxu0 0
      %2633 = vmatpush2.bf16.xpose.msra.mxu0 0
      %2634 = vmatprep.subr.bf16.mxu0 0
      %2635 = vmatpush2.bf16.xpose.msra.mxu0 0
      %2636 = vmatprep.subr.bf16.mxu0 0
      %2637 = vmatpush2.bf16.xpose.msra.mxu0 0
      %2638 = vmatprep.subr.bf16.mxu0 0
      %2639 = vmatpush2.bf16.xpose.msra.mxu0 0
      %2640 = vmatprep.subr.bf16.mxu0 0
      %2641 = vmatpush2.bf16.xpose.msra.mxu0 0
      %2642 = vmatprep.subr.bf16.mxu0 0
      %2643 = vmatpush2.bf16.xpose.msra.mxu0 0
      %2644 = vmatprep.mubr.bf16.mxu0 0
      %2645 = vmatmul.mubr.bf16.gmra.mxu0 %v2607
      %v2646 = vpop.f32.mrf.mxu0
      %v2647 = vadd.f32 %v564, %v2646
      %v2648 = vpop.f32.mrf.mxu0
      %v2649 = vpop.f32.mrf.mxu0
      %v2650 = vpop.f32.mrf.mxu0
      %2651 = vdwg.mxu0
      %2652 = vrot.lane.b32.xlu0 %v580, 112
      %v2653 = vpop.permute.xlu0 %2652
      %2654 = vrot.lane.b32.xlu0 %v588, 80
      %v2655 = vpop.permute.xlu0 %2654
      %v2657 = vsel %vm593, %v2653, 0
      %v2660 = vsel %vm593, %v2655, 0
      %2662 = vmatprep.subr.bf16.mxu0 0
      %2663 = vmatpush1.bf16.xpose.msra.mxu0 0
      %2664 = vmatprep.subr.bf16.mxu0 0
      %2665 = vmatpush1.bf16.xpose.msra.mxu0 0
      %2666 = vmatprep.subr.bf16.mxu0 0
      %2667 = vmatpush1.bf16.xpose.msra.mxu0 0
      %2668 = vmatprep.subr.bf16.mxu0 0
      %2669 = vmatpush1.bf16.xpose.msra.mxu0 0
      %2670 = vmatprep.subr.bf16.mxu0 0
      %2671 = vmatpush1.bf16.xpose.msra.mxu0 0
      %2672 = vmatprep.subr.bf16.mxu0 0
      %2673 = vmatpush1.bf16.xpose.msra.mxu0 0
      %2674 = vmatprep.subr.bf16.mxu0 0
      %2675 = vmatpush1.bf16.xpose.msra.mxu0 0
      %2676 = vmatprep.subr.bf16.mxu0 0
      %2677 = vmatpush1.bf16.xpose.msra.mxu0 %v2660
      %2678 = vmatprep.subr.bf16.mxu0 0
      %2679 = vmatpush2.bf16.xpose.msra.mxu0 0
      %2680 = vmatprep.subr.bf16.mxu0 0
      %2681 = vmatpush2.bf16.xpose.msra.mxu0 0
      %2682 = vmatprep.subr.bf16.mxu0 0
      %2683 = vmatpush2.bf16.xpose.msra.mxu0 0
      %2684 = vmatprep.subr.bf16.mxu0 0
      %2685 = vmatpush2.bf16.xpose.msra.mxu0 0
      %2686 = vmatprep.subr.bf16.mxu0 0
      %2687 = vmatpush2.bf16.xpose.msra.mxu0 0
      %2688 = vmatprep.subr.bf16.mxu0 0
      %2689 = vmatpush2.bf16.xpose.msra.mxu0 0
      %2690 = vmatprep.subr.bf16.mxu0 0
      %2691 = vmatpush2.bf16.xpose.msra.mxu0 0
      %2692 = vmatprep.subr.bf16.mxu0 0
      %2693 = vmatpush2.bf16.xpose.msra.mxu0 0
      %2694 = vmatprep.mubr.bf16.mxu0 0
      %2695 = vmatmul.mubr.bf16.gmra.mxu0 %v2657
      %v2696 = vpop.f32.mrf.mxu0
      %v2697 = vadd.f32 %v564, %v2696
      %v2698 = vpop.f32.mrf.mxu0
      %v2699 = vpop.f32.mrf.mxu0
      %v2700 = vpop.f32.mrf.mxu0
      %2701 = vdwg.mxu0
      %2702 = vrot.lane.b32.xlu0 %v581, 112
      %v2703 = vpop.permute.xlu0 %2702
      %2704 = vrot.lane.b32.xlu0 %v589, 80
      %v2705 = vpop.permute.xlu0 %2704
      %v2707 = vsel %vm593, %v2703, 0
      %v2710 = vsel %vm593, %v2705, 0
      %2712 = vmatprep.subr.bf16.mxu0 0
      %2713 = vmatpush1.bf16.xpose.msra.mxu0 0
      %2714 = vmatprep.subr.bf16.mxu0 0
      %2715 = vmatpush1.bf16.xpose.msra.mxu0 0
      %2716 = vmatprep.subr.bf16.mxu0 0
      %2717 = vmatpush1.bf16.xpose.msra.mxu0 0
      %2718 = vmatprep.subr.bf16.mxu0 0
      %2719 = vmatpush1.bf16.xpose.msra.mxu0 0
      %2720 = vmatprep.subr.bf16.mxu0 0
      %2721 = vmatpush1.bf16.xpose.msra.mxu0 0
      %2722 = vmatprep.subr.bf16.mxu0 0
      %2723 = vmatpush1.bf16.xpose.msra.mxu0 0
      %2724 = vmatprep.subr.bf16.mxu0 0
      %2725 = vmatpush1.bf16.xpose.msra.mxu0 0
      %2726 = vmatprep.subr.bf16.mxu0 0
      %2727 = vmatpush1.bf16.xpose.msra.mxu0 %v2710
      %2728 = vmatprep.subr.bf16.mxu0 0
      %2729 = vmatpush2.bf16.xpose.msra.mxu0 0
      %2730 = vmatprep.subr.bf16.mxu0 0
      %2731 = vmatpush2.bf16.xpose.msra.mxu0 0
      %2732 = vmatprep.subr.bf16.mxu0 0
      %2733 = vmatpush2.bf16.xpose.msra.mxu0 0
      %2734 = vmatprep.subr.bf16.mxu0 0
      %2735 = vmatpush2.bf16.xpose.msra.mxu0 0
      %2736 = vmatprep.subr.bf16.mxu0 0
      %2737 = vmatpush2.bf16.xpose.msra.mxu0 0
      %2738 = vmatprep.subr.bf16.mxu0 0
      %2739 = vmatpush2.bf16.xpose.msra.mxu0 0
      %2740 = vmatprep.subr.bf16.mxu0 0
      %2741 = vmatpush2.bf16.xpose.msra.mxu0 0
      %2742 = vmatprep.subr.bf16.mxu0 0
      %2743 = vmatpush2.bf16.xpose.msra.mxu0 0
      %2744 = vmatprep.mubr.bf16.mxu0 0
      %2745 = vmatmul.mubr.bf16.gmra.mxu0 %v2707
      %v2746 = vpop.f32.mrf.mxu0
      %v2747 = vadd.f32 %v564, %v2746
      %v2748 = vpop.f32.mrf.mxu0
      %v2749 = vpop.f32.mrf.mxu0
      %v2750 = vpop.f32.mrf.mxu0
      %2751 = vdwg.mxu0
      %v2752 = vsel %vm593, %v2397, -inf
      %2753 = vmax.xlane.f32.xlu0 %v2752
      %v2754 = vpop.xlane.xlu0 %2753
      %v2755 = vsel %vm593, %v2447, -inf
      %2756 = vmax.xlane.f32.xlu0 %v2755
      %v2757 = vpop.xlane.xlu0 %2756
      %v2758 = vsel %vm593, %v2497, -inf
      %2759 = vmax.xlane.f32.xlu0 %v2758
      %v2760 = vpop.xlane.xlu0 %2759
      %v2761 = vsel %vm593, %v2547, -inf
      %2762 = vmax.xlane.f32.xlu0 %v2761
      %v2763 = vpop.xlane.xlu0 %2762
      %v2764 = vsel %vm593, %v2597, -inf
      %2765 = vmax.xlane.f32.xlu0 %v2764
      %v2766 = vpop.xlane.xlu0 %2765
      %v2767 = vsel %vm593, %v2647, -inf
      %2768 = vmax.xlane.f32.xlu0 %v2767
      %v2769 = vpop.xlane.xlu0 %2768
      %v2770 = vsel %vm593, %v2697, -inf
      %2771 = vmax.xlane.f32.xlu0 %v2770
      %v2772 = vpop.xlane.xlu0 %2771
      %v2773 = vsel %vm593, %v2747, -inf
      %2774 = vmax.xlane.f32.xlu0 %v2773
      %v2775 = vpop.xlane.xlu0 %2774
      %v2776 = vsub.f32 %v2397, %v2754
      %v2777 = vsub.f32 %v2447, %v2757
      %v2778 = vsub.f32 %v2497, %v2760
      %v2779 = vsub.f32 %v2547, %v2763
      %v2780 = vsub.f32 %v2597, %v2766
      %v2781 = vsub.f32 %v2647, %v2769
      %v2782 = vsub.f32 %v2697, %v2772
      %v2783 = vsub.f32 %v2747, %v2775
      %v2784 = vmul.f32 %v2776, 1.442695
      %v2785 = vpow.pop %v2784
      %v2786 = vmul.f32 %v2777, 1.442695
      %v2787 = vpow.pop %v2786
      %v2788 = vmul.f32 %v2778, 1.442695
      %v2789 = vpow.pop %v2788
      %v2790 = vmul.f32 %v2779, 1.442695
      %v2791 = vpow.pop %v2790
      %v2792 = vmul.f32 %v2780, 1.442695
      %v2793 = vpow.pop %v2792
      %v2794 = vmul.f32 %v2781, 1.442695
      %v2795 = vpow.pop %v2794
      %v2796 = vmul.f32 %v2782, 1.442695
      %v2797 = vpow.pop %v2796
      %v2798 = vmul.f32 %v2783, 1.442695
      %v2799 = vpow.pop %v2798
      %v2800 = vsel %vm593, %v2785, 0.0
      %2801 = vadd.xlane.f32.xlu0 %v2800
      %v2802 = vpop.xlane.xlu0 %2801
      %v2803 = vsel %vm593, %v2787, 0.0
      %2804 = vadd.xlane.f32.xlu0 %v2803
      %v2805 = vpop.xlane.xlu0 %2804
      %v2806 = vsel %vm593, %v2789, 0.0
      %2807 = vadd.xlane.f32.xlu0 %v2806
      %v2808 = vpop.xlane.xlu0 %2807
      %v2809 = vsel %vm593, %v2791, 0.0
      %2810 = vadd.xlane.f32.xlu0 %v2809
      %v2811 = vpop.xlane.xlu0 %2810
      %v2812 = vsel %vm593, %v2793, 0.0
      %2813 = vadd.xlane.f32.xlu0 %v2812
      %v2814 = vpop.xlane.xlu0 %2813
      %v2815 = vsel %vm593, %v2795, 0.0
      %2816 = vadd.xlane.f32.xlu0 %v2815
      %v2817 = vpop.xlane.xlu0 %2816
      %v2818 = vsel %vm593, %v2797, 0.0
      %2819 = vadd.xlane.f32.xlu0 %v2818
      %v2820 = vpop.xlane.xlu0 %2819
      %v2821 = vsel %vm593, %v2799, 0.0
      %2822 = vadd.xlane.f32.xlu0 %v2821
      %v2823 = vpop.xlane.xlu0 %2822
      %v2824 = vpack.c.bf16 %v2785, %v2785
      %v2825 = vpack.c.bf16 %v2787, %v2787
      %v2826 = vpack.c.bf16 %v2789, %v2789
      %v2827 = vpack.c.bf16 %v2791, %v2791
      %v2828 = vpack.c.bf16 %v2793, %v2793
      %v2829 = vpack.c.bf16 %v2795, %v2795
      %v2830 = vpack.c.bf16 %v2797, %v2797
      %v2831 = vpack.c.bf16 %v2799, %v2799
      %2832 = vrot.lane.b32.xlu0 %v582, 48
      %v2833 = vpop.permute.xlu0 %2832
      %v2835 = vsel %vm593, %v2824, 0
      %v2838 = vsel %vm1068, %v2833, 0
      %2840 = vmatprep.subr.bf16.mxu0 0
      %2841 = vmatpush1.bf16.msra.mxu0 0
      %2842 = vmatprep.subr.bf16.mxu0 0
      %2843 = vmatpush1.bf16.msra.mxu0 0
      %2844 = vmatprep.subr.bf16.mxu0 0
      %2845 = vmatpush1.bf16.msra.mxu0 0
      %2846 = vmatprep.subr.bf16.mxu0 0
      %2847 = vmatpush1.bf16.msra.mxu0 0
      %2848 = vmatprep.subr.bf16.mxu0 0
      %2849 = vmatpush1.bf16.msra.mxu0 0
      %2850 = vmatprep.subr.bf16.mxu0 0
      %2851 = vmatpush1.bf16.msra.mxu0 0
      %2852 = vmatprep.subr.bf16.mxu0 0
      %2853 = vmatpush1.bf16.msra.mxu0 0
      %2854 = vmatprep.subr.bf16.mxu0 0
      %2855 = vmatpush1.bf16.msra.mxu0 %v2838
      %2856 = vmatprep.subr.bf16.mxu0 0
      %2857 = vmatpush2.bf16.msra.mxu0 0
      %2858 = vmatprep.subr.bf16.mxu0 0
      %2859 = vmatpush2.bf16.msra.mxu0 0
      %2860 = vmatprep.subr.bf16.mxu0 0
      %2861 = vmatpush2.bf16.msra.mxu0 0
      %2862 = vmatprep.subr.bf16.mxu0 0
      %2863 = vmatpush2.bf16.msra.mxu0 0
      %2864 = vmatprep.subr.bf16.mxu0 0
      %2865 = vmatpush2.bf16.msra.mxu0 0
      %2866 = vmatprep.subr.bf16.mxu0 0
      %2867 = vmatpush2.bf16.msra.mxu0 0
      %2868 = vmatprep.subr.bf16.mxu0 0
      %2869 = vmatpush2.bf16.msra.mxu0 0
      %2870 = vmatprep.subr.bf16.mxu0 0
      %2871 = vmatpush2.bf16.msra.mxu0 0
      %2872 = vmatprep.mubr.bf16.mxu0 0
      %2873 = vmatmul.mubr.bf16.gmra.mxu0 %v2835
      %v2874 = vpop.f32.mrf.mxu0
      %v2875 = vadd.f32 0.0, %v2874
      %v2876 = vpop.f32.mrf.mxu0
      %v2877 = vpop.f32.mrf.mxu0
      %v2878 = vpop.f32.mrf.mxu0
      %2879 = vdwg.mxu0
      %2880 = vrot.lane.b32.xlu0 %v583, 48
      %v2881 = vpop.permute.xlu0 %2880
      %v2883 = vsel %vm593, %v2825, 0
      %v2886 = vsel %vm1068, %v2881, 0
      %2888 = vmatprep.subr.bf16.mxu0 0
      %2889 = vmatpush1.bf16.msra.mxu0 0
      %2890 = vmatprep.subr.bf16.mxu0 0
      %2891 = vmatpush1.bf16.msra.mxu0 0
      %2892 = vmatprep.subr.bf16.mxu0 0
      %2893 = vmatpush1.bf16.msra.mxu0 0
      %2894 = vmatprep.subr.bf16.mxu0 0
      %2895 = vmatpush1.bf16.msra.mxu0 0
      %2896 = vmatprep.subr.bf16.mxu0 0
      %2897 = vmatpush1.bf16.msra.mxu0 0
      %2898 = vmatprep.subr.bf16.mxu0 0
      %2899 = vmatpush1.bf16.msra.mxu0 0
      %2900 = vmatprep.subr.bf16.mxu0 0
      %2901 = vmatpush1.bf16.msra.mxu0 0
      %2902 = vmatprep.subr.bf16.mxu0 0
      %2903 = vmatpush1.bf16.msra.mxu0 %v2886
      %2904 = vmatprep.subr.bf16.mxu0 0
      %2905 = vmatpush2.bf16.msra.mxu0 0
      %2906 = vmatprep.subr.bf16.mxu0 0
      %2907 = vmatpush2.bf16.msra.mxu0 0
      %2908 = vmatprep.subr.bf16.mxu0 0
      %2909 = vmatpush2.bf16.msra.mxu0 0
      %2910 = vmatprep.subr.bf16.mxu0 0
      %2911 = vmatpush2.bf16.msra.mxu0 0
      %2912 = vmatprep.subr.bf16.mxu0 0
      %2913 = vmatpush2.bf16.msra.mxu0 0
      %2914 = vmatprep.subr.bf16.mxu0 0
      %2915 = vmatpush2.bf16.msra.mxu0 0
      %2916 = vmatprep.subr.bf16.mxu0 0
      %2917 = vmatpush2.bf16.msra.mxu0 0
      %2918 = vmatprep.subr.bf16.mxu0 0
      %2919 = vmatpush2.bf16.msra.mxu0 0
      %2920 = vmatprep.mubr.bf16.mxu0 0
      %2921 = vmatmul.mubr.bf16.gmra.mxu0 %v2883
      %v2922 = vpop.f32.mrf.mxu0
      %v2923 = vadd.f32 0.0, %v2922
      %v2924 = vpop.f32.mrf.mxu0
      %v2925 = vpop.f32.mrf.mxu0
      %v2926 = vpop.f32.mrf.mxu0
      %2927 = vdwg.mxu0
      %2928 = vrot.lane.b32.xlu0 %v584, 48
      %v2929 = vpop.permute.xlu0 %2928
      %v2931 = vsel %vm593, %v2826, 0
      %v2934 = vsel %vm1068, %v2929, 0
      %2936 = vmatprep.subr.bf16.mxu0 0
      %2937 = vmatpush1.bf16.msra.mxu0 0
      %2938 = vmatprep.subr.bf16.mxu0 0
      %2939 = vmatpush1.bf16.msra.mxu0 0
      %2940 = vmatprep.subr.bf16.mxu0 0
      %2941 = vmatpush1.bf16.msra.mxu0 0
      %2942 = vmatprep.subr.bf16.mxu0 0
      %2943 = vmatpush1.bf16.msra.mxu0 0
      %2944 = vmatprep.subr.bf16.mxu0 0
      %2945 = vmatpush1.bf16.msra.mxu0 0
      %2946 = vmatprep.subr.bf16.mxu0 0
      %2947 = vmatpush1.bf16.msra.mxu0 0
      %2948 = vmatprep.subr.bf16.mxu0 0
      %2949 = vmatpush1.bf16.msra.mxu0 0
      %2950 = vmatprep.subr.bf16.mxu0 0
      %2951 = vmatpush1.bf16.msra.mxu0 %v2934
      %2952 = vmatprep.subr.bf16.mxu0 0
      %2953 = vmatpush2.bf16.msra.mxu0 0
      %2954 = vmatprep.subr.bf16.mxu0 0
      %2955 = vmatpush2.bf16.msra.mxu0 0
      %2956 = vmatprep.subr.bf16.mxu0 0
      %2957 = vmatpush2.bf16.msra.mxu0 0
      %2958 = vmatprep.subr.bf16.mxu0 0
      %2959 = vmatpush2.bf16.msra.mxu0 0
      %2960 = vmatprep.subr.bf16.mxu0 0
      %2961 = vmatpush2.bf16.msra.mxu0 0
      %2962 = vmatprep.subr.bf16.mxu0 0
      %2963 = vmatpush2.bf16.msra.mxu0 0
      %2964 = vmatprep.subr.bf16.mxu0 0
      %2965 = vmatpush2.bf16.msra.mxu0 0
      %2966 = vmatprep.subr.bf16.mxu0 0
      %2967 = vmatpush2.bf16.msra.mxu0 0
      %2968 = vmatprep.mubr.bf16.mxu0 0
      %2969 = vmatmul.mubr.bf16.gmra.mxu0 %v2931
      %v2970 = vpop.f32.mrf.mxu0
      %v2971 = vadd.f32 0.0, %v2970
      %v2972 = vpop.f32.mrf.mxu0
      %v2973 = vpop.f32.mrf.mxu0
      %v2974 = vpop.f32.mrf.mxu0
      %2975 = vdwg.mxu0
      %2976 = vrot.lane.b32.xlu0 %v585, 48
      %v2977 = vpop.permute.xlu0 %2976
      %v2979 = vsel %vm593, %v2827, 0
      %v2982 = vsel %vm1068, %v2977, 0
      %2984 = vmatprep.subr.bf16.mxu0 0
      %2985 = vmatpush1.bf16.msra.mxu0 0
      %2986 = vmatprep.subr.bf16.mxu0 0
      %2987 = vmatpush1.bf16.msra.mxu0 0
      %2988 = vmatprep.subr.bf16.mxu0 0
      %2989 = vmatpush1.bf16.msra.mxu0 0
      %2990 = vmatprep.subr.bf16.mxu0 0
      %2991 = vmatpush1.bf16.msra.mxu0 0
      %2992 = vmatprep.subr.bf16.mxu0 0
      %2993 = vmatpush1.bf16.msra.mxu0 0
      %2994 = vmatprep.subr.bf16.mxu0 0
      %2995 = vmatpush1.bf16.msra.mxu0 0
      %2996 = vmatprep.subr.bf16.mxu0 0
      %2997 = vmatpush1.bf16.msra.mxu0 0
      %2998 = vmatprep.subr.bf16.mxu0 0
      %2999 = vmatpush1.bf16.msra.mxu0 %v2982
      %3000 = vmatprep.subr.bf16.mxu0 0
      %3001 = vmatpush2.bf16.msra.mxu0 0
      %3002 = vmatprep.subr.bf16.mxu0 0
      %3003 = vmatpush2.bf16.msra.mxu0 0
      %3004 = vmatprep.subr.bf16.mxu0 0
      %3005 = vmatpush2.bf16.msra.mxu0 0
      %3006 = vmatprep.subr.bf16.mxu0 0
      %3007 = vmatpush2.bf16.msra.mxu0 0
      %3008 = vmatprep.subr.bf16.mxu0 0
      %3009 = vmatpush2.bf16.msra.mxu0 0
      %3010 = vmatprep.subr.bf16.mxu0 0
      %3011 = vmatpush2.bf16.msra.mxu0 0
      %3012 = vmatprep.subr.bf16.mxu0 0
      %3013 = vmatpush2.bf16.msra.mxu0 0
      %3014 = vmatprep.subr.bf16.mxu0 0
      %3015 = vmatpush2.bf16.msra.mxu0 0
      %3016 = vmatprep.mubr.bf16.mxu0 0
      %3017 = vmatmul.mubr.bf16.gmra.mxu0 %v2979
      %v3018 = vpop.f32.mrf.mxu0
      %v3019 = vadd.f32 0.0, %v3018
      %v3020 = vpop.f32.mrf.mxu0
      %v3021 = vpop.f32.mrf.mxu0
      %v3022 = vpop.f32.mrf.mxu0
      %3023 = vdwg.mxu0
      %3024 = vrot.lane.b32.xlu0 %v586, 48
      %v3025 = vpop.permute.xlu0 %3024
      %v3027 = vsel %vm593, %v2828, 0
      %v3030 = vsel %vm1068, %v3025, 0
      %3032 = vmatprep.subr.bf16.mxu0 0
      %3033 = vmatpush1.bf16.msra.mxu0 0
      %3034 = vmatprep.subr.bf16.mxu0 0
      %3035 = vmatpush1.bf16.msra.mxu0 0
      %3036 = vmatprep.subr.bf16.mxu0 0
      %3037 = vmatpush1.bf16.msra.mxu0 0
      %3038 = vmatprep.subr.bf16.mxu0 0
      %3039 = vmatpush1.bf16.msra.mxu0 0
      %3040 = vmatprep.subr.bf16.mxu0 0
      %3041 = vmatpush1.bf16.msra.mxu0 0
      %3042 = vmatprep.subr.bf16.mxu0 0
      %3043 = vmatpush1.bf16.msra.mxu0 0
      %3044 = vmatprep.subr.bf16.mxu0 0
      %3045 = vmatpush1.bf16.msra.mxu0 0
      %3046 = vmatprep.subr.bf16.mxu0 0
      %3047 = vmatpush1.bf16.msra.mxu0 %v3030
      %3048 = vmatprep.subr.bf16.mxu0 0
      %3049 = vmatpush2.bf16.msra.mxu0 0
      %3050 = vmatprep.subr.bf16.mxu0 0
      %3051 = vmatpush2.bf16.msra.mxu0 0
      %3052 = vmatprep.subr.bf16.mxu0 0
      %3053 = vmatpush2.bf16.msra.mxu0 0
      %3054 = vmatprep.subr.bf16.mxu0 0
      %3055 = vmatpush2.bf16.msra.mxu0 0
      %3056 = vmatprep.subr.bf16.mxu0 0
      %3057 = vmatpush2.bf16.msra.mxu0 0
      %3058 = vmatprep.subr.bf16.mxu0 0
      %3059 = vmatpush2.bf16.msra.mxu0 0
      %3060 = vmatprep.subr.bf16.mxu0 0
      %3061 = vmatpush2.bf16.msra.mxu0 0
      %3062 = vmatprep.subr.bf16.mxu0 0
      %3063 = vmatpush2.bf16.msra.mxu0 0
      %3064 = vmatprep.mubr.bf16.mxu0 0
      %3065 = vmatmul.mubr.bf16.gmra.mxu0 %v3027
      %v3066 = vpop.f32.mrf.mxu0
      %v3067 = vadd.f32 0.0, %v3066
      %v3068 = vpop.f32.mrf.mxu0
      %v3069 = vpop.f32.mrf.mxu0
      %v3070 = vpop.f32.mrf.mxu0
      %3071 = vdwg.mxu0
      %3072 = vrot.lane.b32.xlu0 %v587, 48
      %v3073 = vpop.permute.xlu0 %3072
      %v3075 = vsel %vm593, %v2829, 0
      %v3078 = vsel %vm1068, %v3073, 0
      %3080 = vmatprep.subr.bf16.mxu0 0
      %3081 = vmatpush1.bf16.msra.mxu0 0
      %3082 = vmatprep.subr.bf16.mxu0 0
      %3083 = vmatpush1.bf16.msra.mxu0 0
      %3084 = vmatprep.subr.bf16.mxu0 0
      %3085 = vmatpush1.bf16.msra.mxu0 0
      %3086 = vmatprep.subr.bf16.mxu0 0
      %3087 = vmatpush1.bf16.msra.mxu0 0
      %3088 = vmatprep.subr.bf16.mxu0 0
      %3089 = vmatpush1.bf16.msra.mxu0 0
      %3090 = vmatprep.subr.bf16.mxu0 0
      %3091 = vmatpush1.bf16.msra.mxu0 0
      %3092 = vmatprep.subr.bf16.mxu0 0
      %3093 = vmatpush1.bf16.msra.mxu0 0
      %3094 = vmatprep.subr.bf16.mxu0 0
      %3095 = vmatpush1.bf16.msra.mxu0 %v3078
      %3096 = vmatprep.subr.bf16.mxu0 0
      %3097 = vmatpush2.bf16.msra.mxu0 0
      %3098 = vmatprep.subr.bf16.mxu0 0
      %3099 = vmatpush2.bf16.msra.mxu0 0
      %3100 = vmatprep.subr.bf16.mxu0 0
      %3101 = vmatpush2.bf16.msra.mxu0 0
      %3102 = vmatprep.subr.bf16.mxu0 0
      %3103 = vmatpush2.bf16.msra.mxu0 0
      %3104 = vmatprep.subr.bf16.mxu0 0
      %3105 = vmatpush2.bf16.msra.mxu0 0
      %3106 = vmatprep.subr.bf16.mxu0 0
      %3107 = vmatpush2.bf16.msra.mxu0 0
      %3108 = vmatprep.subr.bf16.mxu0 0
      %3109 = vmatpush2.bf16.msra.mxu0 0
      %3110 = vmatprep.subr.bf16.mxu0 0
      %3111 = vmatpush2.bf16.msra.mxu0 0
      %3112 = vmatprep.mubr.bf16.mxu0 0
      %3113 = vmatmul.mubr.bf16.gmra.mxu0 %v3075
      %v3114 = vpop.f32.mrf.mxu0
      %v3115 = vadd.f32 0.0, %v3114
      %v3116 = vpop.f32.mrf.mxu0
      %v3117 = vpop.f32.mrf.mxu0
      %v3118 = vpop.f32.mrf.mxu0
      %3119 = vdwg.mxu0
      %3120 = vrot.lane.b32.xlu0 %v588, 48
      %v3121 = vpop.permute.xlu0 %3120
      %v3123 = vsel %vm593, %v2830, 0
      %v3126 = vsel %vm1068, %v3121, 0
      %3128 = vmatprep.subr.bf16.mxu0 0
      %3129 = vmatpush1.bf16.msra.mxu0 0
      %3130 = vmatprep.subr.bf16.mxu0 0
      %3131 = vmatpush1.bf16.msra.mxu0 0
      %3132 = vmatprep.subr.bf16.mxu0 0
      %3133 = vmatpush1.bf16.msra.mxu0 0
      %3134 = vmatprep.subr.bf16.mxu0 0
      %3135 = vmatpush1.bf16.msra.mxu0 0
      %3136 = vmatprep.subr.bf16.mxu0 0
      %3137 = vmatpush1.bf16.msra.mxu0 0
      %3138 = vmatprep.subr.bf16.mxu0 0
      %3139 = vmatpush1.bf16.msra.mxu0 0
      %3140 = vmatprep.subr.bf16.mxu0 0
      %3141 = vmatpush1.bf16.msra.mxu0 0
      %3142 = vmatprep.subr.bf16.mxu0 0
      %3143 = vmatpush1.bf16.msra.mxu0 %v3126
      %3144 = vmatprep.subr.bf16.mxu0 0
      %3145 = vmatpush2.bf16.msra.mxu0 0
      %3146 = vmatprep.subr.bf16.mxu0 0
      %3147 = vmatpush2.bf16.msra.mxu0 0
      %3148 = vmatprep.subr.bf16.mxu0 0
      %3149 = vmatpush2.bf16.msra.mxu0 0
      %3150 = vmatprep.subr.bf16.mxu0 0
      %3151 = vmatpush2.bf16.msra.mxu0 0
      %3152 = vmatprep.subr.bf16.mxu0 0
      %3153 = vmatpush2.bf16.msra.mxu0 0
      %3154 = vmatprep.subr.bf16.mxu0 0
      %3155 = vmatpush2.bf16.msra.mxu0 0
      %3156 = vmatprep.subr.bf16.mxu0 0
      %3157 = vmatpush2.bf16.msra.mxu0 0
      %3158 = vmatprep.subr.bf16.mxu0 0
      %3159 = vmatpush2.bf16.msra.mxu0 0
      %3160 = vmatprep.mubr.bf16.mxu0 0
      %3161 = vmatmul.mubr.bf16.gmra.mxu0 %v3123
      %v3162 = vpop.f32.mrf.mxu0
      %v3163 = vadd.f32 0.0, %v3162
      %v3164 = vpop.f32.mrf.mxu0
      %v3165 = vpop.f32.mrf.mxu0
      %v3166 = vpop.f32.mrf.mxu0
      %3167 = vdwg.mxu0
      %3168 = vrot.lane.b32.xlu0 %v589, 48
      %v3169 = vpop.permute.xlu0 %3168
      %v3171 = vsel %vm593, %v2831, 0
      %v3174 = vsel %vm1068, %v3169, 0
      %3176 = vmatprep.subr.bf16.mxu0 0
      %3177 = vmatpush1.bf16.msra.mxu0 0
      %3178 = vmatprep.subr.bf16.mxu0 0
      %3179 = vmatpush1.bf16.msra.mxu0 0
      %3180 = vmatprep.subr.bf16.mxu0 0
      %3181 = vmatpush1.bf16.msra.mxu0 0
      %3182 = vmatprep.subr.bf16.mxu0 0
      %3183 = vmatpush1.bf16.msra.mxu0 0
      %3184 = vmatprep.subr.bf16.mxu0 0
      %3185 = vmatpush1.bf16.msra.mxu0 0
      %3186 = vmatprep.subr.bf16.mxu0 0
      %3187 = vmatpush1.bf16.msra.mxu0 0
      %3188 = vmatprep.subr.bf16.mxu0 0
      %3189 = vmatpush1.bf16.msra.mxu0 0
      %3190 = vmatprep.subr.bf16.mxu0 0
      %3191 = vmatpush1.bf16.msra.mxu0 %v3174
      %3192 = vmatprep.subr.bf16.mxu0 0
      %3193 = vmatpush2.bf16.msra.mxu0 0
      %3194 = vmatprep.subr.bf16.mxu0 0
      %3195 = vmatpush2.bf16.msra.mxu0 0
      %3196 = vmatprep.subr.bf16.mxu0 0
      %3197 = vmatpush2.bf16.msra.mxu0 0
      %3198 = vmatprep.subr.bf16.mxu0 0
      %3199 = vmatpush2.bf16.msra.mxu0 0
      %3200 = vmatprep.subr.bf16.mxu0 0
      %3201 = vmatpush2.bf16.msra.mxu0 0
      %3202 = vmatprep.subr.bf16.mxu0 0
      %3203 = vmatpush2.bf16.msra.mxu0 0
      %3204 = vmatprep.subr.bf16.mxu0 0
      %3205 = vmatpush2.bf16.msra.mxu0 0
      %3206 = vmatprep.subr.bf16.mxu0 0
      %3207 = vmatpush2.bf16.msra.mxu0 0
      %3208 = vmatprep.mubr.bf16.mxu0 0
      %3209 = vmatmul.mubr.bf16.gmra.mxu0 %v3171
      %v3210 = vpop.f32.mrf.mxu0
      %v3211 = vadd.f32 0.0, %v3210
      %v3212 = vpop.f32.mrf.mxu0
      %v3213 = vpop.f32.mrf.mxu0
      %v3214 = vpop.f32.mrf.mxu0
      %3215 = vdwg.mxu0
      %v3216 = vrcp.pop %v2802
      %v3217 = vrcp.pop %v2805
      %v3218 = vrcp.pop %v2808
      %v3219 = vrcp.pop %v2811
      %v3220 = vrcp.pop %v2814
      %v3221 = vrcp.pop %v2817
      %v3222 = vrcp.pop %v2820
      %v3223 = vrcp.pop %v2823
      %v3224 = vmul.f32 %v2875, %v3216
      %v3225 = vmul.f32 %v2923, %v3217
      %v3226 = vmul.f32 %v2971, %v3218
      %v3227 = vmul.f32 %v3019, %v3219
      %v3228 = vmul.f32 %v3067, %v3220
      %v3229 = vmul.f32 %v3115, %v3221
      %v3230 = vmul.f32 %v3163, %v3222
      %v3231 = vmul.f32 %v3211, %v3223
      %3232 = vrot.lane.b32.xlu0 %v574, 104
      %v3233 = vpop.permute.xlu0 %3232
      %3234 = vrot.lane.b32.xlu0 %v582, 72
      %v3235 = vpop.permute.xlu0 %3234
      %v3237 = vsel %vm593, %v3233, 0
      %v3240 = vsel %vm593, %v3235, 0
      %3242 = vmatprep.subr.bf16.mxu0 0
      %3243 = vmatpush1.bf16.xpose.msra.mxu0 0
      %3244 = vmatprep.subr.bf16.mxu0 0
      %3245 = vmatpush1.bf16.xpose.msra.mxu0 0
      %3246 = vmatprep.subr.bf16.mxu0 0
      %3247 = vmatpush1.bf16.xpose.msra.mxu0 0
      %3248 = vmatprep.subr.bf16.mxu0 0
      %3249 = vmatpush1.bf16.xpose.msra.mxu0 0
      %3250 = vmatprep.subr.bf16.mxu0 0
      %3251 = vmatpush1.bf16.xpose.msra.mxu0 0
      %3252 = vmatprep.subr.bf16.mxu0 0
      %3253 = vmatpush1.bf16.xpose.msra.mxu0 0
      %3254 = vmatprep.subr.bf16.mxu0 0
      %3255 = vmatpush1.bf16.xpose.msra.mxu0 0
      %3256 = vmatprep.subr.bf16.mxu0 0
      %3257 = vmatpush1.bf16.xpose.msra.mxu0 %v3240
      %3258 = vmatprep.subr.bf16.mxu0 0
      %3259 = vmatpush2.bf16.xpose.msra.mxu0 0
      %3260 = vmatprep.subr.bf16.mxu0 0
      %3261 = vmatpush2.bf16.xpose.msra.mxu0 0
      %3262 = vmatprep.subr.bf16.mxu0 0
      %3263 = vmatpush2.bf16.xpose.msra.mxu0 0
      %3264 = vmatprep.subr.bf16.mxu0 0
      %3265 = vmatpush2.bf16.xpose.msra.mxu0 0
      %3266 = vmatprep.subr.bf16.mxu0 0
      %3267 = vmatpush2.bf16.xpose.msra.mxu0 0
      %3268 = vmatprep.subr.bf16.mxu0 0
      %3269 = vmatpush2.bf16.xpose.msra.mxu0 0
      %3270 = vmatprep.subr.bf16.mxu0 0
      %3271 = vmatpush2.bf16.xpose.msra.mxu0 0
      %3272 = vmatprep.subr.bf16.mxu0 0
      %3273 = vmatpush2.bf16.xpose.msra.mxu0 0
      %3274 = vmatprep.mubr.bf16.mxu0 0
      %3275 = vmatmul.mubr.bf16.gmra.mxu0 %v3237
      %v3276 = vpop.f32.mrf.mxu0
      %v3277 = vadd.f32 %v565, %v3276
      %v3278 = vpop.f32.mrf.mxu0
      %v3279 = vpop.f32.mrf.mxu0
      %v3280 = vpop.f32.mrf.mxu0
      %3281 = vdwg.mxu0
      %3282 = vrot.lane.b32.xlu0 %v575, 104
      %v3283 = vpop.permute.xlu0 %3282
      %3284 = vrot.lane.b32.xlu0 %v583, 72
      %v3285 = vpop.permute.xlu0 %3284
      %v3287 = vsel %vm593, %v3283, 0
      %v3290 = vsel %vm593, %v3285, 0
      %3292 = vmatprep.subr.bf16.mxu0 0
      %3293 = vmatpush1.bf16.xpose.msra.mxu0 0
      %3294 = vmatprep.subr.bf16.mxu0 0
      %3295 = vmatpush1.bf16.xpose.msra.mxu0 0
      %3296 = vmatprep.subr.bf16.mxu0 0
      %3297 = vmatpush1.bf16.xpose.msra.mxu0 0
      %3298 = vmatprep.subr.bf16.mxu0 0
      %3299 = vmatpush1.bf16.xpose.msra.mxu0 0
      %3300 = vmatprep.subr.bf16.mxu0 0
      %3301 = vmatpush1.bf16.xpose.msra.mxu0 0
      %3302 = vmatprep.subr.bf16.mxu0 0
      %3303 = vmatpush1.bf16.xpose.msra.mxu0 0
      %3304 = vmatprep.subr.bf16.mxu0 0
      %3305 = vmatpush1.bf16.xpose.msra.mxu0 0
      %3306 = vmatprep.subr.bf16.mxu0 0
      %3307 = vmatpush1.bf16.xpose.msra.mxu0 %v3290
      %3308 = vmatprep.subr.bf16.mxu0 0
      %3309 = vmatpush2.bf16.xpose.msra.mxu0 0
      %3310 = vmatprep.subr.bf16.mxu0 0
      %3311 = vmatpush2.bf16.xpose.msra.mxu0 0
      %3312 = vmatprep.subr.bf16.mxu0 0
      %3313 = vmatpush2.bf16.xpose.msra.mxu0 0
      %3314 = vmatprep.subr.bf16.mxu0 0
      %3315 = vmatpush2.bf16.xpose.msra.mxu0 0
      %3316 = vmatprep.subr.bf16.mxu0 0
      %3317 = vmatpush2.bf16.xpose.msra.mxu0 0
      %3318 = vmatprep.subr.bf16.mxu0 0
      %3319 = vmatpush2.bf16.xpose.msra.mxu0 0
      %3320 = vmatprep.subr.bf16.mxu0 0
      %3321 = vmatpush2.bf16.xpose.msra.mxu0 0
      %3322 = vmatprep.subr.bf16.mxu0 0
      %3323 = vmatpush2.bf16.xpose.msra.mxu0 0
      %3324 = vmatprep.mubr.bf16.mxu0 0
      %3325 = vmatmul.mubr.bf16.gmra.mxu0 %v3287
      %v3326 = vpop.f32.mrf.mxu0
      %v3327 = vadd.f32 %v565, %v3326
      %v3328 = vpop.f32.mrf.mxu0
      %v3329 = vpop.f32.mrf.mxu0
      %v3330 = vpop.f32.mrf.mxu0
      %3331 = vdwg.mxu0
      %3332 = vrot.lane.b32.xlu0 %v576, 104
      %v3333 = vpop.permute.xlu0 %3332
      %3334 = vrot.lane.b32.xlu0 %v584, 72
      %v3335 = vpop.permute.xlu0 %3334
      %v3337 = vsel %vm593, %v3333, 0
      %v3340 = vsel %vm593, %v3335, 0
      %3342 = vmatprep.subr.bf16.mxu0 0
      %3343 = vmatpush1.bf16.xpose.msra.mxu0 0
      %3344 = vmatprep.subr.bf16.mxu0 0
      %3345 = vmatpush1.bf16.xpose.msra.mxu0 0
      %3346 = vmatprep.subr.bf16.mxu0 0
      %3347 = vmatpush1.bf16.xpose.msra.mxu0 0
      %3348 = vmatprep.subr.bf16.mxu0 0
      %3349 = vmatpush1.bf16.xpose.msra.mxu0 0
      %3350 = vmatprep.subr.bf16.mxu0 0
      %3351 = vmatpush1.bf16.xpose.msra.mxu0 0
      %3352 = vmatprep.subr.bf16.mxu0 0
      %3353 = vmatpush1.bf16.xpose.msra.mxu0 0
      %3354 = vmatprep.subr.bf16.mxu0 0
      %3355 = vmatpush1.bf16.xpose.msra.mxu0 0
      %3356 = vmatprep.subr.bf16.mxu0 0
      %3357 = vmatpush1.bf16.xpose.msra.mxu0 %v3340
      %3358 = vmatprep.subr.bf16.mxu0 0
      %3359 = vmatpush2.bf16.xpose.msra.mxu0 0
      %3360 = vmatprep.subr.bf16.mxu0 0
      %3361 = vmatpush2.bf16.xpose.msra.mxu0 0
      %3362 = vmatprep.subr.bf16.mxu0 0
      %3363 = vmatpush2.bf16.xpose.msra.mxu0 0
      %3364 = vmatprep.subr.bf16.mxu0 0
      %3365 = vmatpush2.bf16.xpose.msra.mxu0 0
      %3366 = vmatprep.subr.bf16.mxu0 0
      %3367 = vmatpush2.bf16.xpose.msra.mxu0 0
      %3368 = vmatprep.subr.bf16.mxu0 0
      %3369 = vmatpush2.bf16.xpose.msra.mxu0 0
      %3370 = vmatprep.subr.bf16.mxu0 0
      %3371 = vmatpush2.bf16.xpose.msra.mxu0 0
      %3372 = vmatprep.subr.bf16.mxu0 0
      %3373 = vmatpush2.bf16.xpose.msra.mxu0 0
      %3374 = vmatprep.mubr.bf16.mxu0 0
      %3375 = vmatmul.mubr.bf16.gmra.mxu0 %v3337
      %v3376 = vpop.f32.mrf.mxu0
      %v3377 = vadd.f32 %v565, %v3376
      %v3378 = vpop.f32.mrf.mxu0
      %v3379 = vpop.f32.mrf.mxu0
      %v3380 = vpop.f32.mrf.mxu0
      %3381 = vdwg.mxu0
      %3382 = vrot.lane.b32.xlu0 %v577, 104
      %v3383 = vpop.permute.xlu0 %3382
      %3384 = vrot.lane.b32.xlu0 %v585, 72
      %v3385 = vpop.permute.xlu0 %3384
      %v3387 = vsel %vm593, %v3383, 0
      %v3390 = vsel %vm593, %v3385, 0
      %3392 = vmatprep.subr.bf16.mxu0 0
      %3393 = vmatpush1.bf16.xpose.msra.mxu0 0
      %3394 = vmatprep.subr.bf16.mxu0 0
      %3395 = vmatpush1.bf16.xpose.msra.mxu0 0
      %3396 = vmatprep.subr.bf16.mxu0 0
      %3397 = vmatpush1.bf16.xpose.msra.mxu0 0
      %3398 = vmatprep.subr.bf16.mxu0 0
      %3399 = vmatpush1.bf16.xpose.msra.mxu0 0
      %3400 = vmatprep.subr.bf16.mxu0 0
      %3401 = vmatpush1.bf16.xpose.msra.mxu0 0
      %3402 = vmatprep.subr.bf16.mxu0 0
      %3403 = vmatpush1.bf16.xpose.msra.mxu0 0
      %3404 = vmatprep.subr.bf16.mxu0 0
      %3405 = vmatpush1.bf16.xpose.msra.mxu0 0
      %3406 = vmatprep.subr.bf16.mxu0 0
      %3407 = vmatpush1.bf16.xpose.msra.mxu0 %v3390
      %3408 = vmatprep.subr.bf16.mxu0 0
      %3409 = vmatpush2.bf16.xpose.msra.mxu0 0
      %3410 = vmatprep.subr.bf16.mxu0 0
      %3411 = vmatpush2.bf16.xpose.msra.mxu0 0
      %3412 = vmatprep.subr.bf16.mxu0 0
      %3413 = vmatpush2.bf16.xpose.msra.mxu0 0
      %3414 = vmatprep.subr.bf16.mxu0 0
      %3415 = vmatpush2.bf16.xpose.msra.mxu0 0
      %3416 = vmatprep.subr.bf16.mxu0 0
      %3417 = vmatpush2.bf16.xpose.msra.mxu0 0
      %3418 = vmatprep.subr.bf16.mxu0 0
      %3419 = vmatpush2.bf16.xpose.msra.mxu0 0
      %3420 = vmatprep.subr.bf16.mxu0 0
      %3421 = vmatpush2.bf16.xpose.msra.mxu0 0
      %3422 = vmatprep.subr.bf16.mxu0 0
      %3423 = vmatpush2.bf16.xpose.msra.mxu0 0
      %3424 = vmatprep.mubr.bf16.mxu0 0
      %3425 = vmatmul.mubr.bf16.gmra.mxu0 %v3387
      %v3426 = vpop.f32.mrf.mxu0
      %v3427 = vadd.f32 %v565, %v3426
      %v3428 = vpop.f32.mrf.mxu0
      %v3429 = vpop.f32.mrf.mxu0
      %v3430 = vpop.f32.mrf.mxu0
      %3431 = vdwg.mxu0
      %3432 = vrot.lane.b32.xlu0 %v578, 104
      %v3433 = vpop.permute.xlu0 %3432
      %3434 = vrot.lane.b32.xlu0 %v586, 72
      %v3435 = vpop.permute.xlu0 %3434
      %v3437 = vsel %vm593, %v3433, 0
      %v3440 = vsel %vm593, %v3435, 0
      %3442 = vmatprep.subr.bf16.mxu0 0
      %3443 = vmatpush1.bf16.xpose.msra.mxu0 0
      %3444 = vmatprep.subr.bf16.mxu0 0
      %3445 = vmatpush1.bf16.xpose.msra.mxu0 0
      %3446 = vmatprep.subr.bf16.mxu0 0
      %3447 = vmatpush1.bf16.xpose.msra.mxu0 0
      %3448 = vmatprep.subr.bf16.mxu0 0
      %3449 = vmatpush1.bf16.xpose.msra.mxu0 0
      %3450 = vmatprep.subr.bf16.mxu0 0
      %3451 = vmatpush1.bf16.xpose.msra.mxu0 0
      %3452 = vmatprep.subr.bf16.mxu0 0
      %3453 = vmatpush1.bf16.xpose.msra.mxu0 0
      %3454 = vmatprep.subr.bf16.mxu0 0
      %3455 = vmatpush1.bf16.xpose.msra.mxu0 0
      %3456 = vmatprep.subr.bf16.mxu0 0
      %3457 = vmatpush1.bf16.xpose.msra.mxu0 %v3440
      %3458 = vmatprep.subr.bf16.mxu0 0
      %3459 = vmatpush2.bf16.xpose.msra.mxu0 0
      %3460 = vmatprep.subr.bf16.mxu0 0
      %3461 = vmatpush2.bf16.xpose.msra.mxu0 0
      %3462 = vmatprep.subr.bf16.mxu0 0
      %3463 = vmatpush2.bf16.xpose.msra.mxu0 0
      %3464 = vmatprep.subr.bf16.mxu0 0
      %3465 = vmatpush2.bf16.xpose.msra.mxu0 0
      %3466 = vmatprep.subr.bf16.mxu0 0
      %3467 = vmatpush2.bf16.xpose.msra.mxu0 0
      %3468 = vmatprep.subr.bf16.mxu0 0
      %3469 = vmatpush2.bf16.xpose.msra.mxu0 0
      %3470 = vmatprep.subr.bf16.mxu0 0
      %3471 = vmatpush2.bf16.xpose.msra.mxu0 0
      %3472 = vmatprep.subr.bf16.mxu0 0
      %3473 = vmatpush2.bf16.xpose.msra.mxu0 0
      %3474 = vmatprep.mubr.bf16.mxu0 0
      %3475 = vmatmul.mubr.bf16.gmra.mxu0 %v3437
      %v3476 = vpop.f32.mrf.mxu0
      %v3477 = vadd.f32 %v565, %v3476
      %v3478 = vpop.f32.mrf.mxu0
      %v3479 = vpop.f32.mrf.mxu0
      %v3480 = vpop.f32.mrf.mxu0
      %3481 = vdwg.mxu0
      %3482 = vrot.lane.b32.xlu0 %v579, 104
      %v3483 = vpop.permute.xlu0 %3482
      %3484 = vrot.lane.b32.xlu0 %v587, 72
      %v3485 = vpop.permute.xlu0 %3484
      %v3487 = vsel %vm593, %v3483, 0
      %v3490 = vsel %vm593, %v3485, 0
      %3492 = vmatprep.subr.bf16.mxu0 0
      %3493 = vmatpush1.bf16.xpose.msra.mxu0 0
      %3494 = vmatprep.subr.bf16.mxu0 0
      %3495 = vmatpush1.bf16.xpose.msra.mxu0 0
      %3496 = vmatprep.subr.bf16.mxu0 0
      %3497 = vmatpush1.bf16.xpose.msra.mxu0 0
      %3498 = vmatprep.subr.bf16.mxu0 0
      %3499 = vmatpush1.bf16.xpose.msra.mxu0 0
      %3500 = vmatprep.subr.bf16.mxu0 0
      %3501 = vmatpush1.bf16.xpose.msra.mxu0 0
      %3502 = vmatprep.subr.bf16.mxu0 0
      %3503 = vmatpush1.bf16.xpose.msra.mxu0 0
      %3504 = vmatprep.subr.bf16.mxu0 0
      %3505 = vmatpush1.bf16.xpose.msra.mxu0 0
      %3506 = vmatprep.subr.bf16.mxu0 0
      %3507 = vmatpush1.bf16.xpose.msra.mxu0 %v3490
      %3508 = vmatprep.subr.bf16.mxu0 0
      %3509 = vmatpush2.bf16.xpose.msra.mxu0 0
      %3510 = vmatprep.subr.bf16.mxu0 0
      %3511 = vmatpush2.bf16.xpose.msra.mxu0 0
      %3512 = vmatprep.subr.bf16.mxu0 0
      %3513 = vmatpush2.bf16.xpose.msra.mxu0 0
      %3514 = vmatprep.subr.bf16.mxu0 0
      %3515 = vmatpush2.bf16.xpose.msra.mxu0 0
      %3516 = vmatprep.subr.bf16.mxu0 0
      %3517 = vmatpush2.bf16.xpose.msra.mxu0 0
      %3518 = vmatprep.subr.bf16.mxu0 0
      %3519 = vmatpush2.bf16.xpose.msra.mxu0 0
      %3520 = vmatprep.subr.bf16.mxu0 0
      %3521 = vmatpush2.bf16.xpose.msra.mxu0 0
      %3522 = vmatprep.subr.bf16.mxu0 0
      %3523 = vmatpush2.bf16.xpose.msra.mxu0 0
      %3524 = vmatprep.mubr.bf16.mxu0 0
      %3525 = vmatmul.mubr.bf16.gmra.mxu0 %v3487
      %v3526 = vpop.f32.mrf.mxu0
      %v3527 = vadd.f32 %v565, %v3526
      %v3528 = vpop.f32.mrf.mxu0
      %v3529 = vpop.f32.mrf.mxu0
      %v3530 = vpop.f32.mrf.mxu0
      %3531 = vdwg.mxu0
      %3532 = vrot.lane.b32.xlu0 %v580, 104
      %v3533 = vpop.permute.xlu0 %3532
      %3534 = vrot.lane.b32.xlu0 %v588, 72
      %v3535 = vpop.permute.xlu0 %3534
      %v3537 = vsel %vm593, %v3533, 0
      %v3540 = vsel %vm593, %v3535, 0
      %3542 = vmatprep.subr.bf16.mxu0 0
      %3543 = vmatpush1.bf16.xpose.msra.mxu0 0
      %3544 = vmatprep.subr.bf16.mxu0 0
      %3545 = vmatpush1.bf16.xpose.msra.mxu0 0
      %3546 = vmatprep.subr.bf16.mxu0 0
      %3547 = vmatpush1.bf16.xpose.msra.mxu0 0
      %3548 = vmatprep.subr.bf16.mxu0 0
      %3549 = vmatpush1.bf16.xpose.msra.mxu0 0
      %3550 = vmatprep.subr.bf16.mxu0 0
      %3551 = vmatpush1.bf16.xpose.msra.mxu0 0
      %3552 = vmatprep.subr.bf16.mxu0 0
      %3553 = vmatpush1.bf16.xpose.msra.mxu0 0
      %3554 = vmatprep.subr.bf16.mxu0 0
      %3555 = vmatpush1.bf16.xpose.msra.mxu0 0
      %3556 = vmatprep.subr.bf16.mxu0 0
      %3557 = vmatpush1.bf16.xpose.msra.mxu0 %v3540
      %3558 = vmatprep.subr.bf16.mxu0 0
      %3559 = vmatpush2.bf16.xpose.msra.mxu0 0
      %3560 = vmatprep.subr.bf16.mxu0 0
      %3561 = vmatpush2.bf16.xpose.msra.mxu0 0
      %3562 = vmatprep.subr.bf16.mxu0 0
      %3563 = vmatpush2.bf16.xpose.msra.mxu0 0
      %3564 = vmatprep.subr.bf16.mxu0 0
      %3565 = vmatpush2.bf16.xpose.msra.mxu0 0
      %3566 = vmatprep.subr.bf16.mxu0 0
      %3567 = vmatpush2.bf16.xpose.msra.mxu0 0
      %3568 = vmatprep.subr.bf16.mxu0 0
      %3569 = vmatpush2.bf16.xpose.msra.mxu0 0
      %3570 = vmatprep.subr.bf16.mxu0 0
      %3571 = vmatpush2.bf16.xpose.msra.mxu0 0
      %3572 = vmatprep.subr.bf16.mxu0 0
      %3573 = vmatpush2.bf16.xpose.msra.mxu0 0
      %3574 = vmatprep.mubr.bf16.mxu0 0
      %3575 = vmatmul.mubr.bf16.gmra.mxu0 %v3537
      %v3576 = vpop.f32.mrf.mxu0
      %v3577 = vadd.f32 %v565, %v3576
      %v3578 = vpop.f32.mrf.mxu0
      %v3579 = vpop.f32.mrf.mxu0
      %v3580 = vpop.f32.mrf.mxu0
      %3581 = vdwg.mxu0
      %3582 = vrot.lane.b32.xlu0 %v581, 104
      %v3583 = vpop.permute.xlu0 %3582
      %3584 = vrot.lane.b32.xlu0 %v589, 72
      %v3585 = vpop.permute.xlu0 %3584
      %v3587 = vsel %vm593, %v3583, 0
      %v3590 = vsel %vm593, %v3585, 0
      %3592 = vmatprep.subr.bf16.mxu0 0
      %3593 = vmatpush1.bf16.xpose.msra.mxu0 0
      %3594 = vmatprep.subr.bf16.mxu0 0
      %3595 = vmatpush1.bf16.xpose.msra.mxu0 0
      %3596 = vmatprep.subr.bf16.mxu0 0
      %3597 = vmatpush1.bf16.xpose.msra.mxu0 0
      %3598 = vmatprep.subr.bf16.mxu0 0
      %3599 = vmatpush1.bf16.xpose.msra.mxu0 0
      %3600 = vmatprep.subr.bf16.mxu0 0
      %3601 = vmatpush1.bf16.xpose.msra.mxu0 0
      %3602 = vmatprep.subr.bf16.mxu0 0
      %3603 = vmatpush1.bf16.xpose.msra.mxu0 0
      %3604 = vmatprep.subr.bf16.mxu0 0
      %3605 = vmatpush1.bf16.xpose.msra.mxu0 0
      %3606 = vmatprep.subr.bf16.mxu0 0
      %3607 = vmatpush1.bf16.xpose.msra.mxu0 %v3590
      %3608 = vmatprep.subr.bf16.mxu0 0
      %3609 = vmatpush2.bf16.xpose.msra.mxu0 0
      %3610 = vmatprep.subr.bf16.mxu0 0
      %3611 = vmatpush2.bf16.xpose.msra.mxu0 0
      %3612 = vmatprep.subr.bf16.mxu0 0
      %3613 = vmatpush2.bf16.xpose.msra.mxu0 0
      %3614 = vmatprep.subr.bf16.mxu0 0
      %3615 = vmatpush2.bf16.xpose.msra.mxu0 0
      %3616 = vmatprep.subr.bf16.mxu0 0
      %3617 = vmatpush2.bf16.xpose.msra.mxu0 0
      %3618 = vmatprep.subr.bf16.mxu0 0
      %3619 = vmatpush2.bf16.xpose.msra.mxu0 0
      %3620 = vmatprep.subr.bf16.mxu0 0
      %3621 = vmatpush2.bf16.xpose.msra.mxu0 0
      %3622 = vmatprep.subr.bf16.mxu0 0
      %3623 = vmatpush2.bf16.xpose.msra.mxu0 0
      %3624 = vmatprep.mubr.bf16.mxu0 0
      %3625 = vmatmul.mubr.bf16.gmra.mxu0 %v3587
      %v3626 = vpop.f32.mrf.mxu0
      %v3627 = vadd.f32 %v565, %v3626
      %v3628 = vpop.f32.mrf.mxu0
      %v3629 = vpop.f32.mrf.mxu0
      %v3630 = vpop.f32.mrf.mxu0
      %3631 = vdwg.mxu0
      %v3632 = vsel %vm593, %v3277, -inf
      %3633 = vmax.xlane.f32.xlu0 %v3632
      %v3634 = vpop.xlane.xlu0 %3633
      %v3635 = vsel %vm593, %v3327, -inf
      %3636 = vmax.xlane.f32.xlu0 %v3635
      %v3637 = vpop.xlane.xlu0 %3636
      %v3638 = vsel %vm593, %v3377, -inf
      %3639 = vmax.xlane.f32.xlu0 %v3638
      %v3640 = vpop.xlane.xlu0 %3639
      %v3641 = vsel %vm593, %v3427, -inf
      %3642 = vmax.xlane.f32.xlu0 %v3641
      %v3643 = vpop.xlane.xlu0 %3642
      %v3644 = vsel %vm593, %v3477, -inf
      %3645 = vmax.xlane.f32.xlu0 %v3644
      %v3646 = vpop.xlane.xlu0 %3645
      %v3647 = vsel %vm593, %v3527, -inf
      %3648 = vmax.xlane.f32.xlu0 %v3647
      %v3649 = vpop.xlane.xlu0 %3648
      %v3650 = vsel %vm593, %v3577, -inf
      %3651 = vmax.xlane.f32.xlu0 %v3650
      %v3652 = vpop.xlane.xlu0 %3651
      %v3653 = vsel %vm593, %v3627, -inf
      %3654 = vmax.xlane.f32.xlu0 %v3653
      %v3655 = vpop.xlane.xlu0 %3654
      %v3656 = vsub.f32 %v3277, %v3634
      %v3657 = vsub.f32 %v3327, %v3637
      %v3658 = vsub.f32 %v3377, %v3640
      %v3659 = vsub.f32 %v3427, %v3643
      %v3660 = vsub.f32 %v3477, %v3646
      %v3661 = vsub.f32 %v3527, %v3649
      %v3662 = vsub.f32 %v3577, %v3652
      %v3663 = vsub.f32 %v3627, %v3655
      %v3664 = vmul.f32 %v3656, 1.442695
      %v3665 = vpow.pop %v3664
      %v3666 = vmul.f32 %v3657, 1.442695
      %v3667 = vpow.pop %v3666
      %v3668 = vmul.f32 %v3658, 1.442695
      %v3669 = vpow.pop %v3668
      %v3670 = vmul.f32 %v3659, 1.442695
      %v3671 = vpow.pop %v3670
      %v3672 = vmul.f32 %v3660, 1.442695
      %v3673 = vpow.pop %v3672
      %v3674 = vmul.f32 %v3661, 1.442695
      %v3675 = vpow.pop %v3674
      %v3676 = vmul.f32 %v3662, 1.442695
      %v3677 = vpow.pop %v3676
      %v3678 = vmul.f32 %v3663, 1.442695
      %v3679 = vpow.pop %v3678
      %v3680 = vsel %vm593, %v3665, 0.0
      %3681 = vadd.xlane.f32.xlu0 %v3680
      %v3682 = vpop.xlane.xlu0 %3681
      %v3683 = vsel %vm593, %v3667, 0.0
      %3684 = vadd.xlane.f32.xlu0 %v3683
      %v3685 = vpop.xlane.xlu0 %3684
      %v3686 = vsel %vm593, %v3669, 0.0
      %3687 = vadd.xlane.f32.xlu0 %v3686
      %v3688 = vpop.xlane.xlu0 %3687
      %v3689 = vsel %vm593, %v3671, 0.0
      %3690 = vadd.xlane.f32.xlu0 %v3689
      %v3691 = vpop.xlane.xlu0 %3690
      %v3692 = vsel %vm593, %v3673, 0.0
      %3693 = vadd.xlane.f32.xlu0 %v3692
      %v3694 = vpop.xlane.xlu0 %3693
      %v3695 = vsel %vm593, %v3675, 0.0
      %3696 = vadd.xlane.f32.xlu0 %v3695
      %v3697 = vpop.xlane.xlu0 %3696
      %v3698 = vsel %vm593, %v3677, 0.0
      %3699 = vadd.xlane.f32.xlu0 %v3698
      %v3700 = vpop.xlane.xlu0 %3699
      %v3701 = vsel %vm593, %v3679, 0.0
      %3702 = vadd.xlane.f32.xlu0 %v3701
      %v3703 = vpop.xlane.xlu0 %3702
      %v3704 = vpack.c.bf16 %v3665, %v3665
      %v3705 = vpack.c.bf16 %v3667, %v3667
      %v3706 = vpack.c.bf16 %v3669, %v3669
      %v3707 = vpack.c.bf16 %v3671, %v3671
      %v3708 = vpack.c.bf16 %v3673, %v3673
      %v3709 = vpack.c.bf16 %v3675, %v3675
      %v3710 = vpack.c.bf16 %v3677, %v3677
      %v3711 = vpack.c.bf16 %v3679, %v3679
      %3712 = vrot.lane.b32.xlu0 %v582, 40
      %v3713 = vpop.permute.xlu0 %3712
      %v3715 = vsel %vm593, %v3704, 0
      %v3718 = vsel %vm1068, %v3713, 0
      %3720 = vmatprep.subr.bf16.mxu0 0
      %3721 = vmatpush1.bf16.msra.mxu0 0
      %3722 = vmatprep.subr.bf16.mxu0 0
      %3723 = vmatpush1.bf16.msra.mxu0 0
      %3724 = vmatprep.subr.bf16.mxu0 0
      %3725 = vmatpush1.bf16.msra.mxu0 0
      %3726 = vmatprep.subr.bf16.mxu0 0
      %3727 = vmatpush1.bf16.msra.mxu0 0
      %3728 = vmatprep.subr.bf16.mxu0 0
      %3729 = vmatpush1.bf16.msra.mxu0 0
      %3730 = vmatprep.subr.bf16.mxu0 0
      %3731 = vmatpush1.bf16.msra.mxu0 0
      %3732 = vmatprep.subr.bf16.mxu0 0
      %3733 = vmatpush1.bf16.msra.mxu0 0
      %3734 = vmatprep.subr.bf16.mxu0 0
      %3735 = vmatpush1.bf16.msra.mxu0 %v3718
      %3736 = vmatprep.subr.bf16.mxu0 0
      %3737 = vmatpush2.bf16.msra.mxu0 0
      %3738 = vmatprep.subr.bf16.mxu0 0
      %3739 = vmatpush2.bf16.msra.mxu0 0
      %3740 = vmatprep.subr.bf16.mxu0 0
      %3741 = vmatpush2.bf16.msra.mxu0 0
      %3742 = vmatprep.subr.bf16.mxu0 0
      %3743 = vmatpush2.bf16.msra.mxu0 0
      %3744 = vmatprep.subr.bf16.mxu0 0
      %3745 = vmatpush2.bf16.msra.mxu0 0
      %3746 = vmatprep.subr.bf16.mxu0 0
      %3747 = vmatpush2.bf16.msra.mxu0 0
      %3748 = vmatprep.subr.bf16.mxu0 0
      %3749 = vmatpush2.bf16.msra.mxu0 0
      %3750 = vmatprep.subr.bf16.mxu0 0
      %3751 = vmatpush2.bf16.msra.mxu0 0
      %3752 = vmatprep.mubr.bf16.mxu0 0
      %3753 = vmatmul.mubr.bf16.gmra.mxu0 %v3715
      %v3754 = vpop.f32.mrf.mxu0
      %v3755 = vadd.f32 0.0, %v3754
      %v3756 = vpop.f32.mrf.mxu0
      %v3757 = vpop.f32.mrf.mxu0
      %v3758 = vpop.f32.mrf.mxu0
      %3759 = vdwg.mxu0
      %3760 = vrot.lane.b32.xlu0 %v583, 40
      %v3761 = vpop.permute.xlu0 %3760
      %v3763 = vsel %vm593, %v3705, 0
      %v3766 = vsel %vm1068, %v3761, 0
      %3768 = vmatprep.subr.bf16.mxu0 0
      %3769 = vmatpush1.bf16.msra.mxu0 0
      %3770 = vmatprep.subr.bf16.mxu0 0
      %3771 = vmatpush1.bf16.msra.mxu0 0
      %3772 = vmatprep.subr.bf16.mxu0 0
      %3773 = vmatpush1.bf16.msra.mxu0 0
      %3774 = vmatprep.subr.bf16.mxu0 0
      %3775 = vmatpush1.bf16.msra.mxu0 0
      %3776 = vmatprep.subr.bf16.mxu0 0
      %3777 = vmatpush1.bf16.msra.mxu0 0
      %3778 = vmatprep.subr.bf16.mxu0 0
      %3779 = vmatpush1.bf16.msra.mxu0 0
      %3780 = vmatprep.subr.bf16.mxu0 0
      %3781 = vmatpush1.bf16.msra.mxu0 0
      %3782 = vmatprep.subr.bf16.mxu0 0
      %3783 = vmatpush1.bf16.msra.mxu0 %v3766
      %3784 = vmatprep.subr.bf16.mxu0 0
      %3785 = vmatpush2.bf16.msra.mxu0 0
      %3786 = vmatprep.subr.bf16.mxu0 0
      %3787 = vmatpush2.bf16.msra.mxu0 0
      %3788 = vmatprep.subr.bf16.mxu0 0
      %3789 = vmatpush2.bf16.msra.mxu0 0
      %3790 = vmatprep.subr.bf16.mxu0 0
      %3791 = vmatpush2.bf16.msra.mxu0 0
      %3792 = vmatprep.subr.bf16.mxu0 0
      %3793 = vmatpush2.bf16.msra.mxu0 0
      %3794 = vmatprep.subr.bf16.mxu0 0
      %3795 = vmatpush2.bf16.msra.mxu0 0
      %3796 = vmatprep.subr.bf16.mxu0 0
      %3797 = vmatpush2.bf16.msra.mxu0 0
      %3798 = vmatprep.subr.bf16.mxu0 0
      %3799 = vmatpush2.bf16.msra.mxu0 0
      %3800 = vmatprep.mubr.bf16.mxu0 0
      %3801 = vmatmul.mubr.bf16.gmra.mxu0 %v3763
      %v3802 = vpop.f32.mrf.mxu0
      %v3803 = vadd.f32 0.0, %v3802
      %v3804 = vpop.f32.mrf.mxu0
      %v3805 = vpop.f32.mrf.mxu0
      %v3806 = vpop.f32.mrf.mxu0
      %3807 = vdwg.mxu0
      %3808 = vrot.lane.b32.xlu0 %v584, 40
      %v3809 = vpop.permute.xlu0 %3808
      %v3811 = vsel %vm593, %v3706, 0
      %v3814 = vsel %vm1068, %v3809, 0
      %3816 = vmatprep.subr.bf16.mxu0 0
      %3817 = vmatpush1.bf16.msra.mxu0 0
      %3818 = vmatprep.subr.bf16.mxu0 0
      %3819 = vmatpush1.bf16.msra.mxu0 0
      %3820 = vmatprep.subr.bf16.mxu0 0
      %3821 = vmatpush1.bf16.msra.mxu0 0
      %3822 = vmatprep.subr.bf16.mxu0 0
      %3823 = vmatpush1.bf16.msra.mxu0 0
      %3824 = vmatprep.subr.bf16.mxu0 0
      %3825 = vmatpush1.bf16.msra.mxu0 0
      %3826 = vmatprep.subr.bf16.mxu0 0
      %3827 = vmatpush1.bf16.msra.mxu0 0
      %3828 = vmatprep.subr.bf16.mxu0 0
      %3829 = vmatpush1.bf16.msra.mxu0 0
      %3830 = vmatprep.subr.bf16.mxu0 0
      %3831 = vmatpush1.bf16.msra.mxu0 %v3814
      %3832 = vmatprep.subr.bf16.mxu0 0
      %3833 = vmatpush2.bf16.msra.mxu0 0
      %3834 = vmatprep.subr.bf16.mxu0 0
      %3835 = vmatpush2.bf16.msra.mxu0 0
      %3836 = vmatprep.subr.bf16.mxu0 0
      %3837 = vmatpush2.bf16.msra.mxu0 0
      %3838 = vmatprep.subr.bf16.mxu0 0
      %3839 = vmatpush2.bf16.msra.mxu0 0
      %3840 = vmatprep.subr.bf16.mxu0 0
      %3841 = vmatpush2.bf16.msra.mxu0 0
      %3842 = vmatprep.subr.bf16.mxu0 0
      %3843 = vmatpush2.bf16.msra.mxu0 0
      %3844 = vmatprep.subr.bf16.mxu0 0
      %3845 = vmatpush2.bf16.msra.mxu0 0
      %3846 = vmatprep.subr.bf16.mxu0 0
      %3847 = vmatpush2.bf16.msra.mxu0 0
      %3848 = vmatprep.mubr.bf16.mxu0 0
      %3849 = vmatmul.mubr.bf16.gmra.mxu0 %v3811
      %v3850 = vpop.f32.mrf.mxu0
      %v3851 = vadd.f32 0.0, %v3850
      %v3852 = vpop.f32.mrf.mxu0
      %v3853 = vpop.f32.mrf.mxu0
      %v3854 = vpop.f32.mrf.mxu0
      %3855 = vdwg.mxu0
      %3856 = vrot.lane.b32.xlu0 %v585, 40
      %v3857 = vpop.permute.xlu0 %3856
      %v3859 = vsel %vm593, %v3707, 0
      %v3862 = vsel %vm1068, %v3857, 0
      %3864 = vmatprep.subr.bf16.mxu0 0
      %3865 = vmatpush1.bf16.msra.mxu0 0
      %3866 = vmatprep.subr.bf16.mxu0 0
      %3867 = vmatpush1.bf16.msra.mxu0 0
      %3868 = vmatprep.subr.bf16.mxu0 0
      %3869 = vmatpush1.bf16.msra.mxu0 0
      %3870 = vmatprep.subr.bf16.mxu0 0
      %3871 = vmatpush1.bf16.msra.mxu0 0
      %3872 = vmatprep.subr.bf16.mxu0 0
      %3873 = vmatpush1.bf16.msra.mxu0 0
      %3874 = vmatprep.subr.bf16.mxu0 0
      %3875 = vmatpush1.bf16.msra.mxu0 0
      %3876 = vmatprep.subr.bf16.mxu0 0
      %3877 = vmatpush1.bf16.msra.mxu0 0
      %3878 = vmatprep.subr.bf16.mxu0 0
      %3879 = vmatpush1.bf16.msra.mxu0 %v3862
      %3880 = vmatprep.subr.bf16.mxu0 0
      %3881 = vmatpush2.bf16.msra.mxu0 0
      %3882 = vmatprep.subr.bf16.mxu0 0
      %3883 = vmatpush2.bf16.msra.mxu0 0
      %3884 = vmatprep.subr.bf16.mxu0 0
      %3885 = vmatpush2.bf16.msra.mxu0 0
      %3886 = vmatprep.subr.bf16.mxu0 0
      %3887 = vmatpush2.bf16.msra.mxu0 0
      %3888 = vmatprep.subr.bf16.mxu0 0
      %3889 = vmatpush2.bf16.msra.mxu0 0
      %3890 = vmatprep.subr.bf16.mxu0 0
      %3891 = vmatpush2.bf16.msra.mxu0 0
      %3892 = vmatprep.subr.bf16.mxu0 0
      %3893 = vmatpush2.bf16.msra.mxu0 0
      %3894 = vmatprep.subr.bf16.mxu0 0
      %3895 = vmatpush2.bf16.msra.mxu0 0
      %3896 = vmatprep.mubr.bf16.mxu0 0
      %3897 = vmatmul.mubr.bf16.gmra.mxu0 %v3859
      %v3898 = vpop.f32.mrf.mxu0
      %v3899 = vadd.f32 0.0, %v3898
      %v3900 = vpop.f32.mrf.mxu0
      %v3901 = vpop.f32.mrf.mxu0
      %v3902 = vpop.f32.mrf.mxu0
      %3903 = vdwg.mxu0
      %3904 = vrot.lane.b32.xlu0 %v586, 40
      %v3905 = vpop.permute.xlu0 %3904
      %v3907 = vsel %vm593, %v3708, 0
      %v3910 = vsel %vm1068, %v3905, 0
      %3912 = vmatprep.subr.bf16.mxu0 0
      %3913 = vmatpush1.bf16.msra.mxu0 0
      %3914 = vmatprep.subr.bf16.mxu0 0
      %3915 = vmatpush1.bf16.msra.mxu0 0
      %3916 = vmatprep.subr.bf16.mxu0 0
      %3917 = vmatpush1.bf16.msra.mxu0 0
      %3918 = vmatprep.subr.bf16.mxu0 0
      %3919 = vmatpush1.bf16.msra.mxu0 0
      %3920 = vmatprep.subr.bf16.mxu0 0
      %3921 = vmatpush1.bf16.msra.mxu0 0
      %3922 = vmatprep.subr.bf16.mxu0 0
      %3923 = vmatpush1.bf16.msra.mxu0 0
      %3924 = vmatprep.subr.bf16.mxu0 0
      %3925 = vmatpush1.bf16.msra.mxu0 0
      %3926 = vmatprep.subr.bf16.mxu0 0
      %3927 = vmatpush1.bf16.msra.mxu0 %v3910
      %3928 = vmatprep.subr.bf16.mxu0 0
      %3929 = vmatpush2.bf16.msra.mxu0 0
      %3930 = vmatprep.subr.bf16.mxu0 0
      %3931 = vmatpush2.bf16.msra.mxu0 0
      %3932 = vmatprep.subr.bf16.mxu0 0
      %3933 = vmatpush2.bf16.msra.mxu0 0
      %3934 = vmatprep.subr.bf16.mxu0 0
      %3935 = vmatpush2.bf16.msra.mxu0 0
      %3936 = vmatprep.subr.bf16.mxu0 0
      %3937 = vmatpush2.bf16.msra.mxu0 0
      %3938 = vmatprep.subr.bf16.mxu0 0
      %3939 = vmatpush2.bf16.msra.mxu0 0
      %3940 = vmatprep.subr.bf16.mxu0 0
      %3941 = vmatpush2.bf16.msra.mxu0 0
      %3942 = vmatprep.subr.bf16.mxu0 0
      %3943 = vmatpush2.bf16.msra.mxu0 0
      %3944 = vmatprep.mubr.bf16.mxu0 0
      %3945 = vmatmul.mubr.bf16.gmra.mxu0 %v3907
      %v3946 = vpop.f32.mrf.mxu0
      %v3947 = vadd.f32 0.0, %v3946
      %v3948 = vpop.f32.mrf.mxu0
      %v3949 = vpop.f32.mrf.mxu0
      %v3950 = vpop.f32.mrf.mxu0
      %3951 = vdwg.mxu0
      %3952 = vrot.lane.b32.xlu0 %v587, 40
      %v3953 = vpop.permute.xlu0 %3952
      %v3955 = vsel %vm593, %v3709, 0
      %v3958 = vsel %vm1068, %v3953, 0
      %3960 = vmatprep.subr.bf16.mxu0 0
      %3961 = vmatpush1.bf16.msra.mxu0 0
      %3962 = vmatprep.subr.bf16.mxu0 0
      %3963 = vmatpush1.bf16.msra.mxu0 0
      %3964 = vmatprep.subr.bf16.mxu0 0
      %3965 = vmatpush1.bf16.msra.mxu0 0
      %3966 = vmatprep.subr.bf16.mxu0 0
      %3967 = vmatpush1.bf16.msra.mxu0 0
      %3968 = vmatprep.subr.bf16.mxu0 0
      %3969 = vmatpush1.bf16.msra.mxu0 0
      %3970 = vmatprep.subr.bf16.mxu0 0
      %3971 = vmatpush1.bf16.msra.mxu0 0
      %3972 = vmatprep.subr.bf16.mxu0 0
      %3973 = vmatpush1.bf16.msra.mxu0 0
      %3974 = vmatprep.subr.bf16.mxu0 0
      %3975 = vmatpush1.bf16.msra.mxu0 %v3958
      %3976 = vmatprep.subr.bf16.mxu0 0
      %3977 = vmatpush2.bf16.msra.mxu0 0
      %3978 = vmatprep.subr.bf16.mxu0 0
      %3979 = vmatpush2.bf16.msra.mxu0 0
      %3980 = vmatprep.subr.bf16.mxu0 0
      %3981 = vmatpush2.bf16.msra.mxu0 0
      %3982 = vmatprep.subr.bf16.mxu0 0
      %3983 = vmatpush2.bf16.msra.mxu0 0
      %3984 = vmatprep.subr.bf16.mxu0 0
      %3985 = vmatpush2.bf16.msra.mxu0 0
      %3986 = vmatprep.subr.bf16.mxu0 0
      %3987 = vmatpush2.bf16.msra.mxu0 0
      %3988 = vmatprep.subr.bf16.mxu0 0
      %3989 = vmatpush2.bf16.msra.mxu0 0
      %3990 = vmatprep.subr.bf16.mxu0 0
      %3991 = vmatpush2.bf16.msra.mxu0 0
      %3992 = vmatprep.mubr.bf16.mxu0 0
      %3993 = vmatmul.mubr.bf16.gmra.mxu0 %v3955
      %v3994 = vpop.f32.mrf.mxu0
      %v3995 = vadd.f32 0.0, %v3994
      %v3996 = vpop.f32.mrf.mxu0
      %v3997 = vpop.f32.mrf.mxu0
      %v3998 = vpop.f32.mrf.mxu0
      %3999 = vdwg.mxu0
      %4000 = vrot.lane.b32.xlu0 %v588, 40
      %v4001 = vpop.permute.xlu0 %4000
      %v4003 = vsel %vm593, %v3710, 0
      %v4006 = vsel %vm1068, %v4001, 0
      %4008 = vmatprep.subr.bf16.mxu0 0
      %4009 = vmatpush1.bf16.msra.mxu0 0
      %4010 = vmatprep.subr.bf16.mxu0 0
      %4011 = vmatpush1.bf16.msra.mxu0 0
      %4012 = vmatprep.subr.bf16.mxu0 0
      %4013 = vmatpush1.bf16.msra.mxu0 0
      %4014 = vmatprep.subr.bf16.mxu0 0
      %4015 = vmatpush1.bf16.msra.mxu0 0
      %4016 = vmatprep.subr.bf16.mxu0 0
      %4017 = vmatpush1.bf16.msra.mxu0 0
      %4018 = vmatprep.subr.bf16.mxu0 0
      %4019 = vmatpush1.bf16.msra.mxu0 0
      %4020 = vmatprep.subr.bf16.mxu0 0
      %4021 = vmatpush1.bf16.msra.mxu0 0
      %4022 = vmatprep.subr.bf16.mxu0 0
      %4023 = vmatpush1.bf16.msra.mxu0 %v4006
      %4024 = vmatprep.subr.bf16.mxu0 0
      %4025 = vmatpush2.bf16.msra.mxu0 0
      %4026 = vmatprep.subr.bf16.mxu0 0
      %4027 = vmatpush2.bf16.msra.mxu0 0
      %4028 = vmatprep.subr.bf16.mxu0 0
      %4029 = vmatpush2.bf16.msra.mxu0 0
      %4030 = vmatprep.subr.bf16.mxu0 0
      %4031 = vmatpush2.bf16.msra.mxu0 0
      %4032 = vmatprep.subr.bf16.mxu0 0
      %4033 = vmatpush2.bf16.msra.mxu0 0
      %4034 = vmatprep.subr.bf16.mxu0 0
      %4035 = vmatpush2.bf16.msra.mxu0 0
      %4036 = vmatprep.subr.bf16.mxu0 0
      %4037 = vmatpush2.bf16.msra.mxu0 0
      %4038 = vmatprep.subr.bf16.mxu0 0
      %4039 = vmatpush2.bf16.msra.mxu0 0
      %4040 = vmatprep.mubr.bf16.mxu0 0
      %4041 = vmatmul.mubr.bf16.gmra.mxu0 %v4003
      %v4042 = vpop.f32.mrf.mxu0
      %v4043 = vadd.f32 0.0, %v4042
      %v4044 = vpop.f32.mrf.mxu0
      %v4045 = vpop.f32.mrf.mxu0
      %v4046 = vpop.f32.mrf.mxu0
      %4047 = vdwg.mxu0
      %4048 = vrot.lane.b32.xlu0 %v589, 40
      %v4049 = vpop.permute.xlu0 %4048
      %v4051 = vsel %vm593, %v3711, 0
      %v4054 = vsel %vm1068, %v4049, 0
      %4056 = vmatprep.subr.bf16.mxu0 0
      %4057 = vmatpush1.bf16.msra.mxu0 0
      %4058 = vmatprep.subr.bf16.mxu0 0
      %4059 = vmatpush1.bf16.msra.mxu0 0
      %4060 = vmatprep.subr.bf16.mxu0 0
      %4061 = vmatpush1.bf16.msra.mxu0 0
      %4062 = vmatprep.subr.bf16.mxu0 0
      %4063 = vmatpush1.bf16.msra.mxu0 0
      %4064 = vmatprep.subr.bf16.mxu0 0
      %4065 = vmatpush1.bf16.msra.mxu0 0
      %4066 = vmatprep.subr.bf16.mxu0 0
      %4067 = vmatpush1.bf16.msra.mxu0 0
      %4068 = vmatprep.subr.bf16.mxu0 0
      %4069 = vmatpush1.bf16.msra.mxu0 0
      %4070 = vmatprep.subr.bf16.mxu0 0
      %4071 = vmatpush1.bf16.msra.mxu0 %v4054
      %4072 = vmatprep.subr.bf16.mxu0 0
      %4073 = vmatpush2.bf16.msra.mxu0 0
      %4074 = vmatprep.subr.bf16.mxu0 0
      %4075 = vmatpush2.bf16.msra.mxu0 0
      %4076 = vmatprep.subr.bf16.mxu0 0
      %4077 = vmatpush2.bf16.msra.mxu0 0
      %4078 = vmatprep.subr.bf16.mxu0 0
      %4079 = vmatpush2.bf16.msra.mxu0 0
      %4080 = vmatprep.subr.bf16.mxu0 0
      %4081 = vmatpush2.bf16.msra.mxu0 0
      %4082 = vmatprep.subr.bf16.mxu0 0
      %4083 = vmatpush2.bf16.msra.mxu0 0
      %4084 = vmatprep.subr.bf16.mxu0 0
      %4085 = vmatpush2.bf16.msra.mxu0 0
      %4086 = vmatprep.subr.bf16.mxu0 0
      %4087 = vmatpush2.bf16.msra.mxu0 0
      %4088 = vmatprep.mubr.bf16.mxu0 0
      %4089 = vmatmul.mubr.bf16.gmra.mxu0 %v4051
      %v4090 = vpop.f32.mrf.mxu0
      %v4091 = vadd.f32 0.0, %v4090
      %v4092 = vpop.f32.mrf.mxu0
      %v4093 = vpop.f32.mrf.mxu0
      %v4094 = vpop.f32.mrf.mxu0
      %4095 = vdwg.mxu0
      %v4096 = vrcp.pop %v3682
      %v4097 = vrcp.pop %v3685
      %v4098 = vrcp.pop %v3688
      %v4099 = vrcp.pop %v3691
      %v4100 = vrcp.pop %v3694
      %v4101 = vrcp.pop %v3697
      %v4102 = vrcp.pop %v3700
      %v4103 = vrcp.pop %v3703
      %v4104 = vmul.f32 %v3755, %v4096
      %v4105 = vmul.f32 %v3803, %v4097
      %v4106 = vmul.f32 %v3851, %v4098
      %v4107 = vmul.f32 %v3899, %v4099
      %v4108 = vmul.f32 %v3947, %v4100
      %v4109 = vmul.f32 %v3995, %v4101
      %v4110 = vmul.f32 %v4043, %v4102
      %v4111 = vmul.f32 %v4091, %v4103
      %4120 = vrot.lane.b32.xlu0 %v2344, 8
      %v4121 = vpop.permute.xlu0 %4120
      %4122 = vrot.lane.b32.xlu0 %v2345, 8
      %v4123 = vpop.permute.xlu0 %4122
      %4124 = vrot.lane.b32.xlu0 %v2346, 8
      %v4125 = vpop.permute.xlu0 %4124
      %4126 = vrot.lane.b32.xlu0 %v2347, 8
      %v4127 = vpop.permute.xlu0 %4126
      %4128 = vrot.lane.b32.xlu0 %v2348, 8
      %v4129 = vpop.permute.xlu0 %4128
      %4130 = vrot.lane.b32.xlu0 %v2349, 8
      %v4131 = vpop.permute.xlu0 %4130
      %4132 = vrot.lane.b32.xlu0 %v2350, 8
      %v4133 = vpop.permute.xlu0 %4132
      %4134 = vrot.lane.b32.xlu0 %v2351, 8
      %v4135 = vpop.permute.xlu0 %4134
      %4152 = vrot.lane.b32.xlu0 %v3224, 16
      %v4153 = vpop.permute.xlu0 %4152
      %4154 = vrot.lane.b32.xlu0 %v3225, 16
      %v4155 = vpop.permute.xlu0 %4154
      %4156 = vrot.lane.b32.xlu0 %v3226, 16
      %v4157 = vpop.permute.xlu0 %4156
      %4158 = vrot.lane.b32.xlu0 %v3227, 16
      %v4159 = vpop.permute.xlu0 %4158
      %4160 = vrot.lane.b32.xlu0 %v3228, 16
      %v4161 = vpop.permute.xlu0 %4160
      %4162 = vrot.lane.b32.xlu0 %v3229, 16
      %v4163 = vpop.permute.xlu0 %4162
      %4164 = vrot.lane.b32.xlu0 %v3230, 16
      %v4165 = vpop.permute.xlu0 %4164
      %4166 = vrot.lane.b32.xlu0 %v3231, 16
      %v4167 = vpop.permute.xlu0 %4166
      %4184 = vrot.lane.b32.xlu0 %v4104, 24
      %v4185 = vpop.permute.xlu0 %4184
      %4186 = vrot.lane.b32.xlu0 %v4105, 24
      %v4187 = vpop.permute.xlu0 %4186
      %4188 = vrot.lane.b32.xlu0 %v4106, 24
      %v4189 = vpop.permute.xlu0 %4188
      %4190 = vrot.lane.b32.xlu0 %v4107, 24
      %v4191 = vpop.permute.xlu0 %4190
      %4192 = vrot.lane.b32.xlu0 %v4108, 24
      %v4193 = vpop.permute.xlu0 %4192
      %4194 = vrot.lane.b32.xlu0 %v4109, 24
      %v4195 = vpop.permute.xlu0 %4194
      %4196 = vrot.lane.b32.xlu0 %v4110, 24
      %v4197 = vpop.permute.xlu0 %4196
      %4198 = vrot.lane.b32.xlu0 %v4111, 24
      %v4199 = vpop.permute.xlu0 %4198
      %v4208 = vsel %vm593, %v1456, %v4121
      %v4209 = vsel %vm593, %v1457, %v4123
      %v4210 = vsel %vm593, %v1458, %v4125
      %v4211 = vsel %vm593, %v1459, %v4127
      %v4212 = vsel %vm593, %v1460, %v4129
      %v4213 = vsel %vm593, %v1461, %v4131
      %v4214 = vsel %vm593, %v1462, %v4133
      %v4215 = vsel %vm593, %v1463, %v4135
      %vm4216 = vcmask 130048
      %v4217 = vsel %vm4216, %v4208, %v4153
      %v4218 = vsel %vm4216, %v4209, %v4155
      %v4219 = vsel %vm4216, %v4210, %v4157
      %v4220 = vsel %vm4216, %v4211, %v4159
      %v4221 = vsel %vm4216, %v4212, %v4161
      %v4222 = vsel %vm4216, %v4213, %v4163
      %v4223 = vsel %vm4216, %v4214, %v4165
      %v4224 = vsel %vm4216, %v4215, %v4167
      %vm4225 = vcmask 195584
      %v4226 = vsel %vm4225, %v4217, %v4185
      %v4227 = vsel %vm4225, %v4218, %v4187
      %v4228 = vsel %vm4225, %v4219, %v4189
      %v4229 = vsel %vm4225, %v4220, %v4191
      %v4230 = vsel %vm4225, %v4221, %v4193
      %v4231 = vsel %vm4225, %v4222, %v4195
      %v4232 = vsel %vm4225, %v4223, %v4197
      %v4233 = vsel %vm4225, %v4224, %v4199
      %v4234 = vpack.c.bf16 %v4227, %v4226
      %v4235 = vpack.c.bf16 %v4229, %v4228
      %v4236 = vpack.c.bf16 %v4231, %v4230
      %v4237 = vpack.c.bf16 %v4233, %v4232
      %v4238 = vld [vmem:[%s6] sm:$0xf]
      %v4239 = vld [vmem:[%s6 + $0x4] sm:$0xf]
      %v4240 = vld [vmem:[%s6 + $0x8] sm:$0xf]
      %v4241 = vld [vmem:[%s6 + $0xc] sm:$0xf]
      %v4242 = vld [vmem:[%s7] sm:$0x1]
      %v4244 = vlaneseq
      %v4245 = vshrl.u32 %v4244, 7
      %v4246 = vsub.s32 0, %v4245
      %v4247 = vrot.slane %v4242, %v4246
      %v4253 = vunpack.c.l.b16 %v4238
      %v4254 = vunpack.c.l.b16 %v4239
      %v4255 = vunpack.c.l.b16 %v4240
      %v4256 = vunpack.c.l.b16 %v4241
      %v4257 = vpack.c.b16 %v4254, %v4253
      %v4258 = vpack.c.b16 %v4256, %v4255
      %v4262 = vsel %vm320, %v4234, 0
      %v4265 = vsel %vm320, %v4235, 0
      %v4268 = vsel %vm320, %v4236, 0
      %v4271 = vsel %vm320, %v4237, 0
      %4273 = vmatprep.subr.bf16.mxu0 0
      %4274 = vmatpush1.bf16.msra.mxu0 0
      %4275 = vmatprep.subr.bf16.mxu0 0
      %4276 = vmatpush1.bf16.msra.mxu0 0
      %4277 = vmatprep.subr.bf16.mxu0 0
      %4278 = vmatpush1.bf16.msra.mxu0 0
      %4279 = vmatprep.subr.bf16.mxu0 0
      %4280 = vmatpush1.bf16.msra.mxu0 0
      %4281 = vmatprep.subr.bf16.mxu0 0
      %4282 = vmatpush1.bf16.msra.mxu0 0
      %4283 = vmatprep.subr.bf16.mxu0 0
      %4284 = vmatpush1.bf16.msra.mxu0 0
      %4285 = vmatprep.subr.bf16.mxu0 0
      %4286 = vmatpush1.bf16.msra.mxu0 %v4258
      %4287 = vmatprep.subr.bf16.mxu0 0
      %4288 = vmatpush1.bf16.msra.mxu0 %v4257
      %4289 = vmatprep.subr.bf16.mxu0 0
      %4290 = vmatpush2.bf16.msra.mxu0 0
      %4291 = vmatprep.subr.bf16.mxu0 0
      %4292 = vmatpush2.bf16.msra.mxu0 0
      %4293 = vmatprep.subr.bf16.mxu0 0
      %4294 = vmatpush2.bf16.msra.mxu0 0
      %4295 = vmatprep.subr.bf16.mxu0 0
      %4296 = vmatpush2.bf16.msra.mxu0 0
      %4297 = vmatprep.subr.bf16.mxu0 0
      %4298 = vmatpush2.bf16.msra.mxu0 0
      %4299 = vmatprep.subr.bf16.mxu0 0
      %4300 = vmatpush2.bf16.msra.mxu0 0
      %4301 = vmatprep.subr.bf16.mxu0 0
      %4302 = vmatpush2.bf16.msra.mxu0 0
      %4303 = vmatprep.subr.bf16.mxu0 0
      %4304 = vmatpush2.bf16.msra.mxu0 0
      %4305 = vmatprep.mubr.bf16.mxu0 0
      %4306 = vmatmul.mubr.bf16.gmra.mxu0 %v4262
      %v4307 = vpop.f32.mrf.mxu0
      %v4308 = vadd.f32 %v4247, %v4307
      %v4309 = vpop.f32.mrf.mxu0
      %v4310 = vpop.f32.mrf.mxu0
      %v4311 = vadd.f32 %v4247, %v4310
      %v4312 = vpop.f32.mrf.mxu0
      %4313 = vmatprep.mubr.bf16.mxu0 0
      %4314 = vmatmul.mubr.bf16.gmra.mxu0 %v4265
      %v4315 = vpop.f32.mrf.mxu0
      %v4316 = vadd.f32 %v4247, %v4315
      %v4317 = vpop.f32.mrf.mxu0
      %v4318 = vpop.f32.mrf.mxu0
      %v4319 = vadd.f32 %v4247, %v4318
      %v4320 = vpop.f32.mrf.mxu0
      %4321 = vmatprep.mubr.bf16.mxu0 0
      %4322 = vmatmul.mubr.bf16.gmra.mxu0 %v4268
      %v4323 = vpop.f32.mrf.mxu0
      %v4324 = vadd.f32 %v4247, %v4323
      %v4325 = vpop.f32.mrf.mxu0
      %v4326 = vpop.f32.mrf.mxu0
      %v4327 = vadd.f32 %v4247, %v4326
      %v4328 = vpop.f32.mrf.mxu0
      %4329 = vmatprep.mubr.bf16.mxu0 0
      %4330 = vmatmul.mubr.bf16.gmra.mxu0 %v4271
      %v4331 = vpop.f32.mrf.mxu0
      %v4332 = vadd.f32 %v4247, %v4331
      %v4333 = vpop.f32.mrf.mxu0
      %v4334 = vpop.f32.mrf.mxu0
      %v4335 = vadd.f32 %v4247, %v4334
      %v4336 = vpop.f32.mrf.mxu0
      %4337 = vdwg.mxu0
      %4338 = vst.msk [vmem:[%s307] sm:$0xff] %vm320, %v4308
      %4339 = vst.msk [vmem:[%s307 + $0x8] sm:$0xff] %vm320, %v4311
      %4340 = vst.msk [vmem:[%s307 + $0x10] sm:$0xff] %vm320, %v4316
      %4341 = vst.msk [vmem:[%s307 + $0x18] sm:$0xff] %vm320, %v4319
      %4342 = vst.msk [vmem:[%s307 + $0x20] sm:$0xff] %vm320, %v4324
      %4343 = vst.msk [vmem:[%s307 + $0x28] sm:$0xff] %vm320, %v4327
      %4344 = vst.msk [vmem:[%s307 + $0x30] sm:$0xff] %vm320, %v4332
      %4345 = vst.msk [vmem:[%s307 + $0x38] sm:$0xff] %vm320, %v4335
      %s4346 = smul.u32 8, %s19
      %p4347 = scmp.lt.s32.totalorder %s4346, 15
      %s4348 = scalar_select %p4347, %s4346, 15
      %s4349 = smul.addr %s4348, 8
      %s4350 = scalar_lea.vmem %s8, %s4349
      // Predicated region
      $region53: #{a_call__.5} parent=51 // pred_check
        %p4351 = pneg %p210
      $region54: #{a_call__.5} parent=51 // pred_check_branch
        %4353 = sbr.rel (%p4351) target = $region56
      $region55: #{a_call__.5} parent=51 // pred_region
        %s4354 = smul.u32 8, %s19
      $region56: #{a_call__.5} parent=51 // pred_fallthru
        _
    $region52: #{a_call__.5} parent=5 // pred_fallthru
      _
    %p4355 = scmp.le.s32.totalorder 2, %s14
    // Predicated region
    $region57: #{a_call__.5} parent=5 // pred_check
      %p4356 = pneg %p4355
    $region58: #{a_call__.5} parent=5 // pred_check_branch
      %4358 = sbr.rel (%p4356) target = $region60
    $region59: #{a_call__.5} parent=5 // pred_region
      %s4359 = ssub.s32 %s14, 2
      // Predicated region
      $region61: #{a_call__.5} parent=59 // pred_check
        %p4360 = pneg %p216
      $region62: #{a_call__.5} parent=59 // pred_check_branch
        %4362 = sbr.rel (%p4360) target = $region64
      $region63: #{a_call__.5} parent=59 // pred_region
        %s4363 = smul.u32 8, %s20
        %p4364 = scmp.lt.s32.totalorder %s4363, 15
        %s4365 = scalar_select %p4364, %s4363, 15
        %s4366 = smul.addr %s4365, 8
        %s4367 = scalar_lea.vmem %s8, %s4366
      $region64: #{a_call__.5} parent=59 // pred_fallthru
        _
    $region60: #{a_call__.5} parent=5 // pred_fallthru
      _
  $region6: #{a_call__.5} parent=0 // loop_footer
    %s18 = sadd.s32 1, %s14
  $region7: #{a_call__.5} parent=0 // loop_footer_branch
    %13 = sbr.rel target = $region3
  $region8: #{a_call__.5} parent=0 // loop_exit
    _

// kernel: a_call__.7
$region0: #{a_call__.7}
  #allocation0 [shape = 'u32[]', space=smem, size = 0x4, offset = 0x4, fixed_abs, tag = 'smem constant byte address 0x4 - core index']
  #allocation1 [shape = 'u32[144,128]{1,0:T(1,128)}', space=vmem, size = 0x12000, scoped, tag = 'internal scratch']
  %s0 = inlined_call_operand.vmem [shape: f32[16,8,32], index: 0, kind: input, shape index: {}]
  %s1 = inlined_call_operand.vmem [shape: f32[1,32], index: 1, kind: input, shape index: {}]
  %s2 = inlined_call_operand.vmem [shape: f32[1,32], index: 2, kind: input, shape index: {}]
  %s3 = inlined_call_operand.vmem [shape: bf16[32,96], index: 3, kind: input, shape index: {}]
  %s4 = inlined_call_operand.vmem [shape: f32[1,96], index: 4, kind: input, shape index: {}]
  %s5 = inlined_call_operand.vmem [shape: bf16[4,8,8], index: 5, kind: input, shape index: {}]
  %s6 = inlined_call_operand.vmem [shape: bf16[8,8,8], index: 6, kind: input, shape index: {}]
  %s7 = inlined_call_operand.vmem [shape: bf16[32,32], index: 7, kind: input, shape index: {}]
  %s8 = inlined_call_operand.vmem [shape: f32[1,32], index: 8, kind: input, shape index: {}]
  %s9 = inlined_call_operand.vmem [shape: f32[16,8,32], index: 9, kind: output, shape index: {}]
  %s10 = sld [smem:[#allocation0]]
  $region69: #{a_call__.7} parent=0
    _
  %s12 = ssub.s32 1, %s10
  %s13 = scalar_select 0, %s12, %s10
  loop: start=0, step=1, limit=4
  $region2: #{a_call__.7} parent=0 // loop_pre_header
    _
  $region3: #{a_call__.7} parent=0 // loop_header
    %s15 = sphi 0, %s19
    %p16 = scmp.ge.s32.totalorder %s15, 4
    %s25 = sphi 0, %s27
    %s28 = sphi 0, %s25
    %s29 = sphi 0, %s28
    %s45 = sphi 0, %s29
    %s49 = sphi 0, %s49
    %s51 = sphi 0, %s49
    %s52 = sphi 0, %s51
    %s66 = sphi 0, %s52
    %s70 = sphi 0, %s70
    %s72 = sphi 0, %s70
    %s73 = sphi 0, %s72
    %s87 = sphi 0, %s73
    %s91 = sphi 0, %s91
    %s93 = sphi 0, %s91
    %s94 = sphi 0, %s93
    %s108 = sphi 0, %s94
    %s112 = sphi 0, %s112
    %s114 = sphi 0, %s112
    %s115 = sphi 0, %s114
    %s129 = sphi 0, %s115
    %s133 = sphi 0, %s133
    %s135 = sphi 0, %s133
    %s136 = sphi 0, %s135
    %s150 = sphi 0, %s136
    %s154 = sphi 0, %s154
    %s156 = sphi 0, %s154
    %s157 = sphi 0, %s156
    %s171 = sphi 0, %s157
    %s175 = sphi 0, %s175
    %s177 = sphi 0, %s175
    %s178 = sphi 0, %s177
    %s192 = sphi 0, %s178
    %s196 = sphi 0, %s196
    %s198 = sphi 0, %s196
    %s199 = sphi 0, %s198
    %s213 = sphi 0, %s199
    %s219 = sphi 0, %s221
    %s222 = sphi 0, %s219
    %s223 = sphi 0, %s222
    %s239 = sphi 0, %s223
  $region4: #{a_call__.7} parent=0 // loop_header_branch
    %18 = sbr.rel (%p16) target = $region8
  $region5: #{a_call__.7} parent=0 // loop_body
    %s20 = ssub.s32 %s15, 1
    %s21 = ssub.s32 %s15, 2
    %s22 = sadd.s32 %s15, 1
    %s23 = ssub.s32 %s15, %s22
    %p24 = scmp.eq.s32.totalorder %s23, 0
    %s26 = sadd.s32 %s25, 1
    %s27 = scalar_select %p24, %s25, %s26
    %p30 = pneg %p24
    %p31 = scmp.eq.s32.totalorder %s15, 1
    %p32 = por %p30, %p31
    %p33 = scmp.ne.s32.totalorder %s25, %s28
    %p34 = scmp.eq.s32.totalorder %s15, 0
    %p35 = por %p33, %p34
    %p36 = scmp.ne.s32.totalorder %s25, %s28
    %p37 = scmp.eq.s32.totalorder %s20, 1
    %p38 = por %p36, %p37
    %p39 = scmp.ne.s32.totalorder %s28, %s29
    %p40 = scmp.eq.s32.totalorder %s20, 0
    %p41 = por %p39, %p40
    %p42 = scmp.ne.s32.totalorder %s28, %s29
    %p43 = scmp.eq.s32.totalorder %s21, 1
    %p44 = por %p42, %p43
    %p46 = scmp.ne.s32.totalorder %s29, %s45
    %p47 = scmp.eq.s32.totalorder %s21, 0
    %p48 = por %p46, %p47
    %s50 = sadd.s32 %s49, 1
    %p53 = scmp.eq.s32.totalorder %s15, 1
    %p54 = scmp.ne.s32.totalorder %s49, %s51
    %p55 = scmp.eq.s32.totalorder %s15, 0
    %p56 = por %p54, %p55
    %p57 = scmp.ne.s32.totalorder %s49, %s51
    %p58 = scmp.eq.s32.totalorder %s20, 1
    %p59 = por %p57, %p58
    %p60 = scmp.ne.s32.totalorder %s51, %s52
    %p61 = scmp.eq.s32.totalorder %s20, 0
    %p62 = por %p60, %p61
    %p63 = scmp.ne.s32.totalorder %s51, %s52
    %p64 = scmp.eq.s32.totalorder %s21, 1
    %p65 = por %p63, %p64
    %p67 = scmp.ne.s32.totalorder %s52, %s66
    %p68 = scmp.eq.s32.totalorder %s21, 0
    %p69 = por %p67, %p68
    %s71 = sadd.s32 %s70, 1
    %p74 = scmp.eq.s32.totalorder %s15, 1
    %p75 = scmp.ne.s32.totalorder %s70, %s72
    %p76 = scmp.eq.s32.totalorder %s15, 0
    %p77 = por %p75, %p76
    %p78 = scmp.ne.s32.totalorder %s70, %s72
    %p79 = scmp.eq.s32.totalorder %s20, 1
    %p80 = por %p78, %p79
    %p81 = scmp.ne.s32.totalorder %s72, %s73
    %p82 = scmp.eq.s32.totalorder %s20, 0
    %p83 = por %p81, %p82
    %p84 = scmp.ne.s32.totalorder %s72, %s73
    %p85 = scmp.eq.s32.totalorder %s21, 1
    %p86 = por %p84, %p85
    %p88 = scmp.ne.s32.totalorder %s73, %s87
    %p89 = scmp.eq.s32.totalorder %s21, 0
    %p90 = por %p88, %p89
    %s92 = sadd.s32 %s91, 1
    %p95 = scmp.eq.s32.totalorder %s15, 1
    %p96 = scmp.ne.s32.totalorder %s91, %s93
    %p97 = scmp.eq.s32.totalorder %s15, 0
    %p98 = por %p96, %p97
    %p99 = scmp.ne.s32.totalorder %s91, %s93
    %p100 = scmp.eq.s32.totalorder %s20, 1
    %p101 = por %p99, %p100
    %p102 = scmp.ne.s32.totalorder %s93, %s94
    %p103 = scmp.eq.s32.totalorder %s20, 0
    %p104 = por %p102, %p103
    %p105 = scmp.ne.s32.totalorder %s93, %s94
    %p106 = scmp.eq.s32.totalorder %s21, 1
    %p107 = por %p105, %p106
    %p109 = scmp.ne.s32.totalorder %s94, %s108
    %p110 = scmp.eq.s32.totalorder %s21, 0
    %p111 = por %p109, %p110
    %s113 = sadd.s32 %s112, 1
    %p116 = scmp.eq.s32.totalorder %s15, 1
    %p117 = scmp.ne.s32.totalorder %s112, %s114
    %p118 = scmp.eq.s32.totalorder %s15, 0
    %p119 = por %p117, %p118
    %p120 = scmp.ne.s32.totalorder %s112, %s114
    %p121 = scmp.eq.s32.totalorder %s20, 1
    %p122 = por %p120, %p121
    %p123 = scmp.ne.s32.totalorder %s114, %s115
    %p124 = scmp.eq.s32.totalorder %s20, 0
    %p125 = por %p123, %p124
    %p126 = scmp.ne.s32.totalorder %s114, %s115
    %p127 = scmp.eq.s32.totalorder %s21, 1
    %p128 = por %p126, %p127
    %p130 = scmp.ne.s32.totalorder %s115, %s129
    %p131 = scmp.eq.s32.totalorder %s21, 0
    %p132 = por %p130, %p131
    %s134 = sadd.s32 %s133, 1
    %p137 = scmp.eq.s32.totalorder %s15, 1
    %p138 = scmp.ne.s32.totalorder %s133, %s135
    %p139 = scmp.eq.s32.totalorder %s15, 0
    %p140 = por %p138, %p139
    %p141 = scmp.ne.s32.totalorder %s133, %s135
    %p142 = scmp.eq.s32.totalorder %s20, 1
    %p143 = por %p141, %p142
    %p144 = scmp.ne.s32.totalorder %s135, %s136
    %p145 = scmp.eq.s32.totalorder %s20, 0
    %p146 = por %p144, %p145
    %p147 = scmp.ne.s32.totalorder %s135, %s136
    %p148 = scmp.eq.s32.totalorder %s21, 1
    %p149 = por %p147, %p148
    %p151 = scmp.ne.s32.totalorder %s136, %s150
    %p152 = scmp.eq.s32.totalorder %s21, 0
    %p153 = por %p151, %p152
    %s155 = sadd.s32 %s154, 1
    %p158 = scmp.eq.s32.totalorder %s15, 1
    %p159 = scmp.ne.s32.totalorder %s154, %s156
    %p160 = scmp.eq.s32.totalorder %s15, 0
    %p161 = por %p159, %p160
    %p162 = scmp.ne.s32.totalorder %s154, %s156
    %p163 = scmp.eq.s32.totalorder %s20, 1
    %p164 = por %p162, %p163
    %p165 = scmp.ne.s32.totalorder %s156, %s157
    %p166 = scmp.eq.s32.totalorder %s20, 0
    %p167 = por %p165, %p166
    %p168 = scmp.ne.s32.totalorder %s156, %s157
    %p169 = scmp.eq.s32.totalorder %s21, 1
    %p170 = por %p168, %p169
    %p172 = scmp.ne.s32.totalorder %s157, %s171
    %p173 = scmp.eq.s32.totalorder %s21, 0
    %p174 = por %p172, %p173
    %s176 = sadd.s32 %s175, 1
    %p179 = scmp.eq.s32.totalorder %s15, 1
    %p180 = scmp.ne.s32.totalorder %s175, %s177
    %p181 = scmp.eq.s32.totalorder %s15, 0
    %p182 = por %p180, %p181
    %p183 = scmp.ne.s32.totalorder %s175, %s177
    %p184 = scmp.eq.s32.totalorder %s20, 1
    %p185 = por %p183, %p184
    %p186 = scmp.ne.s32.totalorder %s177, %s178
    %p187 = scmp.eq.s32.totalorder %s20, 0
    %p188 = por %p186, %p187
    %p189 = scmp.ne.s32.totalorder %s177, %s178
    %p190 = scmp.eq.s32.totalorder %s21, 1
    %p191 = por %p189, %p190
    %p193 = scmp.ne.s32.totalorder %s178, %s192
    %p194 = scmp.eq.s32.totalorder %s21, 0
    %p195 = por %p193, %p194
    %s197 = sadd.s32 %s196, 1
    %p200 = scmp.eq.s32.totalorder %s15, 1
    %p201 = scmp.ne.s32.totalorder %s196, %s198
    %p202 = scmp.eq.s32.totalorder %s15, 0
    %p203 = por %p201, %p202
    %p204 = scmp.ne.s32.totalorder %s196, %s198
    %p205 = scmp.eq.s32.totalorder %s20, 1
    %p206 = por %p204, %p205
    %p207 = scmp.ne.s32.totalorder %s198, %s199
    %p208 = scmp.eq.s32.totalorder %s20, 0
    %p209 = por %p207, %p208
    %p210 = scmp.ne.s32.totalorder %s198, %s199
    %p211 = scmp.eq.s32.totalorder %s21, 1
    %p212 = por %p210, %p211
    %p214 = scmp.ne.s32.totalorder %s199, %s213
    %p215 = scmp.eq.s32.totalorder %s21, 0
    %p216 = por %p214, %p215
    %s217 = ssub.s32 %s15, %s22
    %p218 = scmp.eq.s32.totalorder %s217, 0
    %s220 = sadd.s32 %s219, 1
    %s221 = scalar_select %p218, %s219, %s220
    %p224 = pneg %p218
    %p225 = scmp.eq.s32.totalorder %s15, 1
    %p226 = por %p224, %p225
    %p227 = scmp.ne.s32.totalorder %s219, %s222
    %p228 = scmp.eq.s32.totalorder %s15, 0
    %p229 = por %p227, %p228
    %p230 = scmp.ne.s32.totalorder %s219, %s222
    %p231 = scmp.eq.s32.totalorder %s20, 1
    %p232 = por %p230, %p231
    %p233 = scmp.ne.s32.totalorder %s222, %s223
    %p234 = scmp.eq.s32.totalorder %s20, 0
    %p235 = por %p233, %p234
    %p236 = scmp.ne.s32.totalorder %s222, %s223
    %p237 = scmp.eq.s32.totalorder %s21, 1
    %p238 = por %p236, %p237
    %p240 = scmp.ne.s32.totalorder %s223, %s239
    %p241 = scmp.eq.s32.totalorder %s21, 0
    %p242 = por %p240, %p241
    %p243 = scmp.le.s32.totalorder 1, %s15
    %p244 = scmp.lt.s32.totalorder %s15, 3
    %p245 = pnand %p243, %p244
    %p246 = pneg %p245
    // Predicated region
    $region9: #{a_call__.7} parent=5 // pred_check
      _
    $region10: #{a_call__.7} parent=5 // pred_check_branch
      %248 = sbr.rel (%p245) target = $region12
    $region11: #{a_call__.7} parent=5 // pred_region
      %s249 = ssub.s32 %s15, 1
      // Predicated region
      $region13: #{a_call__.7} parent=11 // pred_check
        %p250 = pneg %p62
      $region14: #{a_call__.7} parent=11 // pred_check_branch
        %252 = sbr.rel (%p250) target = $region16
      $region15: #{a_call__.7} parent=11 // pred_region
        _
      $region16: #{a_call__.7} parent=11 // pred_fallthru
        _
      // Predicated region
      $region17: #{a_call__.7} parent=11 // pred_check
        %p253 = pneg %p83
      $region18: #{a_call__.7} parent=11 // pred_check_branch
        %255 = sbr.rel (%p253) target = $region20
      $region19: #{a_call__.7} parent=11 // pred_region
        _
      $region20: #{a_call__.7} parent=11 // pred_fallthru
        _
      // Predicated region
      $region21: #{a_call__.7} parent=11 // pred_check
        %p256 = pneg %p104
      $region22: #{a_call__.7} parent=11 // pred_check_branch
        %258 = sbr.rel (%p256) target = $region24
      $region23: #{a_call__.7} parent=11 // pred_region
        _
      $region24: #{a_call__.7} parent=11 // pred_fallthru
        _
      // Predicated region
      $region25: #{a_call__.7} parent=11 // pred_check
        %p259 = pneg %p125
      $region26: #{a_call__.7} parent=11 // pred_check_branch
        %261 = sbr.rel (%p259) target = $region28
      $region27: #{a_call__.7} parent=11 // pred_region
        _
      $region28: #{a_call__.7} parent=11 // pred_fallthru
        _
      // Predicated region
      $region29: #{a_call__.7} parent=11 // pred_check
        %p262 = pneg %p146
      $region30: #{a_call__.7} parent=11 // pred_check_branch
        %264 = sbr.rel (%p262) target = $region32
      $region31: #{a_call__.7} parent=11 // pred_region
        _
      $region32: #{a_call__.7} parent=11 // pred_fallthru
        _
      // Predicated region
      $region33: #{a_call__.7} parent=11 // pred_check
        %p265 = pneg %p167
      $region34: #{a_call__.7} parent=11 // pred_check_branch
        %267 = sbr.rel (%p265) target = $region36
      $region35: #{a_call__.7} parent=11 // pred_region
        _
      $region36: #{a_call__.7} parent=11 // pred_fallthru
        _
      // Predicated region
      $region37: #{a_call__.7} parent=11 // pred_check
        %p268 = pneg %p188
      $region38: #{a_call__.7} parent=11 // pred_check_branch
        %270 = sbr.rel (%p268) target = $region40
      $region39: #{a_call__.7} parent=11 // pred_region
        _
      $region40: #{a_call__.7} parent=11 // pred_fallthru
        _
      // Predicated region
      $region41: #{a_call__.7} parent=11 // pred_check
        %p271 = pneg %p209
      $region42: #{a_call__.7} parent=11 // pred_check_branch
        %273 = sbr.rel (%p271) target = $region44
      $region43: #{a_call__.7} parent=11 // pred_region
        _
      $region44: #{a_call__.7} parent=11 // pred_fallthru
        _
    $region12: #{a_call__.7} parent=5 // pred_fallthru
      _
    %p274 = scmp.lt.s32.totalorder %s15, 2
    // Predicated region
    $region45: #{a_call__.7} parent=5 // pred_check
      %p275 = pneg %p274
    $region46: #{a_call__.7} parent=5 // pred_check_branch
      %277 = sbr.rel (%p275) target = $region48
    $region47: #{a_call__.7} parent=5 // pred_region
      // Predicated region
      $region49: #{a_call__.7} parent=47 // pred_check
        %p278 = pneg %p35
      $region50: #{a_call__.7} parent=47 // pred_check_branch
        %280 = sbr.rel (%p278) target = $region52
      $region51: #{a_call__.7} parent=47 // pred_region
        %s281 = smul.u32 8, %s15
        %p282 = scmp.lt.s32.totalorder %s281, 15
        %s283 = scalar_select %p282, %s281, 15
        %s284 = smul.addr %s283, 8
        %s285 = scalar_lea.vmem %s0, %s284
        %s286 = smul.u32 8, %s15
      $region52: #{a_call__.7} parent=47 // pred_fallthru
        _
    $region48: #{a_call__.7} parent=5 // pred_fallthru
      _
    %p287 = scmp.le.s32.totalorder 1, %s15
    %p288 = scmp.lt.s32.totalorder %s15, 3
    %p289 = pnand %p287, %p288
    %p290 = pneg %p289
    // Predicated region
    $region53: #{a_call__.7} parent=5 // pred_check
      _
    $region54: #{a_call__.7} parent=5 // pred_check_branch
      %292 = sbr.rel (%p289) target = $region56
    $region55: #{a_call__.7} parent=5 // pred_region
      %s293 = ssub.s32 %s15, 1
      %s294 = smul.u32 8, %s20
      %p295 = scmp.lt.s32.totalorder %s294, 15
      %s296 = scalar_select %p295, %s294, 15
      %s297 = smul.addr %s296, 8
      %s298 = scalar_lea.vmem %s0, %s297
      %p299 = pneg %p41
      %p300 = pneg %p38
      %p301 = pneg %p62
      %p302 = pneg %p59
      %p303 = pneg %p83
      %p304 = pneg %p80
      %p305 = pneg %p104
      %p306 = pneg %p101
      %p307 = pneg %p125
      %p308 = pneg %p122
      %p309 = pneg %p146
      %p310 = pneg %p143
      %p311 = pneg %p167
      %p312 = pneg %p164
      %p313 = pneg %p188
      %p314 = pneg %p185
      %p315 = pneg %p209
      %p316 = pneg %p206
      %p317 = pneg %p235
      %p318 = pneg %p232
      %s319 = smul.u32 8, %s20
      %p320 = scmp.lt.s32.totalorder %s319, 15
      %s321 = scalar_select %p320, %s319, 15
      %s322 = smul.addr %s321, 8
      %s323 = scalar_lea.vmem %s9, %s322
      %s324 = smul.u32 8, %s20
      %p325 = scmp.lt.s32.totalorder %s324, 15
      %s326 = scalar_select %p325, %s324, 15
      %s327 = smul.addr %s326, 8
      %s328 = scalar_lea.vmem %s0, %s327
      %s329 = smul.u32 8, %s20
      %s330 = smul.u32 8, %s20
      %p331 = scmp.lt.s32.totalorder %s330, 15
      %s332 = scalar_select %p331, %s330, 15
      %s333 = smul.addr %s332, 8
      %s334 = scalar_lea.vmem %s9, %s333
      %s335 = smul.u32 8, %s20
      %v337 = vld [vmem:[%s6] sm:$0xf]
      %v338 = vld [vmem:[%s6 + $0x4] sm:$0xf]
      %v339 = vld [vmem:[%s6 + $0x8] sm:$0xf]
      %v340 = vld [vmem:[%s6 + $0xc] sm:$0xf]
      %v341 = vld [vmem:[%s6 + $0x10] sm:$0xf]
      %v342 = vld [vmem:[%s6 + $0x14] sm:$0xf]
      %v343 = vld [vmem:[%s6 + $0x18] sm:$0xf]
      %v344 = vld [vmem:[%s6 + $0x1c] sm:$0xf]
      %v345 = vunpack.c.l.bf16 %v337
      %v346 = vunpack.c.l.bf16 %v338
      %v347 = vunpack.c.l.bf16 %v339
      %v348 = vunpack.c.l.bf16 %v340
      %v349 = vunpack.c.l.bf16 %v341
      %v350 = vunpack.c.l.bf16 %v342
      %v351 = vunpack.c.l.bf16 %v343
      %v352 = vunpack.c.l.bf16 %v344
      %v353 = vld [vmem:[%s328] sm:$0xff]
      %v354 = vld [vmem:[%s328 + $0x8] sm:$0xff]
      %v355 = vld [vmem:[%s328 + $0x10] sm:$0xff]
      %v356 = vld [vmem:[%s328 + $0x18] sm:$0xff]
      %v357 = vld [vmem:[%s328 + $0x20] sm:$0xff]
      %v358 = vld [vmem:[%s328 + $0x28] sm:$0xff]
      %v359 = vld [vmem:[%s328 + $0x30] sm:$0xff]
      %v360 = vld [vmem:[%s328 + $0x38] sm:$0xff]
      %v361 = vld [vmem:[%s1] sm:$0x1]
      %v362 = vld [vmem:[%s2] sm:$0x1]
      %vm363 = vcmask 261120
      %v364 = vsel %vm363, %v353, 0.0
      %365 = vadd.xlane.f32.xlu0 %v364
      %v366 = vpop.xlane.xlu0 %365
      %v367 = vsel %vm363, %v354, 0.0
      %368 = vadd.xlane.f32.xlu0 %v367
      %v369 = vpop.xlane.xlu0 %368
      %v370 = vsel %vm363, %v355, 0.0
      %371 = vadd.xlane.f32.xlu0 %v370
      %v372 = vpop.xlane.xlu0 %371
      %v373 = vsel %vm363, %v356, 0.0
      %374 = vadd.xlane.f32.xlu0 %v373
      %v375 = vpop.xlane.xlu0 %374
      %v376 = vsel %vm363, %v357, 0.0
      %377 = vadd.xlane.f32.xlu0 %v376
      %v378 = vpop.xlane.xlu0 %377
      %v379 = vsel %vm363, %v358, 0.0
      %380 = vadd.xlane.f32.xlu0 %v379
      %v381 = vpop.xlane.xlu0 %380
      %v382 = vsel %vm363, %v359, 0.0
      %383 = vadd.xlane.f32.xlu0 %v382
      %v384 = vpop.xlane.xlu0 %383
      %v385 = vsel %vm363, %v360, 0.0
      %386 = vadd.xlane.f32.xlu0 %v385
      %v387 = vpop.xlane.xlu0 %386
      %v388 = vrcp.pop 32.0
      %v389 = vmul.f32 %v366, %v388
      %v390 = vmul.f32 %v369, %v388
      %v391 = vmul.f32 %v372, %v388
      %v392 = vmul.f32 %v375, %v388
      %v393 = vmul.f32 %v378, %v388
      %v394 = vmul.f32 %v381, %v388
      %v395 = vmul.f32 %v384, %v388
      %v396 = vmul.f32 %v387, %v388
      %v397 = vsub.f32 %v353, %v389
      %v398 = vsub.f32 %v354, %v390
      %v399 = vsub.f32 %v355, %v391
      %v400 = vsub.f32 %v356, %v392
      %v401 = vsub.f32 %v357, %v393
      %v402 = vsub.f32 %v358, %v394
      %v403 = vsub.f32 %v359, %v395
      %v404 = vsub.f32 %v360, %v396
      %v405 = vmul.f32 %v397, %v397
      %v406 = vmul.f32 %v398, %v398
      %v407 = vmul.f32 %v399, %v399
      %v408 = vmul.f32 %v400, %v400
      %v409 = vmul.f32 %v401, %v401
      %v410 = vmul.f32 %v402, %v402
      %v411 = vmul.f32 %v403, %v403
      %v412 = vmul.f32 %v404, %v404
      %v413 = vsel %vm363, %v405, 0.0
      %414 = vadd.xlane.f32.xlu0 %v413
      %v415 = vpop.xlane.xlu0 %414
      %v416 = vsel %vm363, %v406, 0.0
      %417 = vadd.xlane.f32.xlu0 %v416
      %v418 = vpop.xlane.xlu0 %417
      %v419 = vsel %vm363, %v407, 0.0
      %420 = vadd.xlane.f32.xlu0 %v419
      %v421 = vpop.xlane.xlu0 %420
      %v422 = vsel %vm363, %v408, 0.0
      %423 = vadd.xlane.f32.xlu0 %v422
      %v424 = vpop.xlane.xlu0 %423
      %v425 = vsel %vm363, %v409, 0.0
      %426 = vadd.xlane.f32.xlu0 %v425
      %v427 = vpop.xlane.xlu0 %426
      %v428 = vsel %vm363, %v410, 0.0
      %429 = vadd.xlane.f32.xlu0 %v428
      %v430 = vpop.xlane.xlu0 %429
      %v431 = vsel %vm363, %v411, 0.0
      %432 = vadd.xlane.f32.xlu0 %v431
      %v433 = vpop.xlane.xlu0 %432
      %v434 = vsel %vm363, %v412, 0.0
      %435 = vadd.xlane.f32.xlu0 %v434
      %v436 = vpop.xlane.xlu0 %435
      %v437 = vmul.f32 %v415, %v388
      %v438 = vmul.f32 %v418, %v388
      %v439 = vmul.f32 %v421, %v388
      %v440 = vmul.f32 %v424, %v388
      %v441 = vmul.f32 %v427, %v388
      %v442 = vmul.f32 %v430, %v388
      %v443 = vmul.f32 %v433, %v388
      %v444 = vmul.f32 %v436, %v388
      %v445 = vadd.f32 %v437, 1e-05
      %v446 = vadd.f32 %v438, 1e-05
      %v447 = vadd.f32 %v439, 1e-05
      %v448 = vadd.f32 %v440, 1e-05
      %v449 = vadd.f32 %v441, 1e-05
      %v450 = vadd.f32 %v442, 1e-05
      %v451 = vadd.f32 %v443, 1e-05
      %v452 = vadd.f32 %v444, 1e-05
      %v453 = vrsqrt.pop %v445
      %v454 = vrsqrt.pop %v446
      %v455 = vrsqrt.pop %v447
      %v456 = vrsqrt.pop %v448
      %v457 = vrsqrt.pop %v449
      %v458 = vrsqrt.pop %v450
      %v459 = vrsqrt.pop %v451
      %v460 = vrsqrt.pop %v452
      %v461 = vmul.f32 %v397, %v453
      %v462 = vmul.f32 %v398, %v454
      %v463 = vmul.f32 %v399, %v455
      %v464 = vmul.f32 %v400, %v456
      %v465 = vmul.f32 %v401, %v457
      %v466 = vmul.f32 %v402, %v458
      %v467 = vmul.f32 %v403, %v459
      %v468 = vmul.f32 %v404, %v460
      %v470 = vlaneseq
      %v471 = vshrl.u32 %v470, 7
      %v472 = vsub.s32 0, %v471
      %v473 = vrot.slane %v361, %v472
      %v475 = vmul.f32 %v461, %v473
      %v476 = vmul.f32 %v462, %v473
      %v477 = vmul.f32 %v463, %v473
      %v478 = vmul.f32 %v464, %v473
      %v479 = vmul.f32 %v465, %v473
      %v480 = vmul.f32 %v466, %v473
      %v481 = vmul.f32 %v467, %v473
      %v482 = vmul.f32 %v468, %v473
      %v484 = vlaneseq
      %v485 = vshrl.u32 %v484, 7
      %v486 = vsub.s32 0, %v485
      %v487 = vrot.slane %v362, %v486
      %v489 = vadd.f32 %v475, %v487
      %v490 = vadd.f32 %v476, %v487
      %v491 = vadd.f32 %v477, %v487
      %v492 = vadd.f32 %v478, %v487
      %v493 = vadd.f32 %v479, %v487
      %v494 = vadd.f32 %v480, %v487
      %v495 = vadd.f32 %v481, %v487
      %v496 = vadd.f32 %v482, %v487
      %v497 = vpack.c.bf16 %v490, %v489
      %v498 = vpack.c.bf16 %v492, %v491
      %v499 = vpack.c.bf16 %v494, %v493
      %v500 = vpack.c.bf16 %v496, %v495
      %v501 = vld [vmem:[%s3] sm:$0xf]
      %v502 = vld [vmem:[%s3 + $0x4] sm:$0xf]
      %v503 = vld [vmem:[%s3 + $0x8] sm:$0xf]
      %v504 = vld [vmem:[%s3 + $0xc] sm:$0xf]
      %v505 = vld [vmem:[%s4] sm:$0x1]
      %v507 = vlaneseq
      %v508 = vshrl.u32 %v507, 7
      %v509 = vsub.s32 0, %v508
      %v510 = vrot.slane %v505, %v509
      %v516 = vunpack.c.l.b16 %v501
      %v517 = vunpack.c.l.b16 %v502
      %v518 = vunpack.c.l.b16 %v503
      %v519 = vunpack.c.l.b16 %v504
      %v520 = vpack.c.b16 %v517, %v516
      %v521 = vpack.c.b16 %v519, %v518
      %v525 = vsel %vm363, %v497, 0
      %v528 = vsel %vm363, %v498, 0
      %v531 = vsel %vm363, %v499, 0
      %v534 = vsel %vm363, %v500, 0
      %536 = vmatprep.subr.bf16.mxu0 0
      %537 = vmatpush1.bf16.msra.mxu0 0
      %538 = vmatprep.subr.bf16.mxu0 0
      %539 = vmatpush1.bf16.msra.mxu0 0
      %540 = vmatprep.subr.bf16.mxu0 0
      %541 = vmatpush1.bf16.msra.mxu0 0
      %542 = vmatprep.subr.bf16.mxu0 0
      %543 = vmatpush1.bf16.msra.mxu0 0
      %544 = vmatprep.subr.bf16.mxu0 0
      %545 = vmatpush1.bf16.msra.mxu0 0
      %546 = vmatprep.subr.bf16.mxu0 0
      %547 = vmatpush1.bf16.msra.mxu0 0
      %548 = vmatprep.subr.bf16.mxu0 0
      %549 = vmatpush1.bf16.msra.mxu0 %v521
      %550 = vmatprep.subr.bf16.mxu0 0
      %551 = vmatpush1.bf16.msra.mxu0 %v520
      %552 = vmatprep.subr.bf16.mxu0 0
      %553 = vmatpush2.bf16.msra.mxu0 0
      %554 = vmatprep.subr.bf16.mxu0 0
      %555 = vmatpush2.bf16.msra.mxu0 0
      %556 = vmatprep.subr.bf16.mxu0 0
      %557 = vmatpush2.bf16.msra.mxu0 0
      %558 = vmatprep.subr.bf16.mxu0 0
      %559 = vmatpush2.bf16.msra.mxu0 0
      %560 = vmatprep.subr.bf16.mxu0 0
      %561 = vmatpush2.bf16.msra.mxu0 0
      %562 = vmatprep.subr.bf16.mxu0 0
      %563 = vmatpush2.bf16.msra.mxu0 0
      %564 = vmatprep.subr.bf16.mxu0 0
      %565 = vmatpush2.bf16.msra.mxu0 0
      %566 = vmatprep.subr.bf16.mxu0 0
      %567 = vmatpush2.bf16.msra.mxu0 0
      %568 = vmatprep.mubr.bf16.mxu0 0
      %569 = vmatmul.mubr.bf16.gmra.mxu0 %v525
      %v570 = vpop.f32.mrf.mxu0
      %v571 = vadd.f32 %v510, %v570
      %v572 = vpop.f32.mrf.mxu0
      %v573 = vpop.f32.mrf.mxu0
      %v574 = vadd.f32 %v510, %v573
      %v575 = vpop.f32.mrf.mxu0
      %576 = vmatprep.mubr.bf16.mxu0 0
      %577 = vmatmul.mubr.bf16.gmra.mxu0 %v528
      %v578 = vpop.f32.mrf.mxu0
      %v579 = vadd.f32 %v510, %v578
      %v580 = vpop.f32.mrf.mxu0
      %v581 = vpop.f32.mrf.mxu0
      %v582 = vadd.f32 %v510, %v581
      %v583 = vpop.f32.mrf.mxu0
      %584 = vmatprep.mubr.bf16.mxu0 0
      %585 = vmatmul.mubr.bf16.gmra.mxu0 %v531
      %v586 = vpop.f32.mrf.mxu0
      %v587 = vadd.f32 %v510, %v586
      %v588 = vpop.f32.mrf.mxu0
      %v589 = vpop.f32.mrf.mxu0
      %v590 = vadd.f32 %v510, %v589
      %v591 = vpop.f32.mrf.mxu0
      %592 = vmatprep.mubr.bf16.mxu0 0
      %593 = vmatmul.mubr.bf16.gmra.mxu0 %v534
      %v594 = vpop.f32.mrf.mxu0
      %v595 = vadd.f32 %v510, %v594
      %v596 = vpop.f32.mrf.mxu0
      %v597 = vpop.f32.mrf.mxu0
      %v598 = vadd.f32 %v510, %v597
      %v599 = vpop.f32.mrf.mxu0
      %600 = vdwg.mxu0
      %v601 = vld [vmem:[%s5] sm:$0xf]
      %v602 = vld [vmem:[%s5 + $0x4] sm:$0xf]
      %v603 = vld [vmem:[%s5 + $0x8] sm:$0xf]
      %v604 = vld [vmem:[%s5 + $0xc] sm:$0xf]
      %v605 = vunpack.c.l.bf16 %v601
      %v606 = vunpack.c.l.bf16 %v602
      %v607 = vunpack.c.l.bf16 %v603
      %v608 = vunpack.c.l.bf16 %v604
      %v609 = vmul.f32 %v571, 0.35355338
      %v610 = vmul.f32 %v574, 0.35355338
      %v611 = vmul.f32 %v579, 0.35355338
      %v612 = vmul.f32 %v582, 0.35355338
      %v613 = vmul.f32 %v587, 0.35355338
      %v614 = vmul.f32 %v590, 0.35355338
      %v615 = vmul.f32 %v595, 0.35355338
      %v616 = vmul.f32 %v598, 0.35355338
      %v617 = vpack.c.bf16 %v609, %v609
      %v618 = vpack.c.bf16 %v610, %v610
      %v619 = vpack.c.bf16 %v611, %v611
      %v620 = vpack.c.bf16 %v612, %v612
      %v621 = vpack.c.bf16 %v613, %v613
      %v622 = vpack.c.bf16 %v614, %v614
      %v623 = vpack.c.bf16 %v615, %v615
      %v624 = vpack.c.bf16 %v616, %v616
      %v625 = vpack.c.bf16 %v571, %v571
      %v626 = vpack.c.bf16 %v574, %v574
      %v627 = vpack.c.bf16 %v579, %v579
      %v628 = vpack.c.bf16 %v582, %v582
      %v629 = vpack.c.bf16 %v587, %v587
      %v630 = vpack.c.bf16 %v590, %v590
      %v631 = vpack.c.bf16 %v595, %v595
      %v632 = vpack.c.bf16 %v598, %v598
      %634 = vrot.lane.b32.xlu0 %v625, 96
      %v635 = vpop.permute.xlu0 %634
      %vm636 = vcmask 64512
      %v638 = vsel %vm636, %v617, 0
      %v641 = vsel %vm636, %v635, 0
      %643 = vmatprep.subr.bf16.mxu0 0
      %644 = vmatpush1.bf16.xpose.msra.mxu0 0
      %645 = vmatprep.subr.bf16.mxu0 0
      %646 = vmatpush1.bf16.xpose.msra.mxu0 0
      %647 = vmatprep.subr.bf16.mxu0 0
      %648 = vmatpush1.bf16.xpose.msra.mxu0 0
      %649 = vmatprep.subr.bf16.mxu0 0
      %650 = vmatpush1.bf16.xpose.msra.mxu0 0
      %651 = vmatprep.subr.bf16.mxu0 0
      %652 = vmatpush1.bf16.xpose.msra.mxu0 0
      %653 = vmatprep.subr.bf16.mxu0 0
      %654 = vmatpush1.bf16.xpose.msra.mxu0 0
      %655 = vmatprep.subr.bf16.mxu0 0
      %656 = vmatpush1.bf16.xpose.msra.mxu0 0
      %657 = vmatprep.subr.bf16.mxu0 0
      %658 = vmatpush1.bf16.xpose.msra.mxu0 %v641
      %659 = vmatprep.subr.bf16.mxu0 0
      %660 = vmatpush2.bf16.xpose.msra.mxu0 0
      %661 = vmatprep.subr.bf16.mxu0 0
      %662 = vmatpush2.bf16.xpose.msra.mxu0 0
      %663 = vmatprep.subr.bf16.mxu0 0
      %664 = vmatpush2.bf16.xpose.msra.mxu0 0
      %665 = vmatprep.subr.bf16.mxu0 0
      %666 = vmatpush2.bf16.xpose.msra.mxu0 0
      %667 = vmatprep.subr.bf16.mxu0 0
      %668 = vmatpush2.bf16.xpose.msra.mxu0 0
      %669 = vmatprep.subr.bf16.mxu0 0
      %670 = vmatpush2.bf16.xpose.msra.mxu0 0
      %671 = vmatprep.subr.bf16.mxu0 0
      %672 = vmatpush2.bf16.xpose.msra.mxu0 0
      %673 = vmatprep.subr.bf16.mxu0 0
      %674 = vmatpush2.bf16.xpose.msra.mxu0 0
      %675 = vmatprep.mubr.bf16.mxu0 0
      %676 = vmatmul.mubr.bf16.gmra.mxu0 %v638
      %v677 = vpop.f32.mrf.mxu0
      %v678 = vadd.f32 %v605, %v677
      %v679 = vpop.f32.mrf.mxu0
      %v680 = vpop.f32.mrf.mxu0
      %v681 = vpop.f32.mrf.mxu0
      %682 = vdwg.mxu0
      %684 = vrot.lane.b32.xlu0 %v626, 96
      %v685 = vpop.permute.xlu0 %684
      %v687 = vsel %vm636, %v618, 0
      %v690 = vsel %vm636, %v685, 0
      %692 = vmatprep.subr.bf16.mxu0 0
      %693 = vmatpush1.bf16.xpose.msra.mxu0 0
      %694 = vmatprep.subr.bf16.mxu0 0
      %695 = vmatpush1.bf16.xpose.msra.mxu0 0
      %696 = vmatprep.subr.bf16.mxu0 0
      %697 = vmatpush1.bf16.xpose.msra.mxu0 0
      %698 = vmatprep.subr.bf16.mxu0 0
      %699 = vmatpush1.bf16.xpose.msra.mxu0 0
      %700 = vmatprep.subr.bf16.mxu0 0
      %701 = vmatpush1.bf16.xpose.msra.mxu0 0
      %702 = vmatprep.subr.bf16.mxu0 0
      %703 = vmatpush1.bf16.xpose.msra.mxu0 0
      %704 = vmatprep.subr.bf16.mxu0 0
      %705 = vmatpush1.bf16.xpose.msra.mxu0 0
      %706 = vmatprep.subr.bf16.mxu0 0
      %707 = vmatpush1.bf16.xpose.msra.mxu0 %v690
      %708 = vmatprep.subr.bf16.mxu0 0
      %709 = vmatpush2.bf16.xpose.msra.mxu0 0
      %710 = vmatprep.subr.bf16.mxu0 0
      %711 = vmatpush2.bf16.xpose.msra.mxu0 0
      %712 = vmatprep.subr.bf16.mxu0 0
      %713 = vmatpush2.bf16.xpose.msra.mxu0 0
      %714 = vmatprep.subr.bf16.mxu0 0
      %715 = vmatpush2.bf16.xpose.msra.mxu0 0
      %716 = vmatprep.subr.bf16.mxu0 0
      %717 = vmatpush2.bf16.xpose.msra.mxu0 0
      %718 = vmatprep.subr.bf16.mxu0 0
      %719 = vmatpush2.bf16.xpose.msra.mxu0 0
      %720 = vmatprep.subr.bf16.mxu0 0
      %721 = vmatpush2.bf16.xpose.msra.mxu0 0
      %722 = vmatprep.subr.bf16.mxu0 0
      %723 = vmatpush2.bf16.xpose.msra.mxu0 0
      %724 = vmatprep.mubr.bf16.mxu0 0
      %725 = vmatmul.mubr.bf16.gmra.mxu0 %v687
      %v726 = vpop.f32.mrf.mxu0
      %v727 = vadd.f32 %v605, %v726
      %v728 = vpop.f32.mrf.mxu0
      %v729 = vpop.f32.mrf.mxu0
      %v730 = vpop.f32.mrf.mxu0
      %731 = vdwg.mxu0
      %733 = vrot.lane.b32.xlu0 %v627, 96
      %v734 = vpop.permute.xlu0 %733
      %v736 = vsel %vm636, %v619, 0
      %v739 = vsel %vm636, %v734, 0
      %741 = vmatprep.subr.bf16.mxu0 0
      %742 = vmatpush1.bf16.xpose.msra.mxu0 0
      %743 = vmatprep.subr.bf16.mxu0 0
      %744 = vmatpush1.bf16.xpose.msra.mxu0 0
      %745 = vmatprep.subr.bf16.mxu0 0
      %746 = vmatpush1.bf16.xpose.msra.mxu0 0
      %747 = vmatprep.subr.bf16.mxu0 0
      %748 = vmatpush1.bf16.xpose.msra.mxu0 0
      %749 = vmatprep.subr.bf16.mxu0 0
      %750 = vmatpush1.bf16.xpose.msra.mxu0 0
      %751 = vmatprep.subr.bf16.mxu0 0
      %752 = vmatpush1.bf16.xpose.msra.mxu0 0
      %753 = vmatprep.subr.bf16.mxu0 0
      %754 = vmatpush1.bf16.xpose.msra.mxu0 0
      %755 = vmatprep.subr.bf16.mxu0 0
      %756 = vmatpush1.bf16.xpose.msra.mxu0 %v739
      %757 = vmatprep.subr.bf16.mxu0 0
      %758 = vmatpush2.bf16.xpose.msra.mxu0 0
      %759 = vmatprep.subr.bf16.mxu0 0
      %760 = vmatpush2.bf16.xpose.msra.mxu0 0
      %761 = vmatprep.subr.bf16.mxu0 0
      %762 = vmatpush2.bf16.xpose.msra.mxu0 0
      %763 = vmatprep.subr.bf16.mxu0 0
      %764 = vmatpush2.bf16.xpose.msra.mxu0 0
      %765 = vmatprep.subr.bf16.mxu0 0
      %766 = vmatpush2.bf16.xpose.msra.mxu0 0
      %767 = vmatprep.subr.bf16.mxu0 0
      %768 = vmatpush2.bf16.xpose.msra.mxu0 0
      %769 = vmatprep.subr.bf16.mxu0 0
      %770 = vmatpush2.bf16.xpose.msra.mxu0 0
      %771 = vmatprep.subr.bf16.mxu0 0
      %772 = vmatpush2.bf16.xpose.msra.mxu0 0
      %773 = vmatprep.mubr.bf16.mxu0 0
      %774 = vmatmul.mubr.bf16.gmra.mxu0 %v736
      %v775 = vpop.f32.mrf.mxu0
      %v776 = vadd.f32 %v605, %v775
      %v777 = vpop.f32.mrf.mxu0
      %v778 = vpop.f32.mrf.mxu0
      %v779 = vpop.f32.mrf.mxu0
      %780 = vdwg.mxu0
      %782 = vrot.lane.b32.xlu0 %v628, 96
      %v783 = vpop.permute.xlu0 %782
      %v785 = vsel %vm636, %v620, 0
      %v788 = vsel %vm636, %v783, 0
      %790 = vmatprep.subr.bf16.mxu0 0
      %791 = vmatpush1.bf16.xpose.msra.mxu0 0
      %792 = vmatprep.subr.bf16.mxu0 0
      %793 = vmatpush1.bf16.xpose.msra.mxu0 0
      %794 = vmatprep.subr.bf16.mxu0 0
      %795 = vmatpush1.bf16.xpose.msra.mxu0 0
      %796 = vmatprep.subr.bf16.mxu0 0
      %797 = vmatpush1.bf16.xpose.msra.mxu0 0
      %798 = vmatprep.subr.bf16.mxu0 0
      %799 = vmatpush1.bf16.xpose.msra.mxu0 0
      %800 = vmatprep.subr.bf16.mxu0 0
      %801 = vmatpush1.bf16.xpose.msra.mxu0 0
      %802 = vmatprep.subr.bf16.mxu0 0
      %803 = vmatpush1.bf16.xpose.msra.mxu0 0
      %804 = vmatprep.subr.bf16.mxu0 0
      %805 = vmatpush1.bf16.xpose.msra.mxu0 %v788
      %806 = vmatprep.subr.bf16.mxu0 0
      %807 = vmatpush2.bf16.xpose.msra.mxu0 0
      %808 = vmatprep.subr.bf16.mxu0 0
      %809 = vmatpush2.bf16.xpose.msra.mxu0 0
      %810 = vmatprep.subr.bf16.mxu0 0
      %811 = vmatpush2.bf16.xpose.msra.mxu0 0
      %812 = vmatprep.subr.bf16.mxu0 0
      %813 = vmatpush2.bf16.xpose.msra.mxu0 0
      %814 = vmatprep.subr.bf16.mxu0 0
      %815 = vmatpush2.bf16.xpose.msra.mxu0 0
      %816 = vmatprep.subr.bf16.mxu0 0
      %817 = vmatpush2.bf16.xpose.msra.mxu0 0
      %818 = vmatprep.subr.bf16.mxu0 0
      %819 = vmatpush2.bf16.xpose.msra.mxu0 0
      %820 = vmatprep.subr.bf16.mxu0 0
      %821 = vmatpush2.bf16.xpose.msra.mxu0 0
      %822 = vmatprep.mubr.bf16.mxu0 0
      %823 = vmatmul.mubr.bf16.gmra.mxu0 %v785
      %v824 = vpop.f32.mrf.mxu0
      %v825 = vadd.f32 %v605, %v824
      %v826 = vpop.f32.mrf.mxu0
      %v827 = vpop.f32.mrf.mxu0
      %v828 = vpop.f32.mrf.mxu0
      %829 = vdwg.mxu0
      %831 = vrot.lane.b32.xlu0 %v629, 96
      %v832 = vpop.permute.xlu0 %831
      %v834 = vsel %vm636, %v621, 0
      %v837 = vsel %vm636, %v832, 0
      %839 = vmatprep.subr.bf16.mxu0 0
      %840 = vmatpush1.bf16.xpose.msra.mxu0 0
      %841 = vmatprep.subr.bf16.mxu0 0
      %842 = vmatpush1.bf16.xpose.msra.mxu0 0
      %843 = vmatprep.subr.bf16.mxu0 0
      %844 = vmatpush1.bf16.xpose.msra.mxu0 0
      %845 = vmatprep.subr.bf16.mxu0 0
      %846 = vmatpush1.bf16.xpose.msra.mxu0 0
      %847 = vmatprep.subr.bf16.mxu0 0
      %848 = vmatpush1.bf16.xpose.msra.mxu0 0
      %849 = vmatprep.subr.bf16.mxu0 0
      %850 = vmatpush1.bf16.xpose.msra.mxu0 0
      %851 = vmatprep.subr.bf16.mxu0 0
      %852 = vmatpush1.bf16.xpose.msra.mxu0 0
      %853 = vmatprep.subr.bf16.mxu0 0
      %854 = vmatpush1.bf16.xpose.msra.mxu0 %v837
      %855 = vmatprep.subr.bf16.mxu0 0
      %856 = vmatpush2.bf16.xpose.msra.mxu0 0
      %857 = vmatprep.subr.bf16.mxu0 0
      %858 = vmatpush2.bf16.xpose.msra.mxu0 0
      %859 = vmatprep.subr.bf16.mxu0 0
      %860 = vmatpush2.bf16.xpose.msra.mxu0 0
      %861 = vmatprep.subr.bf16.mxu0 0
      %862 = vmatpush2.bf16.xpose.msra.mxu0 0
      %863 = vmatprep.subr.bf16.mxu0 0
      %864 = vmatpush2.bf16.xpose.msra.mxu0 0
      %865 = vmatprep.subr.bf16.mxu0 0
      %866 = vmatpush2.bf16.xpose.msra.mxu0 0
      %867 = vmatprep.subr.bf16.mxu0 0
      %868 = vmatpush2.bf16.xpose.msra.mxu0 0
      %869 = vmatprep.subr.bf16.mxu0 0
      %870 = vmatpush2.bf16.xpose.msra.mxu0 0
      %871 = vmatprep.mubr.bf16.mxu0 0
      %872 = vmatmul.mubr.bf16.gmra.mxu0 %v834
      %v873 = vpop.f32.mrf.mxu0
      %v874 = vadd.f32 %v605, %v873
      %v875 = vpop.f32.mrf.mxu0
      %v876 = vpop.f32.mrf.mxu0
      %v877 = vpop.f32.mrf.mxu0
      %878 = vdwg.mxu0
      %880 = vrot.lane.b32.xlu0 %v630, 96
      %v881 = vpop.permute.xlu0 %880
      %v883 = vsel %vm636, %v622, 0
      %v886 = vsel %vm636, %v881, 0
      %888 = vmatprep.subr.bf16.mxu0 0
      %889 = vmatpush1.bf16.xpose.msra.mxu0 0
      %890 = vmatprep.subr.bf16.mxu0 0
      %891 = vmatpush1.bf16.xpose.msra.mxu0 0
      %892 = vmatprep.subr.bf16.mxu0 0
      %893 = vmatpush1.bf16.xpose.msra.mxu0 0
      %894 = vmatprep.subr.bf16.mxu0 0
      %895 = vmatpush1.bf16.xpose.msra.mxu0 0
      %896 = vmatprep.subr.bf16.mxu0 0
      %897 = vmatpush1.bf16.xpose.msra.mxu0 0
      %898 = vmatprep.subr.bf16.mxu0 0
      %899 = vmatpush1.bf16.xpose.msra.mxu0 0
      %900 = vmatprep.subr.bf16.mxu0 0
      %901 = vmatpush1.bf16.xpose.msra.mxu0 0
      %902 = vmatprep.subr.bf16.mxu0 0
      %903 = vmatpush1.bf16.xpose.msra.mxu0 %v886
      %904 = vmatprep.subr.bf16.mxu0 0
      %905 = vmatpush2.bf16.xpose.msra.mxu0 0
      %906 = vmatprep.subr.bf16.mxu0 0
      %907 = vmatpush2.bf16.xpose.msra.mxu0 0
      %908 = vmatprep.subr.bf16.mxu0 0
      %909 = vmatpush2.bf16.xpose.msra.mxu0 0
      %910 = vmatprep.subr.bf16.mxu0 0
      %911 = vmatpush2.bf16.xpose.msra.mxu0 0
      %912 = vmatprep.subr.bf16.mxu0 0
      %913 = vmatpush2.bf16.xpose.msra.mxu0 0
      %914 = vmatprep.subr.bf16.mxu0 0
      %915 = vmatpush2.bf16.xpose.msra.mxu0 0
      %916 = vmatprep.subr.bf16.mxu0 0
      %917 = vmatpush2.bf16.xpose.msra.mxu0 0
      %918 = vmatprep.subr.bf16.mxu0 0
      %919 = vmatpush2.bf16.xpose.msra.mxu0 0
      %920 = vmatprep.mubr.bf16.mxu0 0
      %921 = vmatmul.mubr.bf16.gmra.mxu0 %v883
      %v922 = vpop.f32.mrf.mxu0
      %v923 = vadd.f32 %v605, %v922
      %v924 = vpop.f32.mrf.mxu0
      %v925 = vpop.f32.mrf.mxu0
      %v926 = vpop.f32.mrf.mxu0
      %927 = vdwg.mxu0
      %929 = vrot.lane.b32.xlu0 %v631, 96
      %v930 = vpop.permute.xlu0 %929
      %v932 = vsel %vm636, %v623, 0
      %v935 = vsel %vm636, %v930, 0
      %937 = vmatprep.subr.bf16.mxu0 0
      %938 = vmatpush1.bf16.xpose.msra.mxu0 0
      %939 = vmatprep.subr.bf16.mxu0 0
      %940 = vmatpush1.bf16.xpose.msra.mxu0 0
      %941 = vmatprep.subr.bf16.mxu0 0
      %942 = vmatpush1.bf16.xpose.msra.mxu0 0
      %943 = vmatprep.subr.bf16.mxu0 0
      %944 = vmatpush1.bf16.xpose.msra.mxu0 0
      %945 = vmatprep.subr.bf16.mxu0 0
      %946 = vmatpush1.bf16.xpose.msra.mxu0 0
      %947 = vmatprep.subr.bf16.mxu0 0
      %948 = vmatpush1.bf16.xpose.msra.mxu0 0
      %949 = vmatprep.subr.bf16.mxu0 0
      %950 = vmatpush1.bf16.xpose.msra.mxu0 0
      %951 = vmatprep.subr.bf16.mxu0 0
      %952 = vmatpush1.bf16.xpose.msra.mxu0 %v935
      %953 = vmatprep.subr.bf16.mxu0 0
      %954 = vmatpush2.bf16.xpose.msra.mxu0 0
      %955 = vmatprep.subr.bf16.mxu0 0
      %956 = vmatpush2.bf16.xpose.msra.mxu0 0
      %957 = vmatprep.subr.bf16.mxu0 0
      %958 = vmatpush2.bf16.xpose.msra.mxu0 0
      %959 = vmatprep.subr.bf16.mxu0 0
      %960 = vmatpush2.bf16.xpose.msra.mxu0 0
      %961 = vmatprep.subr.bf16.mxu0 0
      %962 = vmatpush2.bf16.xpose.msra.mxu0 0
      %963 = vmatprep.subr.bf16.mxu0 0
      %964 = vmatpush2.bf16.xpose.msra.mxu0 0
      %965 = vmatprep.subr.bf16.mxu0 0
      %966 = vmatpush2.bf16.xpose.msra.mxu0 0
      %967 = vmatprep.subr.bf16.mxu0 0
      %968 = vmatpush2.bf16.xpose.msra.mxu0 0
      %969 = vmatprep.mubr.bf16.mxu0 0
      %970 = vmatmul.mubr.bf16.gmra.mxu0 %v932
      %v971 = vpop.f32.mrf.mxu0
      %v972 = vadd.f32 %v605, %v971
      %v973 = vpop.f32.mrf.mxu0
      %v974 = vpop.f32.mrf.mxu0
      %v975 = vpop.f32.mrf.mxu0
      %976 = vdwg.mxu0
      %978 = vrot.lane.b32.xlu0 %v632, 96
      %v979 = vpop.permute.xlu0 %978
      %v981 = vsel %vm636, %v624, 0
      %v984 = vsel %vm636, %v979, 0
      %986 = vmatprep.subr.bf16.mxu0 0
      %987 = vmatpush1.bf16.xpose.msra.mxu0 0
      %988 = vmatprep.subr.bf16.mxu0 0
      %989 = vmatpush1.bf16.xpose.msra.mxu0 0
      %990 = vmatprep.subr.bf16.mxu0 0
      %991 = vmatpush1.bf16.xpose.msra.mxu0 0
      %992 = vmatprep.subr.bf16.mxu0 0
      %993 = vmatpush1.bf16.xpose.msra.mxu0 0
      %994 = vmatprep.subr.bf16.mxu0 0
      %995 = vmatpush1.bf16.xpose.msra.mxu0 0
      %996 = vmatprep.subr.bf16.mxu0 0
      %997 = vmatpush1.bf16.xpose.msra.mxu0 0
      %998 = vmatprep.subr.bf16.mxu0 0
      %999 = vmatpush1.bf16.xpose.msra.mxu0 0
      %1000 = vmatprep.subr.bf16.mxu0 0
      %1001 = vmatpush1.bf16.xpose.msra.mxu0 %v984
      %1002 = vmatprep.subr.bf16.mxu0 0
      %1003 = vmatpush2.bf16.xpose.msra.mxu0 0
      %1004 = vmatprep.subr.bf16.mxu0 0
      %1005 = vmatpush2.bf16.xpose.msra.mxu0 0
      %1006 = vmatprep.subr.bf16.mxu0 0
      %1007 = vmatpush2.bf16.xpose.msra.mxu0 0
      %1008 = vmatprep.subr.bf16.mxu0 0
      %1009 = vmatpush2.bf16.xpose.msra.mxu0 0
      %1010 = vmatprep.subr.bf16.mxu0 0
      %1011 = vmatpush2.bf16.xpose.msra.mxu0 0
      %1012 = vmatprep.subr.bf16.mxu0 0
      %1013 = vmatpush2.bf16.xpose.msra.mxu0 0
      %1014 = vmatprep.subr.bf16.mxu0 0
      %1015 = vmatpush2.bf16.xpose.msra.mxu0 0
      %1016 = vmatprep.subr.bf16.mxu0 0
      %1017 = vmatpush2.bf16.xpose.msra.mxu0 0
      %1018 = vmatprep.mubr.bf16.mxu0 0
      %1019 = vmatmul.mubr.bf16.gmra.mxu0 %v981
      %v1020 = vpop.f32.mrf.mxu0
      %v1021 = vadd.f32 %v605, %v1020
      %v1022 = vpop.f32.mrf.mxu0
      %v1023 = vpop.f32.mrf.mxu0
      %v1024 = vpop.f32.mrf.mxu0
      %1025 = vdwg.mxu0
      %v1026 = vadd.f32 %v678, %v345
      %v1027 = vadd.f32 %v727, %v346
      %v1028 = vadd.f32 %v776, %v347
      %v1029 = vadd.f32 %v825, %v348
      %v1030 = vadd.f32 %v874, %v349
      %v1031 = vadd.f32 %v923, %v350
      %v1032 = vadd.f32 %v972, %v351
      %v1033 = vadd.f32 %v1021, %v352
      %v1034 = vsel %vm636, %v1026, -inf
      %1035 = vmax.xlane.f32.xlu0 %v1034
      %v1036 = vpop.xlane.xlu0 %1035
      %v1037 = vsel %vm636, %v1027, -inf
      %1038 = vmax.xlane.f32.xlu0 %v1037
      %v1039 = vpop.xlane.xlu0 %1038
      %v1040 = vsel %vm636, %v1028, -inf
      %1041 = vmax.xlane.f32.xlu0 %v1040
      %v1042 = vpop.xlane.xlu0 %1041
      %v1043 = vsel %vm636, %v1029, -inf
      %1044 = vmax.xlane.f32.xlu0 %v1043
      %v1045 = vpop.xlane.xlu0 %1044
      %v1046 = vsel %vm636, %v1030, -inf
      %1047 = vmax.xlane.f32.xlu0 %v1046
      %v1048 = vpop.xlane.xlu0 %1047
      %v1049 = vsel %vm636, %v1031, -inf
      %1050 = vmax.xlane.f32.xlu0 %v1049
      %v1051 = vpop.xlane.xlu0 %1050
      %v1052 = vsel %vm636, %v1032, -inf
      %1053 = vmax.xlane.f32.xlu0 %v1052
      %v1054 = vpop.xlane.xlu0 %1053
      %v1055 = vsel %vm636, %v1033, -inf
      %1056 = vmax.xlane.f32.xlu0 %v1055
      %v1057 = vpop.xlane.xlu0 %1056
      %v1058 = vsub.f32 %v1026, %v1036
      %v1059 = vsub.f32 %v1027, %v1039
      %v1060 = vsub.f32 %v1028, %v1042
      %v1061 = vsub.f32 %v1029, %v1045
      %v1062 = vsub.f32 %v1030, %v1048
      %v1063 = vsub.f32 %v1031, %v1051
      %v1064 = vsub.f32 %v1032, %v1054
      %v1065 = vsub.f32 %v1033, %v1057
      %v1066 = vmul.f32 %v1058, 1.442695
      %v1067 = vpow.pop %v1066
      %v1068 = vmul.f32 %v1059, 1.442695
      %v1069 = vpow.pop %v1068
      %v1070 = vmul.f32 %v1060, 1.442695
      %v1071 = vpow.pop %v1070
      %v1072 = vmul.f32 %v1061, 1.442695
      %v1073 = vpow.pop %v1072
      %v1074 = vmul.f32 %v1062, 1.442695
      %v1075 = vpow.pop %v1074
      %v1076 = vmul.f32 %v1063, 1.442695
      %v1077 = vpow.pop %v1076
      %v1078 = vmul.f32 %v1064, 1.442695
      %v1079 = vpow.pop %v1078
      %v1080 = vmul.f32 %v1065, 1.442695
      %v1081 = vpow.pop %v1080
      %v1082 = vsel %vm636, %v1067, 0.0
      %1083 = vadd.xlane.f32.xlu0 %v1082
      %v1084 = vpop.xlane.xlu0 %1083
      %v1085 = vsel %vm636, %v1069, 0.0
      %1086 = vadd.xlane.f32.xlu0 %v1085
      %v1087 = vpop.xlane.xlu0 %1086
      %v1088 = vsel %vm636, %v1071, 0.0
      %1089 = vadd.xlane.f32.xlu0 %v1088
      %v1090 = vpop.xlane.xlu0 %1089
      %v1091 = vsel %vm636, %v1073, 0.0
      %1092 = vadd.xlane.f32.xlu0 %v1091
      %v1093 = vpop.xlane.xlu0 %1092
      %v1094 = vsel %vm636, %v1075, 0.0
      %1095 = vadd.xlane.f32.xlu0 %v1094
      %v1096 = vpop.xlane.xlu0 %1095
      %v1097 = vsel %vm636, %v1077, 0.0
      %1098 = vadd.xlane.f32.xlu0 %v1097
      %v1099 = vpop.xlane.xlu0 %1098
      %v1100 = vsel %vm636, %v1079, 0.0
      %1101 = vadd.xlane.f32.xlu0 %v1100
      %v1102 = vpop.xlane.xlu0 %1101
      %v1103 = vsel %vm636, %v1081, 0.0
      %1104 = vadd.xlane.f32.xlu0 %v1103
      %v1105 = vpop.xlane.xlu0 %1104
      %v1106 = vpack.c.bf16 %v1067, %v1067
      %v1107 = vpack.c.bf16 %v1069, %v1069
      %v1108 = vpack.c.bf16 %v1071, %v1071
      %v1109 = vpack.c.bf16 %v1073, %v1073
      %v1110 = vpack.c.bf16 %v1075, %v1075
      %v1111 = vpack.c.bf16 %v1077, %v1077
      %v1112 = vpack.c.bf16 %v1079, %v1079
      %v1113 = vpack.c.bf16 %v1081, %v1081
      %1114 = vrot.lane.b32.xlu0 %v625, 64
      %v1115 = vpop.permute.xlu0 %1114
      %v1117 = vsel %vm636, %v1106, 0
      %vm1119 = vcmask 1043456
      %v1121 = vsel %vm1119, %v1115, 0
      %1123 = vmatprep.subr.bf16.mxu0 0
      %1124 = vmatpush1.bf16.msra.mxu0 0
      %1125 = vmatprep.subr.bf16.mxu0 0
      %1126 = vmatpush1.bf16.msra.mxu0 0
      %1127 = vmatprep.subr.bf16.mxu0 0
      %1128 = vmatpush1.bf16.msra.mxu0 0
      %1129 = vmatprep.subr.bf16.mxu0 0
      %1130 = vmatpush1.bf16.msra.mxu0 0
      %1131 = vmatprep.subr.bf16.mxu0 0
      %1132 = vmatpush1.bf16.msra.mxu0 0
      %1133 = vmatprep.subr.bf16.mxu0 0
      %1134 = vmatpush1.bf16.msra.mxu0 0
      %1135 = vmatprep.subr.bf16.mxu0 0
      %1136 = vmatpush1.bf16.msra.mxu0 0
      %1137 = vmatprep.subr.bf16.mxu0 0
      %1138 = vmatpush1.bf16.msra.mxu0 %v1121
      %1139 = vmatprep.subr.bf16.mxu0 0
      %1140 = vmatpush2.bf16.msra.mxu0 0
      %1141 = vmatprep.subr.bf16.mxu0 0
      %1142 = vmatpush2.bf16.msra.mxu0 0
      %1143 = vmatprep.subr.bf16.mxu0 0
      %1144 = vmatpush2.bf16.msra.mxu0 0
      %1145 = vmatprep.subr.bf16.mxu0 0
      %1146 = vmatpush2.bf16.msra.mxu0 0
      %1147 = vmatprep.subr.bf16.mxu0 0
      %1148 = vmatpush2.bf16.msra.mxu0 0
      %1149 = vmatprep.subr.bf16.mxu0 0
      %1150 = vmatpush2.bf16.msra.mxu0 0
      %1151 = vmatprep.subr.bf16.mxu0 0
      %1152 = vmatpush2.bf16.msra.mxu0 0
      %1153 = vmatprep.subr.bf16.mxu0 0
      %1154 = vmatpush2.bf16.msra.mxu0 0
      %1155 = vmatprep.mubr.bf16.mxu0 0
      %1156 = vmatmul.mubr.bf16.gmra.mxu0 %v1117
      %v1157 = vpop.f32.mrf.mxu0
      %v1158 = vadd.f32 0.0, %v1157
      %v1159 = vpop.f32.mrf.mxu0
      %v1160 = vpop.f32.mrf.mxu0
      %v1161 = vpop.f32.mrf.mxu0
      %1162 = vdwg.mxu0
      %1163 = vrot.lane.b32.xlu0 %v626, 64
      %v1164 = vpop.permute.xlu0 %1163
      %v1166 = vsel %vm636, %v1107, 0
      %v1169 = vsel %vm1119, %v1164, 0
      %1171 = vmatprep.subr.bf16.mxu0 0
      %1172 = vmatpush1.bf16.msra.mxu0 0
      %1173 = vmatprep.subr.bf16.mxu0 0
      %1174 = vmatpush1.bf16.msra.mxu0 0
      %1175 = vmatprep.subr.bf16.mxu0 0
      %1176 = vmatpush1.bf16.msra.mxu0 0
      %1177 = vmatprep.subr.bf16.mxu0 0
      %1178 = vmatpush1.bf16.msra.mxu0 0
      %1179 = vmatprep.subr.bf16.mxu0 0
      %1180 = vmatpush1.bf16.msra.mxu0 0
      %1181 = vmatprep.subr.bf16.mxu0 0
      %1182 = vmatpush1.bf16.msra.mxu0 0
      %1183 = vmatprep.subr.bf16.mxu0 0
      %1184 = vmatpush1.bf16.msra.mxu0 0
      %1185 = vmatprep.subr.bf16.mxu0 0
      %1186 = vmatpush1.bf16.msra.mxu0 %v1169
      %1187 = vmatprep.subr.bf16.mxu0 0
      %1188 = vmatpush2.bf16.msra.mxu0 0
      %1189 = vmatprep.subr.bf16.mxu0 0
      %1190 = vmatpush2.bf16.msra.mxu0 0
      %1191 = vmatprep.subr.bf16.mxu0 0
      %1192 = vmatpush2.bf16.msra.mxu0 0
      %1193 = vmatprep.subr.bf16.mxu0 0
      %1194 = vmatpush2.bf16.msra.mxu0 0
      %1195 = vmatprep.subr.bf16.mxu0 0
      %1196 = vmatpush2.bf16.msra.mxu0 0
      %1197 = vmatprep.subr.bf16.mxu0 0
      %1198 = vmatpush2.bf16.msra.mxu0 0
      %1199 = vmatprep.subr.bf16.mxu0 0
      %1200 = vmatpush2.bf16.msra.mxu0 0
      %1201 = vmatprep.subr.bf16.mxu0 0
      %1202 = vmatpush2.bf16.msra.mxu0 0
      %1203 = vmatprep.mubr.bf16.mxu0 0
      %1204 = vmatmul.mubr.bf16.gmra.mxu0 %v1166
      %v1205 = vpop.f32.mrf.mxu0
      %v1206 = vadd.f32 0.0, %v1205
      %v1207 = vpop.f32.mrf.mxu0
      %v1208 = vpop.f32.mrf.mxu0
      %v1209 = vpop.f32.mrf.mxu0
      %1210 = vdwg.mxu0
      %1211 = vrot.lane.b32.xlu0 %v627, 64
      %v1212 = vpop.permute.xlu0 %1211
      %v1214 = vsel %vm636, %v1108, 0
      %v1217 = vsel %vm1119, %v1212, 0
      %1219 = vmatprep.subr.bf16.mxu0 0
      %1220 = vmatpush1.bf16.msra.mxu0 0
      %1221 = vmatprep.subr.bf16.mxu0 0
      %1222 = vmatpush1.bf16.msra.mxu0 0
      %1223 = vmatprep.subr.bf16.mxu0 0
      %1224 = vmatpush1.bf16.msra.mxu0 0
      %1225 = vmatprep.subr.bf16.mxu0 0
      %1226 = vmatpush1.bf16.msra.mxu0 0
      %1227 = vmatprep.subr.bf16.mxu0 0
      %1228 = vmatpush1.bf16.msra.mxu0 0
      %1229 = vmatprep.subr.bf16.mxu0 0
      %1230 = vmatpush1.bf16.msra.mxu0 0
      %1231 = vmatprep.subr.bf16.mxu0 0
      %1232 = vmatpush1.bf16.msra.mxu0 0
      %1233 = vmatprep.subr.bf16.mxu0 0
      %1234 = vmatpush1.bf16.msra.mxu0 %v1217
      %1235 = vmatprep.subr.bf16.mxu0 0
      %1236 = vmatpush2.bf16.msra.mxu0 0
      %1237 = vmatprep.subr.bf16.mxu0 0
      %1238 = vmatpush2.bf16.msra.mxu0 0
      %1239 = vmatprep.subr.bf16.mxu0 0
      %1240 = vmatpush2.bf16.msra.mxu0 0
      %1241 = vmatprep.subr.bf16.mxu0 0
      %1242 = vmatpush2.bf16.msra.mxu0 0
      %1243 = vmatprep.subr.bf16.mxu0 0
      %1244 = vmatpush2.bf16.msra.mxu0 0
      %1245 = vmatprep.subr.bf16.mxu0 0
      %1246 = vmatpush2.bf16.msra.mxu0 0
      %1247 = vmatprep.subr.bf16.mxu0 0
      %1248 = vmatpush2.bf16.msra.mxu0 0
      %1249 = vmatprep.subr.bf16.mxu0 0
      %1250 = vmatpush2.bf16.msra.mxu0 0
      %1251 = vmatprep.mubr.bf16.mxu0 0
      %1252 = vmatmul.mubr.bf16.gmra.mxu0 %v1214
      %v1253 = vpop.f32.mrf.mxu0
      %v1254 = vadd.f32 0.0, %v1253
      %v1255 = vpop.f32.mrf.mxu0
      %v1256 = vpop.f32.mrf.mxu0
      %v1257 = vpop.f32.mrf.mxu0
      %1258 = vdwg.mxu0
      %1259 = vrot.lane.b32.xlu0 %v628, 64
      %v1260 = vpop.permute.xlu0 %1259
      %v1262 = vsel %vm636, %v1109, 0
      %v1265 = vsel %vm1119, %v1260, 0
      %1267 = vmatprep.subr.bf16.mxu0 0
      %1268 = vmatpush1.bf16.msra.mxu0 0
      %1269 = vmatprep.subr.bf16.mxu0 0
      %1270 = vmatpush1.bf16.msra.mxu0 0
      %1271 = vmatprep.subr.bf16.mxu0 0
      %1272 = vmatpush1.bf16.msra.mxu0 0
      %1273 = vmatprep.subr.bf16.mxu0 0
      %1274 = vmatpush1.bf16.msra.mxu0 0
      %1275 = vmatprep.subr.bf16.mxu0 0
      %1276 = vmatpush1.bf16.msra.mxu0 0
      %1277 = vmatprep.subr.bf16.mxu0 0
      %1278 = vmatpush1.bf16.msra.mxu0 0
      %1279 = vmatprep.subr.bf16.mxu0 0
      %1280 = vmatpush1.bf16.msra.mxu0 0
      %1281 = vmatprep.subr.bf16.mxu0 0
      %1282 = vmatpush1.bf16.msra.mxu0 %v1265
      %1283 = vmatprep.subr.bf16.mxu0 0
      %1284 = vmatpush2.bf16.msra.mxu0 0
      %1285 = vmatprep.subr.bf16.mxu0 0
      %1286 = vmatpush2.bf16.msra.mxu0 0
      %1287 = vmatprep.subr.bf16.mxu0 0
      %1288 = vmatpush2.bf16.msra.mxu0 0
      %1289 = vmatprep.subr.bf16.mxu0 0
      %1290 = vmatpush2.bf16.msra.mxu0 0
      %1291 = vmatprep.subr.bf16.mxu0 0
      %1292 = vmatpush2.bf16.msra.mxu0 0
      %1293 = vmatprep.subr.bf16.mxu0 0
      %1294 = vmatpush2.bf16.msra.mxu0 0
      %1295 = vmatprep.subr.bf16.mxu0 0
      %1296 = vmatpush2.bf16.msra.mxu0 0
      %1297 = vmatprep.subr.bf16.mxu0 0
      %1298 = vmatpush2.bf16.msra.mxu0 0
      %1299 = vmatprep.mubr.bf16.mxu0 0
      %1300 = vmatmul.mubr.bf16.gmra.mxu0 %v1262
      %v1301 = vpop.f32.mrf.mxu0
      %v1302 = vadd.f32 0.0, %v1301
      %v1303 = vpop.f32.mrf.mxu0
      %v1304 = vpop.f32.mrf.mxu0
      %v1305 = vpop.f32.mrf.mxu0
      %1306 = vdwg.mxu0
      %1307 = vrot.lane.b32.xlu0 %v629, 64
      %v1308 = vpop.permute.xlu0 %1307
      %v1310 = vsel %vm636, %v1110, 0
      %v1313 = vsel %vm1119, %v1308, 0
      %1315 = vmatprep.subr.bf16.mxu0 0
      %1316 = vmatpush1.bf16.msra.mxu0 0
      %1317 = vmatprep.subr.bf16.mxu0 0
      %1318 = vmatpush1.bf16.msra.mxu0 0
      %1319 = vmatprep.subr.bf16.mxu0 0
      %1320 = vmatpush1.bf16.msra.mxu0 0
      %1321 = vmatprep.subr.bf16.mxu0 0
      %1322 = vmatpush1.bf16.msra.mxu0 0
      %1323 = vmatprep.subr.bf16.mxu0 0
      %1324 = vmatpush1.bf16.msra.mxu0 0
      %1325 = vmatprep.subr.bf16.mxu0 0
      %1326 = vmatpush1.bf16.msra.mxu0 0
      %1327 = vmatprep.subr.bf16.mxu0 0
      %1328 = vmatpush1.bf16.msra.mxu0 0
      %1329 = vmatprep.subr.bf16.mxu0 0
      %1330 = vmatpush1.bf16.msra.mxu0 %v1313
      %1331 = vmatprep.subr.bf16.mxu0 0
      %1332 = vmatpush2.bf16.msra.mxu0 0
      %1333 = vmatprep.subr.bf16.mxu0 0
      %1334 = vmatpush2.bf16.msra.mxu0 0
      %1335 = vmatprep.subr.bf16.mxu0 0
      %1336 = vmatpush2.bf16.msra.mxu0 0
      %1337 = vmatprep.subr.bf16.mxu0 0
      %1338 = vmatpush2.bf16.msra.mxu0 0
      %1339 = vmatprep.subr.bf16.mxu0 0
      %1340 = vmatpush2.bf16.msra.mxu0 0
      %1341 = vmatprep.subr.bf16.mxu0 0
      %1342 = vmatpush2.bf16.msra.mxu0 0
      %1343 = vmatprep.subr.bf16.mxu0 0
      %1344 = vmatpush2.bf16.msra.mxu0 0
      %1345 = vmatprep.subr.bf16.mxu0 0
      %1346 = vmatpush2.bf16.msra.mxu0 0
      %1347 = vmatprep.mubr.bf16.mxu0 0
      %1348 = vmatmul.mubr.bf16.gmra.mxu0 %v1310
      %v1349 = vpop.f32.mrf.mxu0
      %v1350 = vadd.f32 0.0, %v1349
      %v1351 = vpop.f32.mrf.mxu0
      %v1352 = vpop.f32.mrf.mxu0
      %v1353 = vpop.f32.mrf.mxu0
      %1354 = vdwg.mxu0
      %1355 = vrot.lane.b32.xlu0 %v630, 64
      %v1356 = vpop.permute.xlu0 %1355
      %v1358 = vsel %vm636, %v1111, 0
      %v1361 = vsel %vm1119, %v1356, 0
      %1363 = vmatprep.subr.bf16.mxu0 0
      %1364 = vmatpush1.bf16.msra.mxu0 0
      %1365 = vmatprep.subr.bf16.mxu0 0
      %1366 = vmatpush1.bf16.msra.mxu0 0
      %1367 = vmatprep.subr.bf16.mxu0 0
      %1368 = vmatpush1.bf16.msra.mxu0 0
      %1369 = vmatprep.subr.bf16.mxu0 0
      %1370 = vmatpush1.bf16.msra.mxu0 0
      %1371 = vmatprep.subr.bf16.mxu0 0
      %1372 = vmatpush1.bf16.msra.mxu0 0
      %1373 = vmatprep.subr.bf16.mxu0 0
      %1374 = vmatpush1.bf16.msra.mxu0 0
      %1375 = vmatprep.subr.bf16.mxu0 0
      %1376 = vmatpush1.bf16.msra.mxu0 0
      %1377 = vmatprep.subr.bf16.mxu0 0
      %1378 = vmatpush1.bf16.msra.mxu0 %v1361
      %1379 = vmatprep.subr.bf16.mxu0 0
      %1380 = vmatpush2.bf16.msra.mxu0 0
      %1381 = vmatprep.subr.bf16.mxu0 0
      %1382 = vmatpush2.bf16.msra.mxu0 0
      %1383 = vmatprep.subr.bf16.mxu0 0
      %1384 = vmatpush2.bf16.msra.mxu0 0
      %1385 = vmatprep.subr.bf16.mxu0 0
      %1386 = vmatpush2.bf16.msra.mxu0 0
      %1387 = vmatprep.subr.bf16.mxu0 0
      %1388 = vmatpush2.bf16.msra.mxu0 0
      %1389 = vmatprep.subr.bf16.mxu0 0
      %1390 = vmatpush2.bf16.msra.mxu0 0
      %1391 = vmatprep.subr.bf16.mxu0 0
      %1392 = vmatpush2.bf16.msra.mxu0 0
      %1393 = vmatprep.subr.bf16.mxu0 0
      %1394 = vmatpush2.bf16.msra.mxu0 0
      %1395 = vmatprep.mubr.bf16.mxu0 0
      %1396 = vmatmul.mubr.bf16.gmra.mxu0 %v1358
      %v1397 = vpop.f32.mrf.mxu0
      %v1398 = vadd.f32 0.0, %v1397
      %v1399 = vpop.f32.mrf.mxu0
      %v1400 = vpop.f32.mrf.mxu0
      %v1401 = vpop.f32.mrf.mxu0
      %1402 = vdwg.mxu0
      %1403 = vrot.lane.b32.xlu0 %v631, 64
      %v1404 = vpop.permute.xlu0 %1403
      %v1406 = vsel %vm636, %v1112, 0
      %v1409 = vsel %vm1119, %v1404, 0
      %1411 = vmatprep.subr.bf16.mxu0 0
      %1412 = vmatpush1.bf16.msra.mxu0 0
      %1413 = vmatprep.subr.bf16.mxu0 0
      %1414 = vmatpush1.bf16.msra.mxu0 0
      %1415 = vmatprep.subr.bf16.mxu0 0
      %1416 = vmatpush1.bf16.msra.mxu0 0
      %1417 = vmatprep.subr.bf16.mxu0 0
      %1418 = vmatpush1.bf16.msra.mxu0 0
      %1419 = vmatprep.subr.bf16.mxu0 0
      %1420 = vmatpush1.bf16.msra.mxu0 0
      %1421 = vmatprep.subr.bf16.mxu0 0
      %1422 = vmatpush1.bf16.msra.mxu0 0
      %1423 = vmatprep.subr.bf16.mxu0 0
      %1424 = vmatpush1.bf16.msra.mxu0 0
      %1425 = vmatprep.subr.bf16.mxu0 0
      %1426 = vmatpush1.bf16.msra.mxu0 %v1409
      %1427 = vmatprep.subr.bf16.mxu0 0
      %1428 = vmatpush2.bf16.msra.mxu0 0
      %1429 = vmatprep.subr.bf16.mxu0 0
      %1430 = vmatpush2.bf16.msra.mxu0 0
      %1431 = vmatprep.subr.bf16.mxu0 0
      %1432 = vmatpush2.bf16.msra.mxu0 0
      %1433 = vmatprep.subr.bf16.mxu0 0
      %1434 = vmatpush2.bf16.msra.mxu0 0
      %1435 = vmatprep.subr.bf16.mxu0 0
      %1436 = vmatpush2.bf16.msra.mxu0 0
      %1437 = vmatprep.subr.bf16.mxu0 0
      %1438 = vmatpush2.bf16.msra.mxu0 0
      %1439 = vmatprep.subr.bf16.mxu0 0
      %1440 = vmatpush2.bf16.msra.mxu0 0
      %1441 = vmatprep.subr.bf16.mxu0 0
      %1442 = vmatpush2.bf16.msra.mxu0 0
      %1443 = vmatprep.mubr.bf16.mxu0 0
      %1444 = vmatmul.mubr.bf16.gmra.mxu0 %v1406
      %v1445 = vpop.f32.mrf.mxu0
      %v1446 = vadd.f32 0.0, %v1445
      %v1447 = vpop.f32.mrf.mxu0
      %v1448 = vpop.f32.mrf.mxu0
      %v1449 = vpop.f32.mrf.mxu0
      %1450 = vdwg.mxu0
      %1451 = vrot.lane.b32.xlu0 %v632, 64
      %v1452 = vpop.permute.xlu0 %1451
      %v1454 = vsel %vm636, %v1113, 0
      %v1457 = vsel %vm1119, %v1452, 0
      %1459 = vmatprep.subr.bf16.mxu0 0
      %1460 = vmatpush1.bf16.msra.mxu0 0
      %1461 = vmatprep.subr.bf16.mxu0 0
      %1462 = vmatpush1.bf16.msra.mxu0 0
      %1463 = vmatprep.subr.bf16.mxu0 0
      %1464 = vmatpush1.bf16.msra.mxu0 0
      %1465 = vmatprep.subr.bf16.mxu0 0
      %1466 = vmatpush1.bf16.msra.mxu0 0
      %1467 = vmatprep.subr.bf16.mxu0 0
      %1468 = vmatpush1.bf16.msra.mxu0 0
      %1469 = vmatprep.subr.bf16.mxu0 0
      %1470 = vmatpush1.bf16.msra.mxu0 0
      %1471 = vmatprep.subr.bf16.mxu0 0
      %1472 = vmatpush1.bf16.msra.mxu0 0
      %1473 = vmatprep.subr.bf16.mxu0 0
      %1474 = vmatpush1.bf16.msra.mxu0 %v1457
      %1475 = vmatprep.subr.bf16.mxu0 0
      %1476 = vmatpush2.bf16.msra.mxu0 0
      %1477 = vmatprep.subr.bf16.mxu0 0
      %1478 = vmatpush2.bf16.msra.mxu0 0
      %1479 = vmatprep.subr.bf16.mxu0 0
      %1480 = vmatpush2.bf16.msra.mxu0 0
      %1481 = vmatprep.subr.bf16.mxu0 0
      %1482 = vmatpush2.bf16.msra.mxu0 0
      %1483 = vmatprep.subr.bf16.mxu0 0
      %1484 = vmatpush2.bf16.msra.mxu0 0
      %1485 = vmatprep.subr.bf16.mxu0 0
      %1486 = vmatpush2.bf16.msra.mxu0 0
      %1487 = vmatprep.subr.bf16.mxu0 0
      %1488 = vmatpush2.bf16.msra.mxu0 0
      %1489 = vmatprep.subr.bf16.mxu0 0
      %1490 = vmatpush2.bf16.msra.mxu0 0
      %1491 = vmatprep.mubr.bf16.mxu0 0
      %1492 = vmatmul.mubr.bf16.gmra.mxu0 %v1454
      %v1493 = vpop.f32.mrf.mxu0
      %v1494 = vadd.f32 0.0, %v1493
      %v1495 = vpop.f32.mrf.mxu0
      %v1496 = vpop.f32.mrf.mxu0
      %v1497 = vpop.f32.mrf.mxu0
      %1498 = vdwg.mxu0
      %v1499 = vrcp.pop %v1084
      %v1500 = vrcp.pop %v1087
      %v1501 = vrcp.pop %v1090
      %v1502 = vrcp.pop %v1093
      %v1503 = vrcp.pop %v1096
      %v1504 = vrcp.pop %v1099
      %v1505 = vrcp.pop %v1102
      %v1506 = vrcp.pop %v1105
      %v1507 = vmul.f32 %v1158, %v1499
      %v1508 = vmul.f32 %v1206, %v1500
      %v1509 = vmul.f32 %v1254, %v1501
      %v1510 = vmul.f32 %v1302, %v1502
      %v1511 = vmul.f32 %v1350, %v1503
      %v1512 = vmul.f32 %v1398, %v1504
      %v1513 = vmul.f32 %v1446, %v1505
      %v1514 = vmul.f32 %v1494, %v1506
      %1516 = vrot.lane.b32.xlu0 %v617, 120
      %v1517 = vpop.permute.xlu0 %1516
      %1518 = vrot.lane.b32.xlu0 %v625, 88
      %v1519 = vpop.permute.xlu0 %1518
      %v1521 = vsel %vm636, %v1517, 0
      %v1524 = vsel %vm636, %v1519, 0
      %1526 = vmatprep.subr.bf16.mxu0 0
      %1527 = vmatpush1.bf16.xpose.msra.mxu0 0
      %1528 = vmatprep.subr.bf16.mxu0 0
      %1529 = vmatpush1.bf16.xpose.msra.mxu0 0
      %1530 = vmatprep.subr.bf16.mxu0 0
      %1531 = vmatpush1.bf16.xpose.msra.mxu0 0
      %1532 = vmatprep.subr.bf16.mxu0 0
      %1533 = vmatpush1.bf16.xpose.msra.mxu0 0
      %1534 = vmatprep.subr.bf16.mxu0 0
      %1535 = vmatpush1.bf16.xpose.msra.mxu0 0
      %1536 = vmatprep.subr.bf16.mxu0 0
      %1537 = vmatpush1.bf16.xpose.msra.mxu0 0
      %1538 = vmatprep.subr.bf16.mxu0 0
      %1539 = vmatpush1.bf16.xpose.msra.mxu0 0
      %1540 = vmatprep.subr.bf16.mxu0 0
      %1541 = vmatpush1.bf16.xpose.msra.mxu0 %v1524
      %1542 = vmatprep.subr.bf16.mxu0 0
      %1543 = vmatpush2.bf16.xpose.msra.mxu0 0
      %1544 = vmatprep.subr.bf16.mxu0 0
      %1545 = vmatpush2.bf16.xpose.msra.mxu0 0
      %1546 = vmatprep.subr.bf16.mxu0 0
      %1547 = vmatpush2.bf16.xpose.msra.mxu0 0
      %1548 = vmatprep.subr.bf16.mxu0 0
      %1549 = vmatpush2.bf16.xpose.msra.mxu0 0
      %1550 = vmatprep.subr.bf16.mxu0 0
      %1551 = vmatpush2.bf16.xpose.msra.mxu0 0
      %1552 = vmatprep.subr.bf16.mxu0 0
      %1553 = vmatpush2.bf16.xpose.msra.mxu0 0
      %1554 = vmatprep.subr.bf16.mxu0 0
      %1555 = vmatpush2.bf16.xpose.msra.mxu0 0
      %1556 = vmatprep.subr.bf16.mxu0 0
      %1557 = vmatpush2.bf16.xpose.msra.mxu0 0
      %1558 = vmatprep.mubr.bf16.mxu0 0
      %1559 = vmatmul.mubr.bf16.gmra.mxu0 %v1521
      %v1560 = vpop.f32.mrf.mxu0
      %v1561 = vadd.f32 %v606, %v1560
      %v1562 = vpop.f32.mrf.mxu0
      %v1563 = vpop.f32.mrf.mxu0
      %v1564 = vpop.f32.mrf.mxu0
      %1565 = vdwg.mxu0
      %1567 = vrot.lane.b32.xlu0 %v618, 120
      %v1568 = vpop.permute.xlu0 %1567
      %1569 = vrot.lane.b32.xlu0 %v626, 88
      %v1570 = vpop.permute.xlu0 %1569
      %v1572 = vsel %vm636, %v1568, 0
      %v1575 = vsel %vm636, %v1570, 0
      %1577 = vmatprep.subr.bf16.mxu0 0
      %1578 = vmatpush1.bf16.xpose.msra.mxu0 0
      %1579 = vmatprep.subr.bf16.mxu0 0
      %1580 = vmatpush1.bf16.xpose.msra.mxu0 0
      %1581 = vmatprep.subr.bf16.mxu0 0
      %1582 = vmatpush1.bf16.xpose.msra.mxu0 0
      %1583 = vmatprep.subr.bf16.mxu0 0
      %1584 = vmatpush1.bf16.xpose.msra.mxu0 0
      %1585 = vmatprep.subr.bf16.mxu0 0
      %1586 = vmatpush1.bf16.xpose.msra.mxu0 0
      %1587 = vmatprep.subr.bf16.mxu0 0
      %1588 = vmatpush1.bf16.xpose.msra.mxu0 0
      %1589 = vmatprep.subr.bf16.mxu0 0
      %1590 = vmatpush1.bf16.xpose.msra.mxu0 0
      %1591 = vmatprep.subr.bf16.mxu0 0
      %1592 = vmatpush1.bf16.xpose.msra.mxu0 %v1575
      %1593 = vmatprep.subr.bf16.mxu0 0
      %1594 = vmatpush2.bf16.xpose.msra.mxu0 0
      %1595 = vmatprep.subr.bf16.mxu0 0
      %1596 = vmatpush2.bf16.xpose.msra.mxu0 0
      %1597 = vmatprep.subr.bf16.mxu0 0
      %1598 = vmatpush2.bf16.xpose.msra.mxu0 0
      %1599 = vmatprep.subr.bf16.mxu0 0
      %1600 = vmatpush2.bf16.xpose.msra.mxu0 0
      %1601 = vmatprep.subr.bf16.mxu0 0
      %1602 = vmatpush2.bf16.xpose.msra.mxu0 0
      %1603 = vmatprep.subr.bf16.mxu0 0
      %1604 = vmatpush2.bf16.xpose.msra.mxu0 0
      %1605 = vmatprep.subr.bf16.mxu0 0
      %1606 = vmatpush2.bf16.xpose.msra.mxu0 0
      %1607 = vmatprep.subr.bf16.mxu0 0
      %1608 = vmatpush2.bf16.xpose.msra.mxu0 0
      %1609 = vmatprep.mubr.bf16.mxu0 0
      %1610 = vmatmul.mubr.bf16.gmra.mxu0 %v1572
      %v1611 = vpop.f32.mrf.mxu0
      %v1612 = vadd.f32 %v606, %v1611
      %v1613 = vpop.f32.mrf.mxu0
      %v1614 = vpop.f32.mrf.mxu0
      %v1615 = vpop.f32.mrf.mxu0
      %1616 = vdwg.mxu0
      %1618 = vrot.lane.b32.xlu0 %v619, 120
      %v1619 = vpop.permute.xlu0 %1618
      %1620 = vrot.lane.b32.xlu0 %v627, 88
      %v1621 = vpop.permute.xlu0 %1620
      %v1623 = vsel %vm636, %v1619, 0
      %v1626 = vsel %vm636, %v1621, 0
      %1628 = vmatprep.subr.bf16.mxu0 0
      %1629 = vmatpush1.bf16.xpose.msra.mxu0 0
      %1630 = vmatprep.subr.bf16.mxu0 0
      %1631 = vmatpush1.bf16.xpose.msra.mxu0 0
      %1632 = vmatprep.subr.bf16.mxu0 0
      %1633 = vmatpush1.bf16.xpose.msra.mxu0 0
      %1634 = vmatprep.subr.bf16.mxu0 0
      %1635 = vmatpush1.bf16.xpose.msra.mxu0 0
      %1636 = vmatprep.subr.bf16.mxu0 0
      %1637 = vmatpush1.bf16.xpose.msra.mxu0 0
      %1638 = vmatprep.subr.bf16.mxu0 0
      %1639 = vmatpush1.bf16.xpose.msra.mxu0 0
      %1640 = vmatprep.subr.bf16.mxu0 0
      %1641 = vmatpush1.bf16.xpose.msra.mxu0 0
      %1642 = vmatprep.subr.bf16.mxu0 0
      %1643 = vmatpush1.bf16.xpose.msra.mxu0 %v1626
      %1644 = vmatprep.subr.bf16.mxu0 0
      %1645 = vmatpush2.bf16.xpose.msra.mxu0 0
      %1646 = vmatprep.subr.bf16.mxu0 0
      %1647 = vmatpush2.bf16.xpose.msra.mxu0 0
      %1648 = vmatprep.subr.bf16.mxu0 0
      %1649 = vmatpush2.bf16.xpose.msra.mxu0 0
      %1650 = vmatprep.subr.bf16.mxu0 0
      %1651 = vmatpush2.bf16.xpose.msra.mxu0 0
      %1652 = vmatprep.subr.bf16.mxu0 0
      %1653 = vmatpush2.bf16.xpose.msra.mxu0 0
      %1654 = vmatprep.subr.bf16.mxu0 0
      %1655 = vmatpush2.bf16.xpose.msra.mxu0 0
      %1656 = vmatprep.subr.bf16.mxu0 0
      %1657 = vmatpush2.bf16.xpose.msra.mxu0 0
      %1658 = vmatprep.subr.bf16.mxu0 0
      %1659 = vmatpush2.bf16.xpose.msra.mxu0 0
      %1660 = vmatprep.mubr.bf16.mxu0 0
      %1661 = vmatmul.mubr.bf16.gmra.mxu0 %v1623
      %v1662 = vpop.f32.mrf.mxu0
      %v1663 = vadd.f32 %v606, %v1662
      %v1664 = vpop.f32.mrf.mxu0
      %v1665 = vpop.f32.mrf.mxu0
      %v1666 = vpop.f32.mrf.mxu0
      %1667 = vdwg.mxu0
      %1669 = vrot.lane.b32.xlu0 %v620, 120
      %v1670 = vpop.permute.xlu0 %1669
      %1671 = vrot.lane.b32.xlu0 %v628, 88
      %v1672 = vpop.permute.xlu0 %1671
      %v1674 = vsel %vm636, %v1670, 0
      %v1677 = vsel %vm636, %v1672, 0
      %1679 = vmatprep.subr.bf16.mxu0 0
      %1680 = vmatpush1.bf16.xpose.msra.mxu0 0
      %1681 = vmatprep.subr.bf16.mxu0 0
      %1682 = vmatpush1.bf16.xpose.msra.mxu0 0
      %1683 = vmatprep.subr.bf16.mxu0 0
      %1684 = vmatpush1.bf16.xpose.msra.mxu0 0
      %1685 = vmatprep.subr.bf16.mxu0 0
      %1686 = vmatpush1.bf16.xpose.msra.mxu0 0
      %1687 = vmatprep.subr.bf16.mxu0 0
      %1688 = vmatpush1.bf16.xpose.msra.mxu0 0
      %1689 = vmatprep.subr.bf16.mxu0 0
      %1690 = vmatpush1.bf16.xpose.msra.mxu0 0
      %1691 = vmatprep.subr.bf16.mxu0 0
      %1692 = vmatpush1.bf16.xpose.msra.mxu0 0
      %1693 = vmatprep.subr.bf16.mxu0 0
      %1694 = vmatpush1.bf16.xpose.msra.mxu0 %v1677
      %1695 = vmatprep.subr.bf16.mxu0 0
      %1696 = vmatpush2.bf16.xpose.msra.mxu0 0
      %1697 = vmatprep.subr.bf16.mxu0 0
      %1698 = vmatpush2.bf16.xpose.msra.mxu0 0
      %1699 = vmatprep.subr.bf16.mxu0 0
      %1700 = vmatpush2.bf16.xpose.msra.mxu0 0
      %1701 = vmatprep.subr.bf16.mxu0 0
      %1702 = vmatpush2.bf16.xpose.msra.mxu0 0
      %1703 = vmatprep.subr.bf16.mxu0 0
      %1704 = vmatpush2.bf16.xpose.msra.mxu0 0
      %1705 = vmatprep.subr.bf16.mxu0 0
      %1706 = vmatpush2.bf16.xpose.msra.mxu0 0
      %1707 = vmatprep.subr.bf16.mxu0 0
      %1708 = vmatpush2.bf16.xpose.msra.mxu0 0
      %1709 = vmatprep.subr.bf16.mxu0 0
      %1710 = vmatpush2.bf16.xpose.msra.mxu0 0
      %1711 = vmatprep.mubr.bf16.mxu0 0
      %1712 = vmatmul.mubr.bf16.gmra.mxu0 %v1674
      %v1713 = vpop.f32.mrf.mxu0
      %v1714 = vadd.f32 %v606, %v1713
      %v1715 = vpop.f32.mrf.mxu0
      %v1716 = vpop.f32.mrf.mxu0
      %v1717 = vpop.f32.mrf.mxu0
      %1718 = vdwg.mxu0
      %1720 = vrot.lane.b32.xlu0 %v621, 120
      %v1721 = vpop.permute.xlu0 %1720
      %1722 = vrot.lane.b32.xlu0 %v629, 88
      %v1723 = vpop.permute.xlu0 %1722
      %v1725 = vsel %vm636, %v1721, 0
      %v1728 = vsel %vm636, %v1723, 0
      %1730 = vmatprep.subr.bf16.mxu0 0
      %1731 = vmatpush1.bf16.xpose.msra.mxu0 0
      %1732 = vmatprep.subr.bf16.mxu0 0
      %1733 = vmatpush1.bf16.xpose.msra.mxu0 0
      %1734 = vmatprep.subr.bf16.mxu0 0
      %1735 = vmatpush1.bf16.xpose.msra.mxu0 0
      %1736 = vmatprep.subr.bf16.mxu0 0
      %1737 = vmatpush1.bf16.xpose.msra.mxu0 0
      %1738 = vmatprep.subr.bf16.mxu0 0
      %1739 = vmatpush1.bf16.xpose.msra.mxu0 0
      %1740 = vmatprep.subr.bf16.mxu0 0
      %1741 = vmatpush1.bf16.xpose.msra.mxu0 0
      %1742 = vmatprep.subr.bf16.mxu0 0
      %1743 = vmatpush1.bf16.xpose.msra.mxu0 0
      %1744 = vmatprep.subr.bf16.mxu0 0
      %1745 = vmatpush1.bf16.xpose.msra.mxu0 %v1728
      %1746 = vmatprep.subr.bf16.mxu0 0
      %1747 = vmatpush2.bf16.xpose.msra.mxu0 0
      %1748 = vmatprep.subr.bf16.mxu0 0
      %1749 = vmatpush2.bf16.xpose.msra.mxu0 0
      %1750 = vmatprep.subr.bf16.mxu0 0
      %1751 = vmatpush2.bf16.xpose.msra.mxu0 0
      %1752 = vmatprep.subr.bf16.mxu0 0
      %1753 = vmatpush2.bf16.xpose.msra.mxu0 0
      %1754 = vmatprep.subr.bf16.mxu0 0
      %1755 = vmatpush2.bf16.xpose.msra.mxu0 0
      %1756 = vmatprep.subr.bf16.mxu0 0
      %1757 = vmatpush2.bf16.xpose.msra.mxu0 0
      %1758 = vmatprep.subr.bf16.mxu0 0
      %1759 = vmatpush2.bf16.xpose.msra.mxu0 0
      %1760 = vmatprep.subr.bf16.mxu0 0
      %1761 = vmatpush2.bf16.xpose.msra.mxu0 0
      %1762 = vmatprep.mubr.bf16.mxu0 0
      %1763 = vmatmul.mubr.bf16.gmra.mxu0 %v1725
      %v1764 = vpop.f32.mrf.mxu0
      %v1765 = vadd.f32 %v606, %v1764
      %v1766 = vpop.f32.mrf.mxu0
      %v1767 = vpop.f32.mrf.mxu0
      %v1768 = vpop.f32.mrf.mxu0
      %1769 = vdwg.mxu0
      %1771 = vrot.lane.b32.xlu0 %v622, 120
      %v1772 = vpop.permute.xlu0 %1771
      %1773 = vrot.lane.b32.xlu0 %v630, 88
      %v1774 = vpop.permute.xlu0 %1773
      %v1776 = vsel %vm636, %v1772, 0
      %v1779 = vsel %vm636, %v1774, 0
      %1781 = vmatprep.subr.bf16.mxu0 0
      %1782 = vmatpush1.bf16.xpose.msra.mxu0 0
      %1783 = vmatprep.subr.bf16.mxu0 0
      %1784 = vmatpush1.bf16.xpose.msra.mxu0 0
      %1785 = vmatprep.subr.bf16.mxu0 0
      %1786 = vmatpush1.bf16.xpose.msra.mxu0 0
      %1787 = vmatprep.subr.bf16.mxu0 0
      %1788 = vmatpush1.bf16.xpose.msra.mxu0 0
      %1789 = vmatprep.subr.bf16.mxu0 0
      %1790 = vmatpush1.bf16.xpose.msra.mxu0 0
      %1791 = vmatprep.subr.bf16.mxu0 0
      %1792 = vmatpush1.bf16.xpose.msra.mxu0 0
      %1793 = vmatprep.subr.bf16.mxu0 0
      %1794 = vmatpush1.bf16.xpose.msra.mxu0 0
      %1795 = vmatprep.subr.bf16.mxu0 0
      %1796 = vmatpush1.bf16.xpose.msra.mxu0 %v1779
      %1797 = vmatprep.subr.bf16.mxu0 0
      %1798 = vmatpush2.bf16.xpose.msra.mxu0 0
      %1799 = vmatprep.subr.bf16.mxu0 0
      %1800 = vmatpush2.bf16.xpose.msra.mxu0 0
      %1801 = vmatprep.subr.bf16.mxu0 0
      %1802 = vmatpush2.bf16.xpose.msra.mxu0 0
      %1803 = vmatprep.subr.bf16.mxu0 0
      %1804 = vmatpush2.bf16.xpose.msra.mxu0 0
      %1805 = vmatprep.subr.bf16.mxu0 0
      %1806 = vmatpush2.bf16.xpose.msra.mxu0 0
      %1807 = vmatprep.subr.bf16.mxu0 0
      %1808 = vmatpush2.bf16.xpose.msra.mxu0 0
      %1809 = vmatprep.subr.bf16.mxu0 0
      %1810 = vmatpush2.bf16.xpose.msra.mxu0 0
      %1811 = vmatprep.subr.bf16.mxu0 0
      %1812 = vmatpush2.bf16.xpose.msra.mxu0 0
      %1813 = vmatprep.mubr.bf16.mxu0 0
      %1814 = vmatmul.mubr.bf16.gmra.mxu0 %v1776
      %v1815 = vpop.f32.mrf.mxu0
      %v1816 = vadd.f32 %v606, %v1815
      %v1817 = vpop.f32.mrf.mxu0
      %v1818 = vpop.f32.mrf.mxu0
      %v1819 = vpop.f32.mrf.mxu0
      %1820 = vdwg.mxu0
      %1822 = vrot.lane.b32.xlu0 %v623, 120
      %v1823 = vpop.permute.xlu0 %1822
      %1824 = vrot.lane.b32.xlu0 %v631, 88
      %v1825 = vpop.permute.xlu0 %1824
      %v1827 = vsel %vm636, %v1823, 0
      %v1830 = vsel %vm636, %v1825, 0
      %1832 = vmatprep.subr.bf16.mxu0 0
      %1833 = vmatpush1.bf16.xpose.msra.mxu0 0
      %1834 = vmatprep.subr.bf16.mxu0 0
      %1835 = vmatpush1.bf16.xpose.msra.mxu0 0
      %1836 = vmatprep.subr.bf16.mxu0 0
      %1837 = vmatpush1.bf16.xpose.msra.mxu0 0
      %1838 = vmatprep.subr.bf16.mxu0 0
      %1839 = vmatpush1.bf16.xpose.msra.mxu0 0
      %1840 = vmatprep.subr.bf16.mxu0 0
      %1841 = vmatpush1.bf16.xpose.msra.mxu0 0
      %1842 = vmatprep.subr.bf16.mxu0 0
      %1843 = vmatpush1.bf16.xpose.msra.mxu0 0
      %1844 = vmatprep.subr.bf16.mxu0 0
      %1845 = vmatpush1.bf16.xpose.msra.mxu0 0
      %1846 = vmatprep.subr.bf16.mxu0 0
      %1847 = vmatpush1.bf16.xpose.msra.mxu0 %v1830
      %1848 = vmatprep.subr.bf16.mxu0 0
      %1849 = vmatpush2.bf16.xpose.msra.mxu0 0
      %1850 = vmatprep.subr.bf16.mxu0 0
      %1851 = vmatpush2.bf16.xpose.msra.mxu0 0
      %1852 = vmatprep.subr.bf16.mxu0 0
      %1853 = vmatpush2.bf16.xpose.msra.mxu0 0
      %1854 = vmatprep.subr.bf16.mxu0 0
      %1855 = vmatpush2.bf16.xpose.msra.mxu0 0
      %1856 = vmatprep.subr.bf16.mxu0 0
      %1857 = vmatpush2.bf16.xpose.msra.mxu0 0
      %1858 = vmatprep.subr.bf16.mxu0 0
      %1859 = vmatpush2.bf16.xpose.msra.mxu0 0
      %1860 = vmatprep.subr.bf16.mxu0 0
      %1861 = vmatpush2.bf16.xpose.msra.mxu0 0
      %1862 = vmatprep.subr.bf16.mxu0 0
      %1863 = vmatpush2.bf16.xpose.msra.mxu0 0
      %1864 = vmatprep.mubr.bf16.mxu0 0
      %1865 = vmatmul.mubr.bf16.gmra.mxu0 %v1827
      %v1866 = vpop.f32.mrf.mxu0
      %v1867 = vadd.f32 %v606, %v1866
      %v1868 = vpop.f32.mrf.mxu0
      %v1869 = vpop.f32.mrf.mxu0
      %v1870 = vpop.f32.mrf.mxu0
      %1871 = vdwg.mxu0
      %1873 = vrot.lane.b32.xlu0 %v624, 120
      %v1874 = vpop.permute.xlu0 %1873
      %1875 = vrot.lane.b32.xlu0 %v632, 88
      %v1876 = vpop.permute.xlu0 %1875
      %v1878 = vsel %vm636, %v1874, 0
      %v1881 = vsel %vm636, %v1876, 0
      %1883 = vmatprep.subr.bf16.mxu0 0
      %1884 = vmatpush1.bf16.xpose.msra.mxu0 0
      %1885 = vmatprep.subr.bf16.mxu0 0
      %1886 = vmatpush1.bf16.xpose.msra.mxu0 0
      %1887 = vmatprep.subr.bf16.mxu0 0
      %1888 = vmatpush1.bf16.xpose.msra.mxu0 0
      %1889 = vmatprep.subr.bf16.mxu0 0
      %1890 = vmatpush1.bf16.xpose.msra.mxu0 0
      %1891 = vmatprep.subr.bf16.mxu0 0
      %1892 = vmatpush1.bf16.xpose.msra.mxu0 0
      %1893 = vmatprep.subr.bf16.mxu0 0
      %1894 = vmatpush1.bf16.xpose.msra.mxu0 0
      %1895 = vmatprep.subr.bf16.mxu0 0
      %1896 = vmatpush1.bf16.xpose.msra.mxu0 0
      %1897 = vmatprep.subr.bf16.mxu0 0
      %1898 = vmatpush1.bf16.xpose.msra.mxu0 %v1881
      %1899 = vmatprep.subr.bf16.mxu0 0
      %1900 = vmatpush2.bf16.xpose.msra.mxu0 0
      %1901 = vmatprep.subr.bf16.mxu0 0
      %1902 = vmatpush2.bf16.xpose.msra.mxu0 0
      %1903 = vmatprep.subr.bf16.mxu0 0
      %1904 = vmatpush2.bf16.xpose.msra.mxu0 0
      %1905 = vmatprep.subr.bf16.mxu0 0
      %1906 = vmatpush2.bf16.xpose.msra.mxu0 0
      %1907 = vmatprep.subr.bf16.mxu0 0
      %1908 = vmatpush2.bf16.xpose.msra.mxu0 0
      %1909 = vmatprep.subr.bf16.mxu0 0
      %1910 = vmatpush2.bf16.xpose.msra.mxu0 0
      %1911 = vmatprep.subr.bf16.mxu0 0
      %1912 = vmatpush2.bf16.xpose.msra.mxu0 0
      %1913 = vmatprep.subr.bf16.mxu0 0
      %1914 = vmatpush2.bf16.xpose.msra.mxu0 0
      %1915 = vmatprep.mubr.bf16.mxu0 0
      %1916 = vmatmul.mubr.bf16.gmra.mxu0 %v1878
      %v1917 = vpop.f32.mrf.mxu0
      %v1918 = vadd.f32 %v606, %v1917
      %v1919 = vpop.f32.mrf.mxu0
      %v1920 = vpop.f32.mrf.mxu0
      %v1921 = vpop.f32.mrf.mxu0
      %1922 = vdwg.mxu0
      %v1923 = vadd.f32 %v1561, %v345
      %v1924 = vadd.f32 %v1612, %v346
      %v1925 = vadd.f32 %v1663, %v347
      %v1926 = vadd.f32 %v1714, %v348
      %v1927 = vadd.f32 %v1765, %v349
      %v1928 = vadd.f32 %v1816, %v350
      %v1929 = vadd.f32 %v1867, %v351
      %v1930 = vadd.f32 %v1918, %v352
      %v1931 = vsel %vm636, %v1923, -inf
      %1932 = vmax.xlane.f32.xlu0 %v1931
      %v1933 = vpop.xlane.xlu0 %1932
      %v1934 = vsel %vm636, %v1924, -inf
      %1935 = vmax.xlane.f32.xlu0 %v1934
      %v1936 = vpop.xlane.xlu0 %1935
      %v1937 = vsel %vm636, %v1925, -inf
      %1938 = vmax.xlane.f32.xlu0 %v1937
      %v1939 = vpop.xlane.xlu0 %1938
      %v1940 = vsel %vm636, %v1926, -inf
      %1941 = vmax.xlane.f32.xlu0 %v1940
      %v1942 = vpop.xlane.xlu0 %1941
      %v1943 = vsel %vm636, %v1927, -inf
      %1944 = vmax.xlane.f32.xlu0 %v1943
      %v1945 = vpop.xlane.xlu0 %1944
      %v1946 = vsel %vm636, %v1928, -inf
      %1947 = vmax.xlane.f32.xlu0 %v1946
      %v1948 = vpop.xlane.xlu0 %1947
      %v1949 = vsel %vm636, %v1929, -inf
      %1950 = vmax.xlane.f32.xlu0 %v1949
      %v1951 = vpop.xlane.xlu0 %1950
      %v1952 = vsel %vm636, %v1930, -inf
      %1953 = vmax.xlane.f32.xlu0 %v1952
      %v1954 = vpop.xlane.xlu0 %1953
      %v1955 = vsub.f32 %v1923, %v1933
      %v1956 = vsub.f32 %v1924, %v1936
      %v1957 = vsub.f32 %v1925, %v1939
      %v1958 = vsub.f32 %v1926, %v1942
      %v1959 = vsub.f32 %v1927, %v1945
      %v1960 = vsub.f32 %v1928, %v1948
      %v1961 = vsub.f32 %v1929, %v1951
      %v1962 = vsub.f32 %v1930, %v1954
      %v1963 = vmul.f32 %v1955, 1.442695
      %v1964 = vpow.pop %v1963
      %v1965 = vmul.f32 %v1956, 1.442695
      %v1966 = vpow.pop %v1965
      %v1967 = vmul.f32 %v1957, 1.442695
      %v1968 = vpow.pop %v1967
      %v1969 = vmul.f32 %v1958, 1.442695
      %v1970 = vpow.pop %v1969
      %v1971 = vmul.f32 %v1959, 1.442695
      %v1972 = vpow.pop %v1971
      %v1973 = vmul.f32 %v1960, 1.442695
      %v1974 = vpow.pop %v1973
      %v1975 = vmul.f32 %v1961, 1.442695
      %v1976 = vpow.pop %v1975
      %v1977 = vmul.f32 %v1962, 1.442695
      %v1978 = vpow.pop %v1977
      %v1979 = vsel %vm636, %v1964, 0.0
      %1980 = vadd.xlane.f32.xlu0 %v1979
      %v1981 = vpop.xlane.xlu0 %1980
      %v1982 = vsel %vm636, %v1966, 0.0
      %1983 = vadd.xlane.f32.xlu0 %v1982
      %v1984 = vpop.xlane.xlu0 %1983
      %v1985 = vsel %vm636, %v1968, 0.0
      %1986 = vadd.xlane.f32.xlu0 %v1985
      %v1987 = vpop.xlane.xlu0 %1986
      %v1988 = vsel %vm636, %v1970, 0.0
      %1989 = vadd.xlane.f32.xlu0 %v1988
      %v1990 = vpop.xlane.xlu0 %1989
      %v1991 = vsel %vm636, %v1972, 0.0
      %1992 = vadd.xlane.f32.xlu0 %v1991
      %v1993 = vpop.xlane.xlu0 %1992
      %v1994 = vsel %vm636, %v1974, 0.0
      %1995 = vadd.xlane.f32.xlu0 %v1994
      %v1996 = vpop.xlane.xlu0 %1995
      %v1997 = vsel %vm636, %v1976, 0.0
      %1998 = vadd.xlane.f32.xlu0 %v1997
      %v1999 = vpop.xlane.xlu0 %1998
      %v2000 = vsel %vm636, %v1978, 0.0
      %2001 = vadd.xlane.f32.xlu0 %v2000
      %v2002 = vpop.xlane.xlu0 %2001
      %v2003 = vpack.c.bf16 %v1964, %v1964
      %v2004 = vpack.c.bf16 %v1966, %v1966
      %v2005 = vpack.c.bf16 %v1968, %v1968
      %v2006 = vpack.c.bf16 %v1970, %v1970
      %v2007 = vpack.c.bf16 %v1972, %v1972
      %v2008 = vpack.c.bf16 %v1974, %v1974
      %v2009 = vpack.c.bf16 %v1976, %v1976
      %v2010 = vpack.c.bf16 %v1978, %v1978
      %2011 = vrot.lane.b32.xlu0 %v625, 56
      %v2012 = vpop.permute.xlu0 %2011
      %v2014 = vsel %vm636, %v2003, 0
      %v2017 = vsel %vm1119, %v2012, 0
      %2019 = vmatprep.subr.bf16.mxu0 0
      %2020 = vmatpush1.bf16.msra.mxu0 0
      %2021 = vmatprep.subr.bf16.mxu0 0
      %2022 = vmatpush1.bf16.msra.mxu0 0
      %2023 = vmatprep.subr.bf16.mxu0 0
      %2024 = vmatpush1.bf16.msra.mxu0 0
      %2025 = vmatprep.subr.bf16.mxu0 0
      %2026 = vmatpush1.bf16.msra.mxu0 0
      %2027 = vmatprep.subr.bf16.mxu0 0
      %2028 = vmatpush1.bf16.msra.mxu0 0
      %2029 = vmatprep.subr.bf16.mxu0 0
      %2030 = vmatpush1.bf16.msra.mxu0 0
      %2031 = vmatprep.subr.bf16.mxu0 0
      %2032 = vmatpush1.bf16.msra.mxu0 0
      %2033 = vmatprep.subr.bf16.mxu0 0
      %2034 = vmatpush1.bf16.msra.mxu0 %v2017
      %2035 = vmatprep.subr.bf16.mxu0 0
      %2036 = vmatpush2.bf16.msra.mxu0 0
      %2037 = vmatprep.subr.bf16.mxu0 0
      %2038 = vmatpush2.bf16.msra.mxu0 0
      %2039 = vmatprep.subr.bf16.mxu0 0
      %2040 = vmatpush2.bf16.msra.mxu0 0
      %2041 = vmatprep.subr.bf16.mxu0 0
      %2042 = vmatpush2.bf16.msra.mxu0 0
      %2043 = vmatprep.subr.bf16.mxu0 0
      %2044 = vmatpush2.bf16.msra.mxu0 0
      %2045 = vmatprep.subr.bf16.mxu0 0
      %2046 = vmatpush2.bf16.msra.mxu0 0
      %2047 = vmatprep.subr.bf16.mxu0 0
      %2048 = vmatpush2.bf16.msra.mxu0 0
      %2049 = vmatprep.subr.bf16.mxu0 0
      %2050 = vmatpush2.bf16.msra.mxu0 0
      %2051 = vmatprep.mubr.bf16.mxu0 0
      %2052 = vmatmul.mubr.bf16.gmra.mxu0 %v2014
      %v2053 = vpop.f32.mrf.mxu0
      %v2054 = vadd.f32 0.0, %v2053
      %v2055 = vpop.f32.mrf.mxu0
      %v2056 = vpop.f32.mrf.mxu0
      %v2057 = vpop.f32.mrf.mxu0
      %2058 = vdwg.mxu0
      %2059 = vrot.lane.b32.xlu0 %v626, 56
      %v2060 = vpop.permute.xlu0 %2059
      %v2062 = vsel %vm636, %v2004, 0
      %v2065 = vsel %vm1119, %v2060, 0
      %2067 = vmatprep.subr.bf16.mxu0 0
      %2068 = vmatpush1.bf16.msra.mxu0 0
      %2069 = vmatprep.subr.bf16.mxu0 0
      %2070 = vmatpush1.bf16.msra.mxu0 0
      %2071 = vmatprep.subr.bf16.mxu0 0
      %2072 = vmatpush1.bf16.msra.mxu0 0
      %2073 = vmatprep.subr.bf16.mxu0 0
      %2074 = vmatpush1.bf16.msra.mxu0 0
      %2075 = vmatprep.subr.bf16.mxu0 0
      %2076 = vmatpush1.bf16.msra.mxu0 0
      %2077 = vmatprep.subr.bf16.mxu0 0
      %2078 = vmatpush1.bf16.msra.mxu0 0
      %2079 = vmatprep.subr.bf16.mxu0 0
      %2080 = vmatpush1.bf16.msra.mxu0 0
      %2081 = vmatprep.subr.bf16.mxu0 0
      %2082 = vmatpush1.bf16.msra.mxu0 %v2065
      %2083 = vmatprep.subr.bf16.mxu0 0
      %2084 = vmatpush2.bf16.msra.mxu0 0
      %2085 = vmatprep.subr.bf16.mxu0 0
      %2086 = vmatpush2.bf16.msra.mxu0 0
      %2087 = vmatprep.subr.bf16.mxu0 0
      %2088 = vmatpush2.bf16.msra.mxu0 0
      %2089 = vmatprep.subr.bf16.mxu0 0
      %2090 = vmatpush2.bf16.msra.mxu0 0
      %2091 = vmatprep.subr.bf16.mxu0 0
      %2092 = vmatpush2.bf16.msra.mxu0 0
      %2093 = vmatprep.subr.bf16.mxu0 0
      %2094 = vmatpush2.bf16.msra.mxu0 0
      %2095 = vmatprep.subr.bf16.mxu0 0
      %2096 = vmatpush2.bf16.msra.mxu0 0
      %2097 = vmatprep.subr.bf16.mxu0 0
      %2098 = vmatpush2.bf16.msra.mxu0 0
      %2099 = vmatprep.mubr.bf16.mxu0 0
      %2100 = vmatmul.mubr.bf16.gmra.mxu0 %v2062
      %v2101 = vpop.f32.mrf.mxu0
      %v2102 = vadd.f32 0.0, %v2101
      %v2103 = vpop.f32.mrf.mxu0
      %v2104 = vpop.f32.mrf.mxu0
      %v2105 = vpop.f32.mrf.mxu0
      %2106 = vdwg.mxu0
      %2107 = vrot.lane.b32.xlu0 %v627, 56
      %v2108 = vpop.permute.xlu0 %2107
      %v2110 = vsel %vm636, %v2005, 0
      %v2113 = vsel %vm1119, %v2108, 0
      %2115 = vmatprep.subr.bf16.mxu0 0
      %2116 = vmatpush1.bf16.msra.mxu0 0
      %2117 = vmatprep.subr.bf16.mxu0 0
      %2118 = vmatpush1.bf16.msra.mxu0 0
      %2119 = vmatprep.subr.bf16.mxu0 0
      %2120 = vmatpush1.bf16.msra.mxu0 0
      %2121 = vmatprep.subr.bf16.mxu0 0
      %2122 = vmatpush1.bf16.msra.mxu0 0
      %2123 = vmatprep.subr.bf16.mxu0 0
      %2124 = vmatpush1.bf16.msra.mxu0 0
      %2125 = vmatprep.subr.bf16.mxu0 0
      %2126 = vmatpush1.bf16.msra.mxu0 0
      %2127 = vmatprep.subr.bf16.mxu0 0
      %2128 = vmatpush1.bf16.msra.mxu0 0
      %2129 = vmatprep.subr.bf16.mxu0 0
      %2130 = vmatpush1.bf16.msra.mxu0 %v2113
      %2131 = vmatprep.subr.bf16.mxu0 0
      %2132 = vmatpush2.bf16.msra.mxu0 0
      %2133 = vmatprep.subr.bf16.mxu0 0
      %2134 = vmatpush2.bf16.msra.mxu0 0
      %2135 = vmatprep.subr.bf16.mxu0 0
      %2136 = vmatpush2.bf16.msra.mxu0 0
      %2137 = vmatprep.subr.bf16.mxu0 0
      %2138 = vmatpush2.bf16.msra.mxu0 0
      %2139 = vmatprep.subr.bf16.mxu0 0
      %2140 = vmatpush2.bf16.msra.mxu0 0
      %2141 = vmatprep.subr.bf16.mxu0 0
      %2142 = vmatpush2.bf16.msra.mxu0 0
      %2143 = vmatprep.subr.bf16.mxu0 0
      %2144 = vmatpush2.bf16.msra.mxu0 0
      %2145 = vmatprep.subr.bf16.mxu0 0
      %2146 = vmatpush2.bf16.msra.mxu0 0
      %2147 = vmatprep.mubr.bf16.mxu0 0
      %2148 = vmatmul.mubr.bf16.gmra.mxu0 %v2110
      %v2149 = vpop.f32.mrf.mxu0
      %v2150 = vadd.f32 0.0, %v2149
      %v2151 = vpop.f32.mrf.mxu0
      %v2152 = vpop.f32.mrf.mxu0
      %v2153 = vpop.f32.mrf.mxu0
      %2154 = vdwg.mxu0
      %2155 = vrot.lane.b32.xlu0 %v628, 56
      %v2156 = vpop.permute.xlu0 %2155
      %v2158 = vsel %vm636, %v2006, 0
      %v2161 = vsel %vm1119, %v2156, 0
      %2163 = vmatprep.subr.bf16.mxu0 0
      %2164 = vmatpush1.bf16.msra.mxu0 0
      %2165 = vmatprep.subr.bf16.mxu0 0
      %2166 = vmatpush1.bf16.msra.mxu0 0
      %2167 = vmatprep.subr.bf16.mxu0 0
      %2168 = vmatpush1.bf16.msra.mxu0 0
      %2169 = vmatprep.subr.bf16.mxu0 0
      %2170 = vmatpush1.bf16.msra.mxu0 0
      %2171 = vmatprep.subr.bf16.mxu0 0
      %2172 = vmatpush1.bf16.msra.mxu0 0
      %2173 = vmatprep.subr.bf16.mxu0 0
      %2174 = vmatpush1.bf16.msra.mxu0 0
      %2175 = vmatprep.subr.bf16.mxu0 0
      %2176 = vmatpush1.bf16.msra.mxu0 0
      %2177 = vmatprep.subr.bf16.mxu0 0
      %2178 = vmatpush1.bf16.msra.mxu0 %v2161
      %2179 = vmatprep.subr.bf16.mxu0 0
      %2180 = vmatpush2.bf16.msra.mxu0 0
      %2181 = vmatprep.subr.bf16.mxu0 0
      %2182 = vmatpush2.bf16.msra.mxu0 0
      %2183 = vmatprep.subr.bf16.mxu0 0
      %2184 = vmatpush2.bf16.msra.mxu0 0
      %2185 = vmatprep.subr.bf16.mxu0 0
      %2186 = vmatpush2.bf16.msra.mxu0 0
      %2187 = vmatprep.subr.bf16.mxu0 0
      %2188 = vmatpush2.bf16.msra.mxu0 0
      %2189 = vmatprep.subr.bf16.mxu0 0
      %2190 = vmatpush2.bf16.msra.mxu0 0
      %2191 = vmatprep.subr.bf16.mxu0 0
      %2192 = vmatpush2.bf16.msra.mxu0 0
      %2193 = vmatprep.subr.bf16.mxu0 0
      %2194 = vmatpush2.bf16.msra.mxu0 0
      %2195 = vmatprep.mubr.bf16.mxu0 0
      %2196 = vmatmul.mubr.bf16.gmra.mxu0 %v2158
      %v2197 = vpop.f32.mrf.mxu0
      %v2198 = vadd.f32 0.0, %v2197
      %v2199 = vpop.f32.mrf.mxu0
      %v2200 = vpop.f32.mrf.mxu0
      %v2201 = vpop.f32.mrf.mxu0
      %2202 = vdwg.mxu0
      %2203 = vrot.lane.b32.xlu0 %v629, 56
      %v2204 = vpop.permute.xlu0 %2203
      %v2206 = vsel %vm636, %v2007, 0
      %v2209 = vsel %vm1119, %v2204, 0
      %2211 = vmatprep.subr.bf16.mxu0 0
      %2212 = vmatpush1.bf16.msra.mxu0 0
      %2213 = vmatprep.subr.bf16.mxu0 0
      %2214 = vmatpush1.bf16.msra.mxu0 0
      %2215 = vmatprep.subr.bf16.mxu0 0
      %2216 = vmatpush1.bf16.msra.mxu0 0
      %2217 = vmatprep.subr.bf16.mxu0 0
      %2218 = vmatpush1.bf16.msra.mxu0 0
      %2219 = vmatprep.subr.bf16.mxu0 0
      %2220 = vmatpush1.bf16.msra.mxu0 0
      %2221 = vmatprep.subr.bf16.mxu0 0
      %2222 = vmatpush1.bf16.msra.mxu0 0
      %2223 = vmatprep.subr.bf16.mxu0 0
      %2224 = vmatpush1.bf16.msra.mxu0 0
      %2225 = vmatprep.subr.bf16.mxu0 0
      %2226 = vmatpush1.bf16.msra.mxu0 %v2209
      %2227 = vmatprep.subr.bf16.mxu0 0
      %2228 = vmatpush2.bf16.msra.mxu0 0
      %2229 = vmatprep.subr.bf16.mxu0 0
      %2230 = vmatpush2.bf16.msra.mxu0 0
      %2231 = vmatprep.subr.bf16.mxu0 0
      %2232 = vmatpush2.bf16.msra.mxu0 0
      %2233 = vmatprep.subr.bf16.mxu0 0
      %2234 = vmatpush2.bf16.msra.mxu0 0
      %2235 = vmatprep.subr.bf16.mxu0 0
      %2236 = vmatpush2.bf16.msra.mxu0 0
      %2237 = vmatprep.subr.bf16.mxu0 0
      %2238 = vmatpush2.bf16.msra.mxu0 0
      %2239 = vmatprep.subr.bf16.mxu0 0
      %2240 = vmatpush2.bf16.msra.mxu0 0
      %2241 = vmatprep.subr.bf16.mxu0 0
      %2242 = vmatpush2.bf16.msra.mxu0 0
      %2243 = vmatprep.mubr.bf16.mxu0 0
      %2244 = vmatmul.mubr.bf16.gmra.mxu0 %v2206
      %v2245 = vpop.f32.mrf.mxu0
      %v2246 = vadd.f32 0.0, %v2245
      %v2247 = vpop.f32.mrf.mxu0
      %v2248 = vpop.f32.mrf.mxu0
      %v2249 = vpop.f32.mrf.mxu0
      %2250 = vdwg.mxu0
      %2251 = vrot.lane.b32.xlu0 %v630, 56
      %v2252 = vpop.permute.xlu0 %2251
      %v2254 = vsel %vm636, %v2008, 0
      %v2257 = vsel %vm1119, %v2252, 0
      %2259 = vmatprep.subr.bf16.mxu0 0
      %2260 = vmatpush1.bf16.msra.mxu0 0
      %2261 = vmatprep.subr.bf16.mxu0 0
      %2262 = vmatpush1.bf16.msra.mxu0 0
      %2263 = vmatprep.subr.bf16.mxu0 0
      %2264 = vmatpush1.bf16.msra.mxu0 0
      %2265 = vmatprep.subr.bf16.mxu0 0
      %2266 = vmatpush1.bf16.msra.mxu0 0
      %2267 = vmatprep.subr.bf16.mxu0 0
      %2268 = vmatpush1.bf16.msra.mxu0 0
      %2269 = vmatprep.subr.bf16.mxu0 0
      %2270 = vmatpush1.bf16.msra.mxu0 0
      %2271 = vmatprep.subr.bf16.mxu0 0
      %2272 = vmatpush1.bf16.msra.mxu0 0
      %2273 = vmatprep.subr.bf16.mxu0 0
      %2274 = vmatpush1.bf16.msra.mxu0 %v2257
      %2275 = vmatprep.subr.bf16.mxu0 0
      %2276 = vmatpush2.bf16.msra.mxu0 0
      %2277 = vmatprep.subr.bf16.mxu0 0
      %2278 = vmatpush2.bf16.msra.mxu0 0
      %2279 = vmatprep.subr.bf16.mxu0 0
      %2280 = vmatpush2.bf16.msra.mxu0 0
      %2281 = vmatprep.subr.bf16.mxu0 0
      %2282 = vmatpush2.bf16.msra.mxu0 0
      %2283 = vmatprep.subr.bf16.mxu0 0
      %2284 = vmatpush2.bf16.msra.mxu0 0
      %2285 = vmatprep.subr.bf16.mxu0 0
      %2286 = vmatpush2.bf16.msra.mxu0 0
      %2287 = vmatprep.subr.bf16.mxu0 0
      %2288 = vmatpush2.bf16.msra.mxu0 0
      %2289 = vmatprep.subr.bf16.mxu0 0
      %2290 = vmatpush2.bf16.msra.mxu0 0
      %2291 = vmatprep.mubr.bf16.mxu0 0
      %2292 = vmatmul.mubr.bf16.gmra.mxu0 %v2254
      %v2293 = vpop.f32.mrf.mxu0
      %v2294 = vadd.f32 0.0, %v2293
      %v2295 = vpop.f32.mrf.mxu0
      %v2296 = vpop.f32.mrf.mxu0
      %v2297 = vpop.f32.mrf.mxu0
      %2298 = vdwg.mxu0
      %2299 = vrot.lane.b32.xlu0 %v631, 56
      %v2300 = vpop.permute.xlu0 %2299
      %v2302 = vsel %vm636, %v2009, 0
      %v2305 = vsel %vm1119, %v2300, 0
      %2307 = vmatprep.subr.bf16.mxu0 0
      %2308 = vmatpush1.bf16.msra.mxu0 0
      %2309 = vmatprep.subr.bf16.mxu0 0
      %2310 = vmatpush1.bf16.msra.mxu0 0
      %2311 = vmatprep.subr.bf16.mxu0 0
      %2312 = vmatpush1.bf16.msra.mxu0 0
      %2313 = vmatprep.subr.bf16.mxu0 0
      %2314 = vmatpush1.bf16.msra.mxu0 0
      %2315 = vmatprep.subr.bf16.mxu0 0
      %2316 = vmatpush1.bf16.msra.mxu0 0
      %2317 = vmatprep.subr.bf16.mxu0 0
      %2318 = vmatpush1.bf16.msra.mxu0 0
      %2319 = vmatprep.subr.bf16.mxu0 0
      %2320 = vmatpush1.bf16.msra.mxu0 0
      %2321 = vmatprep.subr.bf16.mxu0 0
      %2322 = vmatpush1.bf16.msra.mxu0 %v2305
      %2323 = vmatprep.subr.bf16.mxu0 0
      %2324 = vmatpush2.bf16.msra.mxu0 0
      %2325 = vmatprep.subr.bf16.mxu0 0
      %2326 = vmatpush2.bf16.msra.mxu0 0
      %2327 = vmatprep.subr.bf16.mxu0 0
      %2328 = vmatpush2.bf16.msra.mxu0 0
      %2329 = vmatprep.subr.bf16.mxu0 0
      %2330 = vmatpush2.bf16.msra.mxu0 0
      %2331 = vmatprep.subr.bf16.mxu0 0
      %2332 = vmatpush2.bf16.msra.mxu0 0
      %2333 = vmatprep.subr.bf16.mxu0 0
      %2334 = vmatpush2.bf16.msra.mxu0 0
      %2335 = vmatprep.subr.bf16.mxu0 0
      %2336 = vmatpush2.bf16.msra.mxu0 0
      %2337 = vmatprep.subr.bf16.mxu0 0
      %2338 = vmatpush2.bf16.msra.mxu0 0
      %2339 = vmatprep.mubr.bf16.mxu0 0
      %2340 = vmatmul.mubr.bf16.gmra.mxu0 %v2302
      %v2341 = vpop.f32.mrf.mxu0
      %v2342 = vadd.f32 0.0, %v2341
      %v2343 = vpop.f32.mrf.mxu0
      %v2344 = vpop.f32.mrf.mxu0
      %v2345 = vpop.f32.mrf.mxu0
      %2346 = vdwg.mxu0
      %2347 = vrot.lane.b32.xlu0 %v632, 56
      %v2348 = vpop.permute.xlu0 %2347
      %v2350 = vsel %vm636, %v2010, 0
      %v2353 = vsel %vm1119, %v2348, 0
      %2355 = vmatprep.subr.bf16.mxu0 0
      %2356 = vmatpush1.bf16.msra.mxu0 0
      %2357 = vmatprep.subr.bf16.mxu0 0
      %2358 = vmatpush1.bf16.msra.mxu0 0
      %2359 = vmatprep.subr.bf16.mxu0 0
      %2360 = vmatpush1.bf16.msra.mxu0 0
      %2361 = vmatprep.subr.bf16.mxu0 0
      %2362 = vmatpush1.bf16.msra.mxu0 0
      %2363 = vmatprep.subr.bf16.mxu0 0
      %2364 = vmatpush1.bf16.msra.mxu0 0
      %2365 = vmatprep.subr.bf16.mxu0 0
      %2366 = vmatpush1.bf16.msra.mxu0 0
      %2367 = vmatprep.subr.bf16.mxu0 0
      %2368 = vmatpush1.bf16.msra.mxu0 0
      %2369 = vmatprep.subr.bf16.mxu0 0
      %2370 = vmatpush1.bf16.msra.mxu0 %v2353
      %2371 = vmatprep.subr.bf16.mxu0 0
      %2372 = vmatpush2.bf16.msra.mxu0 0
      %2373 = vmatprep.subr.bf16.mxu0 0
      %2374 = vmatpush2.bf16.msra.mxu0 0
      %2375 = vmatprep.subr.bf16.mxu0 0
      %2376 = vmatpush2.bf16.msra.mxu0 0
      %2377 = vmatprep.subr.bf16.mxu0 0
      %2378 = vmatpush2.bf16.msra.mxu0 0
      %2379 = vmatprep.subr.bf16.mxu0 0
      %2380 = vmatpush2.bf16.msra.mxu0 0
      %2381 = vmatprep.subr.bf16.mxu0 0
      %2382 = vmatpush2.bf16.msra.mxu0 0
      %2383 = vmatprep.subr.bf16.mxu0 0
      %2384 = vmatpush2.bf16.msra.mxu0 0
      %2385 = vmatprep.subr.bf16.mxu0 0
      %2386 = vmatpush2.bf16.msra.mxu0 0
      %2387 = vmatprep.mubr.bf16.mxu0 0
      %2388 = vmatmul.mubr.bf16.gmra.mxu0 %v2350
      %v2389 = vpop.f32.mrf.mxu0
      %v2390 = vadd.f32 0.0, %v2389
      %v2391 = vpop.f32.mrf.mxu0
      %v2392 = vpop.f32.mrf.mxu0
      %v2393 = vpop.f32.mrf.mxu0
      %2394 = vdwg.mxu0
      %v2395 = vrcp.pop %v1981
      %v2396 = vrcp.pop %v1984
      %v2397 = vrcp.pop %v1987
      %v2398 = vrcp.pop %v1990
      %v2399 = vrcp.pop %v1993
      %v2400 = vrcp.pop %v1996
      %v2401 = vrcp.pop %v1999
      %v2402 = vrcp.pop %v2002
      %v2403 = vmul.f32 %v2054, %v2395
      %v2404 = vmul.f32 %v2102, %v2396
      %v2405 = vmul.f32 %v2150, %v2397
      %v2406 = vmul.f32 %v2198, %v2398
      %v2407 = vmul.f32 %v2246, %v2399
      %v2408 = vmul.f32 %v2294, %v2400
      %v2409 = vmul.f32 %v2342, %v2401
      %v2410 = vmul.f32 %v2390, %v2402
      %2411 = vrot.lane.b32.xlu0 %v617, 112
      %v2412 = vpop.permute.xlu0 %2411
      %2413 = vrot.lane.b32.xlu0 %v625, 80
      %v2414 = vpop.permute.xlu0 %2413
      %v2416 = vsel %vm636, %v2412, 0
      %v2419 = vsel %vm636, %v2414, 0
      %2421 = vmatprep.subr.bf16.mxu0 0
      %2422 = vmatpush1.bf16.xpose.msra.mxu0 0
      %2423 = vmatprep.subr.bf16.mxu0 0
      %2424 = vmatpush1.bf16.xpose.msra.mxu0 0
      %2425 = vmatprep.subr.bf16.mxu0 0
      %2426 = vmatpush1.bf16.xpose.msra.mxu0 0
      %2427 = vmatprep.subr.bf16.mxu0 0
      %2428 = vmatpush1.bf16.xpose.msra.mxu0 0
      %2429 = vmatprep.subr.bf16.mxu0 0
      %2430 = vmatpush1.bf16.xpose.msra.mxu0 0
      %2431 = vmatprep.subr.bf16.mxu0 0
      %2432 = vmatpush1.bf16.xpose.msra.mxu0 0
      %2433 = vmatprep.subr.bf16.mxu0 0
      %2434 = vmatpush1.bf16.xpose.msra.mxu0 0
      %2435 = vmatprep.subr.bf16.mxu0 0
      %2436 = vmatpush1.bf16.xpose.msra.mxu0 %v2419
      %2437 = vmatprep.subr.bf16.mxu0 0
      %2438 = vmatpush2.bf16.xpose.msra.mxu0 0
      %2439 = vmatprep.subr.bf16.mxu0 0
      %2440 = vmatpush2.bf16.xpose.msra.mxu0 0
      %2441 = vmatprep.subr.bf16.mxu0 0
      %2442 = vmatpush2.bf16.xpose.msra.mxu0 0
      %2443 = vmatprep.subr.bf16.mxu0 0
      %2444 = vmatpush2.bf16.xpose.msra.mxu0 0
      %2445 = vmatprep.subr.bf16.mxu0 0
      %2446 = vmatpush2.bf16.xpose.msra.mxu0 0
      %2447 = vmatprep.subr.bf16.mxu0 0
      %2448 = vmatpush2.bf16.xpose.msra.mxu0 0
      %2449 = vmatprep.subr.bf16.mxu0 0
      %2450 = vmatpush2.bf16.xpose.msra.mxu0 0
      %2451 = vmatprep.subr.bf16.mxu0 0
      %2452 = vmatpush2.bf16.xpose.msra.mxu0 0
      %2453 = vmatprep.mubr.bf16.mxu0 0
      %2454 = vmatmul.mubr.bf16.gmra.mxu0 %v2416
      %v2455 = vpop.f32.mrf.mxu0
      %v2456 = vadd.f32 %v607, %v2455
      %v2457 = vpop.f32.mrf.mxu0
      %v2458 = vpop.f32.mrf.mxu0
      %v2459 = vpop.f32.mrf.mxu0
      %2460 = vdwg.mxu0
      %2461 = vrot.lane.b32.xlu0 %v618, 112
      %v2462 = vpop.permute.xlu0 %2461
      %2463 = vrot.lane.b32.xlu0 %v626, 80
      %v2464 = vpop.permute.xlu0 %2463
      %v2466 = vsel %vm636, %v2462, 0
      %v2469 = vsel %vm636, %v2464, 0
      %2471 = vmatprep.subr.bf16.mxu0 0
      %2472 = vmatpush1.bf16.xpose.msra.mxu0 0
      %2473 = vmatprep.subr.bf16.mxu0 0
      %2474 = vmatpush1.bf16.xpose.msra.mxu0 0
      %2475 = vmatprep.subr.bf16.mxu0 0
      %2476 = vmatpush1.bf16.xpose.msra.mxu0 0
      %2477 = vmatprep.subr.bf16.mxu0 0
      %2478 = vmatpush1.bf16.xpose.msra.mxu0 0
      %2479 = vmatprep.subr.bf16.mxu0 0
      %2480 = vmatpush1.bf16.xpose.msra.mxu0 0
      %2481 = vmatprep.subr.bf16.mxu0 0
      %2482 = vmatpush1.bf16.xpose.msra.mxu0 0
      %2483 = vmatprep.subr.bf16.mxu0 0
      %2484 = vmatpush1.bf16.xpose.msra.mxu0 0
      %2485 = vmatprep.subr.bf16.mxu0 0
      %2486 = vmatpush1.bf16.xpose.msra.mxu0 %v2469
      %2487 = vmatprep.subr.bf16.mxu0 0
      %2488 = vmatpush2.bf16.xpose.msra.mxu0 0
      %2489 = vmatprep.subr.bf16.mxu0 0
      %2490 = vmatpush2.bf16.xpose.msra.mxu0 0
      %2491 = vmatprep.subr.bf16.mxu0 0
      %2492 = vmatpush2.bf16.xpose.msra.mxu0 0
      %2493 = vmatprep.subr.bf16.mxu0 0
      %2494 = vmatpush2.bf16.xpose.msra.mxu0 0
      %2495 = vmatprep.subr.bf16.mxu0 0
      %2496 = vmatpush2.bf16.xpose.msra.mxu0 0
      %2497 = vmatprep.subr.bf16.mxu0 0
      %2498 = vmatpush2.bf16.xpose.msra.mxu0 0
      %2499 = vmatprep.subr.bf16.mxu0 0
      %2500 = vmatpush2.bf16.xpose.msra.mxu0 0
      %2501 = vmatprep.subr.bf16.mxu0 0
      %2502 = vmatpush2.bf16.xpose.msra.mxu0 0
      %2503 = vmatprep.mubr.bf16.mxu0 0
      %2504 = vmatmul.mubr.bf16.gmra.mxu0 %v2466
      %v2505 = vpop.f32.mrf.mxu0
      %v2506 = vadd.f32 %v607, %v2505
      %v2507 = vpop.f32.mrf.mxu0
      %v2508 = vpop.f32.mrf.mxu0
      %v2509 = vpop.f32.mrf.mxu0
      %2510 = vdwg.mxu0
      %2511 = vrot.lane.b32.xlu0 %v619, 112
      %v2512 = vpop.permute.xlu0 %2511
      %2513 = vrot.lane.b32.xlu0 %v627, 80
      %v2514 = vpop.permute.xlu0 %2513
      %v2516 = vsel %vm636, %v2512, 0
      %v2519 = vsel %vm636, %v2514, 0
      %2521 = vmatprep.subr.bf16.mxu0 0
      %2522 = vmatpush1.bf16.xpose.msra.mxu0 0
      %2523 = vmatprep.subr.bf16.mxu0 0
      %2524 = vmatpush1.bf16.xpose.msra.mxu0 0
      %2525 = vmatprep.subr.bf16.mxu0 0
      %2526 = vmatpush1.bf16.xpose.msra.mxu0 0
      %2527 = vmatprep.subr.bf16.mxu0 0
      %2528 = vmatpush1.bf16.xpose.msra.mxu0 0
      %2529 = vmatprep.subr.bf16.mxu0 0
      %2530 = vmatpush1.bf16.xpose.msra.mxu0 0
      %2531 = vmatprep.subr.bf16.mxu0 0
      %2532 = vmatpush1.bf16.xpose.msra.mxu0 0
      %2533 = vmatprep.subr.bf16.mxu0 0
      %2534 = vmatpush1.bf16.xpose.msra.mxu0 0
      %2535 = vmatprep.subr.bf16.mxu0 0
      %2536 = vmatpush1.bf16.xpose.msra.mxu0 %v2519
      %2537 = vmatprep.subr.bf16.mxu0 0
      %2538 = vmatpush2.bf16.xpose.msra.mxu0 0
      %2539 = vmatprep.subr.bf16.mxu0 0
      %2540 = vmatpush2.bf16.xpose.msra.mxu0 0
      %2541 = vmatprep.subr.bf16.mxu0 0
      %2542 = vmatpush2.bf16.xpose.msra.mxu0 0
      %2543 = vmatprep.subr.bf16.mxu0 0
      %2544 = vmatpush2.bf16.xpose.msra.mxu0 0
      %2545 = vmatprep.subr.bf16.mxu0 0
      %2546 = vmatpush2.bf16.xpose.msra.mxu0 0
      %2547 = vmatprep.subr.bf16.mxu0 0
      %2548 = vmatpush2.bf16.xpose.msra.mxu0 0
      %2549 = vmatprep.subr.bf16.mxu0 0
      %2550 = vmatpush2.bf16.xpose.msra.mxu0 0
      %2551 = vmatprep.subr.bf16.mxu0 0
      %2552 = vmatpush2.bf16.xpose.msra.mxu0 0
      %2553 = vmatprep.mubr.bf16.mxu0 0
      %2554 = vmatmul.mubr.bf16.gmra.mxu0 %v2516
      %v2555 = vpop.f32.mrf.mxu0
      %v2556 = vadd.f32 %v607, %v2555
      %v2557 = vpop.f32.mrf.mxu0
      %v2558 = vpop.f32.mrf.mxu0
      %v2559 = vpop.f32.mrf.mxu0
      %2560 = vdwg.mxu0
      %2561 = vrot.lane.b32.xlu0 %v620, 112
      %v2562 = vpop.permute.xlu0 %2561
      %2563 = vrot.lane.b32.xlu0 %v628, 80
      %v2564 = vpop.permute.xlu0 %2563
      %v2566 = vsel %vm636, %v2562, 0
      %v2569 = vsel %vm636, %v2564, 0
      %2571 = vmatprep.subr.bf16.mxu0 0
      %2572 = vmatpush1.bf16.xpose.msra.mxu0 0
      %2573 = vmatprep.subr.bf16.mxu0 0
      %2574 = vmatpush1.bf16.xpose.msra.mxu0 0
      %2575 = vmatprep.subr.bf16.mxu0 0
      %2576 = vmatpush1.bf16.xpose.msra.mxu0 0
      %2577 = vmatprep.subr.bf16.mxu0 0
      %2578 = vmatpush1.bf16.xpose.msra.mxu0 0
      %2579 = vmatprep.subr.bf16.mxu0 0
      %2580 = vmatpush1.bf16.xpose.msra.mxu0 0
      %2581 = vmatprep.subr.bf16.mxu0 0
      %2582 = vmatpush1.bf16.xpose.msra.mxu0 0
      %2583 = vmatprep.subr.bf16.mxu0 0
      %2584 = vmatpush1.bf16.xpose.msra.mxu0 0
      %2585 = vmatprep.subr.bf16.mxu0 0
      %2586 = vmatpush1.bf16.xpose.msra.mxu0 %v2569
      %2587 = vmatprep.subr.bf16.mxu0 0
      %2588 = vmatpush2.bf16.xpose.msra.mxu0 0
      %2589 = vmatprep.subr.bf16.mxu0 0
      %2590 = vmatpush2.bf16.xpose.msra.mxu0 0
      %2591 = vmatprep.subr.bf16.mxu0 0
      %2592 = vmatpush2.bf16.xpose.msra.mxu0 0
      %2593 = vmatprep.subr.bf16.mxu0 0
      %2594 = vmatpush2.bf16.xpose.msra.mxu0 0
      %2595 = vmatprep.subr.bf16.mxu0 0
      %2596 = vmatpush2.bf16.xpose.msra.mxu0 0
      %2597 = vmatprep.subr.bf16.mxu0 0
      %2598 = vmatpush2.bf16.xpose.msra.mxu0 0
      %2599 = vmatprep.subr.bf16.mxu0 0
      %2600 = vmatpush2.bf16.xpose.msra.mxu0 0
      %2601 = vmatprep.subr.bf16.mxu0 0
      %2602 = vmatpush2.bf16.xpose.msra.mxu0 0
      %2603 = vmatprep.mubr.bf16.mxu0 0
      %2604 = vmatmul.mubr.bf16.gmra.mxu0 %v2566
      %v2605 = vpop.f32.mrf.mxu0
      %v2606 = vadd.f32 %v607, %v2605
      %v2607 = vpop.f32.mrf.mxu0
      %v2608 = vpop.f32.mrf.mxu0
      %v2609 = vpop.f32.mrf.mxu0
      %2610 = vdwg.mxu0
      %2611 = vrot.lane.b32.xlu0 %v621, 112
      %v2612 = vpop.permute.xlu0 %2611
      %2613 = vrot.lane.b32.xlu0 %v629, 80
      %v2614 = vpop.permute.xlu0 %2613
      %v2616 = vsel %vm636, %v2612, 0
      %v2619 = vsel %vm636, %v2614, 0
      %2621 = vmatprep.subr.bf16.mxu0 0
      %2622 = vmatpush1.bf16.xpose.msra.mxu0 0
      %2623 = vmatprep.subr.bf16.mxu0 0
      %2624 = vmatpush1.bf16.xpose.msra.mxu0 0
      %2625 = vmatprep.subr.bf16.mxu0 0
      %2626 = vmatpush1.bf16.xpose.msra.mxu0 0
      %2627 = vmatprep.subr.bf16.mxu0 0
      %2628 = vmatpush1.bf16.xpose.msra.mxu0 0
      %2629 = vmatprep.subr.bf16.mxu0 0
      %2630 = vmatpush1.bf16.xpose.msra.mxu0 0
      %2631 = vmatprep.subr.bf16.mxu0 0
      %2632 = vmatpush1.bf16.xpose.msra.mxu0 0
      %2633 = vmatprep.subr.bf16.mxu0 0
      %2634 = vmatpush1.bf16.xpose.msra.mxu0 0
      %2635 = vmatprep.subr.bf16.mxu0 0
      %2636 = vmatpush1.bf16.xpose.msra.mxu0 %v2619
      %2637 = vmatprep.subr.bf16.mxu0 0
      %2638 = vmatpush2.bf16.xpose.msra.mxu0 0
      %2639 = vmatprep.subr.bf16.mxu0 0
      %2640 = vmatpush2.bf16.xpose.msra.mxu0 0
      %2641 = vmatprep.subr.bf16.mxu0 0
      %2642 = vmatpush2.bf16.xpose.msra.mxu0 0
      %2643 = vmatprep.subr.bf16.mxu0 0
      %2644 = vmatpush2.bf16.xpose.msra.mxu0 0
      %2645 = vmatprep.subr.bf16.mxu0 0
      %2646 = vmatpush2.bf16.xpose.msra.mxu0 0
      %2647 = vmatprep.subr.bf16.mxu0 0
      %2648 = vmatpush2.bf16.xpose.msra.mxu0 0
      %2649 = vmatprep.subr.bf16.mxu0 0
      %2650 = vmatpush2.bf16.xpose.msra.mxu0 0
      %2651 = vmatprep.subr.bf16.mxu0 0
      %2652 = vmatpush2.bf16.xpose.msra.mxu0 0
      %2653 = vmatprep.mubr.bf16.mxu0 0
      %2654 = vmatmul.mubr.bf16.gmra.mxu0 %v2616
      %v2655 = vpop.f32.mrf.mxu0
      %v2656 = vadd.f32 %v607, %v2655
      %v2657 = vpop.f32.mrf.mxu0
      %v2658 = vpop.f32.mrf.mxu0
      %v2659 = vpop.f32.mrf.mxu0
      %2660 = vdwg.mxu0
      %2661 = vrot.lane.b32.xlu0 %v622, 112
      %v2662 = vpop.permute.xlu0 %2661
      %2663 = vrot.lane.b32.xlu0 %v630, 80
      %v2664 = vpop.permute.xlu0 %2663
      %v2666 = vsel %vm636, %v2662, 0
      %v2669 = vsel %vm636, %v2664, 0
      %2671 = vmatprep.subr.bf16.mxu0 0
      %2672 = vmatpush1.bf16.xpose.msra.mxu0 0
      %2673 = vmatprep.subr.bf16.mxu0 0
      %2674 = vmatpush1.bf16.xpose.msra.mxu0 0
      %2675 = vmatprep.subr.bf16.mxu0 0
      %2676 = vmatpush1.bf16.xpose.msra.mxu0 0
      %2677 = vmatprep.subr.bf16.mxu0 0
      %2678 = vmatpush1.bf16.xpose.msra.mxu0 0
      %2679 = vmatprep.subr.bf16.mxu0 0
      %2680 = vmatpush1.bf16.xpose.msra.mxu0 0
      %2681 = vmatprep.subr.bf16.mxu0 0
      %2682 = vmatpush1.bf16.xpose.msra.mxu0 0
      %2683 = vmatprep.subr.bf16.mxu0 0
      %2684 = vmatpush1.bf16.xpose.msra.mxu0 0
      %2685 = vmatprep.subr.bf16.mxu0 0
      %2686 = vmatpush1.bf16.xpose.msra.mxu0 %v2669
      %2687 = vmatprep.subr.bf16.mxu0 0
      %2688 = vmatpush2.bf16.xpose.msra.mxu0 0
      %2689 = vmatprep.subr.bf16.mxu0 0
      %2690 = vmatpush2.bf16.xpose.msra.mxu0 0
      %2691 = vmatprep.subr.bf16.mxu0 0
      %2692 = vmatpush2.bf16.xpose.msra.mxu0 0
      %2693 = vmatprep.subr.bf16.mxu0 0
      %2694 = vmatpush2.bf16.xpose.msra.mxu0 0
      %2695 = vmatprep.subr.bf16.mxu0 0
      %2696 = vmatpush2.bf16.xpose.msra.mxu0 0
      %2697 = vmatprep.subr.bf16.mxu0 0
      %2698 = vmatpush2.bf16.xpose.msra.mxu0 0
      %2699 = vmatprep.subr.bf16.mxu0 0
      %2700 = vmatpush2.bf16.xpose.msra.mxu0 0
      %2701 = vmatprep.subr.bf16.mxu0 0
      %2702 = vmatpush2.bf16.xpose.msra.mxu0 0
      %2703 = vmatprep.mubr.bf16.mxu0 0
      %2704 = vmatmul.mubr.bf16.gmra.mxu0 %v2666
      %v2705 = vpop.f32.mrf.mxu0
      %v2706 = vadd.f32 %v607, %v2705
      %v2707 = vpop.f32.mrf.mxu0
      %v2708 = vpop.f32.mrf.mxu0
      %v2709 = vpop.f32.mrf.mxu0
      %2710 = vdwg.mxu0
      %2711 = vrot.lane.b32.xlu0 %v623, 112
      %v2712 = vpop.permute.xlu0 %2711
      %2713 = vrot.lane.b32.xlu0 %v631, 80
      %v2714 = vpop.permute.xlu0 %2713
      %v2716 = vsel %vm636, %v2712, 0
      %v2719 = vsel %vm636, %v2714, 0
      %2721 = vmatprep.subr.bf16.mxu0 0
      %2722 = vmatpush1.bf16.xpose.msra.mxu0 0
      %2723 = vmatprep.subr.bf16.mxu0 0
      %2724 = vmatpush1.bf16.xpose.msra.mxu0 0
      %2725 = vmatprep.subr.bf16.mxu0 0
      %2726 = vmatpush1.bf16.xpose.msra.mxu0 0
      %2727 = vmatprep.subr.bf16.mxu0 0
      %2728 = vmatpush1.bf16.xpose.msra.mxu0 0
      %2729 = vmatprep.subr.bf16.mxu0 0
      %2730 = vmatpush1.bf16.xpose.msra.mxu0 0
      %2731 = vmatprep.subr.bf16.mxu0 0
      %2732 = vmatpush1.bf16.xpose.msra.mxu0 0
      %2733 = vmatprep.subr.bf16.mxu0 0
      %2734 = vmatpush1.bf16.xpose.msra.mxu0 0
      %2735 = vmatprep.subr.bf16.mxu0 0
      %2736 = vmatpush1.bf16.xpose.msra.mxu0 %v2719
      %2737 = vmatprep.subr.bf16.mxu0 0
      %2738 = vmatpush2.bf16.xpose.msra.mxu0 0
      %2739 = vmatprep.subr.bf16.mxu0 0
      %2740 = vmatpush2.bf16.xpose.msra.mxu0 0
      %2741 = vmatprep.subr.bf16.mxu0 0
      %2742 = vmatpush2.bf16.xpose.msra.mxu0 0
      %2743 = vmatprep.subr.bf16.mxu0 0
      %2744 = vmatpush2.bf16.xpose.msra.mxu0 0
      %2745 = vmatprep.subr.bf16.mxu0 0
      %2746 = vmatpush2.bf16.xpose.msra.mxu0 0
      %2747 = vmatprep.subr.bf16.mxu0 0
      %2748 = vmatpush2.bf16.xpose.msra.mxu0 0
      %2749 = vmatprep.subr.bf16.mxu0 0
      %2750 = vmatpush2.bf16.xpose.msra.mxu0 0
      %2751 = vmatprep.subr.bf16.mxu0 0
      %2752 = vmatpush2.bf16.xpose.msra.mxu0 0
      %2753 = vmatprep.mubr.bf16.mxu0 0
      %2754 = vmatmul.mubr.bf16.gmra.mxu0 %v2716
      %v2755 = vpop.f32.mrf.mxu0
      %v2756 = vadd.f32 %v607, %v2755
      %v2757 = vpop.f32.mrf.mxu0
      %v2758 = vpop.f32.mrf.mxu0
      %v2759 = vpop.f32.mrf.mxu0
      %2760 = vdwg.mxu0
      %2761 = vrot.lane.b32.xlu0 %v624, 112
      %v2762 = vpop.permute.xlu0 %2761
      %2763 = vrot.lane.b32.xlu0 %v632, 80
      %v2764 = vpop.permute.xlu0 %2763
      %v2766 = vsel %vm636, %v2762, 0
      %v2769 = vsel %vm636, %v2764, 0
      %2771 = vmatprep.subr.bf16.mxu0 0
      %2772 = vmatpush1.bf16.xpose.msra.mxu0 0
      %2773 = vmatprep.subr.bf16.mxu0 0
      %2774 = vmatpush1.bf16.xpose.msra.mxu0 0
      %2775 = vmatprep.subr.bf16.mxu0 0
      %2776 = vmatpush1.bf16.xpose.msra.mxu0 0
      %2777 = vmatprep.subr.bf16.mxu0 0
      %2778 = vmatpush1.bf16.xpose.msra.mxu0 0
      %2779 = vmatprep.subr.bf16.mxu0 0
      %2780 = vmatpush1.bf16.xpose.msra.mxu0 0
      %2781 = vmatprep.subr.bf16.mxu0 0
      %2782 = vmatpush1.bf16.xpose.msra.mxu0 0
      %2783 = vmatprep.subr.bf16.mxu0 0
      %2784 = vmatpush1.bf16.xpose.msra.mxu0 0
      %2785 = vmatprep.subr.bf16.mxu0 0
      %2786 = vmatpush1.bf16.xpose.msra.mxu0 %v2769
      %2787 = vmatprep.subr.bf16.mxu0 0
      %2788 = vmatpush2.bf16.xpose.msra.mxu0 0
      %2789 = vmatprep.subr.bf16.mxu0 0
      %2790 = vmatpush2.bf16.xpose.msra.mxu0 0
      %2791 = vmatprep.subr.bf16.mxu0 0
      %2792 = vmatpush2.bf16.xpose.msra.mxu0 0
      %2793 = vmatprep.subr.bf16.mxu0 0
      %2794 = vmatpush2.bf16.xpose.msra.mxu0 0
      %2795 = vmatprep.subr.bf16.mxu0 0
      %2796 = vmatpush2.bf16.xpose.msra.mxu0 0
      %2797 = vmatprep.subr.bf16.mxu0 0
      %2798 = vmatpush2.bf16.xpose.msra.mxu0 0
      %2799 = vmatprep.subr.bf16.mxu0 0
      %2800 = vmatpush2.bf16.xpose.msra.mxu0 0
      %2801 = vmatprep.subr.bf16.mxu0 0
      %2802 = vmatpush2.bf16.xpose.msra.mxu0 0
      %2803 = vmatprep.mubr.bf16.mxu0 0
      %2804 = vmatmul.mubr.bf16.gmra.mxu0 %v2766
      %v2805 = vpop.f32.mrf.mxu0
      %v2806 = vadd.f32 %v607, %v2805
      %v2807 = vpop.f32.mrf.mxu0
      %v2808 = vpop.f32.mrf.mxu0
      %v2809 = vpop.f32.mrf.mxu0
      %2810 = vdwg.mxu0
      %v2811 = vadd.f32 %v2456, %v345
      %v2812 = vadd.f32 %v2506, %v346
      %v2813 = vadd.f32 %v2556, %v347
      %v2814 = vadd.f32 %v2606, %v348
      %v2815 = vadd.f32 %v2656, %v349
      %v2816 = vadd.f32 %v2706, %v350
      %v2817 = vadd.f32 %v2756, %v351
      %v2818 = vadd.f32 %v2806, %v352
      %v2819 = vsel %vm636, %v2811, -inf
      %2820 = vmax.xlane.f32.xlu0 %v2819
      %v2821 = vpop.xlane.xlu0 %2820
      %v2822 = vsel %vm636, %v2812, -inf
      %2823 = vmax.xlane.f32.xlu0 %v2822
      %v2824 = vpop.xlane.xlu0 %2823
      %v2825 = vsel %vm636, %v2813, -inf
      %2826 = vmax.xlane.f32.xlu0 %v2825
      %v2827 = vpop.xlane.xlu0 %2826
      %v2828 = vsel %vm636, %v2814, -inf
      %2829 = vmax.xlane.f32.xlu0 %v2828
      %v2830 = vpop.xlane.xlu0 %2829
      %v2831 = vsel %vm636, %v2815, -inf
      %2832 = vmax.xlane.f32.xlu0 %v2831
      %v2833 = vpop.xlane.xlu0 %2832
      %v2834 = vsel %vm636, %v2816, -inf
      %2835 = vmax.xlane.f32.xlu0 %v2834
      %v2836 = vpop.xlane.xlu0 %2835
      %v2837 = vsel %vm636, %v2817, -inf
      %2838 = vmax.xlane.f32.xlu0 %v2837
      %v2839 = vpop.xlane.xlu0 %2838
      %v2840 = vsel %vm636, %v2818, -inf
      %2841 = vmax.xlane.f32.xlu0 %v2840
      %v2842 = vpop.xlane.xlu0 %2841
      %v2843 = vsub.f32 %v2811, %v2821
      %v2844 = vsub.f32 %v2812, %v2824
      %v2845 = vsub.f32 %v2813, %v2827
      %v2846 = vsub.f32 %v2814, %v2830
      %v2847 = vsub.f32 %v2815, %v2833
      %v2848 = vsub.f32 %v2816, %v2836
      %v2849 = vsub.f32 %v2817, %v2839
      %v2850 = vsub.f32 %v2818, %v2842
      %v2851 = vmul.f32 %v2843, 1.442695
      %v2852 = vpow.pop %v2851
      %v2853 = vmul.f32 %v2844, 1.442695
      %v2854 = vpow.pop %v2853
      %v2855 = vmul.f32 %v2845, 1.442695
      %v2856 = vpow.pop %v2855
      %v2857 = vmul.f32 %v2846, 1.442695
      %v2858 = vpow.pop %v2857
      %v2859 = vmul.f32 %v2847, 1.442695
      %v2860 = vpow.pop %v2859
      %v2861 = vmul.f32 %v2848, 1.442695
      %v2862 = vpow.pop %v2861
      %v2863 = vmul.f32 %v2849, 1.442695
      %v2864 = vpow.pop %v2863
      %v2865 = vmul.f32 %v2850, 1.442695
      %v2866 = vpow.pop %v2865
      %v2867 = vsel %vm636, %v2852, 0.0
      %2868 = vadd.xlane.f32.xlu0 %v2867
      %v2869 = vpop.xlane.xlu0 %2868
      %v2870 = vsel %vm636, %v2854, 0.0
      %2871 = vadd.xlane.f32.xlu0 %v2870
      %v2872 = vpop.xlane.xlu0 %2871
      %v2873 = vsel %vm636, %v2856, 0.0
      %2874 = vadd.xlane.f32.xlu0 %v2873
      %v2875 = vpop.xlane.xlu0 %2874
      %v2876 = vsel %vm636, %v2858, 0.0
      %2877 = vadd.xlane.f32.xlu0 %v2876
      %v2878 = vpop.xlane.xlu0 %2877
      %v2879 = vsel %vm636, %v2860, 0.0
      %2880 = vadd.xlane.f32.xlu0 %v2879
      %v2881 = vpop.xlane.xlu0 %2880
      %v2882 = vsel %vm636, %v2862, 0.0
      %2883 = vadd.xlane.f32.xlu0 %v2882
      %v2884 = vpop.xlane.xlu0 %2883
      %v2885 = vsel %vm636, %v2864, 0.0
      %2886 = vadd.xlane.f32.xlu0 %v2885
      %v2887 = vpop.xlane.xlu0 %2886
      %v2888 = vsel %vm636, %v2866, 0.0
      %2889 = vadd.xlane.f32.xlu0 %v2888
      %v2890 = vpop.xlane.xlu0 %2889
      %v2891 = vpack.c.bf16 %v2852, %v2852
      %v2892 = vpack.c.bf16 %v2854, %v2854
      %v2893 = vpack.c.bf16 %v2856, %v2856
      %v2894 = vpack.c.bf16 %v2858, %v2858
      %v2895 = vpack.c.bf16 %v2860, %v2860
      %v2896 = vpack.c.bf16 %v2862, %v2862
      %v2897 = vpack.c.bf16 %v2864, %v2864
      %v2898 = vpack.c.bf16 %v2866, %v2866
      %2899 = vrot.lane.b32.xlu0 %v625, 48
      %v2900 = vpop.permute.xlu0 %2899
      %v2902 = vsel %vm636, %v2891, 0
      %v2905 = vsel %vm1119, %v2900, 0
      %2907 = vmatprep.subr.bf16.mxu0 0
      %2908 = vmatpush1.bf16.msra.mxu0 0
      %2909 = vmatprep.subr.bf16.mxu0 0
      %2910 = vmatpush1.bf16.msra.mxu0 0
      %2911 = vmatprep.subr.bf16.mxu0 0
      %2912 = vmatpush1.bf16.msra.mxu0 0
      %2913 = vmatprep.subr.bf16.mxu0 0
      %2914 = vmatpush1.bf16.msra.mxu0 0
      %2915 = vmatprep.subr.bf16.mxu0 0
      %2916 = vmatpush1.bf16.msra.mxu0 0
      %2917 = vmatprep.subr.bf16.mxu0 0
      %2918 = vmatpush1.bf16.msra.mxu0 0
      %2919 = vmatprep.subr.bf16.mxu0 0
      %2920 = vmatpush1.bf16.msra.mxu0 0
      %2921 = vmatprep.subr.bf16.mxu0 0
      %2922 = vmatpush1.bf16.msra.mxu0 %v2905
      %2923 = vmatprep.subr.bf16.mxu0 0
      %2924 = vmatpush2.bf16.msra.mxu0 0
      %2925 = vmatprep.subr.bf16.mxu0 0
      %2926 = vmatpush2.bf16.msra.mxu0 0
      %2927 = vmatprep.subr.bf16.mxu0 0
      %2928 = vmatpush2.bf16.msra.mxu0 0
      %2929 = vmatprep.subr.bf16.mxu0 0
      %2930 = vmatpush2.bf16.msra.mxu0 0
      %2931 = vmatprep.subr.bf16.mxu0 0
      %2932 = vmatpush2.bf16.msra.mxu0 0
      %2933 = vmatprep.subr.bf16.mxu0 0
      %2934 = vmatpush2.bf16.msra.mxu0 0
      %2935 = vmatprep.subr.bf16.mxu0 0
      %2936 = vmatpush2.bf16.msra.mxu0 0
      %2937 = vmatprep.subr.bf16.mxu0 0
      %2938 = vmatpush2.bf16.msra.mxu0 0
      %2939 = vmatprep.mubr.bf16.mxu0 0
      %2940 = vmatmul.mubr.bf16.gmra.mxu0 %v2902
      %v2941 = vpop.f32.mrf.mxu0
      %v2942 = vadd.f32 0.0, %v2941
      %v2943 = vpop.f32.mrf.mxu0
      %v2944 = vpop.f32.mrf.mxu0
      %v2945 = vpop.f32.mrf.mxu0
      %2946 = vdwg.mxu0
      %2947 = vrot.lane.b32.xlu0 %v626, 48
      %v2948 = vpop.permute.xlu0 %2947
      %v2950 = vsel %vm636, %v2892, 0
      %v2953 = vsel %vm1119, %v2948, 0
      %2955 = vmatprep.subr.bf16.mxu0 0
      %2956 = vmatpush1.bf16.msra.mxu0 0
      %2957 = vmatprep.subr.bf16.mxu0 0
      %2958 = vmatpush1.bf16.msra.mxu0 0
      %2959 = vmatprep.subr.bf16.mxu0 0
      %2960 = vmatpush1.bf16.msra.mxu0 0
      %2961 = vmatprep.subr.bf16.mxu0 0
      %2962 = vmatpush1.bf16.msra.mxu0 0
      %2963 = vmatprep.subr.bf16.mxu0 0
      %2964 = vmatpush1.bf16.msra.mxu0 0
      %2965 = vmatprep.subr.bf16.mxu0 0
      %2966 = vmatpush1.bf16.msra.mxu0 0
      %2967 = vmatprep.subr.bf16.mxu0 0
      %2968 = vmatpush1.bf16.msra.mxu0 0
      %2969 = vmatprep.subr.bf16.mxu0 0
      %2970 = vmatpush1.bf16.msra.mxu0 %v2953
      %2971 = vmatprep.subr.bf16.mxu0 0
      %2972 = vmatpush2.bf16.msra.mxu0 0
      %2973 = vmatprep.subr.bf16.mxu0 0
      %2974 = vmatpush2.bf16.msra.mxu0 0
      %2975 = vmatprep.subr.bf16.mxu0 0
      %2976 = vmatpush2.bf16.msra.mxu0 0
      %2977 = vmatprep.subr.bf16.mxu0 0
      %2978 = vmatpush2.bf16.msra.mxu0 0
      %2979 = vmatprep.subr.bf16.mxu0 0
      %2980 = vmatpush2.bf16.msra.mxu0 0
      %2981 = vmatprep.subr.bf16.mxu0 0
      %2982 = vmatpush2.bf16.msra.mxu0 0
      %2983 = vmatprep.subr.bf16.mxu0 0
      %2984 = vmatpush2.bf16.msra.mxu0 0
      %2985 = vmatprep.subr.bf16.mxu0 0
      %2986 = vmatpush2.bf16.msra.mxu0 0
      %2987 = vmatprep.mubr.bf16.mxu0 0
      %2988 = vmatmul.mubr.bf16.gmra.mxu0 %v2950
      %v2989 = vpop.f32.mrf.mxu0
      %v2990 = vadd.f32 0.0, %v2989
      %v2991 = vpop.f32.mrf.mxu0
      %v2992 = vpop.f32.mrf.mxu0
      %v2993 = vpop.f32.mrf.mxu0
      %2994 = vdwg.mxu0
      %2995 = vrot.lane.b32.xlu0 %v627, 48
      %v2996 = vpop.permute.xlu0 %2995
      %v2998 = vsel %vm636, %v2893, 0
      %v3001 = vsel %vm1119, %v2996, 0
      %3003 = vmatprep.subr.bf16.mxu0 0
      %3004 = vmatpush1.bf16.msra.mxu0 0
      %3005 = vmatprep.subr.bf16.mxu0 0
      %3006 = vmatpush1.bf16.msra.mxu0 0
      %3007 = vmatprep.subr.bf16.mxu0 0
      %3008 = vmatpush1.bf16.msra.mxu0 0
      %3009 = vmatprep.subr.bf16.mxu0 0
      %3010 = vmatpush1.bf16.msra.mxu0 0
      %3011 = vmatprep.subr.bf16.mxu0 0
      %3012 = vmatpush1.bf16.msra.mxu0 0
      %3013 = vmatprep.subr.bf16.mxu0 0
      %3014 = vmatpush1.bf16.msra.mxu0 0
      %3015 = vmatprep.subr.bf16.mxu0 0
      %3016 = vmatpush1.bf16.msra.mxu0 0
      %3017 = vmatprep.subr.bf16.mxu0 0
      %3018 = vmatpush1.bf16.msra.mxu0 %v3001
      %3019 = vmatprep.subr.bf16.mxu0 0
      %3020 = vmatpush2.bf16.msra.mxu0 0
      %3021 = vmatprep.subr.bf16.mxu0 0
      %3022 = vmatpush2.bf16.msra.mxu0 0
      %3023 = vmatprep.subr.bf16.mxu0 0
      %3024 = vmatpush2.bf16.msra.mxu0 0
      %3025 = vmatprep.subr.bf16.mxu0 0
      %3026 = vmatpush2.bf16.msra.mxu0 0
      %3027 = vmatprep.subr.bf16.mxu0 0
      %3028 = vmatpush2.bf16.msra.mxu0 0
      %3029 = vmatprep.subr.bf16.mxu0 0
      %3030 = vmatpush2.bf16.msra.mxu0 0
      %3031 = vmatprep.subr.bf16.mxu0 0
      %3032 = vmatpush2.bf16.msra.mxu0 0
      %3033 = vmatprep.subr.bf16.mxu0 0
      %3034 = vmatpush2.bf16.msra.mxu0 0
      %3035 = vmatprep.mubr.bf16.mxu0 0
      %3036 = vmatmul.mubr.bf16.gmra.mxu0 %v2998
      %v3037 = vpop.f32.mrf.mxu0
      %v3038 = vadd.f32 0.0, %v3037
      %v3039 = vpop.f32.mrf.mxu0
      %v3040 = vpop.f32.mrf.mxu0
      %v3041 = vpop.f32.mrf.mxu0
      %3042 = vdwg.mxu0
      %3043 = vrot.lane.b32.xlu0 %v628, 48
      %v3044 = vpop.permute.xlu0 %3043
      %v3046 = vsel %vm636, %v2894, 0
      %v3049 = vsel %vm1119, %v3044, 0
      %3051 = vmatprep.subr.bf16.mxu0 0
      %3052 = vmatpush1.bf16.msra.mxu0 0
      %3053 = vmatprep.subr.bf16.mxu0 0
      %3054 = vmatpush1.bf16.msra.mxu0 0
      %3055 = vmatprep.subr.bf16.mxu0 0
      %3056 = vmatpush1.bf16.msra.mxu0 0
      %3057 = vmatprep.subr.bf16.mxu0 0
      %3058 = vmatpush1.bf16.msra.mxu0 0
      %3059 = vmatprep.subr.bf16.mxu0 0
      %3060 = vmatpush1.bf16.msra.mxu0 0
      %3061 = vmatprep.subr.bf16.mxu0 0
      %3062 = vmatpush1.bf16.msra.mxu0 0
      %3063 = vmatprep.subr.bf16.mxu0 0
      %3064 = vmatpush1.bf16.msra.mxu0 0
      %3065 = vmatprep.subr.bf16.mxu0 0
      %3066 = vmatpush1.bf16.msra.mxu0 %v3049
      %3067 = vmatprep.subr.bf16.mxu0 0
      %3068 = vmatpush2.bf16.msra.mxu0 0
      %3069 = vmatprep.subr.bf16.mxu0 0
      %3070 = vmatpush2.bf16.msra.mxu0 0
      %3071 = vmatprep.subr.bf16.mxu0 0
      %3072 = vmatpush2.bf16.msra.mxu0 0
      %3073 = vmatprep.subr.bf16.mxu0 0
      %3074 = vmatpush2.bf16.msra.mxu0 0
      %3075 = vmatprep.subr.bf16.mxu0 0
      %3076 = vmatpush2.bf16.msra.mxu0 0
      %3077 = vmatprep.subr.bf16.mxu0 0
      %3078 = vmatpush2.bf16.msra.mxu0 0
      %3079 = vmatprep.subr.bf16.mxu0 0
      %3080 = vmatpush2.bf16.msra.mxu0 0
      %3081 = vmatprep.subr.bf16.mxu0 0
      %3082 = vmatpush2.bf16.msra.mxu0 0
      %3083 = vmatprep.mubr.bf16.mxu0 0
      %3084 = vmatmul.mubr.bf16.gmra.mxu0 %v3046
      %v3085 = vpop.f32.mrf.mxu0
      %v3086 = vadd.f32 0.0, %v3085
      %v3087 = vpop.f32.mrf.mxu0
      %v3088 = vpop.f32.mrf.mxu0
      %v3089 = vpop.f32.mrf.mxu0
      %3090 = vdwg.mxu0
      %3091 = vrot.lane.b32.xlu0 %v629, 48
      %v3092 = vpop.permute.xlu0 %3091
      %v3094 = vsel %vm636, %v2895, 0
      %v3097 = vsel %vm1119, %v3092, 0
      %3099 = vmatprep.subr.bf16.mxu0 0
      %3100 = vmatpush1.bf16.msra.mxu0 0
      %3101 = vmatprep.subr.bf16.mxu0 0
      %3102 = vmatpush1.bf16.msra.mxu0 0
      %3103 = vmatprep.subr.bf16.mxu0 0
      %3104 = vmatpush1.bf16.msra.mxu0 0
      %3105 = vmatprep.subr.bf16.mxu0 0
      %3106 = vmatpush1.bf16.msra.mxu0 0
      %3107 = vmatprep.subr.bf16.mxu0 0
      %3108 = vmatpush1.bf16.msra.mxu0 0
      %3109 = vmatprep.subr.bf16.mxu0 0
      %3110 = vmatpush1.bf16.msra.mxu0 0
      %3111 = vmatprep.subr.bf16.mxu0 0
      %3112 = vmatpush1.bf16.msra.mxu0 0
      %3113 = vmatprep.subr.bf16.mxu0 0
      %3114 = vmatpush1.bf16.msra.mxu0 %v3097
      %3115 = vmatprep.subr.bf16.mxu0 0
      %3116 = vmatpush2.bf16.msra.mxu0 0
      %3117 = vmatprep.subr.bf16.mxu0 0
      %3118 = vmatpush2.bf16.msra.mxu0 0
      %3119 = vmatprep.subr.bf16.mxu0 0
      %3120 = vmatpush2.bf16.msra.mxu0 0
      %3121 = vmatprep.subr.bf16.mxu0 0
      %3122 = vmatpush2.bf16.msra.mxu0 0
      %3123 = vmatprep.subr.bf16.mxu0 0
      %3124 = vmatpush2.bf16.msra.mxu0 0
      %3125 = vmatprep.subr.bf16.mxu0 0
      %3126 = vmatpush2.bf16.msra.mxu0 0
      %3127 = vmatprep.subr.bf16.mxu0 0
      %3128 = vmatpush2.bf16.msra.mxu0 0
      %3129 = vmatprep.subr.bf16.mxu0 0
      %3130 = vmatpush2.bf16.msra.mxu0 0
      %3131 = vmatprep.mubr.bf16.mxu0 0
      %3132 = vmatmul.mubr.bf16.gmra.mxu0 %v3094
      %v3133 = vpop.f32.mrf.mxu0
      %v3134 = vadd.f32 0.0, %v3133
      %v3135 = vpop.f32.mrf.mxu0
      %v3136 = vpop.f32.mrf.mxu0
      %v3137 = vpop.f32.mrf.mxu0
      %3138 = vdwg.mxu0
      %3139 = vrot.lane.b32.xlu0 %v630, 48
      %v3140 = vpop.permute.xlu0 %3139
      %v3142 = vsel %vm636, %v2896, 0
      %v3145 = vsel %vm1119, %v3140, 0
      %3147 = vmatprep.subr.bf16.mxu0 0
      %3148 = vmatpush1.bf16.msra.mxu0 0
      %3149 = vmatprep.subr.bf16.mxu0 0
      %3150 = vmatpush1.bf16.msra.mxu0 0
      %3151 = vmatprep.subr.bf16.mxu0 0
      %3152 = vmatpush1.bf16.msra.mxu0 0
      %3153 = vmatprep.subr.bf16.mxu0 0
      %3154 = vmatpush1.bf16.msra.mxu0 0
      %3155 = vmatprep.subr.bf16.mxu0 0
      %3156 = vmatpush1.bf16.msra.mxu0 0
      %3157 = vmatprep.subr.bf16.mxu0 0
      %3158 = vmatpush1.bf16.msra.mxu0 0
      %3159 = vmatprep.subr.bf16.mxu0 0
      %3160 = vmatpush1.bf16.msra.mxu0 0
      %3161 = vmatprep.subr.bf16.mxu0 0
      %3162 = vmatpush1.bf16.msra.mxu0 %v3145
      %3163 = vmatprep.subr.bf16.mxu0 0
      %3164 = vmatpush2.bf16.msra.mxu0 0
      %3165 = vmatprep.subr.bf16.mxu0 0
      %3166 = vmatpush2.bf16.msra.mxu0 0
      %3167 = vmatprep.subr.bf16.mxu0 0
      %3168 = vmatpush2.bf16.msra.mxu0 0
      %3169 = vmatprep.subr.bf16.mxu0 0
      %3170 = vmatpush2.bf16.msra.mxu0 0
      %3171 = vmatprep.subr.bf16.mxu0 0
      %3172 = vmatpush2.bf16.msra.mxu0 0
      %3173 = vmatprep.subr.bf16.mxu0 0
      %3174 = vmatpush2.bf16.msra.mxu0 0
      %3175 = vmatprep.subr.bf16.mxu0 0
      %3176 = vmatpush2.bf16.msra.mxu0 0
      %3177 = vmatprep.subr.bf16.mxu0 0
      %3178 = vmatpush2.bf16.msra.mxu0 0
      %3179 = vmatprep.mubr.bf16.mxu0 0
      %3180 = vmatmul.mubr.bf16.gmra.mxu0 %v3142
      %v3181 = vpop.f32.mrf.mxu0
      %v3182 = vadd.f32 0.0, %v3181
      %v3183 = vpop.f32.mrf.mxu0
      %v3184 = vpop.f32.mrf.mxu0
      %v3185 = vpop.f32.mrf.mxu0
      %3186 = vdwg.mxu0
      %3187 = vrot.lane.b32.xlu0 %v631, 48
      %v3188 = vpop.permute.xlu0 %3187
      %v3190 = vsel %vm636, %v2897, 0
      %v3193 = vsel %vm1119, %v3188, 0
      %3195 = vmatprep.subr.bf16.mxu0 0
      %3196 = vmatpush1.bf16.msra.mxu0 0
      %3197 = vmatprep.subr.bf16.mxu0 0
      %3198 = vmatpush1.bf16.msra.mxu0 0
      %3199 = vmatprep.subr.bf16.mxu0 0
      %3200 = vmatpush1.bf16.msra.mxu0 0
      %3201 = vmatprep.subr.bf16.mxu0 0
      %3202 = vmatpush1.bf16.msra.mxu0 0
      %3203 = vmatprep.subr.bf16.mxu0 0
      %3204 = vmatpush1.bf16.msra.mxu0 0
      %3205 = vmatprep.subr.bf16.mxu0 0
      %3206 = vmatpush1.bf16.msra.mxu0 0
      %3207 = vmatprep.subr.bf16.mxu0 0
      %3208 = vmatpush1.bf16.msra.mxu0 0
      %3209 = vmatprep.subr.bf16.mxu0 0
      %3210 = vmatpush1.bf16.msra.mxu0 %v3193
      %3211 = vmatprep.subr.bf16.mxu0 0
      %3212 = vmatpush2.bf16.msra.mxu0 0
      %3213 = vmatprep.subr.bf16.mxu0 0
      %3214 = vmatpush2.bf16.msra.mxu0 0
      %3215 = vmatprep.subr.bf16.mxu0 0
      %3216 = vmatpush2.bf16.msra.mxu0 0
      %3217 = vmatprep.subr.bf16.mxu0 0
      %3218 = vmatpush2.bf16.msra.mxu0 0
      %3219 = vmatprep.subr.bf16.mxu0 0
      %3220 = vmatpush2.bf16.msra.mxu0 0
      %3221 = vmatprep.subr.bf16.mxu0 0
      %3222 = vmatpush2.bf16.msra.mxu0 0
      %3223 = vmatprep.subr.bf16.mxu0 0
      %3224 = vmatpush2.bf16.msra.mxu0 0
      %3225 = vmatprep.subr.bf16.mxu0 0
      %3226 = vmatpush2.bf16.msra.mxu0 0
      %3227 = vmatprep.mubr.bf16.mxu0 0
      %3228 = vmatmul.mubr.bf16.gmra.mxu0 %v3190
      %v3229 = vpop.f32.mrf.mxu0
      %v3230 = vadd.f32 0.0, %v3229
      %v3231 = vpop.f32.mrf.mxu0
      %v3232 = vpop.f32.mrf.mxu0
      %v3233 = vpop.f32.mrf.mxu0
      %3234 = vdwg.mxu0
      %3235 = vrot.lane.b32.xlu0 %v632, 48
      %v3236 = vpop.permute.xlu0 %3235
      %v3238 = vsel %vm636, %v2898, 0
      %v3241 = vsel %vm1119, %v3236, 0
      %3243 = vmatprep.subr.bf16.mxu0 0
      %3244 = vmatpush1.bf16.msra.mxu0 0
      %3245 = vmatprep.subr.bf16.mxu0 0
      %3246 = vmatpush1.bf16.msra.mxu0 0
      %3247 = vmatprep.subr.bf16.mxu0 0
      %3248 = vmatpush1.bf16.msra.mxu0 0
      %3249 = vmatprep.subr.bf16.mxu0 0
      %3250 = vmatpush1.bf16.msra.mxu0 0
      %3251 = vmatprep.subr.bf16.mxu0 0
      %3252 = vmatpush1.bf16.msra.mxu0 0
      %3253 = vmatprep.subr.bf16.mxu0 0
      %3254 = vmatpush1.bf16.msra.mxu0 0
      %3255 = vmatprep.subr.bf16.mxu0 0
      %3256 = vmatpush1.bf16.msra.mxu0 0
      %3257 = vmatprep.subr.bf16.mxu0 0
      %3258 = vmatpush1.bf16.msra.mxu0 %v3241
      %3259 = vmatprep.subr.bf16.mxu0 0
      %3260 = vmatpush2.bf16.msra.mxu0 0
      %3261 = vmatprep.subr.bf16.mxu0 0
      %3262 = vmatpush2.bf16.msra.mxu0 0
      %3263 = vmatprep.subr.bf16.mxu0 0
      %3264 = vmatpush2.bf16.msra.mxu0 0
      %3265 = vmatprep.subr.bf16.mxu0 0
      %3266 = vmatpush2.bf16.msra.mxu0 0
      %3267 = vmatprep.subr.bf16.mxu0 0
      %3268 = vmatpush2.bf16.msra.mxu0 0
      %3269 = vmatprep.subr.bf16.mxu0 0
      %3270 = vmatpush2.bf16.msra.mxu0 0
      %3271 = vmatprep.subr.bf16.mxu0 0
      %3272 = vmatpush2.bf16.msra.mxu0 0
      %3273 = vmatprep.subr.bf16.mxu0 0
      %3274 = vmatpush2.bf16.msra.mxu0 0
      %3275 = vmatprep.mubr.bf16.mxu0 0
      %3276 = vmatmul.mubr.bf16.gmra.mxu0 %v3238
      %v3277 = vpop.f32.mrf.mxu0
      %v3278 = vadd.f32 0.0, %v3277
      %v3279 = vpop.f32.mrf.mxu0
      %v3280 = vpop.f32.mrf.mxu0
      %v3281 = vpop.f32.mrf.mxu0
      %3282 = vdwg.mxu0
      %v3283 = vrcp.pop %v2869
      %v3284 = vrcp.pop %v2872
      %v3285 = vrcp.pop %v2875
      %v3286 = vrcp.pop %v2878
      %v3287 = vrcp.pop %v2881
      %v3288 = vrcp.pop %v2884
      %v3289 = vrcp.pop %v2887
      %v3290 = vrcp.pop %v2890
      %v3291 = vmul.f32 %v2942, %v3283
      %v3292 = vmul.f32 %v2990, %v3284
      %v3293 = vmul.f32 %v3038, %v3285
      %v3294 = vmul.f32 %v3086, %v3286
      %v3295 = vmul.f32 %v3134, %v3287
      %v3296 = vmul.f32 %v3182, %v3288
      %v3297 = vmul.f32 %v3230, %v3289
      %v3298 = vmul.f32 %v3278, %v3290
      %3299 = vrot.lane.b32.xlu0 %v617, 104
      %v3300 = vpop.permute.xlu0 %3299
      %3301 = vrot.lane.b32.xlu0 %v625, 72
      %v3302 = vpop.permute.xlu0 %3301
      %v3304 = vsel %vm636, %v3300, 0
      %v3307 = vsel %vm636, %v3302, 0
      %3309 = vmatprep.subr.bf16.mxu0 0
      %3310 = vmatpush1.bf16.xpose.msra.mxu0 0
      %3311 = vmatprep.subr.bf16.mxu0 0
      %3312 = vmatpush1.bf16.xpose.msra.mxu0 0
      %3313 = vmatprep.subr.bf16.mxu0 0
      %3314 = vmatpush1.bf16.xpose.msra.mxu0 0
      %3315 = vmatprep.subr.bf16.mxu0 0
      %3316 = vmatpush1.bf16.xpose.msra.mxu0 0
      %3317 = vmatprep.subr.bf16.mxu0 0
      %3318 = vmatpush1.bf16.xpose.msra.mxu0 0
      %3319 = vmatprep.subr.bf16.mxu0 0
      %3320 = vmatpush1.bf16.xpose.msra.mxu0 0
      %3321 = vmatprep.subr.bf16.mxu0 0
      %3322 = vmatpush1.bf16.xpose.msra.mxu0 0
      %3323 = vmatprep.subr.bf16.mxu0 0
      %3324 = vmatpush1.bf16.xpose.msra.mxu0 %v3307
      %3325 = vmatprep.subr.bf16.mxu0 0
      %3326 = vmatpush2.bf16.xpose.msra.mxu0 0
      %3327 = vmatprep.subr.bf16.mxu0 0
      %3328 = vmatpush2.bf16.xpose.msra.mxu0 0
      %3329 = vmatprep.subr.bf16.mxu0 0
      %3330 = vmatpush2.bf16.xpose.msra.mxu0 0
      %3331 = vmatprep.subr.bf16.mxu0 0
      %3332 = vmatpush2.bf16.xpose.msra.mxu0 0
      %3333 = vmatprep.subr.bf16.mxu0 0
      %3334 = vmatpush2.bf16.xpose.msra.mxu0 0
      %3335 = vmatprep.subr.bf16.mxu0 0
      %3336 = vmatpush2.bf16.xpose.msra.mxu0 0
      %3337 = vmatprep.subr.bf16.mxu0 0
      %3338 = vmatpush2.bf16.xpose.msra.mxu0 0
      %3339 = vmatprep.subr.bf16.mxu0 0
      %3340 = vmatpush2.bf16.xpose.msra.mxu0 0
      %3341 = vmatprep.mubr.bf16.mxu0 0
      %3342 = vmatmul.mubr.bf16.gmra.mxu0 %v3304
      %v3343 = vpop.f32.mrf.mxu0
      %v3344 = vadd.f32 %v608, %v3343
      %v3345 = vpop.f32.mrf.mxu0
      %v3346 = vpop.f32.mrf.mxu0
      %v3347 = vpop.f32.mrf.mxu0
      %3348 = vdwg.mxu0
      %3349 = vrot.lane.b32.xlu0 %v618, 104
      %v3350 = vpop.permute.xlu0 %3349
      %3351 = vrot.lane.b32.xlu0 %v626, 72
      %v3352 = vpop.permute.xlu0 %3351
      %v3354 = vsel %vm636, %v3350, 0
      %v3357 = vsel %vm636, %v3352, 0
      %3359 = vmatprep.subr.bf16.mxu0 0
      %3360 = vmatpush1.bf16.xpose.msra.mxu0 0
      %3361 = vmatprep.subr.bf16.mxu0 0
      %3362 = vmatpush1.bf16.xpose.msra.mxu0 0
      %3363 = vmatprep.subr.bf16.mxu0 0
      %3364 = vmatpush1.bf16.xpose.msra.mxu0 0
      %3365 = vmatprep.subr.bf16.mxu0 0
      %3366 = vmatpush1.bf16.xpose.msra.mxu0 0
      %3367 = vmatprep.subr.bf16.mxu0 0
      %3368 = vmatpush1.bf16.xpose.msra.mxu0 0
      %3369 = vmatprep.subr.bf16.mxu0 0
      %3370 = vmatpush1.bf16.xpose.msra.mxu0 0
      %3371 = vmatprep.subr.bf16.mxu0 0
      %3372 = vmatpush1.bf16.xpose.msra.mxu0 0
      %3373 = vmatprep.subr.bf16.mxu0 0
      %3374 = vmatpush1.bf16.xpose.msra.mxu0 %v3357
      %3375 = vmatprep.subr.bf16.mxu0 0
      %3376 = vmatpush2.bf16.xpose.msra.mxu0 0
      %3377 = vmatprep.subr.bf16.mxu0 0
      %3378 = vmatpush2.bf16.xpose.msra.mxu0 0
      %3379 = vmatprep.subr.bf16.mxu0 0
      %3380 = vmatpush2.bf16.xpose.msra.mxu0 0
      %3381 = vmatprep.subr.bf16.mxu0 0
      %3382 = vmatpush2.bf16.xpose.msra.mxu0 0
      %3383 = vmatprep.subr.bf16.mxu0 0
      %3384 = vmatpush2.bf16.xpose.msra.mxu0 0
      %3385 = vmatprep.subr.bf16.mxu0 0
      %3386 = vmatpush2.bf16.xpose.msra.mxu0 0
      %3387 = vmatprep.subr.bf16.mxu0 0
      %3388 = vmatpush2.bf16.xpose.msra.mxu0 0
      %3389 = vmatprep.subr.bf16.mxu0 0
      %3390 = vmatpush2.bf16.xpose.msra.mxu0 0
      %3391 = vmatprep.mubr.bf16.mxu0 0
      %3392 = vmatmul.mubr.bf16.gmra.mxu0 %v3354
      %v3393 = vpop.f32.mrf.mxu0
      %v3394 = vadd.f32 %v608, %v3393
      %v3395 = vpop.f32.mrf.mxu0
      %v3396 = vpop.f32.mrf.mxu0
      %v3397 = vpop.f32.mrf.mxu0
      %3398 = vdwg.mxu0
      %3399 = vrot.lane.b32.xlu0 %v619, 104
      %v3400 = vpop.permute.xlu0 %3399
      %3401 = vrot.lane.b32.xlu0 %v627, 72
      %v3402 = vpop.permute.xlu0 %3401
      %v3404 = vsel %vm636, %v3400, 0
      %v3407 = vsel %vm636, %v3402, 0
      %3409 = vmatprep.subr.bf16.mxu0 0
      %3410 = vmatpush1.bf16.xpose.msra.mxu0 0
      %3411 = vmatprep.subr.bf16.mxu0 0
      %3412 = vmatpush1.bf16.xpose.msra.mxu0 0
      %3413 = vmatprep.subr.bf16.mxu0 0
      %3414 = vmatpush1.bf16.xpose.msra.mxu0 0
      %3415 = vmatprep.subr.bf16.mxu0 0
      %3416 = vmatpush1.bf16.xpose.msra.mxu0 0
      %3417 = vmatprep.subr.bf16.mxu0 0
      %3418 = vmatpush1.bf16.xpose.msra.mxu0 0
      %3419 = vmatprep.subr.bf16.mxu0 0
      %3420 = vmatpush1.bf16.xpose.msra.mxu0 0
      %3421 = vmatprep.subr.bf16.mxu0 0
      %3422 = vmatpush1.bf16.xpose.msra.mxu0 0
      %3423 = vmatprep.subr.bf16.mxu0 0
      %3424 = vmatpush1.bf16.xpose.msra.mxu0 %v3407
      %3425 = vmatprep.subr.bf16.mxu0 0
      %3426 = vmatpush2.bf16.xpose.msra.mxu0 0
      %3427 = vmatprep.subr.bf16.mxu0 0
      %3428 = vmatpush2.bf16.xpose.msra.mxu0 0
      %3429 = vmatprep.subr.bf16.mxu0 0
      %3430 = vmatpush2.bf16.xpose.msra.mxu0 0
      %3431 = vmatprep.subr.bf16.mxu0 0
      %3432 = vmatpush2.bf16.xpose.msra.mxu0 0
      %3433 = vmatprep.subr.bf16.mxu0 0
      %3434 = vmatpush2.bf16.xpose.msra.mxu0 0
      %3435 = vmatprep.subr.bf16.mxu0 0
      %3436 = vmatpush2.bf16.xpose.msra.mxu0 0
      %3437 = vmatprep.subr.bf16.mxu0 0
      %3438 = vmatpush2.bf16.xpose.msra.mxu0 0
      %3439 = vmatprep.subr.bf16.mxu0 0
      %3440 = vmatpush2.bf16.xpose.msra.mxu0 0
      %3441 = vmatprep.mubr.bf16.mxu0 0
      %3442 = vmatmul.mubr.bf16.gmra.mxu0 %v3404
      %v3443 = vpop.f32.mrf.mxu0
      %v3444 = vadd.f32 %v608, %v3443
      %v3445 = vpop.f32.mrf.mxu0
      %v3446 = vpop.f32.mrf.mxu0
      %v3447 = vpop.f32.mrf.mxu0
      %3448 = vdwg.mxu0
      %3449 = vrot.lane.b32.xlu0 %v620, 104
      %v3450 = vpop.permute.xlu0 %3449
      %3451 = vrot.lane.b32.xlu0 %v628, 72
      %v3452 = vpop.permute.xlu0 %3451
      %v3454 = vsel %vm636, %v3450, 0
      %v3457 = vsel %vm636, %v3452, 0
      %3459 = vmatprep.subr.bf16.mxu0 0
      %3460 = vmatpush1.bf16.xpose.msra.mxu0 0
      %3461 = vmatprep.subr.bf16.mxu0 0
      %3462 = vmatpush1.bf16.xpose.msra.mxu0 0
      %3463 = vmatprep.subr.bf16.mxu0 0
      %3464 = vmatpush1.bf16.xpose.msra.mxu0 0
      %3465 = vmatprep.subr.bf16.mxu0 0
      %3466 = vmatpush1.bf16.xpose.msra.mxu0 0
      %3467 = vmatprep.subr.bf16.mxu0 0
      %3468 = vmatpush1.bf16.xpose.msra.mxu0 0
      %3469 = vmatprep.subr.bf16.mxu0 0
      %3470 = vmatpush1.bf16.xpose.msra.mxu0 0
      %3471 = vmatprep.subr.bf16.mxu0 0
      %3472 = vmatpush1.bf16.xpose.msra.mxu0 0
      %3473 = vmatprep.subr.bf16.mxu0 0
      %3474 = vmatpush1.bf16.xpose.msra.mxu0 %v3457
      %3475 = vmatprep.subr.bf16.mxu0 0
      %3476 = vmatpush2.bf16.xpose.msra.mxu0 0
      %3477 = vmatprep.subr.bf16.mxu0 0
      %3478 = vmatpush2.bf16.xpose.msra.mxu0 0
      %3479 = vmatprep.subr.bf16.mxu0 0
      %3480 = vmatpush2.bf16.xpose.msra.mxu0 0
      %3481 = vmatprep.subr.bf16.mxu0 0
      %3482 = vmatpush2.bf16.xpose.msra.mxu0 0
      %3483 = vmatprep.subr.bf16.mxu0 0
      %3484 = vmatpush2.bf16.xpose.msra.mxu0 0
      %3485 = vmatprep.subr.bf16.mxu0 0
      %3486 = vmatpush2.bf16.xpose.msra.mxu0 0
      %3487 = vmatprep.subr.bf16.mxu0 0
      %3488 = vmatpush2.bf16.xpose.msra.mxu0 0
      %3489 = vmatprep.subr.bf16.mxu0 0
      %3490 = vmatpush2.bf16.xpose.msra.mxu0 0
      %3491 = vmatprep.mubr.bf16.mxu0 0
      %3492 = vmatmul.mubr.bf16.gmra.mxu0 %v3454
      %v3493 = vpop.f32.mrf.mxu0
      %v3494 = vadd.f32 %v608, %v3493
      %v3495 = vpop.f32.mrf.mxu0
      %v3496 = vpop.f32.mrf.mxu0
      %v3497 = vpop.f32.mrf.mxu0
      %3498 = vdwg.mxu0
      %3499 = vrot.lane.b32.xlu0 %v621, 104
      %v3500 = vpop.permute.xlu0 %3499
      %3501 = vrot.lane.b32.xlu0 %v629, 72
      %v3502 = vpop.permute.xlu0 %3501
      %v3504 = vsel %vm636, %v3500, 0
      %v3507 = vsel %vm636, %v3502, 0
      %3509 = vmatprep.subr.bf16.mxu0 0
      %3510 = vmatpush1.bf16.xpose.msra.mxu0 0
      %3511 = vmatprep.subr.bf16.mxu0 0
      %3512 = vmatpush1.bf16.xpose.msra.mxu0 0
      %3513 = vmatprep.subr.bf16.mxu0 0
      %3514 = vmatpush1.bf16.xpose.msra.mxu0 0
      %3515 = vmatprep.subr.bf16.mxu0 0
      %3516 = vmatpush1.bf16.xpose.msra.mxu0 0
      %3517 = vmatprep.subr.bf16.mxu0 0
      %3518 = vmatpush1.bf16.xpose.msra.mxu0 0
      %3519 = vmatprep.subr.bf16.mxu0 0
      %3520 = vmatpush1.bf16.xpose.msra.mxu0 0
      %3521 = vmatprep.subr.bf16.mxu0 0
      %3522 = vmatpush1.bf16.xpose.msra.mxu0 0
      %3523 = vmatprep.subr.bf16.mxu0 0
      %3524 = vmatpush1.bf16.xpose.msra.mxu0 %v3507
      %3525 = vmatprep.subr.bf16.mxu0 0
      %3526 = vmatpush2.bf16.xpose.msra.mxu0 0
      %3527 = vmatprep.subr.bf16.mxu0 0
      %3528 = vmatpush2.bf16.xpose.msra.mxu0 0
      %3529 = vmatprep.subr.bf16.mxu0 0
      %3530 = vmatpush2.bf16.xpose.msra.mxu0 0
      %3531 = vmatprep.subr.bf16.mxu0 0
      %3532 = vmatpush2.bf16.xpose.msra.mxu0 0
      %3533 = vmatprep.subr.bf16.mxu0 0
      %3534 = vmatpush2.bf16.xpose.msra.mxu0 0
      %3535 = vmatprep.subr.bf16.mxu0 0
      %3536 = vmatpush2.bf16.xpose.msra.mxu0 0
      %3537 = vmatprep.subr.bf16.mxu0 0
      %3538 = vmatpush2.bf16.xpose.msra.mxu0 0
      %3539 = vmatprep.subr.bf16.mxu0 0
      %3540 = vmatpush2.bf16.xpose.msra.mxu0 0
      %3541 = vmatprep.mubr.bf16.mxu0 0
      %3542 = vmatmul.mubr.bf16.gmra.mxu0 %v3504
      %v3543 = vpop.f32.mrf.mxu0
      %v3544 = vadd.f32 %v608, %v3543
      %v3545 = vpop.f32.mrf.mxu0
      %v3546 = vpop.f32.mrf.mxu0
      %v3547 = vpop.f32.mrf.mxu0
      %3548 = vdwg.mxu0
      %3549 = vrot.lane.b32.xlu0 %v622, 104
      %v3550 = vpop.permute.xlu0 %3549
      %3551 = vrot.lane.b32.xlu0 %v630, 72
      %v3552 = vpop.permute.xlu0 %3551
      %v3554 = vsel %vm636, %v3550, 0
      %v3557 = vsel %vm636, %v3552, 0
      %3559 = vmatprep.subr.bf16.mxu0 0
      %3560 = vmatpush1.bf16.xpose.msra.mxu0 0
      %3561 = vmatprep.subr.bf16.mxu0 0
      %3562 = vmatpush1.bf16.xpose.msra.mxu0 0
      %3563 = vmatprep.subr.bf16.mxu0 0
      %3564 = vmatpush1.bf16.xpose.msra.mxu0 0
      %3565 = vmatprep.subr.bf16.mxu0 0
      %3566 = vmatpush1.bf16.xpose.msra.mxu0 0
      %3567 = vmatprep.subr.bf16.mxu0 0
      %3568 = vmatpush1.bf16.xpose.msra.mxu0 0
      %3569 = vmatprep.subr.bf16.mxu0 0
      %3570 = vmatpush1.bf16.xpose.msra.mxu0 0
      %3571 = vmatprep.subr.bf16.mxu0 0
      %3572 = vmatpush1.bf16.xpose.msra.mxu0 0
      %3573 = vmatprep.subr.bf16.mxu0 0
      %3574 = vmatpush1.bf16.xpose.msra.mxu0 %v3557
      %3575 = vmatprep.subr.bf16.mxu0 0
      %3576 = vmatpush2.bf16.xpose.msra.mxu0 0
      %3577 = vmatprep.subr.bf16.mxu0 0
      %3578 = vmatpush2.bf16.xpose.msra.mxu0 0
      %3579 = vmatprep.subr.bf16.mxu0 0
      %3580 = vmatpush2.bf16.xpose.msra.mxu0 0
      %3581 = vmatprep.subr.bf16.mxu0 0
      %3582 = vmatpush2.bf16.xpose.msra.mxu0 0
      %3583 = vmatprep.subr.bf16.mxu0 0
      %3584 = vmatpush2.bf16.xpose.msra.mxu0 0
      %3585 = vmatprep.subr.bf16.mxu0 0
      %3586 = vmatpush2.bf16.xpose.msra.mxu0 0
      %3587 = vmatprep.subr.bf16.mxu0 0
      %3588 = vmatpush2.bf16.xpose.msra.mxu0 0
      %3589 = vmatprep.subr.bf16.mxu0 0
      %3590 = vmatpush2.bf16.xpose.msra.mxu0 0
      %3591 = vmatprep.mubr.bf16.mxu0 0
      %3592 = vmatmul.mubr.bf16.gmra.mxu0 %v3554
      %v3593 = vpop.f32.mrf.mxu0
      %v3594 = vadd.f32 %v608, %v3593
      %v3595 = vpop.f32.mrf.mxu0
      %v3596 = vpop.f32.mrf.mxu0
      %v3597 = vpop.f32.mrf.mxu0
      %3598 = vdwg.mxu0
      %3599 = vrot.lane.b32.xlu0 %v623, 104
      %v3600 = vpop.permute.xlu0 %3599
      %3601 = vrot.lane.b32.xlu0 %v631, 72
      %v3602 = vpop.permute.xlu0 %3601
      %v3604 = vsel %vm636, %v3600, 0
      %v3607 = vsel %vm636, %v3602, 0
      %3609 = vmatprep.subr.bf16.mxu0 0
      %3610 = vmatpush1.bf16.xpose.msra.mxu0 0
      %3611 = vmatprep.subr.bf16.mxu0 0
      %3612 = vmatpush1.bf16.xpose.msra.mxu0 0
      %3613 = vmatprep.subr.bf16.mxu0 0
      %3614 = vmatpush1.bf16.xpose.msra.mxu0 0
      %3615 = vmatprep.subr.bf16.mxu0 0
      %3616 = vmatpush1.bf16.xpose.msra.mxu0 0
      %3617 = vmatprep.subr.bf16.mxu0 0
      %3618 = vmatpush1.bf16.xpose.msra.mxu0 0
      %3619 = vmatprep.subr.bf16.mxu0 0
      %3620 = vmatpush1.bf16.xpose.msra.mxu0 0
      %3621 = vmatprep.subr.bf16.mxu0 0
      %3622 = vmatpush1.bf16.xpose.msra.mxu0 0
      %3623 = vmatprep.subr.bf16.mxu0 0
      %3624 = vmatpush1.bf16.xpose.msra.mxu0 %v3607
      %3625 = vmatprep.subr.bf16.mxu0 0
      %3626 = vmatpush2.bf16.xpose.msra.mxu0 0
      %3627 = vmatprep.subr.bf16.mxu0 0
      %3628 = vmatpush2.bf16.xpose.msra.mxu0 0
      %3629 = vmatprep.subr.bf16.mxu0 0
      %3630 = vmatpush2.bf16.xpose.msra.mxu0 0
      %3631 = vmatprep.subr.bf16.mxu0 0
      %3632 = vmatpush2.bf16.xpose.msra.mxu0 0
      %3633 = vmatprep.subr.bf16.mxu0 0
      %3634 = vmatpush2.bf16.xpose.msra.mxu0 0
      %3635 = vmatprep.subr.bf16.mxu0 0
      %3636 = vmatpush2.bf16.xpose.msra.mxu0 0
      %3637 = vmatprep.subr.bf16.mxu0 0
      %3638 = vmatpush2.bf16.xpose.msra.mxu0 0
      %3639 = vmatprep.subr.bf16.mxu0 0
      %3640 = vmatpush2.bf16.xpose.msra.mxu0 0
      %3641 = vmatprep.mubr.bf16.mxu0 0
      %3642 = vmatmul.mubr.bf16.gmra.mxu0 %v3604
      %v3643 = vpop.f32.mrf.mxu0
      %v3644 = vadd.f32 %v608, %v3643
      %v3645 = vpop.f32.mrf.mxu0
      %v3646 = vpop.f32.mrf.mxu0
      %v3647 = vpop.f32.mrf.mxu0
      %3648 = vdwg.mxu0
      %3649 = vrot.lane.b32.xlu0 %v624, 104
      %v3650 = vpop.permute.xlu0 %3649
      %3651 = vrot.lane.b32.xlu0 %v632, 72
      %v3652 = vpop.permute.xlu0 %3651
      %v3654 = vsel %vm636, %v3650, 0
      %v3657 = vsel %vm636, %v3652, 0
      %3659 = vmatprep.subr.bf16.mxu0 0
      %3660 = vmatpush1.bf16.xpose.msra.mxu0 0
      %3661 = vmatprep.subr.bf16.mxu0 0
      %3662 = vmatpush1.bf16.xpose.msra.mxu0 0
      %3663 = vmatprep.subr.bf16.mxu0 0
      %3664 = vmatpush1.bf16.xpose.msra.mxu0 0
      %3665 = vmatprep.subr.bf16.mxu0 0
      %3666 = vmatpush1.bf16.xpose.msra.mxu0 0
      %3667 = vmatprep.subr.bf16.mxu0 0
      %3668 = vmatpush1.bf16.xpose.msra.mxu0 0
      %3669 = vmatprep.subr.bf16.mxu0 0
      %3670 = vmatpush1.bf16.xpose.msra.mxu0 0
      %3671 = vmatprep.subr.bf16.mxu0 0
      %3672 = vmatpush1.bf16.xpose.msra.mxu0 0
      %3673 = vmatprep.subr.bf16.mxu0 0
      %3674 = vmatpush1.bf16.xpose.msra.mxu0 %v3657
      %3675 = vmatprep.subr.bf16.mxu0 0
      %3676 = vmatpush2.bf16.xpose.msra.mxu0 0
      %3677 = vmatprep.subr.bf16.mxu0 0
      %3678 = vmatpush2.bf16.xpose.msra.mxu0 0
      %3679 = vmatprep.subr.bf16.mxu0 0
      %3680 = vmatpush2.bf16.xpose.msra.mxu0 0
      %3681 = vmatprep.subr.bf16.mxu0 0
      %3682 = vmatpush2.bf16.xpose.msra.mxu0 0
      %3683 = vmatprep.subr.bf16.mxu0 0
      %3684 = vmatpush2.bf16.xpose.msra.mxu0 0
      %3685 = vmatprep.subr.bf16.mxu0 0
      %3686 = vmatpush2.bf16.xpose.msra.mxu0 0
      %3687 = vmatprep.subr.bf16.mxu0 0
      %3688 = vmatpush2.bf16.xpose.msra.mxu0 0
      %3689 = vmatprep.subr.bf16.mxu0 0
      %3690 = vmatpush2.bf16.xpose.msra.mxu0 0
      %3691 = vmatprep.mubr.bf16.mxu0 0
      %3692 = vmatmul.mubr.bf16.gmra.mxu0 %v3654
      %v3693 = vpop.f32.mrf.mxu0
      %v3694 = vadd.f32 %v608, %v3693
      %v3695 = vpop.f32.mrf.mxu0
      %v3696 = vpop.f32.mrf.mxu0
      %v3697 = vpop.f32.mrf.mxu0
      %3698 = vdwg.mxu0
      %v3699 = vadd.f32 %v3344, %v345
      %v3700 = vadd.f32 %v3394, %v346
      %v3701 = vadd.f32 %v3444, %v347
      %v3702 = vadd.f32 %v3494, %v348
      %v3703 = vadd.f32 %v3544, %v349
      %v3704 = vadd.f32 %v3594, %v350
      %v3705 = vadd.f32 %v3644, %v351
      %v3706 = vadd.f32 %v3694, %v352
      %v3707 = vsel %vm636, %v3699, -inf
      %3708 = vmax.xlane.f32.xlu0 %v3707
      %v3709 = vpop.xlane.xlu0 %3708
      %v3710 = vsel %vm636, %v3700, -inf
      %3711 = vmax.xlane.f32.xlu0 %v3710
      %v3712 = vpop.xlane.xlu0 %3711
      %v3713 = vsel %vm636, %v3701, -inf
      %3714 = vmax.xlane.f32.xlu0 %v3713
      %v3715 = vpop.xlane.xlu0 %3714
      %v3716 = vsel %vm636, %v3702, -inf
      %3717 = vmax.xlane.f32.xlu0 %v3716
      %v3718 = vpop.xlane.xlu0 %3717
      %v3719 = vsel %vm636, %v3703, -inf
      %3720 = vmax.xlane.f32.xlu0 %v3719
      %v3721 = vpop.xlane.xlu0 %3720
      %v3722 = vsel %vm636, %v3704, -inf
      %3723 = vmax.xlane.f32.xlu0 %v3722
      %v3724 = vpop.xlane.xlu0 %3723
      %v3725 = vsel %vm636, %v3705, -inf
      %3726 = vmax.xlane.f32.xlu0 %v3725
      %v3727 = vpop.xlane.xlu0 %3726
      %v3728 = vsel %vm636, %v3706, -inf
      %3729 = vmax.xlane.f32.xlu0 %v3728
      %v3730 = vpop.xlane.xlu0 %3729
      %v3731 = vsub.f32 %v3699, %v3709
      %v3732 = vsub.f32 %v3700, %v3712
      %v3733 = vsub.f32 %v3701, %v3715
      %v3734 = vsub.f32 %v3702, %v3718
      %v3735 = vsub.f32 %v3703, %v3721
      %v3736 = vsub.f32 %v3704, %v3724
      %v3737 = vsub.f32 %v3705, %v3727
      %v3738 = vsub.f32 %v3706, %v3730
      %v3739 = vmul.f32 %v3731, 1.442695
      %v3740 = vpow.pop %v3739
      %v3741 = vmul.f32 %v3732, 1.442695
      %v3742 = vpow.pop %v3741
      %v3743 = vmul.f32 %v3733, 1.442695
      %v3744 = vpow.pop %v3743
      %v3745 = vmul.f32 %v3734, 1.442695
      %v3746 = vpow.pop %v3745
      %v3747 = vmul.f32 %v3735, 1.442695
      %v3748 = vpow.pop %v3747
      %v3749 = vmul.f32 %v3736, 1.442695
      %v3750 = vpow.pop %v3749
      %v3751 = vmul.f32 %v3737, 1.442695
      %v3752 = vpow.pop %v3751
      %v3753 = vmul.f32 %v3738, 1.442695
      %v3754 = vpow.pop %v3753
      %v3755 = vsel %vm636, %v3740, 0.0
      %3756 = vadd.xlane.f32.xlu0 %v3755
      %v3757 = vpop.xlane.xlu0 %3756
      %v3758 = vsel %vm636, %v3742, 0.0
      %3759 = vadd.xlane.f32.xlu0 %v3758
      %v3760 = vpop.xlane.xlu0 %3759
      %v3761 = vsel %vm636, %v3744, 0.0
      %3762 = vadd.xlane.f32.xlu0 %v3761
      %v3763 = vpop.xlane.xlu0 %3762
      %v3764 = vsel %vm636, %v3746, 0.0
      %3765 = vadd.xlane.f32.xlu0 %v3764
      %v3766 = vpop.xlane.xlu0 %3765
      %v3767 = vsel %vm636, %v3748, 0.0
      %3768 = vadd.xlane.f32.xlu0 %v3767
      %v3769 = vpop.xlane.xlu0 %3768
      %v3770 = vsel %vm636, %v3750, 0.0
      %3771 = vadd.xlane.f32.xlu0 %v3770
      %v3772 = vpop.xlane.xlu0 %3771
      %v3773 = vsel %vm636, %v3752, 0.0
      %3774 = vadd.xlane.f32.xlu0 %v3773
      %v3775 = vpop.xlane.xlu0 %3774
      %v3776 = vsel %vm636, %v3754, 0.0
      %3777 = vadd.xlane.f32.xlu0 %v3776
      %v3778 = vpop.xlane.xlu0 %3777
      %v3779 = vpack.c.bf16 %v3740, %v3740
      %v3780 = vpack.c.bf16 %v3742, %v3742
      %v3781 = vpack.c.bf16 %v3744, %v3744
      %v3782 = vpack.c.bf16 %v3746, %v3746
      %v3783 = vpack.c.bf16 %v3748, %v3748
      %v3784 = vpack.c.bf16 %v3750, %v3750
      %v3785 = vpack.c.bf16 %v3752, %v3752
      %v3786 = vpack.c.bf16 %v3754, %v3754
      %3787 = vrot.lane.b32.xlu0 %v625, 40
      %v3788 = vpop.permute.xlu0 %3787
      %v3790 = vsel %vm636, %v3779, 0
      %v3793 = vsel %vm1119, %v3788, 0
      %3795 = vmatprep.subr.bf16.mxu0 0
      %3796 = vmatpush1.bf16.msra.mxu0 0
      %3797 = vmatprep.subr.bf16.mxu0 0
      %3798 = vmatpush1.bf16.msra.mxu0 0
      %3799 = vmatprep.subr.bf16.mxu0 0
      %3800 = vmatpush1.bf16.msra.mxu0 0
      %3801 = vmatprep.subr.bf16.mxu0 0
      %3802 = vmatpush1.bf16.msra.mxu0 0
      %3803 = vmatprep.subr.bf16.mxu0 0
      %3804 = vmatpush1.bf16.msra.mxu0 0
      %3805 = vmatprep.subr.bf16.mxu0 0
      %3806 = vmatpush1.bf16.msra.mxu0 0
      %3807 = vmatprep.subr.bf16.mxu0 0
      %3808 = vmatpush1.bf16.msra.mxu0 0
      %3809 = vmatprep.subr.bf16.mxu0 0
      %3810 = vmatpush1.bf16.msra.mxu0 %v3793
      %3811 = vmatprep.subr.bf16.mxu0 0
      %3812 = vmatpush2.bf16.msra.mxu0 0
      %3813 = vmatprep.subr.bf16.mxu0 0
      %3814 = vmatpush2.bf16.msra.mxu0 0
      %3815 = vmatprep.subr.bf16.mxu0 0
      %3816 = vmatpush2.bf16.msra.mxu0 0
      %3817 = vmatprep.subr.bf16.mxu0 0
      %3818 = vmatpush2.bf16.msra.mxu0 0
      %3819 = vmatprep.subr.bf16.mxu0 0
      %3820 = vmatpush2.bf16.msra.mxu0 0
      %3821 = vmatprep.subr.bf16.mxu0 0
      %3822 = vmatpush2.bf16.msra.mxu0 0
      %3823 = vmatprep.subr.bf16.mxu0 0
      %3824 = vmatpush2.bf16.msra.mxu0 0
      %3825 = vmatprep.subr.bf16.mxu0 0
      %3826 = vmatpush2.bf16.msra.mxu0 0
      %3827 = vmatprep.mubr.bf16.mxu0 0
      %3828 = vmatmul.mubr.bf16.gmra.mxu0 %v3790
      %v3829 = vpop.f32.mrf.mxu0
      %v3830 = vadd.f32 0.0, %v3829
      %v3831 = vpop.f32.mrf.mxu0
      %v3832 = vpop.f32.mrf.mxu0
      %v3833 = vpop.f32.mrf.mxu0
      %3834 = vdwg.mxu0
      %3835 = vrot.lane.b32.xlu0 %v626, 40
      %v3836 = vpop.permute.xlu0 %3835
      %v3838 = vsel %vm636, %v3780, 0
      %v3841 = vsel %vm1119, %v3836, 0
      %3843 = vmatprep.subr.bf16.mxu0 0
      %3844 = vmatpush1.bf16.msra.mxu0 0
      %3845 = vmatprep.subr.bf16.mxu0 0
      %3846 = vmatpush1.bf16.msra.mxu0 0
      %3847 = vmatprep.subr.bf16.mxu0 0
      %3848 = vmatpush1.bf16.msra.mxu0 0
      %3849 = vmatprep.subr.bf16.mxu0 0
      %3850 = vmatpush1.bf16.msra.mxu0 0
      %3851 = vmatprep.subr.bf16.mxu0 0
      %3852 = vmatpush1.bf16.msra.mxu0 0
      %3853 = vmatprep.subr.bf16.mxu0 0
      %3854 = vmatpush1.bf16.msra.mxu0 0
      %3855 = vmatprep.subr.bf16.mxu0 0
      %3856 = vmatpush1.bf16.msra.mxu0 0
      %3857 = vmatprep.subr.bf16.mxu0 0
      %3858 = vmatpush1.bf16.msra.mxu0 %v3841
      %3859 = vmatprep.subr.bf16.mxu0 0
      %3860 = vmatpush2.bf16.msra.mxu0 0
      %3861 = vmatprep.subr.bf16.mxu0 0
      %3862 = vmatpush2.bf16.msra.mxu0 0
      %3863 = vmatprep.subr.bf16.mxu0 0
      %3864 = vmatpush2.bf16.msra.mxu0 0
      %3865 = vmatprep.subr.bf16.mxu0 0
      %3866 = vmatpush2.bf16.msra.mxu0 0
      %3867 = vmatprep.subr.bf16.mxu0 0
      %3868 = vmatpush2.bf16.msra.mxu0 0
      %3869 = vmatprep.subr.bf16.mxu0 0
      %3870 = vmatpush2.bf16.msra.mxu0 0
      %3871 = vmatprep.subr.bf16.mxu0 0
      %3872 = vmatpush2.bf16.msra.mxu0 0
      %3873 = vmatprep.subr.bf16.mxu0 0
      %3874 = vmatpush2.bf16.msra.mxu0 0
      %3875 = vmatprep.mubr.bf16.mxu0 0
      %3876 = vmatmul.mubr.bf16.gmra.mxu0 %v3838
      %v3877 = vpop.f32.mrf.mxu0
      %v3878 = vadd.f32 0.0, %v3877
      %v3879 = vpop.f32.mrf.mxu0
      %v3880 = vpop.f32.mrf.mxu0
      %v3881 = vpop.f32.mrf.mxu0
      %3882 = vdwg.mxu0
      %3883 = vrot.lane.b32.xlu0 %v627, 40
      %v3884 = vpop.permute.xlu0 %3883
      %v3886 = vsel %vm636, %v3781, 0
      %v3889 = vsel %vm1119, %v3884, 0
      %3891 = vmatprep.subr.bf16.mxu0 0
      %3892 = vmatpush1.bf16.msra.mxu0 0
      %3893 = vmatprep.subr.bf16.mxu0 0
      %3894 = vmatpush1.bf16.msra.mxu0 0
      %3895 = vmatprep.subr.bf16.mxu0 0
      %3896 = vmatpush1.bf16.msra.mxu0 0
      %3897 = vmatprep.subr.bf16.mxu0 0
      %3898 = vmatpush1.bf16.msra.mxu0 0
      %3899 = vmatprep.subr.bf16.mxu0 0
      %3900 = vmatpush1.bf16.msra.mxu0 0
      %3901 = vmatprep.subr.bf16.mxu0 0
      %3902 = vmatpush1.bf16.msra.mxu0 0
      %3903 = vmatprep.subr.bf16.mxu0 0
      %3904 = vmatpush1.bf16.msra.mxu0 0
      %3905 = vmatprep.subr.bf16.mxu0 0
      %3906 = vmatpush1.bf16.msra.mxu0 %v3889
      %3907 = vmatprep.subr.bf16.mxu0 0
      %3908 = vmatpush2.bf16.msra.mxu0 0
      %3909 = vmatprep.subr.bf16.mxu0 0
      %3910 = vmatpush2.bf16.msra.mxu0 0
      %3911 = vmatprep.subr.bf16.mxu0 0
      %3912 = vmatpush2.bf16.msra.mxu0 0
      %3913 = vmatprep.subr.bf16.mxu0 0
      %3914 = vmatpush2.bf16.msra.mxu0 0
      %3915 = vmatprep.subr.bf16.mxu0 0
      %3916 = vmatpush2.bf16.msra.mxu0 0
      %3917 = vmatprep.subr.bf16.mxu0 0
      %3918 = vmatpush2.bf16.msra.mxu0 0
      %3919 = vmatprep.subr.bf16.mxu0 0
      %3920 = vmatpush2.bf16.msra.mxu0 0
      %3921 = vmatprep.subr.bf16.mxu0 0
      %3922 = vmatpush2.bf16.msra.mxu0 0
      %3923 = vmatprep.mubr.bf16.mxu0 0
      %3924 = vmatmul.mubr.bf16.gmra.mxu0 %v3886
      %v3925 = vpop.f32.mrf.mxu0
      %v3926 = vadd.f32 0.0, %v3925
      %v3927 = vpop.f32.mrf.mxu0
      %v3928 = vpop.f32.mrf.mxu0
      %v3929 = vpop.f32.mrf.mxu0
      %3930 = vdwg.mxu0
      %3931 = vrot.lane.b32.xlu0 %v628, 40
      %v3932 = vpop.permute.xlu0 %3931
      %v3934 = vsel %vm636, %v3782, 0
      %v3937 = vsel %vm1119, %v3932, 0
      %3939 = vmatprep.subr.bf16.mxu0 0
      %3940 = vmatpush1.bf16.msra.mxu0 0
      %3941 = vmatprep.subr.bf16.mxu0 0
      %3942 = vmatpush1.bf16.msra.mxu0 0
      %3943 = vmatprep.subr.bf16.mxu0 0
      %3944 = vmatpush1.bf16.msra.mxu0 0
      %3945 = vmatprep.subr.bf16.mxu0 0
      %3946 = vmatpush1.bf16.msra.mxu0 0
      %3947 = vmatprep.subr.bf16.mxu0 0
      %3948 = vmatpush1.bf16.msra.mxu0 0
      %3949 = vmatprep.subr.bf16.mxu0 0
      %3950 = vmatpush1.bf16.msra.mxu0 0
      %3951 = vmatprep.subr.bf16.mxu0 0
      %3952 = vmatpush1.bf16.msra.mxu0 0
      %3953 = vmatprep.subr.bf16.mxu0 0
      %3954 = vmatpush1.bf16.msra.mxu0 %v3937
      %3955 = vmatprep.subr.bf16.mxu0 0
      %3956 = vmatpush2.bf16.msra.mxu0 0
      %3957 = vmatprep.subr.bf16.mxu0 0
      %3958 = vmatpush2.bf16.msra.mxu0 0
      %3959 = vmatprep.subr.bf16.mxu0 0
      %3960 = vmatpush2.bf16.msra.mxu0 0
      %3961 = vmatprep.subr.bf16.mxu0 0
      %3962 = vmatpush2.bf16.msra.mxu0 0
      %3963 = vmatprep.subr.bf16.mxu0 0
      %3964 = vmatpush2.bf16.msra.mxu0 0
      %3965 = vmatprep.subr.bf16.mxu0 0
      %3966 = vmatpush2.bf16.msra.mxu0 0
      %3967 = vmatprep.subr.bf16.mxu0 0
      %3968 = vmatpush2.bf16.msra.mxu0 0
      %3969 = vmatprep.subr.bf16.mxu0 0
      %3970 = vmatpush2.bf16.msra.mxu0 0
      %3971 = vmatprep.mubr.bf16.mxu0 0
      %3972 = vmatmul.mubr.bf16.gmra.mxu0 %v3934
      %v3973 = vpop.f32.mrf.mxu0
      %v3974 = vadd.f32 0.0, %v3973
      %v3975 = vpop.f32.mrf.mxu0
      %v3976 = vpop.f32.mrf.mxu0
      %v3977 = vpop.f32.mrf.mxu0
      %3978 = vdwg.mxu0
      %3979 = vrot.lane.b32.xlu0 %v629, 40
      %v3980 = vpop.permute.xlu0 %3979
      %v3982 = vsel %vm636, %v3783, 0
      %v3985 = vsel %vm1119, %v3980, 0
      %3987 = vmatprep.subr.bf16.mxu0 0
      %3988 = vmatpush1.bf16.msra.mxu0 0
      %3989 = vmatprep.subr.bf16.mxu0 0
      %3990 = vmatpush1.bf16.msra.mxu0 0
      %3991 = vmatprep.subr.bf16.mxu0 0
      %3992 = vmatpush1.bf16.msra.mxu0 0
      %3993 = vmatprep.subr.bf16.mxu0 0
      %3994 = vmatpush1.bf16.msra.mxu0 0
      %3995 = vmatprep.subr.bf16.mxu0 0
      %3996 = vmatpush1.bf16.msra.mxu0 0
      %3997 = vmatprep.subr.bf16.mxu0 0
      %3998 = vmatpush1.bf16.msra.mxu0 0
      %3999 = vmatprep.subr.bf16.mxu0 0
      %4000 = vmatpush1.bf16.msra.mxu0 0
      %4001 = vmatprep.subr.bf16.mxu0 0
      %4002 = vmatpush1.bf16.msra.mxu0 %v3985
      %4003 = vmatprep.subr.bf16.mxu0 0
      %4004 = vmatpush2.bf16.msra.mxu0 0
      %4005 = vmatprep.subr.bf16.mxu0 0
      %4006 = vmatpush2.bf16.msra.mxu0 0
      %4007 = vmatprep.subr.bf16.mxu0 0
      %4008 = vmatpush2.bf16.msra.mxu0 0
      %4009 = vmatprep.subr.bf16.mxu0 0
      %4010 = vmatpush2.bf16.msra.mxu0 0
      %4011 = vmatprep.subr.bf16.mxu0 0
      %4012 = vmatpush2.bf16.msra.mxu0 0
      %4013 = vmatprep.subr.bf16.mxu0 0
      %4014 = vmatpush2.bf16.msra.mxu0 0
      %4015 = vmatprep.subr.bf16.mxu0 0
      %4016 = vmatpush2.bf16.msra.mxu0 0
      %4017 = vmatprep.subr.bf16.mxu0 0
      %4018 = vmatpush2.bf16.msra.mxu0 0
      %4019 = vmatprep.mubr.bf16.mxu0 0
      %4020 = vmatmul.mubr.bf16.gmra.mxu0 %v3982
      %v4021 = vpop.f32.mrf.mxu0
      %v4022 = vadd.f32 0.0, %v4021
      %v4023 = vpop.f32.mrf.mxu0
      %v4024 = vpop.f32.mrf.mxu0
      %v4025 = vpop.f32.mrf.mxu0
      %4026 = vdwg.mxu0
      %4027 = vrot.lane.b32.xlu0 %v630, 40
      %v4028 = vpop.permute.xlu0 %4027
      %v4030 = vsel %vm636, %v3784, 0
      %v4033 = vsel %vm1119, %v4028, 0
      %4035 = vmatprep.subr.bf16.mxu0 0
      %4036 = vmatpush1.bf16.msra.mxu0 0
      %4037 = vmatprep.subr.bf16.mxu0 0
      %4038 = vmatpush1.bf16.msra.mxu0 0
      %4039 = vmatprep.subr.bf16.mxu0 0
      %4040 = vmatpush1.bf16.msra.mxu0 0
      %4041 = vmatprep.subr.bf16.mxu0 0
      %4042 = vmatpush1.bf16.msra.mxu0 0
      %4043 = vmatprep.subr.bf16.mxu0 0
      %4044 = vmatpush1.bf16.msra.mxu0 0
      %4045 = vmatprep.subr.bf16.mxu0 0
      %4046 = vmatpush1.bf16.msra.mxu0 0
      %4047 = vmatprep.subr.bf16.mxu0 0
      %4048 = vmatpush1.bf16.msra.mxu0 0
      %4049 = vmatprep.subr.bf16.mxu0 0
      %4050 = vmatpush1.bf16.msra.mxu0 %v4033
      %4051 = vmatprep.subr.bf16.mxu0 0
      %4052 = vmatpush2.bf16.msra.mxu0 0
      %4053 = vmatprep.subr.bf16.mxu0 0
      %4054 = vmatpush2.bf16.msra.mxu0 0
      %4055 = vmatprep.subr.bf16.mxu0 0
      %4056 = vmatpush2.bf16.msra.mxu0 0
      %4057 = vmatprep.subr.bf16.mxu0 0
      %4058 = vmatpush2.bf16.msra.mxu0 0
      %4059 = vmatprep.subr.bf16.mxu0 0
      %4060 = vmatpush2.bf16.msra.mxu0 0
      %4061 = vmatprep.subr.bf16.mxu0 0
      %4062 = vmatpush2.bf16.msra.mxu0 0
      %4063 = vmatprep.subr.bf16.mxu0 0
      %4064 = vmatpush2.bf16.msra.mxu0 0
      %4065 = vmatprep.subr.bf16.mxu0 0
      %4066 = vmatpush2.bf16.msra.mxu0 0
      %4067 = vmatprep.mubr.bf16.mxu0 0
      %4068 = vmatmul.mubr.bf16.gmra.mxu0 %v4030
      %v4069 = vpop.f32.mrf.mxu0
      %v4070 = vadd.f32 0.0, %v4069
      %v4071 = vpop.f32.mrf.mxu0
      %v4072 = vpop.f32.mrf.mxu0
      %v4073 = vpop.f32.mrf.mxu0
      %4074 = vdwg.mxu0
      %4075 = vrot.lane.b32.xlu0 %v631, 40
      %v4076 = vpop.permute.xlu0 %4075
      %v4078 = vsel %vm636, %v3785, 0
      %v4081 = vsel %vm1119, %v4076, 0
      %4083 = vmatprep.subr.bf16.mxu0 0
      %4084 = vmatpush1.bf16.msra.mxu0 0
      %4085 = vmatprep.subr.bf16.mxu0 0
      %4086 = vmatpush1.bf16.msra.mxu0 0
      %4087 = vmatprep.subr.bf16.mxu0 0
      %4088 = vmatpush1.bf16.msra.mxu0 0
      %4089 = vmatprep.subr.bf16.mxu0 0
      %4090 = vmatpush1.bf16.msra.mxu0 0
      %4091 = vmatprep.subr.bf16.mxu0 0
      %4092 = vmatpush1.bf16.msra.mxu0 0
      %4093 = vmatprep.subr.bf16.mxu0 0
      %4094 = vmatpush1.bf16.msra.mxu0 0
      %4095 = vmatprep.subr.bf16.mxu0 0
      %4096 = vmatpush1.bf16.msra.mxu0 0
      %4097 = vmatprep.subr.bf16.mxu0 0
      %4098 = vmatpush1.bf16.msra.mxu0 %v4081
      %4099 = vmatprep.subr.bf16.mxu0 0
      %4100 = vmatpush2.bf16.msra.mxu0 0
      %4101 = vmatprep.subr.bf16.mxu0 0
      %4102 = vmatpush2.bf16.msra.mxu0 0
      %4103 = vmatprep.subr.bf16.mxu0 0
      %4104 = vmatpush2.bf16.msra.mxu0 0
      %4105 = vmatprep.subr.bf16.mxu0 0
      %4106 = vmatpush2.bf16.msra.mxu0 0
      %4107 = vmatprep.subr.bf16.mxu0 0
      %4108 = vmatpush2.bf16.msra.mxu0 0
      %4109 = vmatprep.subr.bf16.mxu0 0
      %4110 = vmatpush2.bf16.msra.mxu0 0
      %4111 = vmatprep.subr.bf16.mxu0 0
      %4112 = vmatpush2.bf16.msra.mxu0 0
      %4113 = vmatprep.subr.bf16.mxu0 0
      %4114 = vmatpush2.bf16.msra.mxu0 0
      %4115 = vmatprep.mubr.bf16.mxu0 0
      %4116 = vmatmul.mubr.bf16.gmra.mxu0 %v4078
      %v4117 = vpop.f32.mrf.mxu0
      %v4118 = vadd.f32 0.0, %v4117
      %v4119 = vpop.f32.mrf.mxu0
      %v4120 = vpop.f32.mrf.mxu0
      %v4121 = vpop.f32.mrf.mxu0
      %4122 = vdwg.mxu0
      %4123 = vrot.lane.b32.xlu0 %v632, 40
      %v4124 = vpop.permute.xlu0 %4123
      %v4126 = vsel %vm636, %v3786, 0
      %v4129 = vsel %vm1119, %v4124, 0
      %4131 = vmatprep.subr.bf16.mxu0 0
      %4132 = vmatpush1.bf16.msra.mxu0 0
      %4133 = vmatprep.subr.bf16.mxu0 0
      %4134 = vmatpush1.bf16.msra.mxu0 0
      %4135 = vmatprep.subr.bf16.mxu0 0
      %4136 = vmatpush1.bf16.msra.mxu0 0
      %4137 = vmatprep.subr.bf16.mxu0 0
      %4138 = vmatpush1.bf16.msra.mxu0 0
      %4139 = vmatprep.subr.bf16.mxu0 0
      %4140 = vmatpush1.bf16.msra.mxu0 0
      %4141 = vmatprep.subr.bf16.mxu0 0
      %4142 = vmatpush1.bf16.msra.mxu0 0
      %4143 = vmatprep.subr.bf16.mxu0 0
      %4144 = vmatpush1.bf16.msra.mxu0 0
      %4145 = vmatprep.subr.bf16.mxu0 0
      %4146 = vmatpush1.bf16.msra.mxu0 %v4129
      %4147 = vmatprep.subr.bf16.mxu0 0
      %4148 = vmatpush2.bf16.msra.mxu0 0
      %4149 = vmatprep.subr.bf16.mxu0 0
      %4150 = vmatpush2.bf16.msra.mxu0 0
      %4151 = vmatprep.subr.bf16.mxu0 0
      %4152 = vmatpush2.bf16.msra.mxu0 0
      %4153 = vmatprep.subr.bf16.mxu0 0
      %4154 = vmatpush2.bf16.msra.mxu0 0
      %4155 = vmatprep.subr.bf16.mxu0 0
      %4156 = vmatpush2.bf16.msra.mxu0 0
      %4157 = vmatprep.subr.bf16.mxu0 0
      %4158 = vmatpush2.bf16.msra.mxu0 0
      %4159 = vmatprep.subr.bf16.mxu0 0
      %4160 = vmatpush2.bf16.msra.mxu0 0
      %4161 = vmatprep.subr.bf16.mxu0 0
      %4162 = vmatpush2.bf16.msra.mxu0 0
      %4163 = vmatprep.mubr.bf16.mxu0 0
      %4164 = vmatmul.mubr.bf16.gmra.mxu0 %v4126
      %v4165 = vpop.f32.mrf.mxu0
      %v4166 = vadd.f32 0.0, %v4165
      %v4167 = vpop.f32.mrf.mxu0
      %v4168 = vpop.f32.mrf.mxu0
      %v4169 = vpop.f32.mrf.mxu0
      %4170 = vdwg.mxu0
      %v4171 = vrcp.pop %v3757
      %v4172 = vrcp.pop %v3760
      %v4173 = vrcp.pop %v3763
      %v4174 = vrcp.pop %v3766
      %v4175 = vrcp.pop %v3769
      %v4176 = vrcp.pop %v3772
      %v4177 = vrcp.pop %v3775
      %v4178 = vrcp.pop %v3778
      %v4179 = vmul.f32 %v3830, %v4171
      %v4180 = vmul.f32 %v3878, %v4172
      %v4181 = vmul.f32 %v3926, %v4173
      %v4182 = vmul.f32 %v3974, %v4174
      %v4183 = vmul.f32 %v4022, %v4175
      %v4184 = vmul.f32 %v4070, %v4176
      %v4185 = vmul.f32 %v4118, %v4177
      %v4186 = vmul.f32 %v4166, %v4178
      %4195 = vrot.lane.b32.xlu0 %v2403, 8
      %v4196 = vpop.permute.xlu0 %4195
      %4197 = vrot.lane.b32.xlu0 %v2404, 8
      %v4198 = vpop.permute.xlu0 %4197
      %4199 = vrot.lane.b32.xlu0 %v2405, 8
      %v4200 = vpop.permute.xlu0 %4199
      %4201 = vrot.lane.b32.xlu0 %v2406, 8
      %v4202 = vpop.permute.xlu0 %4201
      %4203 = vrot.lane.b32.xlu0 %v2407, 8
      %v4204 = vpop.permute.xlu0 %4203
      %4205 = vrot.lane.b32.xlu0 %v2408, 8
      %v4206 = vpop.permute.xlu0 %4205
      %4207 = vrot.lane.b32.xlu0 %v2409, 8
      %v4208 = vpop.permute.xlu0 %4207
      %4209 = vrot.lane.b32.xlu0 %v2410, 8
      %v4210 = vpop.permute.xlu0 %4209
      %4227 = vrot.lane.b32.xlu0 %v3291, 16
      %v4228 = vpop.permute.xlu0 %4227
      %4229 = vrot.lane.b32.xlu0 %v3292, 16
      %v4230 = vpop.permute.xlu0 %4229
      %4231 = vrot.lane.b32.xlu0 %v3293, 16
      %v4232 = vpop.permute.xlu0 %4231
      %4233 = vrot.lane.b32.xlu0 %v3294, 16
      %v4234 = vpop.permute.xlu0 %4233
      %4235 = vrot.lane.b32.xlu0 %v3295, 16
      %v4236 = vpop.permute.xlu0 %4235
      %4237 = vrot.lane.b32.xlu0 %v3296, 16
      %v4238 = vpop.permute.xlu0 %4237
      %4239 = vrot.lane.b32.xlu0 %v3297, 16
      %v4240 = vpop.permute.xlu0 %4239
      %4241 = vrot.lane.b32.xlu0 %v3298, 16
      %v4242 = vpop.permute.xlu0 %4241
      %4259 = vrot.lane.b32.xlu0 %v4179, 24
      %v4260 = vpop.permute.xlu0 %4259
      %4261 = vrot.lane.b32.xlu0 %v4180, 24
      %v4262 = vpop.permute.xlu0 %4261
      %4263 = vrot.lane.b32.xlu0 %v4181, 24
      %v4264 = vpop.permute.xlu0 %4263
      %4265 = vrot.lane.b32.xlu0 %v4182, 24
      %v4266 = vpop.permute.xlu0 %4265
      %4267 = vrot.lane.b32.xlu0 %v4183, 24
      %v4268 = vpop.permute.xlu0 %4267
      %4269 = vrot.lane.b32.xlu0 %v4184, 24
      %v4270 = vpop.permute.xlu0 %4269
      %4271 = vrot.lane.b32.xlu0 %v4185, 24
      %v4272 = vpop.permute.xlu0 %4271
      %4273 = vrot.lane.b32.xlu0 %v4186, 24
      %v4274 = vpop.permute.xlu0 %4273
      %v4283 = vsel %vm636, %v1507, %v4196
      %v4284 = vsel %vm636, %v1508, %v4198
      %v4285 = vsel %vm636, %v1509, %v4200
      %v4286 = vsel %vm636, %v1510, %v4202
      %v4287 = vsel %vm636, %v1511, %v4204
      %v4288 = vsel %vm636, %v1512, %v4206
      %v4289 = vsel %vm636, %v1513, %v4208
      %v4290 = vsel %vm636, %v1514, %v4210
      %vm4291 = vcmask 130048
      %v4292 = vsel %vm4291, %v4283, %v4228
      %v4293 = vsel %vm4291, %v4284, %v4230
      %v4294 = vsel %vm4291, %v4285, %v4232
      %v4295 = vsel %vm4291, %v4286, %v4234
      %v4296 = vsel %vm4291, %v4287, %v4236
      %v4297 = vsel %vm4291, %v4288, %v4238
      %v4298 = vsel %vm4291, %v4289, %v4240
      %v4299 = vsel %vm4291, %v4290, %v4242
      %vm4300 = vcmask 195584
      %v4301 = vsel %vm4300, %v4292, %v4260
      %v4302 = vsel %vm4300, %v4293, %v4262
      %v4303 = vsel %vm4300, %v4294, %v4264
      %v4304 = vsel %vm4300, %v4295, %v4266
      %v4305 = vsel %vm4300, %v4296, %v4268
      %v4306 = vsel %vm4300, %v4297, %v4270
      %v4307 = vsel %vm4300, %v4298, %v4272
      %v4308 = vsel %vm4300, %v4299, %v4274
      %v4309 = vpack.c.bf16 %v4302, %v4301
      %v4310 = vpack.c.bf16 %v4304, %v4303
      %v4311 = vpack.c.bf16 %v4306, %v4305
      %v4312 = vpack.c.bf16 %v4308, %v4307
      %v4313 = vld [vmem:[%s7] sm:$0xf]
      %v4314 = vld [vmem:[%s7 + $0x4] sm:$0xf]
      %v4315 = vld [vmem:[%s7 + $0x8] sm:$0xf]
      %v4316 = vld [vmem:[%s7 + $0xc] sm:$0xf]
      %v4317 = vld [vmem:[%s8] sm:$0x1]
      %v4319 = vlaneseq
      %v4320 = vshrl.u32 %v4319, 7
      %v4321 = vsub.s32 0, %v4320
      %v4322 = vrot.slane %v4317, %v4321
      %v4328 = vunpack.c.l.b16 %v4313
      %v4329 = vunpack.c.l.b16 %v4314
      %v4330 = vunpack.c.l.b16 %v4315
      %v4331 = vunpack.c.l.b16 %v4316
      %v4332 = vpack.c.b16 %v4329, %v4328
      %v4333 = vpack.c.b16 %v4331, %v4330
      %v4337 = vsel %vm363, %v4309, 0
      %v4340 = vsel %vm363, %v4310, 0
      %v4343 = vsel %vm363, %v4311, 0
      %v4346 = vsel %vm363, %v4312, 0
      %4348 = vmatprep.subr.bf16.mxu0 0
      %4349 = vmatpush1.bf16.msra.mxu0 0
      %4350 = vmatprep.subr.bf16.mxu0 0
      %4351 = vmatpush1.bf16.msra.mxu0 0
      %4352 = vmatprep.subr.bf16.mxu0 0
      %4353 = vmatpush1.bf16.msra.mxu0 0
      %4354 = vmatprep.subr.bf16.mxu0 0
      %4355 = vmatpush1.bf16.msra.mxu0 0
      %4356 = vmatprep.subr.bf16.mxu0 0
      %4357 = vmatpush1.bf16.msra.mxu0 0
      %4358 = vmatprep.subr.bf16.mxu0 0
      %4359 = vmatpush1.bf16.msra.mxu0 0
      %4360 = vmatprep.subr.bf16.mxu0 0
      %4361 = vmatpush1.bf16.msra.mxu0 %v4333
      %4362 = vmatprep.subr.bf16.mxu0 0
      %4363 = vmatpush1.bf16.msra.mxu0 %v4332
      %4364 = vmatprep.subr.bf16.mxu0 0
      %4365 = vmatpush2.bf16.msra.mxu0 0
      %4366 = vmatprep.subr.bf16.mxu0 0
      %4367 = vmatpush2.bf16.msra.mxu0 0
      %4368 = vmatprep.subr.bf16.mxu0 0
      %4369 = vmatpush2.bf16.msra.mxu0 0
      %4370 = vmatprep.subr.bf16.mxu0 0
      %4371 = vmatpush2.bf16.msra.mxu0 0
      %4372 = vmatprep.subr.bf16.mxu0 0
      %4373 = vmatpush2.bf16.msra.mxu0 0
      %4374 = vmatprep.subr.bf16.mxu0 0
      %4375 = vmatpush2.bf16.msra.mxu0 0
      %4376 = vmatprep.subr.bf16.mxu0 0
      %4377 = vmatpush2.bf16.msra.mxu0 0
      %4378 = vmatprep.subr.bf16.mxu0 0
      %4379 = vmatpush2.bf16.msra.mxu0 0
      %4380 = vmatprep.mubr.bf16.mxu0 0
      %4381 = vmatmul.mubr.bf16.gmra.mxu0 %v4337
      %v4382 = vpop.f32.mrf.mxu0
      %v4383 = vadd.f32 %v4322, %v4382
      %v4384 = vpop.f32.mrf.mxu0
      %v4385 = vpop.f32.mrf.mxu0
      %v4386 = vadd.f32 %v4322, %v4385
      %v4387 = vpop.f32.mrf.mxu0
      %4388 = vmatprep.mubr.bf16.mxu0 0
      %4389 = vmatmul.mubr.bf16.gmra.mxu0 %v4340
      %v4390 = vpop.f32.mrf.mxu0
      %v4391 = vadd.f32 %v4322, %v4390
      %v4392 = vpop.f32.mrf.mxu0
      %v4393 = vpop.f32.mrf.mxu0
      %v4394 = vadd.f32 %v4322, %v4393
      %v4395 = vpop.f32.mrf.mxu0
      %4396 = vmatprep.mubr.bf16.mxu0 0
      %4397 = vmatmul.mubr.bf16.gmra.mxu0 %v4343
      %v4398 = vpop.f32.mrf.mxu0
      %v4399 = vadd.f32 %v4322, %v4398
      %v4400 = vpop.f32.mrf.mxu0
      %v4401 = vpop.f32.mrf.mxu0
      %v4402 = vadd.f32 %v4322, %v4401
      %v4403 = vpop.f32.mrf.mxu0
      %4404 = vmatprep.mubr.bf16.mxu0 0
      %4405 = vmatmul.mubr.bf16.gmra.mxu0 %v4346
      %v4406 = vpop.f32.mrf.mxu0
      %v4407 = vadd.f32 %v4322, %v4406
      %v4408 = vpop.f32.mrf.mxu0
      %v4409 = vpop.f32.mrf.mxu0
      %v4410 = vadd.f32 %v4322, %v4409
      %v4411 = vpop.f32.mrf.mxu0
      %4412 = vdwg.mxu0
      %4413 = vst.msk [vmem:[%s334] sm:$0xff] %vm363, %v4383
      %4414 = vst.msk [vmem:[%s334 + $0x8] sm:$0xff] %vm363, %v4386
      %4415 = vst.msk [vmem:[%s334 + $0x10] sm:$0xff] %vm363, %v4391
      %4416 = vst.msk [vmem:[%s334 + $0x18] sm:$0xff] %vm363, %v4394
      %4417 = vst.msk [vmem:[%s334 + $0x20] sm:$0xff] %vm363, %v4399
      %4418 = vst.msk [vmem:[%s334 + $0x28] sm:$0xff] %vm363, %v4402
      %4419 = vst.msk [vmem:[%s334 + $0x30] sm:$0xff] %vm363, %v4407
      %4420 = vst.msk [vmem:[%s334 + $0x38] sm:$0xff] %vm363, %v4410
      %s4421 = smul.u32 8, %s20
      %p4422 = scmp.lt.s32.totalorder %s4421, 15
      %s4423 = scalar_select %p4422, %s4421, 15
      %s4424 = smul.addr %s4423, 8
      %s4425 = scalar_lea.vmem %s9, %s4424
      // Predicated region
      $region57: #{a_call__.7} parent=55 // pred_check
        %p4426 = pneg %p232
      $region58: #{a_call__.7} parent=55 // pred_check_branch
        %4428 = sbr.rel (%p4426) target = $region60
      $region59: #{a_call__.7} parent=55 // pred_region
        %s4429 = smul.u32 8, %s20
      $region60: #{a_call__.7} parent=55 // pred_fallthru
        _
    $region56: #{a_call__.7} parent=5 // pred_fallthru
      _
    %p4430 = scmp.le.s32.totalorder 2, %s15
    // Predicated region
    $region61: #{a_call__.7} parent=5 // pred_check
      %p4431 = pneg %p4430
    $region62: #{a_call__.7} parent=5 // pred_check_branch
      %4433 = sbr.rel (%p4431) target = $region64
    $region63: #{a_call__.7} parent=5 // pred_region
      %s4434 = ssub.s32 %s15, 2
      // Predicated region
      $region65: #{a_call__.7} parent=63 // pred_check
        %p4435 = pneg %p238
      $region66: #{a_call__.7} parent=63 // pred_check_branch
        %4437 = sbr.rel (%p4435) target = $region68
      $region67: #{a_call__.7} parent=63 // pred_region
        %s4438 = smul.u32 8, %s21
        %p4439 = scmp.lt.s32.totalorder %s4438, 15
        %s4440 = scalar_select %p4439, %s4438, 15
        %s4441 = smul.addr %s4440, 8
        %s4442 = scalar_lea.vmem %s9, %s4441
      $region68: #{a_call__.7} parent=63 // pred_fallthru
        _
    $region64: #{a_call__.7} parent=5 // pred_fallthru
      _
  $region6: #{a_call__.7} parent=0 // loop_footer
    %s19 = sadd.s32 1, %s15
  $region7: #{a_call__.7} parent=0 // loop_footer_branch
    %14 = sbr.rel target = $region3
  $region8: #{a_call__.7} parent=0 // loop_exit
    _

</llo_original>
